<compile_context>
chip_gen: v5e
topology: v5e:2x2
jax: 0.10.0
libtpu: 0.0.40
codegen_flags: <defaults>
</compile_context>

<pallas_src>
import jax
import jax.numpy as jnp
from jax.experimental import pallas as pl
from jax.experimental.pallas import tpu as pltpu


# --------------------------------------------------------------------------
# Pallas kernels
# --------------------------------------------------------------------------

def _conv_bn_relu_kernel(p_ref, w_ref, scale_ref, shift_ref, o_ref):
    """o = relu((patches @ w) * scale + shift); single block, fits VMEM."""
    acc = jnp.dot(p_ref[...], w_ref[...], preferred_element_type=jnp.float32)
    y = acc * scale_ref[...] + shift_ref[...]
    o_ref[...] = jnp.maximum(y, 0.0).astype(o_ref.dtype)


def _maxpool_kernel(p_ref, o_ref):
    """p: (M, KK, C) window patches -> o: (M, C) max over window axis."""
    kk = p_ref.shape[1]
    acc = p_ref[:, 0, :]
    for i in range(1, kk):                       # static unroll (KK = 9)
        acc = jnp.maximum(acc, p_ref[:, i, :])
    o_ref[...] = acc.astype(o_ref.dtype)


def _avgpool_kernel(x_ref, o_ref):
    """x: (B, S, C) -> o: (B, C) mean over the spatial axis S."""
    s = x_ref.shape[1]
    acc = x_ref[:, 0, :].astype(jnp.float32)
    for i in range(1, s):                        # static unroll (S is tiny)
        acc = acc + x_ref[:, i, :]
    o_ref[...] = (acc * (1.0 / s)).astype(o_ref.dtype)


def _fc_kernel(x_ref, w_ref, b_ref, o_ref):
    """One lane-dense output tile of y = x @ W + b (full K per block)."""
    o_ref[...] = (
        jnp.dot(x_ref[...], w_ref[...], preferred_element_type=jnp.float32)
        + b_ref[...]
    ).astype(o_ref.dtype)


# --------------------------------------------------------------------------
# Wrappers (layout plumbing only; all FLOPs happen in the kernels above)
# --------------------------------------------------------------------------

def _full_spec(shape):
    nd = len(shape)
    return pl.BlockSpec(tuple(shape), lambda i, _nd=nd: (0,) * _nd)


def _single_block_call(kernel, inputs, out_shape, out_dtype):
    return pl.pallas_call(
        kernel,
        out_shape=jax.ShapeDtypeStruct(out_shape, out_dtype),
        grid=(1,),
        in_specs=[_full_spec(a.shape) for a in inputs],
        out_specs=_full_spec(out_shape),
    )(*inputs)


def _extract_patches(x_nhwc, kh, kw, stride, pad, pad_value=0.0):
    """im2col: (B,H,W,C) -> (B*Ho*Wo, kh*kw, C), plus (Ho, Wo)."""
    B, H, W, C = x_nhwc.shape
    xp = jnp.pad(
        x_nhwc, ((0, 0), (pad, pad), (pad, pad), (0, 0)),
        constant_values=pad_value,
    )
    Ho = (H + 2 * pad - kh) // stride + 1
    Wo = (W + 2 * pad - kw) // stride + 1
    views = []
    for dy in range(kh):
        for dx in range(kw):
            sl = jax.lax.slice(
                xp,
                (0, dy, dx, 0),
                (B, dy + (Ho - 1) * stride + 1, dx + (Wo - 1) * stride + 1, C),
                (1, stride, stride, 1),
            )
            views.append(sl)                     # each (B, Ho, Wo, C)
    patches = jnp.stack(views, axis=3)           # (B, Ho, Wo, kh*kw, C)
    return patches.reshape(B * Ho * Wo, kh * kw, C), Ho, Wo


def conv_bn_relu(x_nhwc, w_oihw, conv_b, gamma, beta, mean, var, *,
                 stride, pad, eps=1e-5):
    B, H, W, Cin = x_nhwc.shape
    Cout, Cin2, KH, KW = w_oihw.shape
    assert Cin == Cin2
    patches, Ho, Wo = _extract_patches(x_nhwc, KH, KW, stride, pad, 0.0)
    M = B * Ho * Wo
    pmat = patches.reshape(M, KH * KW * Cin)
    # (Cout, Cin, KH, KW) -> (KH*KW*Cin, Cout), matching the patch ordering.
    wmat = jnp.transpose(w_oihw, (2, 3, 1, 0)).reshape(KH * KW * Cin, Cout)
    # Fold conv bias + inference-mode BatchNorm into per-channel scale/shift.
    scale = gamma / jnp.sqrt(var + eps)
    shift = (conv_b - mean) * scale + beta
    out = _single_block_call(
        _conv_bn_relu_kernel,
        (pmat, wmat, scale.reshape(1, Cout), shift.reshape(1, Cout)),
        (M, Cout), x_nhwc.dtype,
    )
    return out.reshape(B, Ho, Wo, Cout)


def maxpool2d(x_nhwc, *, k=3, stride=2, pad=1):
    B, H, W, C = x_nhwc.shape
    patches, Ho, Wo = _extract_patches(x_nhwc, k, k, stride, pad,
                                       pad_value=-jnp.inf)
    M = B * Ho * Wo
    out = _single_block_call(_maxpool_kernel, (patches,), (M, C), x_nhwc.dtype)
    return out.reshape(B, Ho, Wo, C)


def global_avgpool(x_nhwc):
    B, H, W, C = x_nhwc.shape
    xr = x_nhwc.reshape(B, H * W, C)
    return _single_block_call(_avgpool_kernel, (xr,), (B, C), x_nhwc.dtype)


def linear_tiled(x, w_kn, bias, *, tn=2048):
    """y = x @ w_kn + bias; tiled over the (large) output dim only."""
    M, K = x.shape
    K2, N = w_kn.shape
    assert K == K2
    n_blocks = pl.cdiv(N, tn)
    Np = n_blocks * tn
    w_p = jnp.pad(w_kn, ((0, 0), (0, Np - N)))
    b_p = jnp.pad(bias, (0, Np - N)).reshape(1, Np)
    cost = pl.CostEstimate(
        flops=2 * M * K * Np,
        transcendentals=0,
        bytes_accessed=4 * (M * K + K * Np + Np + M * Np),
    )
    out = pl.pallas_call(
        _fc_kernel,
        out_shape=jax.ShapeDtypeStruct((M, Np), x.dtype),
        grid=(n_blocks,),
        in_specs=[
            pl.BlockSpec((M, K), lambda j: (0, 0)),    # x stays resident
            pl.BlockSpec((K, tn), lambda j: (0, j)),   # weight stream (HBM-bound)
            pl.BlockSpec((1, tn), lambda j: (0, j)),   # bias tile
        ],
        out_specs=pl.BlockSpec((M, tn), lambda j: (0, j)),
        compiler_params=pltpu.CompilerParams(
            dimension_semantics=("parallel",),
        ),
        cost_estimate=cost,
    )(x, w_p, b_p)
    return out[:, :N]


@jax.jit
def basic_cnn_forward(x_nchw, p):
    x = jnp.transpose(x_nchw, (0, 2, 3, 1))      # NCHW -> NHWC
    x = conv_bn_relu(x, p["conv1_w"], p["conv1_b"], p["bn1_g"], p["bn1_b"],
                     p["bn1_m"], p["bn1_v"], stride=2, pad=3)
    x = maxpool2d(x, k=3, stride=2, pad=1)
    x = conv_bn_relu(x, p["conv2_w"], p["conv2_b"], p["bn2_g"], p["bn2_b"],
                     p["bn2_m"], p["bn2_v"], stride=2, pad=1)
    x = conv_bn_relu(x, p["conv3_w"], p["conv3_b"], p["bn3_g"], p["bn3_b"],
                     p["bn3_m"], p["bn3_v"], stride=2, pad=1)
    x = conv_bn_relu(x, p["conv4_w"], p["conv4_b"], p["bn4_g"], p["bn4_b"],
                     p["bn4_m"], p["bn4_v"], stride=2, pad=1)
    feats = global_avgpool(x)                    # (B, 512)
    y = linear_tiled(feats, p["fc_w"], p["fc_b"], tn=2048)   # (B, 64800)
    return y.reshape(-1, 180, 360)


# --------------------------------------------------------------------------
# Pure-JAX reference + deterministic params + self-test
# --------------------------------------------------------------------------

def reference_forward(x_nchw, p, eps=1e-5):
    hp = jax.lax.Precision.HIGHEST
    x = jnp.transpose(x_nchw, (0, 2, 3, 1))

    def conv(x, w, b, stride, pad):
        w_hwio = jnp.transpose(w, (2, 3, 1, 0))
        y = jax.lax.conv_general_dilated(
            x, w_hwio, (stride, stride), [(pad, pad), (pad, pad)],
            dimension_numbers=("NHWC", "HWIO", "NHWC"), precision=hp)
        return y + b

    def bn_relu(y, g, b, m, v):
        y = (y - m) / jnp.sqrt(v + eps) * g + b
        return jnp.maximum(y, 0.0)

    x = bn_relu(conv(x, p["conv1_w"], p["conv1_b"], 2, 3),
                p["bn1_g"], p["bn1_b"], p["bn1_m"], p["bn1_v"])
    x = jax.lax.reduce_window(x, -jnp.inf, jax.lax.max,
                              (1, 3, 3, 1), (1, 2, 2, 1),
                              [(0, 0), (1, 1), (1, 1), (0, 0)])
    x = bn_relu(conv(x, p["conv2_w"], p["conv2_b"], 2, 1),
                p["bn2_g"], p["bn2_b"], p["bn2_m"], p["bn2_v"])
    x = bn_relu(conv(x, p["conv3_w"], p["conv3_b"], 2, 1),
                p["bn3_g"], p["bn3_b"], p["bn3_m"], p["bn3_v"])
    x = bn_relu(conv(x, p["conv4_w"], p["conv4_b"], 2, 1),
                p["bn4_g"], p["bn4_b"], p["bn4_m"], p["bn4_v"])
    feats = jnp.mean(x, axis=(1, 2))
    y = jnp.dot(feats, p["fc_w"], precision=hp) + p["fc_b"]
    return y.reshape(-1, 180, 360)


def make_params(key):
    ks = iter(jax.random.split(key, 26))
    p = {}

    def uni(k, shape, bound):
        return jax.random.uniform(k, shape, jnp.float32, -bound, bound)

    def add_conv(name, cin, cout, ksz):
        bound = (cin * ksz * ksz) ** -0.5
        p[name + "_w"] = uni(next(ks), (cout, cin, ksz, ksz), bound)
        p[name + "_b"] = uni(next(ks), (cout,), bound)

    def add_bn(name, c):
        p[name + "_g"] = 1.0 + 0.1 * jax.random.normal(next(ks), (c,), jnp.float32)
        p[name + "_b"] = 0.1 * jax.random.normal(next(ks), (c,), jnp.float32)
        p[name + "_m"] = 0.1 * jax.random.normal(next(ks), (c,), jnp.float32)
        p[name + "_v"] = jax.random.uniform(next(ks), (c,), jnp.float32, 0.5, 1.5)

    add_conv("conv1", 3, 64, 7);    add_bn("bn1", 64)
    add_conv("conv2", 64, 128, 3);  add_bn("bn2", 128)
    add_conv("conv3", 128, 256, 3); add_bn("bn3", 256)
    add_conv("conv4", 256, 512, 3); add_bn("bn4", 512)
    fb = 512 ** -0.5
    # fc weight stored as (in_features, out_features) = PyTorch weight^T.
    p["fc_w"] = uni(next(ks), (512, 360 * 180), fb)
    p["fc_b"] = uni(next(ks), (360 * 180,), fb)
    return p


if __name__ == "__main__":
    key = jax.random.PRNGKey(0)
    kx, kp = jax.random.split(key)
    params = make_params(kp)
    x = jax.random.normal(kx, (2, 3, 16, 16), jnp.float32)   # NCHW, like PyTorch

    y = basic_cnn_forward(x, params)
    jax.block_until_ready(y)
    assert y.shape == (2, 180, 360)

    y_ref = reference_forward(x, params)
    err = float(jnp.max(jnp.abs(y - y_ref)))
    assert err < 5e-3, f"max abs error {err}"

    print("KERNEL_OK")
</pallas_src>

<mosaic_0001>
module attributes {stable_mosaic.version = 11 : i64} {
  func.func @_conv_bn_relu_kernel(%arg0: i32, %arg1: memref<128x147xf32, #tpu.memory_space<vmem>>, %arg2: memref<147x64xf32, #tpu.memory_space<vmem>>, %arg3: memref<1x64xf32, #tpu.memory_space<vmem>>, %arg4: memref<1x64xf32, #tpu.memory_space<vmem>>, %arg5: memref<128x64xf32, #tpu.memory_space<vmem>>) attributes {dimension_semantics = [#tpu.dimension_semantics<arbitrary>], iteration_bounds = array<i64: 1>, scalar_prefetch = 0 : i64, scratch_operands = 0 : i64, tpu.core_type = #tpu.core_type<tc>, window_params = [{pipeline_mode = #tpu.pipeline_mode<synchronous>, transform_indices = @transform_0, window_bounds = array<i64: 128, 147>}, {pipeline_mode = #tpu.pipeline_mode<synchronous>, transform_indices = @transform_1, window_bounds = array<i64: 147, 64>}, {pipeline_mode = #tpu.pipeline_mode<synchronous>, transform_indices = @transform_2, window_bounds = array<i64: 1, 64>}, {pipeline_mode = #tpu.pipeline_mode<synchronous>, transform_indices = @transform_3, window_bounds = array<i64: 1, 64>}, {pipeline_mode = #tpu.pipeline_mode<synchronous>, transform_indices = @transform_4, window_bounds = array<i64: 128, 64>}]} {
    %c0 = arith.constant 0 : index
    %c0_0 = arith.constant 0 : index
    %0 = vector.load %arg1[%c0, %c0_0] : memref<128x147xf32, #tpu.memory_space<vmem>>, vector<128x147xf32>
    %c0_1 = arith.constant 0 : index
    %c0_2 = arith.constant 0 : index
    %1 = vector.load %arg2[%c0_1, %c0_2] : memref<147x64xf32, #tpu.memory_space<vmem>>, vector<147x64xf32>
    %cst = arith.constant dense<0.000000e+00> : vector<128x64xf32>
    %2 = tpu.matmul %0, %1, %cst {dimension_numbers = #tpu.dot_dimension_numbers<[1], [0], [0], [1], [0, 0, 1, 1], [], []>} : vector<128x147xf32>, vector<147x64xf32>, vector<128x64xf32> -> vector<128x64xf32>
    %c0_3 = arith.constant 0 : index
    %c0_4 = arith.constant 0 : index
    %3 = vector.load %arg3[%c0_3, %c0_4] : memref<1x64xf32, #tpu.memory_space<vmem>>, vector<1x64xf32>
    %4 = vector.broadcast %3 : vector<1x64xf32> to vector<128x64xf32>
    %5 = arith.mulf %2, %4 : vector<128x64xf32>
    %c0_5 = arith.constant 0 : index
    %c0_6 = arith.constant 0 : index
    %6 = vector.load %arg4[%c0_5, %c0_6] : memref<1x64xf32, #tpu.memory_space<vmem>>, vector<1x64xf32>
    %7 = vector.broadcast %6 : vector<1x64xf32> to vector<128x64xf32>
    %8 = arith.addf %5, %7 : vector<128x64xf32>
    %cst_7 = arith.constant 0.000000e+00 : f32
    %9 = vector.broadcast %cst_7 : f32 to vector<128x64xf32>
    %10 = arith.maximumf %8, %9 : vector<128x64xf32>
    %c0_8 = arith.constant 0 : index
    %c0_9 = arith.constant 0 : index
    %11 = vector.load %arg5[%c0_8, %c0_9] : memref<128x64xf32, #tpu.memory_space<vmem>>, vector<128x64xf32>
    tpu.vector_store %arg5[%c0_8, %c0_9], %10 {strides = array<i32>} : memref<128x64xf32, #tpu.memory_space<vmem>>, vector<128x64xf32>,
    return
  }
  func.func @transform_0(%arg0: i32) -> (i32, i32) {
    %c0_i32 = arith.constant 0 : i32
    %c0_i32_0 = arith.constant 0 : i32
    %c0_i32_1 = arith.constant 0 : i32
    return %c0_i32, %c0_i32_0 : i32, i32
  }
  func.func @transform_1(%arg0: i32) -> (i32, i32) {
    %c0_i32 = arith.constant 0 : i32
    %c0_i32_0 = arith.constant 0 : i32
    %c0_i32_1 = arith.constant 0 : i32
    return %c0_i32, %c0_i32_0 : i32, i32
  }
  func.func @transform_2(%arg0: i32) -> (i32, i32) {
    %c0_i32 = arith.constant 0 : i32
    %c0_i32_0 = arith.constant 0 : i32
    %c0_i32_1 = arith.constant 0 : i32
    return %c0_i32, %c0_i32_0 : i32, i32
  }
  func.func @transform_3(%arg0: i32) -> (i32, i32) {
    %c0_i32 = arith.constant 0 : i32
    %c0_i32_0 = arith.constant 0 : i32
    %c0_i32_1 = arith.constant 0 : i32
    return %c0_i32, %c0_i32_0 : i32, i32
  }
  func.func @transform_4(%arg0: i32) -> (i32, i32) {
    %c0_i32 = arith.constant 0 : i32
    %c0_i32_0 = arith.constant 0 : i32
    %c0_i32_1 = arith.constant 0 : i32
    return %c0_i32, %c0_i32_0 : i32, i32
  }
}

module attributes {stable_mosaic.version = 11 : i64} {
  func.func @_maxpool_kernel(%arg0: i32, %arg1: memref<32x9x64xf32, #tpu.memory_space<vmem>>, %arg2: memref<32x64xf32, #tpu.memory_space<vmem>>) attributes {dimension_semantics = [#tpu.dimension_semantics<arbitrary>], iteration_bounds = array<i64: 1>, scalar_prefetch = 0 : i64, scratch_operands = 0 : i64, tpu.core_type = #tpu.core_type<tc>, window_params = [{pipeline_mode = #tpu.pipeline_mode<synchronous>, transform_indices = @transform_0, window_bounds = array<i64: 32, 9, 64>}, {pipeline_mode = #tpu.pipeline_mode<synchronous>, transform_indices = @transform_1, window_bounds = array<i64: 32, 64>}]} {
    %c0 = arith.constant 0 : index
    %c0_0 = arith.constant 0 : index
    %c0_1 = arith.constant 0 : index
    %0 = vector.load %arg1[%c0, %c0_0, %c0_1] : memref<32x9x64xf32, #tpu.memory_space<vmem>>, vector<32x1x64xf32>
    %1 = vector.shape_cast %0 : vector<32x1x64xf32> to vector<32x64xf32>
    %c0_2 = arith.constant 0 : index
    %c1 = arith.constant 1 : index
    %c0_3 = arith.constant 0 : index
    %2 = vector.load %arg1[%c0_2, %c1, %c0_3] : memref<32x9x64xf32, #tpu.memory_space<vmem>>, vector<32x1x64xf32>
    %3 = vector.shape_cast %2 : vector<32x1x64xf32> to vector<32x64xf32>
    %4 = arith.maximumf %1, %3 : vector<32x64xf32>
    %c0_4 = arith.constant 0 : index
    %c2 = arith.constant 2 : index
    %c0_5 = arith.constant 0 : index
    %5 = vector.load %arg1[%c0_4, %c2, %c0_5] : memref<32x9x64xf32, #tpu.memory_space<vmem>>, vector<32x1x64xf32>
    %6 = vector.shape_cast %5 : vector<32x1x64xf32> to vector<32x64xf32>
    %7 = arith.maximumf %4, %6 : vector<32x64xf32>
    %c0_6 = arith.constant 0 : index
    %c3 = arith.constant 3 : index
    %c0_7 = arith.constant 0 : index
    %8 = vector.load %arg1[%c0_6, %c3, %c0_7] : memref<32x9x64xf32, #tpu.memory_space<vmem>>, vector<32x1x64xf32>
    %9 = vector.shape_cast %8 : vector<32x1x64xf32> to vector<32x64xf32>
    %10 = arith.maximumf %7, %9 : vector<32x64xf32>
    %c0_8 = arith.constant 0 : index
    %c4 = arith.constant 4 : index
    %c0_9 = arith.constant 0 : index
    %11 = vector.load %arg1[%c0_8, %c4, %c0_9] : memref<32x9x64xf32, #tpu.memory_space<vmem>>, vector<32x1x64xf32>
    %12 = vector.shape_cast %11 : vector<32x1x64xf32> to vector<32x64xf32>
    %13 = arith.maximumf %10, %12 : vector<32x64xf32>
    %c0_10 = arith.constant 0 : index
    %c5 = arith.constant 5 : index
    %c0_11 = arith.constant 0 : index
    %14 = vector.load %arg1[%c0_10, %c5, %c0_11] : memref<32x9x64xf32, #tpu.memory_space<vmem>>, vector<32x1x64xf32>
    %15 = vector.shape_cast %14 : vector<32x1x64xf32> to vector<32x64xf32>
    %16 = arith.maximumf %13, %15 : vector<32x64xf32>
    %c0_12 = arith.constant 0 : index
    %c6 = arith.constant 6 : index
    %c0_13 = arith.constant 0 : index
    %17 = vector.load %arg1[%c0_12, %c6, %c0_13] : memref<32x9x64xf32, #tpu.memory_space<vmem>>, vector<32x1x64xf32>
    %18 = vector.shape_cast %17 : vector<32x1x64xf32> to vector<32x64xf32>
    %19 = arith.maximumf %16, %18 : vector<32x64xf32>
    %c0_14 = arith.constant 0 : index
    %c7 = arith.constant 7 : index
    %c0_15 = arith.constant 0 : index
    %20 = vector.load %arg1[%c0_14, %c7, %c0_15] : memref<32x9x64xf32, #tpu.memory_space<vmem>>, vector<32x1x64xf32>
    %21 = vector.shape_cast %20 : vector<32x1x64xf32> to vector<32x64xf32>
    %22 = arith.maximumf %19, %21 : vector<32x64xf32>
    %c0_16 = arith.constant 0 : index
    %c8 = arith.constant 8 : index
    %c0_17 = arith.constant 0 : index
    %23 = vector.load %arg1[%c0_16, %c8, %c0_17] : memref<32x9x64xf32, #tpu.memory_space<vmem>>, vector<32x1x64xf32>
    %24 = vector.shape_cast %23 : vector<32x1x64xf32> to vector<32x64xf32>
    %25 = arith.maximumf %22, %24 : vector<32x64xf32>
    %c0_18 = arith.constant 0 : index
    %c0_19 = arith.constant 0 : index
    %26 = vector.load %arg2[%c0_18, %c0_19] : memref<32x64xf32, #tpu.memory_space<vmem>>, vector<32x64xf32>
    tpu.vector_store %arg2[%c0_18, %c0_19], %25 {strides = array<i32>} : memref<32x64xf32, #tpu.memory_space<vmem>>, vector<32x64xf32>,
    return
  }
  func.func @transform_0(%arg0: i32) -> (i32, i32, i32) {
    %c0_i32 = arith.constant 0 : i32
    %c0_i32_0 = arith.constant 0 : i32
    %c0_i32_1 = arith.constant 0 : i32
    %c0_i32_2 = arith.constant 0 : i32
    return %c0_i32, %c0_i32_0, %c0_i32_1 : i32, i32, i32
  }
  func.func @transform_1(%arg0: i32) -> (i32, i32) {
    %c0_i32 = arith.constant 0 : i32
    %c0_i32_0 = arith.constant 0 : i32
    %c0_i32_1 = arith.constant 0 : i32
    return %c0_i32, %c0_i32_0 : i32, i32
  }
}

module attributes {stable_mosaic.version = 11 : i64} {
  func.func @_conv_bn_relu_kernel(%arg0: i32, %arg1: memref<8x576xf32, #tpu.memory_space<vmem>>, %arg2: memref<576x128xf32, #tpu.memory_space<vmem>>, %arg3: memref<1x128xf32, #tpu.memory_space<vmem>>, %arg4: memref<1x128xf32, #tpu.memory_space<vmem>>, %arg5: memref<8x128xf32, #tpu.memory_space<vmem>>) attributes {dimension_semantics = [#tpu.dimension_semantics<arbitrary>], iteration_bounds = array<i64: 1>, scalar_prefetch = 0 : i64, scratch_operands = 0 : i64, tpu.core_type = #tpu.core_type<tc>, window_params = [{pipeline_mode = #tpu.pipeline_mode<synchronous>, transform_indices = @transform_0, window_bounds = array<i64: 8, 576>}, {pipeline_mode = #tpu.pipeline_mode<synchronous>, transform_indices = @transform_1, window_bounds = array<i64: 576, 128>}, {pipeline_mode = #tpu.pipeline_mode<synchronous>, transform_indices = @transform_2, window_bounds = array<i64: 1, 128>}, {pipeline_mode = #tpu.pipeline_mode<synchronous>, transform_indices = @transform_3, window_bounds = array<i64: 1, 128>}, {pipeline_mode = #tpu.pipeline_mode<synchronous>, transform_indices = @transform_4, window_bounds = array<i64: 8, 128>}]} {
    %c0 = arith.constant 0 : index
    %c0_0 = arith.constant 0 : index
    %0 = vector.load %arg1[%c0, %c0_0] : memref<8x576xf32, #tpu.memory_space<vmem>>, vector<8x576xf32>
    %c0_1 = arith.constant 0 : index
    %c0_2 = arith.constant 0 : index
    %1 = vector.load %arg2[%c0_1, %c0_2] : memref<576x128xf32, #tpu.memory_space<vmem>>, vector<576x128xf32>
    %cst = arith.constant dense<0.000000e+00> : vector<8x128xf32>
    %2 = tpu.matmul %0, %1, %cst {dimension_numbers = #tpu.dot_dimension_numbers<[1], [0], [0], [1], [0, 0, 1, 1], [], []>} : vector<8x576xf32>, vector<576x128xf32>, vector<8x128xf32> -> vector<8x128xf32>
    %c0_3 = arith.constant 0 : index
    %c0_4 = arith.constant 0 : index
    %3 = vector.load %arg3[%c0_3, %c0_4] : memref<1x128xf32, #tpu.memory_space<vmem>>, vector<1x128xf32>
    %4 = vector.broadcast %3 : vector<1x128xf32> to vector<8x128xf32>
    %5 = arith.mulf %2, %4 : vector<8x128xf32>
    %c0_5 = arith.constant 0 : index
    %c0_6 = arith.constant 0 : index
    %6 = vector.load %arg4[%c0_5, %c0_6] : memref<1x128xf32, #tpu.memory_space<vmem>>, vector<1x128xf32>
    %7 = vector.broadcast %6 : vector<1x128xf32> to vector<8x128xf32>
    %8 = arith.addf %5, %7 : vector<8x128xf32>
    %cst_7 = arith.constant 0.000000e+00 : f32
    %9 = vector.broadcast %cst_7 : f32 to vector<8x128xf32>
    %10 = arith.maximumf %8, %9 : vector<8x128xf32>
    %c0_8 = arith.constant 0 : index
    %c0_9 = arith.constant 0 : index
    %11 = vector.load %arg5[%c0_8, %c0_9] : memref<8x128xf32, #tpu.memory_space<vmem>>, vector<8x128xf32>
    tpu.vector_store %arg5[%c0_8, %c0_9], %10 {strides = array<i32>} : memref<8x128xf32, #tpu.memory_space<vmem>>, vector<8x128xf32>,
    return
  }
  func.func @transform_0(%arg0: i32) -> (i32, i32) {
    %c0_i32 = arith.constant 0 : i32
    %c0_i32_0 = arith.constant 0 : i32
    %c0_i32_1 = arith.constant 0 : i32
    return %c0_i32, %c0_i32_0 : i32, i32
  }
  func.func @transform_1(%arg0: i32) -> (i32, i32) {
    %c0_i32 = arith.constant 0 : i32
    %c0_i32_0 = arith.constant 0 : i32
    %c0_i32_1 = arith.constant 0 : i32
    return %c0_i32, %c0_i32_0 : i32, i32
  }
  func.func @transform_2(%arg0: i32) -> (i32, i32) {
    %c0_i32 = arith.constant 0 : i32
    %c0_i32_0 = arith.constant 0 : i32
    %c0_i32_1 = arith.constant 0 : i32
    return %c0_i32, %c0_i32_0 : i32, i32
  }
  func.func @transform_3(%arg0: i32) -> (i32, i32) {
    %c0_i32 = arith.constant 0 : i32
    %c0_i32_0 = arith.constant 0 : i32
    %c0_i32_1 = arith.constant 0 : i32
    return %c0_i32, %c0_i32_0 : i32, i32
  }
  func.func @transform_4(%arg0: i32) -> (i32, i32) {
    %c0_i32 = arith.constant 0 : i32
    %c0_i32_0 = arith.constant 0 : i32
    %c0_i32_1 = arith.constant 0 : i32
    return %c0_i32, %c0_i32_0 : i32, i32
  }
}

module attributes {stable_mosaic.version = 11 : i64} {
  func.func @_conv_bn_relu_kernel(%arg0: i32, %arg1: memref<2x1152xf32, #tpu.memory_space<vmem>>, %arg2: memref<1152x256xf32, #tpu.memory_space<vmem>>, %arg3: memref<1x256xf32, #tpu.memory_space<vmem>>, %arg4: memref<1x256xf32, #tpu.memory_space<vmem>>, %arg5: memref<2x256xf32, #tpu.memory_space<vmem>>) attributes {dimension_semantics = [#tpu.dimension_semantics<arbitrary>], iteration_bounds = array<i64: 1>, scalar_prefetch = 0 : i64, scratch_operands = 0 : i64, tpu.core_type = #tpu.core_type<tc>, window_params = [{pipeline_mode = #tpu.pipeline_mode<synchronous>, transform_indices = @transform_0, window_bounds = array<i64: 2, 1152>}, {pipeline_mode = #tpu.pipeline_mode<synchronous>, transform_indices = @transform_1, window_bounds = array<i64: 1152, 256>}, {pipeline_mode = #tpu.pipeline_mode<synchronous>, transform_indices = @transform_2, window_bounds = array<i64: 1, 256>}, {pipeline_mode = #tpu.pipeline_mode<synchronous>, transform_indices = @transform_3, window_bounds = array<i64: 1, 256>}, {pipeline_mode = #tpu.pipeline_mode<synchronous>, transform_indices = @transform_4, window_bounds = array<i64: 2, 256>}]} {
    %c0 = arith.constant 0 : index
    %c0_0 = arith.constant 0 : index
    %0 = vector.load %arg1[%c0, %c0_0] : memref<2x1152xf32, #tpu.memory_space<vmem>>, vector<2x1152xf32>
    %c0_1 = arith.constant 0 : index
    %c0_2 = arith.constant 0 : index
    %1 = vector.load %arg2[%c0_1, %c0_2] : memref<1152x256xf32, #tpu.memory_space<vmem>>, vector<1152x256xf32>
    %cst = arith.constant dense<0.000000e+00> : vector<2x256xf32>
    %2 = tpu.matmul %0, %1, %cst {dimension_numbers = #tpu.dot_dimension_numbers<[1], [0], [0], [1], [0, 0, 1, 1], [], []>} : vector<2x1152xf32>, vector<1152x256xf32>, vector<2x256xf32> -> vector<2x256xf32>
    %c0_3 = arith.constant 0 : index
    %c0_4 = arith.constant 0 : index
    %3 = vector.load %arg3[%c0_3, %c0_4] : memref<1x256xf32, #tpu.memory_space<vmem>>, vector<1x256xf32>
    %4 = vector.broadcast %3 : vector<1x256xf32> to vector<2x256xf32>
    %5 = arith.mulf %2, %4 : vector<2x256xf32>
    %c0_5 = arith.constant 0 : index
    %c0_6 = arith.constant 0 : index
    %6 = vector.load %arg4[%c0_5, %c0_6] : memref<1x256xf32, #tpu.memory_space<vmem>>, vector<1x256xf32>
    %7 = vector.broadcast %6 : vector<1x256xf32> to vector<2x256xf32>
    %8 = arith.addf %5, %7 : vector<2x256xf32>
    %cst_7 = arith.constant 0.000000e+00 : f32
    %9 = vector.broadcast %cst_7 : f32 to vector<2x256xf32>
    %10 = arith.maximumf %8, %9 : vector<2x256xf32>
    %c0_8 = arith.constant 0 : index
    %c0_9 = arith.constant 0 : index
    %11 = vector.load %arg5[%c0_8, %c0_9] : memref<2x256xf32, #tpu.memory_space<vmem>>, vector<2x256xf32>
    tpu.vector_store %arg5[%c0_8, %c0_9], %10 {strides = array<i32>} : memref<2x256xf32, #tpu.memory_space<vmem>>, vector<2x256xf32>,
    return
  }
  func.func @transform_0(%arg0: i32) -> (i32, i32) {
    %c0_i32 = arith.constant 0 : i32
    %c0_i32_0 = arith.constant 0 : i32
    %c0_i32_1 = arith.constant 0 : i32
    return %c0_i32, %c0_i32_0 : i32, i32
  }
  func.func @transform_1(%arg0: i32) -> (i32, i32) {
    %c0_i32 = arith.constant 0 : i32
    %c0_i32_0 = arith.constant 0 : i32
    %c0_i32_1 = arith.constant 0 : i32
    return %c0_i32, %c0_i32_0 : i32, i32
  }
  func.func @transform_2(%arg0: i32) -> (i32, i32) {
    %c0_i32 = arith.constant 0 : i32
    %c0_i32_0 = arith.constant 0 : i32
    %c0_i32_1 = arith.constant 0 : i32
    return %c0_i32, %c0_i32_0 : i32, i32
  }
  func.func @transform_3(%arg0: i32) -> (i32, i32) {
    %c0_i32 = arith.constant 0 : i32
    %c0_i32_0 = arith.constant 0 : i32
    %c0_i32_1 = arith.constant 0 : i32
    return %c0_i32, %c0_i32_0 : i32, i32
  }
  func.func @transform_4(%arg0: i32) -> (i32, i32) {
    %c0_i32 = arith.constant 0 : i32
    %c0_i32_0 = arith.constant 0 : i32
    %c0_i32_1 = arith.constant 0 : i32
    return %c0_i32, %c0_i32_0 : i32, i32
  }
}

module attributes {stable_mosaic.version = 11 : i64} {
  func.func @_conv_bn_relu_kernel(%arg0: i32, %arg1: memref<2x2304xf32, #tpu.memory_space<vmem>>, %arg2: memref<2304x512xf32, #tpu.memory_space<vmem>>, %arg3: memref<1x512xf32, #tpu.memory_space<vmem>>, %arg4: memref<1x512xf32, #tpu.memory_space<vmem>>, %arg5: memref<2x512xf32, #tpu.memory_space<vmem>>) attributes {dimension_semantics = [#tpu.dimension_semantics<arbitrary>], iteration_bounds = array<i64: 1>, scalar_prefetch = 0 : i64, scratch_operands = 0 : i64, tpu.core_type = #tpu.core_type<tc>, window_params = [{pipeline_mode = #tpu.pipeline_mode<synchronous>, transform_indices = @transform_0, window_bounds = array<i64: 2, 2304>}, {pipeline_mode = #tpu.pipeline_mode<synchronous>, transform_indices = @transform_1, window_bounds = array<i64: 2304, 512>}, {pipeline_mode = #tpu.pipeline_mode<synchronous>, transform_indices = @transform_2, window_bounds = array<i64: 1, 512>}, {pipeline_mode = #tpu.pipeline_mode<synchronous>, transform_indices = @transform_3, window_bounds = array<i64: 1, 512>}, {pipeline_mode = #tpu.pipeline_mode<synchronous>, transform_indices = @transform_4, window_bounds = array<i64: 2, 512>}]} {
    %c0 = arith.constant 0 : index
    %c0_0 = arith.constant 0 : index
    %0 = vector.load %arg1[%c0, %c0_0] : memref<2x2304xf32, #tpu.memory_space<vmem>>, vector<2x2304xf32>
    %c0_1 = arith.constant 0 : index
    %c0_2 = arith.constant 0 : index
    %1 = vector.load %arg2[%c0_1, %c0_2] : memref<2304x512xf32, #tpu.memory_space<vmem>>, vector<2304x512xf32>
    %cst = arith.constant dense<0.000000e+00> : vector<2x512xf32>
    %2 = tpu.matmul %0, %1, %cst {dimension_numbers = #tpu.dot_dimension_numbers<[1], [0], [0], [1], [0, 0, 1, 1], [], []>} : vector<2x2304xf32>, vector<2304x512xf32>, vector<2x512xf32> -> vector<2x512xf32>
    %c0_3 = arith.constant 0 : index
    %c0_4 = arith.constant 0 : index
    %3 = vector.load %arg3[%c0_3, %c0_4] : memref<1x512xf32, #tpu.memory_space<vmem>>, vector<1x512xf32>
    %4 = vector.broadcast %3 : vector<1x512xf32> to vector<2x512xf32>
    %5 = arith.mulf %2, %4 : vector<2x512xf32>
    %c0_5 = arith.constant 0 : index
    %c0_6 = arith.constant 0 : index
    %6 = vector.load %arg4[%c0_5, %c0_6] : memref<1x512xf32, #tpu.memory_space<vmem>>, vector<1x512xf32>
    %7 = vector.broadcast %6 : vector<1x512xf32> to vector<2x512xf32>
    %8 = arith.addf %5, %7 : vector<2x512xf32>
    %cst_7 = arith.constant 0.000000e+00 : f32
    %9 = vector.broadcast %cst_7 : f32 to vector<2x512xf32>
    %10 = arith.maximumf %8, %9 : vector<2x512xf32>
    %c0_8 = arith.constant 0 : index
    %c0_9 = arith.constant 0 : index
    %11 = vector.load %arg5[%c0_8, %c0_9] : memref<2x512xf32, #tpu.memory_space<vmem>>, vector<2x512xf32>
    tpu.vector_store %arg5[%c0_8, %c0_9], %10 {strides = array<i32>} : memref<2x512xf32, #tpu.memory_space<vmem>>, vector<2x512xf32>,
    return
  }
  func.func @transform_0(%arg0: i32) -> (i32, i32) {
    %c0_i32 = arith.constant 0 : i32
    %c0_i32_0 = arith.constant 0 : i32
    %c0_i32_1 = arith.constant 0 : i32
    return %c0_i32, %c0_i32_0 : i32, i32
  }
  func.func @transform_1(%arg0: i32) -> (i32, i32) {
    %c0_i32 = arith.constant 0 : i32
    %c0_i32_0 = arith.constant 0 : i32
    %c0_i32_1 = arith.constant 0 : i32
    return %c0_i32, %c0_i32_0 : i32, i32
  }
  func.func @transform_2(%arg0: i32) -> (i32, i32) {
    %c0_i32 = arith.constant 0 : i32
    %c0_i32_0 = arith.constant 0 : i32
    %c0_i32_1 = arith.constant 0 : i32
    return %c0_i32, %c0_i32_0 : i32, i32
  }
  func.func @transform_3(%arg0: i32) -> (i32, i32) {
    %c0_i32 = arith.constant 0 : i32
    %c0_i32_0 = arith.constant 0 : i32
    %c0_i32_1 = arith.constant 0 : i32
    return %c0_i32, %c0_i32_0 : i32, i32
  }
  func.func @transform_4(%arg0: i32) -> (i32, i32) {
    %c0_i32 = arith.constant 0 : i32
    %c0_i32_0 = arith.constant 0 : i32
    %c0_i32_1 = arith.constant 0 : i32
    return %c0_i32, %c0_i32_0 : i32, i32
  }
}

module attributes {stable_mosaic.version = 11 : i64} {
  func.func @_avgpool_kernel(%arg0: i32, %arg1: memref<2x1x512xf32, #tpu.memory_space<vmem>>, %arg2: memref<2x512xf32, #tpu.memory_space<vmem>>) attributes {dimension_semantics = [#tpu.dimension_semantics<arbitrary>], iteration_bounds = array<i64: 1>, scalar_prefetch = 0 : i64, scratch_operands = 0 : i64, tpu.core_type = #tpu.core_type<tc>, window_params = [{pipeline_mode = #tpu.pipeline_mode<synchronous>, transform_indices = @transform_0, window_bounds = array<i64: 2, 1, 512>}, {pipeline_mode = #tpu.pipeline_mode<synchronous>, transform_indices = @transform_1, window_bounds = array<i64: 2, 512>}]} {
    %c0 = arith.constant 0 : index
    %c0_0 = arith.constant 0 : index
    %c0_1 = arith.constant 0 : index
    %0 = vector.load %arg1[%c0, %c0_0, %c0_1] : memref<2x1x512xf32, #tpu.memory_space<vmem>>, vector<2x1x512xf32>
    %1 = vector.shape_cast %0 : vector<2x1x512xf32> to vector<2x512xf32>
    %cst = arith.constant 1.000000e+00 : f32
    %2 = vector.broadcast %cst : f32 to vector<2x512xf32>
    %3 = arith.mulf %1, %2 : vector<2x512xf32>
    %c0_2 = arith.constant 0 : index
    %c0_3 = arith.constant 0 : index
    %4 = vector.load %arg2[%c0_2, %c0_3] : memref<2x512xf32, #tpu.memory_space<vmem>>, vector<2x512xf32>
    tpu.vector_store %arg2[%c0_2, %c0_3], %3 {strides = array<i32>} : memref<2x512xf32, #tpu.memory_space<vmem>>, vector<2x512xf32>,
    return
  }
  func.func @transform_0(%arg0: i32) -> (i32, i32, i32) {
    %c0_i32 = arith.constant 0 : i32
    %c0_i32_0 = arith.constant 0 : i32
    %c0_i32_1 = arith.constant 0 : i32
    %c0_i32_2 = arith.constant 0 : i32
    return %c0_i32, %c0_i32_0, %c0_i32_1 : i32, i32, i32
  }
  func.func @transform_1(%arg0: i32) -> (i32, i32) {
    %c0_i32 = arith.constant 0 : i32
    %c0_i32_0 = arith.constant 0 : i32
    %c0_i32_1 = arith.constant 0 : i32
    return %c0_i32, %c0_i32_0 : i32, i32
  }
}

module attributes {stable_mosaic.version = 11 : i64} {
  func.func @_fc_kernel(%arg0: i32, %arg1: memref<2x512xf32, #tpu.memory_space<vmem>>, %arg2: memref<512x2048xf32, #tpu.memory_space<vmem>>, %arg3: memref<1x2048xf32, #tpu.memory_space<vmem>>, %arg4: memref<2x2048xf32, #tpu.memory_space<vmem>>) attributes {dimension_semantics = [#tpu.dimension_semantics<parallel>], iteration_bounds = array<i64: 32>, scalar_prefetch = 0 : i64, scratch_operands = 0 : i64, tpu.core_type = #tpu.core_type<tc>, window_params = [{pipeline_mode = #tpu.pipeline_mode<synchronous>, transform_indices = @transform_0, window_bounds = array<i64: 2, 512>}, {transform_indices = @transform_1, window_bounds = array<i64: 512, 2048>}, {transform_indices = @transform_2, window_bounds = array<i64: 1, 2048>}, {transform_indices = @transform_3, window_bounds = array<i64: 2, 2048>}]} {
    %c0 = arith.constant 0 : index
    %c0_0 = arith.constant 0 : index
    %0 = vector.load %arg1[%c0, %c0_0] : memref<2x512xf32, #tpu.memory_space<vmem>>, vector<2x512xf32>
    %c0_1 = arith.constant 0 : index
    %c0_2 = arith.constant 0 : index
    %1 = vector.load %arg2[%c0_1, %c0_2] : memref<512x2048xf32, #tpu.memory_space<vmem>>, vector<512x2048xf32>
    %cst = arith.constant dense<0.000000e+00> : vector<2x2048xf32>
    %2 = tpu.matmul %0, %1, %cst {dimension_numbers = #tpu.dot_dimension_numbers<[1], [0], [0], [1], [0, 0, 1, 1], [], []>} : vector<2x512xf32>, vector<512x2048xf32>, vector<2x2048xf32> -> vector<2x2048xf32>
    %c0_3 = arith.constant 0 : index
    %c0_4 = arith.constant 0 : index
    %3 = vector.load %arg3[%c0_3, %c0_4] : memref<1x2048xf32, #tpu.memory_space<vmem>>, vector<1x2048xf32>
    %4 = vector.broadcast %3 : vector<1x2048xf32> to vector<2x2048xf32>
    %5 = arith.addf %2, %4 : vector<2x2048xf32>
    %c0_5 = arith.constant 0 : index
    %c0_6 = arith.constant 0 : index
    %6 = vector.load %arg4[%c0_5, %c0_6] : memref<2x2048xf32, #tpu.memory_space<vmem>>, vector<2x2048xf32>
    tpu.vector_store %arg4[%c0_5, %c0_6], %5 {strides = array<i32>} : memref<2x2048xf32, #tpu.memory_space<vmem>>, vector<2x2048xf32>,
    return
  }
  func.func @transform_0(%arg0: i32) -> (i32, i32) {
    %c0_i32 = arith.constant 0 : i32
    %c0_i32_0 = arith.constant 0 : i32
    %c0_i32_1 = arith.constant 0 : i32
    return %c0_i32, %c0_i32_0 : i32, i32
  }
  func.func @transform_1(%arg0: i32) -> (i32, i32) {
    %c0_i32 = arith.constant 0 : i32
    %c0_i32_0 = arith.constant 0 : i32
    return %c0_i32, %arg0 : i32, i32
  }
  func.func @transform_2(%arg0: i32) -> (i32, i32) {
    %c0_i32 = arith.constant 0 : i32
    %c0_i32_0 = arith.constant 0 : i32
    return %c0_i32, %arg0 : i32, i32
  }
  func.func @transform_3(%arg0: i32) -> (i32, i32) {
    %c0_i32 = arith.constant 0 : i32
    %c0_i32_0 = arith.constant 0 : i32
    return %c0_i32, %arg0 : i32, i32
  }
}

</mosaic_0001>

<llo_original>
// kernel: basic_cnn_forward.8
$region0: #{basic_cnn_forward.8}
  #allocation0 [shape = 'u32[]', space=smem, size = 0x4, offset = 0x4, fixed_abs, tag = 'smem constant byte address 0x4 - core index']
  #allocation1 [shape = 'u32[72,128]{1,0:T(1,128)}', space=vmem, size = 0x9000, scoped, tag = 'internal scratch']
  %s0 = inlined_call_operand.vmem [shape: f32[128,147], index: 0, kind: input, shape index: {}]
  %s1 = inlined_call_operand.vmem [shape: f32[147,64], index: 1, kind: input, shape index: {}]
  %s2 = inlined_call_operand.vmem [shape: f32[1,64], index: 2, kind: input, shape index: {}]
  %s3 = inlined_call_operand.vmem [shape: f32[1,64], index: 3, kind: input, shape index: {}]
  %s4 = inlined_call_operand.vmem [shape: f32[128,64], index: 4, kind: output, shape index: {}]
  %s5 = sld [smem:[#allocation0]]
  $region26: #{basic_cnn_forward.8} parent=0
    _
  %s7 = ssub.s32 1, %s5
  %s8 = scalar_select 0, %s7, %s5
  // Predicated region
  $region2: #{basic_cnn_forward.8} parent=0 // pred_check
    _
  $region3: #{basic_cnn_forward.8} parent=0 // pred_check_branch
    %10 = sbr.rel (0) target = $region5
  $region4: #{basic_cnn_forward.8} parent=0 // pred_region
    _
  $region5: #{basic_cnn_forward.8} parent=0 // pred_fallthru
    _
  // Predicated region
  $region6: #{basic_cnn_forward.8} parent=0 // pred_check
    _
  $region7: #{basic_cnn_forward.8} parent=0 // pred_check_branch
    %12 = sbr.rel (0) target = $region9
  $region8: #{basic_cnn_forward.8} parent=0 // pred_region
    _
  $region9: #{basic_cnn_forward.8} parent=0 // pred_fallthru
    _
  // Predicated region
  $region10: #{basic_cnn_forward.8} parent=0 // pred_check
    _
  $region11: #{basic_cnn_forward.8} parent=0 // pred_check_branch
    %14 = sbr.rel (0) target = $region13
  $region12: #{basic_cnn_forward.8} parent=0 // pred_region
    _
  $region13: #{basic_cnn_forward.8} parent=0 // pred_fallthru
    _
  // Predicated region
  $region14: #{basic_cnn_forward.8} parent=0 // pred_check
    _
  $region15: #{basic_cnn_forward.8} parent=0 // pred_check_branch
    %16 = sbr.rel (0) target = $region17
  $region16: #{basic_cnn_forward.8} parent=0 // pred_region
    _
  $region17: #{basic_cnn_forward.8} parent=0 // pred_fallthru
    _
  %v17 = vld [vmem:[%s0] sm:$0xff]
  %v18 = vld [vmem:[%s0 + $0x8] sm:$0xff]
  %v19 = vld [vmem:[%s0 + $0x10] sm:$0xff]
  %v20 = vld [vmem:[%s0 + $0x18] sm:$0xff]
  %v21 = vld [vmem:[%s0 + $0x20] sm:$0xff]
  %v22 = vld [vmem:[%s0 + $0x28] sm:$0xff]
  %v23 = vld [vmem:[%s0 + $0x30] sm:$0xff]
  %v24 = vld [vmem:[%s0 + $0x38] sm:$0xff]
  %v25 = vld [vmem:[%s0 + $0x40] sm:$0xff]
  %v26 = vld [vmem:[%s0 + $0x48] sm:$0xff]
  %v27 = vld [vmem:[%s0 + $0x50] sm:$0xff]
  %v28 = vld [vmem:[%s0 + $0x58] sm:$0xff]
  %v29 = vld [vmem:[%s0 + $0x60] sm:$0xff]
  %v30 = vld [vmem:[%s0 + $0x68] sm:$0xff]
  %v31 = vld [vmem:[%s0 + $0x70] sm:$0xff]
  %v32 = vld [vmem:[%s0 + $0x78] sm:$0xff]
  %v33 = vld [vmem:[%s0 + $0x80] sm:$0xff]
  %v34 = vld [vmem:[%s0 + $0x88] sm:$0xff]
  %v35 = vld [vmem:[%s0 + $0x90] sm:$0xff]
  %v36 = vld [vmem:[%s0 + $0x98] sm:$0xff]
  %v37 = vld [vmem:[%s0 + $0xa0] sm:$0xff]
  %v38 = vld [vmem:[%s0 + $0xa8] sm:$0xff]
  %v39 = vld [vmem:[%s0 + $0xb0] sm:$0xff]
  %v40 = vld [vmem:[%s0 + $0xb8] sm:$0xff]
  %v41 = vld [vmem:[%s0 + $0xc0] sm:$0xff]
  %v42 = vld [vmem:[%s0 + $0xc8] sm:$0xff]
  %v43 = vld [vmem:[%s0 + $0xd0] sm:$0xff]
  %v44 = vld [vmem:[%s0 + $0xd8] sm:$0xff]
  %v45 = vld [vmem:[%s0 + $0xe0] sm:$0xff]
  %v46 = vld [vmem:[%s0 + $0xe8] sm:$0xff]
  %v47 = vld [vmem:[%s0 + $0xf0] sm:$0xff]
  %v48 = vld [vmem:[%s0 + $0xf8] sm:$0xff]
  %v49 = vld [vmem:[%s1] sm:$0xff]
  %v50 = vld [vmem:[%s1 + $0x8] sm:$0xff]
  %v51 = vld [vmem:[%s1 + $0x10] sm:$0xff]
  %v52 = vld [vmem:[%s1 + $0x18] sm:$0xff]
  %v53 = vld [vmem:[%s1 + $0x20] sm:$0xff]
  %v54 = vld [vmem:[%s1 + $0x28] sm:$0xff]
  %v55 = vld [vmem:[%s1 + $0x30] sm:$0xff]
  %v56 = vld [vmem:[%s1 + $0x38] sm:$0xff]
  %v57 = vld [vmem:[%s1 + $0x40] sm:$0xff]
  %v58 = vld [vmem:[%s1 + $0x48] sm:$0xff]
  %v59 = vld [vmem:[%s1 + $0x50] sm:$0xff]
  %v60 = vld [vmem:[%s1 + $0x58] sm:$0xff]
  %v61 = vld [vmem:[%s1 + $0x60] sm:$0xff]
  %v62 = vld [vmem:[%s1 + $0x68] sm:$0xff]
  %v63 = vld [vmem:[%s1 + $0x70] sm:$0xff]
  %v64 = vld [vmem:[%s1 + $0x78] sm:$0xff]
  %v65 = vld [vmem:[%s1 + $0x80] sm:$0xff]
  %v66 = vld [vmem:[%s1 + $0x88] sm:$0xff]
  %v67 = vld [vmem:[%s1 + $0x90] sm:$0x7]
  %vm68 = vcmask 154624
  %v70 = vsel %vm68, %v18, 0
  %v73 = vsel %vm68, %v20, 0
  %v76 = vsel %vm68, %v22, 0
  %v79 = vsel %vm68, %v24, 0
  %v82 = vsel %vm68, %v26, 0
  %v85 = vsel %vm68, %v28, 0
  %v88 = vsel %vm68, %v30, 0
  %v91 = vsel %vm68, %v32, 0
  %v94 = vsel %vm68, %v34, 0
  %v97 = vsel %vm68, %v36, 0
  %v100 = vsel %vm68, %v38, 0
  %v103 = vsel %vm68, %v40, 0
  %v106 = vsel %vm68, %v42, 0
  %v109 = vsel %vm68, %v44, 0
  %v112 = vsel %vm68, %v46, 0
  %v115 = vsel %vm68, %v48, 0
  %vm117 = vcmask 1042432
  %v119 = vsel %vm117, %v67, 0
  %121 = vmatpush.msra.mxu0 %v64
  %122 = vmatpush.msra.mxu0 %v63
  %123 = vmatpush.msra.mxu0 %v62
  %124 = vmatpush.msra.mxu0 %v61
  %125 = vmatpush.msra.mxu0 %v60
  %126 = vmatpush.msra.mxu0 %v59
  %127 = vmatpush.msra.mxu0 %v58
  %128 = vmatpush.msra.mxu0 %v57
  %129 = vmatpush.msra.mxu0 %v56
  %130 = vmatpush.msra.mxu0 %v55
  %131 = vmatpush.msra.mxu0 %v54
  %132 = vmatpush.msra.mxu0 %v53
  %133 = vmatpush.msra.mxu0 %v52
  %134 = vmatpush.msra.mxu0 %v51
  %135 = vmatpush.msra.mxu0 %v50
  %136 = vmatpush.msra.mxu0 %v49
  %137 = vmatmul.f32.gmra.mxu0 %v17
  %v138 = vpop.f32.mrf.mxu0
  %v139 = vadd.f32 0.0, %v138
  %140 = vmatmul.f32.gmra.mxu0 %v19
  %v141 = vpop.f32.mrf.mxu0
  %v142 = vadd.f32 0.0, %v141
  %143 = vmatmul.f32.gmra.mxu0 %v21
  %v144 = vpop.f32.mrf.mxu0
  %v145 = vadd.f32 0.0, %v144
  %146 = vmatmul.f32.gmra.mxu0 %v23
  %v147 = vpop.f32.mrf.mxu0
  %v148 = vadd.f32 0.0, %v147
  %149 = vmatmul.f32.gmra.mxu0 %v25
  %v150 = vpop.f32.mrf.mxu0
  %v151 = vadd.f32 0.0, %v150
  %152 = vmatmul.f32.gmra.mxu0 %v27
  %v153 = vpop.f32.mrf.mxu0
  %v154 = vadd.f32 0.0, %v153
  %155 = vmatmul.f32.gmra.mxu0 %v29
  %v156 = vpop.f32.mrf.mxu0
  %v157 = vadd.f32 0.0, %v156
  %158 = vmatmul.f32.gmra.mxu0 %v31
  %v159 = vpop.f32.mrf.mxu0
  %v160 = vadd.f32 0.0, %v159
  %161 = vmatmul.f32.gmra.mxu0 %v33
  %v162 = vpop.f32.mrf.mxu0
  %v163 = vadd.f32 0.0, %v162
  %164 = vmatmul.f32.gmra.mxu0 %v35
  %v165 = vpop.f32.mrf.mxu0
  %v166 = vadd.f32 0.0, %v165
  %167 = vmatmul.f32.gmra.mxu0 %v37
  %v168 = vpop.f32.mrf.mxu0
  %v169 = vadd.f32 0.0, %v168
  %170 = vmatmul.f32.gmra.mxu0 %v39
  %v171 = vpop.f32.mrf.mxu0
  %v172 = vadd.f32 0.0, %v171
  %173 = vmatmul.f32.gmra.mxu0 %v41
  %v174 = vpop.f32.mrf.mxu0
  %v175 = vadd.f32 0.0, %v174
  %176 = vmatmul.f32.gmra.mxu0 %v43
  %v177 = vpop.f32.mrf.mxu0
  %v178 = vadd.f32 0.0, %v177
  %179 = vmatmul.f32.gmra.mxu0 %v45
  %v180 = vpop.f32.mrf.mxu0
  %v181 = vadd.f32 0.0, %v180
  %182 = vmatmul.f32.gmra.mxu0 %v47
  %v183 = vpop.f32.mrf.mxu0
  %v184 = vadd.f32 0.0, %v183
  %185 = vdwg.mxu0
  %186 = vmatpush.msra.mxu0 0.0
  %187 = vmatpush.msra.mxu0 0.0
  %188 = vmatpush.msra.mxu0 0.0
  %189 = vmatpush.msra.mxu0 0.0
  %190 = vmatpush.msra.mxu0 0.0
  %191 = vmatpush.msra.mxu0 0.0
  %192 = vmatpush.msra.mxu0 0.0
  %193 = vmatpush.msra.mxu0 0.0
  %194 = vmatpush.msra.mxu0 0.0
  %195 = vmatpush.msra.mxu0 0.0
  %196 = vmatpush.msra.mxu0 0.0
  %197 = vmatpush.msra.mxu0 0.0
  %198 = vmatpush.msra.mxu0 0.0
  %199 = vmatpush.msra.mxu0 %v119
  %200 = vmatpush.msra.mxu0 %v66
  %201 = vmatpush.msra.mxu0 %v65
  %202 = vmatmul.f32.gmra.mxu0 %v70
  %v203 = vpop.f32.mrf.mxu0
  %v204 = vadd.f32 %v139, %v203
  %205 = vmatmul.f32.gmra.mxu0 %v73
  %v206 = vpop.f32.mrf.mxu0
  %v207 = vadd.f32 %v142, %v206
  %208 = vmatmul.f32.gmra.mxu0 %v76
  %v209 = vpop.f32.mrf.mxu0
  %v210 = vadd.f32 %v145, %v209
  %211 = vmatmul.f32.gmra.mxu0 %v79
  %v212 = vpop.f32.mrf.mxu0
  %v213 = vadd.f32 %v148, %v212
  %214 = vmatmul.f32.gmra.mxu0 %v82
  %v215 = vpop.f32.mrf.mxu0
  %v216 = vadd.f32 %v151, %v215
  %217 = vmatmul.f32.gmra.mxu0 %v85
  %v218 = vpop.f32.mrf.mxu0
  %v219 = vadd.f32 %v154, %v218
  %220 = vmatmul.f32.gmra.mxu0 %v88
  %v221 = vpop.f32.mrf.mxu0
  %v222 = vadd.f32 %v157, %v221
  %223 = vmatmul.f32.gmra.mxu0 %v91
  %v224 = vpop.f32.mrf.mxu0
  %v225 = vadd.f32 %v160, %v224
  %226 = vmatmul.f32.gmra.mxu0 %v94
  %v227 = vpop.f32.mrf.mxu0
  %v228 = vadd.f32 %v163, %v227
  %229 = vmatmul.f32.gmra.mxu0 %v97
  %v230 = vpop.f32.mrf.mxu0
  %v231 = vadd.f32 %v166, %v230
  %232 = vmatmul.f32.gmra.mxu0 %v100
  %v233 = vpop.f32.mrf.mxu0
  %v234 = vadd.f32 %v169, %v233
  %235 = vmatmul.f32.gmra.mxu0 %v103
  %v236 = vpop.f32.mrf.mxu0
  %v237 = vadd.f32 %v172, %v236
  %238 = vmatmul.f32.gmra.mxu0 %v106
  %v239 = vpop.f32.mrf.mxu0
  %v240 = vadd.f32 %v175, %v239
  %241 = vmatmul.f32.gmra.mxu0 %v109
  %v242 = vpop.f32.mrf.mxu0
  %v243 = vadd.f32 %v178, %v242
  %244 = vmatmul.f32.gmra.mxu0 %v112
  %v245 = vpop.f32.mrf.mxu0
  %v246 = vadd.f32 %v181, %v245
  %247 = vmatmul.f32.gmra.mxu0 %v115
  %v248 = vpop.f32.mrf.mxu0
  %v249 = vadd.f32 %v184, %v248
  %250 = vdwg.mxu0
  %v251 = vld [vmem:[%s2] sm:$0x1]
  %v253 = vperm.slane %v251, 0
  %v255 = vmul.f32 %v204, %v253
  %v256 = vmul.f32 %v207, %v253
  %v257 = vmul.f32 %v210, %v253
  %v258 = vmul.f32 %v213, %v253
  %v259 = vmul.f32 %v216, %v253
  %v260 = vmul.f32 %v219, %v253
  %v261 = vmul.f32 %v222, %v253
  %v262 = vmul.f32 %v225, %v253
  %v263 = vmul.f32 %v228, %v253
  %v264 = vmul.f32 %v231, %v253
  %v265 = vmul.f32 %v234, %v253
  %v266 = vmul.f32 %v237, %v253
  %v267 = vmul.f32 %v240, %v253
  %v268 = vmul.f32 %v243, %v253
  %v269 = vmul.f32 %v246, %v253
  %v270 = vmul.f32 %v249, %v253
  %v271 = vld [vmem:[%s3] sm:$0x1]
  %v273 = vperm.slane %v271, 0
  %v275 = vadd.f32 %v255, %v273
  %v276 = vadd.f32 %v256, %v273
  %v277 = vadd.f32 %v257, %v273
  %v278 = vadd.f32 %v258, %v273
  %v279 = vadd.f32 %v259, %v273
  %v280 = vadd.f32 %v260, %v273
  %v281 = vadd.f32 %v261, %v273
  %v282 = vadd.f32 %v262, %v273
  %v283 = vadd.f32 %v263, %v273
  %v284 = vadd.f32 %v264, %v273
  %v285 = vadd.f32 %v265, %v273
  %v286 = vadd.f32 %v266, %v273
  %v287 = vadd.f32 %v267, %v273
  %v288 = vadd.f32 %v268, %v273
  %v289 = vadd.f32 %v269, %v273
  %v290 = vadd.f32 %v270, %v273
  %v291 = vmax.f32 %v275, 0.0
  %v292 = vmax.f32 %v276, 0.0
  %v293 = vmax.f32 %v277, 0.0
  %v294 = vmax.f32 %v278, 0.0
  %v295 = vmax.f32 %v279, 0.0
  %v296 = vmax.f32 %v280, 0.0
  %v297 = vmax.f32 %v281, 0.0
  %v298 = vmax.f32 %v282, 0.0
  %v299 = vmax.f32 %v283, 0.0
  %v300 = vmax.f32 %v284, 0.0
  %v301 = vmax.f32 %v285, 0.0
  %v302 = vmax.f32 %v286, 0.0
  %v303 = vmax.f32 %v287, 0.0
  %v304 = vmax.f32 %v288, 0.0
  %v305 = vmax.f32 %v289, 0.0
  %v306 = vmax.f32 %v290, 0.0
  %vm307 = vcmask 523264
  %308 = vst.msk [vmem:[%s4] sm:$0xff] %vm307, %v291
  %309 = vst.msk [vmem:[%s4 + $0x8] sm:$0xff] %vm307, %v292
  %310 = vst.msk [vmem:[%s4 + $0x10] sm:$0xff] %vm307, %v293
  %311 = vst.msk [vmem:[%s4 + $0x18] sm:$0xff] %vm307, %v294
  %312 = vst.msk [vmem:[%s4 + $0x20] sm:$0xff] %vm307, %v295
  %313 = vst.msk [vmem:[%s4 + $0x28] sm:$0xff] %vm307, %v296
  %314 = vst.msk [vmem:[%s4 + $0x30] sm:$0xff] %vm307, %v297
  %315 = vst.msk [vmem:[%s4 + $0x38] sm:$0xff] %vm307, %v298
  %316 = vst.msk [vmem:[%s4 + $0x40] sm:$0xff] %vm307, %v299
  %317 = vst.msk [vmem:[%s4 + $0x48] sm:$0xff] %vm307, %v300
  %318 = vst.msk [vmem:[%s4 + $0x50] sm:$0xff] %vm307, %v301
  %319 = vst.msk [vmem:[%s4 + $0x58] sm:$0xff] %vm307, %v302
  %320 = vst.msk [vmem:[%s4 + $0x60] sm:$0xff] %vm307, %v303
  %321 = vst.msk [vmem:[%s4 + $0x68] sm:$0xff] %vm307, %v304
  %322 = vst.msk [vmem:[%s4 + $0x70] sm:$0xff] %vm307, %v305
  %323 = vst.msk [vmem:[%s4 + $0x78] sm:$0xff] %vm307, %v306
  // Predicated region
  $region18: #{basic_cnn_forward.8} parent=0 // pred_check
    _
  $region19: #{basic_cnn_forward.8} parent=0 // pred_check_branch
    %325 = sbr.rel (0) target = $region21
  $region20: #{basic_cnn_forward.8} parent=0 // pred_region
    _
  $region21: #{basic_cnn_forward.8} parent=0 // pred_fallthru
    _
  // Predicated region
  $region22: #{basic_cnn_forward.8} parent=0 // pred_check
    _
  $region23: #{basic_cnn_forward.8} parent=0 // pred_check_branch
    %327 = sbr.rel (0) target = $region25
  $region24: #{basic_cnn_forward.8} parent=0 // pred_region
    _
  $region25: #{basic_cnn_forward.8} parent=0 // pred_fallthru
    _

// kernel: basic_cnn_forward.9
$region0: #{basic_cnn_forward.9}
  #allocation0 [shape = 'u32[]', space=smem, size = 0x4, offset = 0x4, fixed_abs, tag = 'smem constant byte address 0x4 - core index']
  #allocation1 [shape = 'u32[72,128]{1,0:T(1,128)}', space=vmem, size = 0x9000, scoped, tag = 'internal scratch']
  %s0 = inlined_call_operand.vmem [shape: f32[32,9,64], index: 0, kind: input, shape index: {}]
  %s1 = inlined_call_operand.vmem [shape: f32[32,64], index: 1, kind: output, shape index: {}]
  %s2 = sld [smem:[#allocation0]]
  $region14: #{basic_cnn_forward.9} parent=0
    _
  %s4 = ssub.s32 1, %s2
  %s5 = scalar_select 0, %s4, %s2
  // Predicated region
  $region2: #{basic_cnn_forward.9} parent=0 // pred_check
    _
  $region3: #{basic_cnn_forward.9} parent=0 // pred_check_branch
    %7 = sbr.rel (0) target = $region5
  $region4: #{basic_cnn_forward.9} parent=0 // pred_region
    _
  $region5: #{basic_cnn_forward.9} parent=0 // pred_fallthru
    _
  %v8 = vld [vmem:[%s0] sm:$0x1]
  %v9 = vld [vmem:[%s0 + $0x10] sm:$0x1]
  %v10 = vld [vmem:[%s0 + $0x20] sm:$0x1]
  %v11 = vld [vmem:[%s0 + $0x30] sm:$0x1]
  %v12 = vld [vmem:[%s0 + $0x40] sm:$0x1]
  %v13 = vld [vmem:[%s0 + $0x50] sm:$0x1]
  %v14 = vld [vmem:[%s0 + $0x60] sm:$0x1]
  %v15 = vld [vmem:[%s0 + $0x70] sm:$0x1]
  %v16 = vld [vmem:[%s0 + $0x80] sm:$0x1]
  %v17 = vld [vmem:[%s0 + $0x90] sm:$0x1]
  %v18 = vld [vmem:[%s0 + $0xa0] sm:$0x1]
  %v19 = vld [vmem:[%s0 + $0xb0] sm:$0x1]
  %v20 = vld [vmem:[%s0 + $0xc0] sm:$0x1]
  %v21 = vld [vmem:[%s0 + $0xd0] sm:$0x1]
  %v22 = vld [vmem:[%s0 + $0xe0] sm:$0x1]
  %v23 = vld [vmem:[%s0 + $0xf0] sm:$0x1]
  %v24 = vld [vmem:[%s0 + $0x100] sm:$0x1]
  %v25 = vld [vmem:[%s0 + $0x110] sm:$0x1]
  %v26 = vld [vmem:[%s0 + $0x120] sm:$0x1]
  %v27 = vld [vmem:[%s0 + $0x130] sm:$0x1]
  %v28 = vld [vmem:[%s0 + $0x140] sm:$0x1]
  %v29 = vld [vmem:[%s0 + $0x150] sm:$0x1]
  %v30 = vld [vmem:[%s0 + $0x160] sm:$0x1]
  %v31 = vld [vmem:[%s0 + $0x170] sm:$0x1]
  %v32 = vld [vmem:[%s0 + $0x180] sm:$0x1]
  %v33 = vld [vmem:[%s0 + $0x190] sm:$0x1]
  %v34 = vld [vmem:[%s0 + $0x1a0] sm:$0x1]
  %v35 = vld [vmem:[%s0 + $0x1b0] sm:$0x1]
  %v36 = vld [vmem:[%s0 + $0x1c0] sm:$0x1]
  %v37 = vld [vmem:[%s0 + $0x1d0] sm:$0x1]
  %v38 = vld [vmem:[%s0 + $0x1e0] sm:$0x1]
  %v39 = vld [vmem:[%s0 + $0x1f0] sm:$0x1]
  %v40 = vld [vmem:[%s0 + $0x1] sm:$0x1]
  %v41 = vld [vmem:[%s0 + $0x11] sm:$0x1]
  %v42 = vld [vmem:[%s0 + $0x21] sm:$0x1]
  %v43 = vld [vmem:[%s0 + $0x31] sm:$0x1]
  %v44 = vld [vmem:[%s0 + $0x41] sm:$0x1]
  %v45 = vld [vmem:[%s0 + $0x51] sm:$0x1]
  %v46 = vld [vmem:[%s0 + $0x61] sm:$0x1]
  %v47 = vld [vmem:[%s0 + $0x71] sm:$0x1]
  %v48 = vld [vmem:[%s0 + $0x81] sm:$0x1]
  %v49 = vld [vmem:[%s0 + $0x91] sm:$0x1]
  %v50 = vld [vmem:[%s0 + $0xa1] sm:$0x1]
  %v51 = vld [vmem:[%s0 + $0xb1] sm:$0x1]
  %v52 = vld [vmem:[%s0 + $0xc1] sm:$0x1]
  %v53 = vld [vmem:[%s0 + $0xd1] sm:$0x1]
  %v54 = vld [vmem:[%s0 + $0xe1] sm:$0x1]
  %v55 = vld [vmem:[%s0 + $0xf1] sm:$0x1]
  %v56 = vld [vmem:[%s0 + $0x101] sm:$0x1]
  %v57 = vld [vmem:[%s0 + $0x111] sm:$0x1]
  %v58 = vld [vmem:[%s0 + $0x121] sm:$0x1]
  %v59 = vld [vmem:[%s0 + $0x131] sm:$0x1]
  %v60 = vld [vmem:[%s0 + $0x141] sm:$0x1]
  %v61 = vld [vmem:[%s0 + $0x151] sm:$0x1]
  %v62 = vld [vmem:[%s0 + $0x161] sm:$0x1]
  %v63 = vld [vmem:[%s0 + $0x171] sm:$0x1]
  %v64 = vld [vmem:[%s0 + $0x181] sm:$0x1]
  %v65 = vld [vmem:[%s0 + $0x191] sm:$0x1]
  %v66 = vld [vmem:[%s0 + $0x1a1] sm:$0x1]
  %v67 = vld [vmem:[%s0 + $0x1b1] sm:$0x1]
  %v68 = vld [vmem:[%s0 + $0x1c1] sm:$0x1]
  %v69 = vld [vmem:[%s0 + $0x1d1] sm:$0x1]
  %v70 = vld [vmem:[%s0 + $0x1e1] sm:$0x1]
  %v71 = vld [vmem:[%s0 + $0x1f1] sm:$0x1]
  %v72 = vmax.f32 %v8, %v40
  %v73 = vmax.f32 %v9, %v41
  %v74 = vmax.f32 %v10, %v42
  %v75 = vmax.f32 %v11, %v43
  %v76 = vmax.f32 %v12, %v44
  %v77 = vmax.f32 %v13, %v45
  %v78 = vmax.f32 %v14, %v46
  %v79 = vmax.f32 %v15, %v47
  %v80 = vmax.f32 %v16, %v48
  %v81 = vmax.f32 %v17, %v49
  %v82 = vmax.f32 %v18, %v50
  %v83 = vmax.f32 %v19, %v51
  %v84 = vmax.f32 %v20, %v52
  %v85 = vmax.f32 %v21, %v53
  %v86 = vmax.f32 %v22, %v54
  %v87 = vmax.f32 %v23, %v55
  %v88 = vmax.f32 %v24, %v56
  %v89 = vmax.f32 %v25, %v57
  %v90 = vmax.f32 %v26, %v58
  %v91 = vmax.f32 %v27, %v59
  %v92 = vmax.f32 %v28, %v60
  %v93 = vmax.f32 %v29, %v61
  %v94 = vmax.f32 %v30, %v62
  %v95 = vmax.f32 %v31, %v63
  %v96 = vmax.f32 %v32, %v64
  %v97 = vmax.f32 %v33, %v65
  %v98 = vmax.f32 %v34, %v66
  %v99 = vmax.f32 %v35, %v67
  %v100 = vmax.f32 %v36, %v68
  %v101 = vmax.f32 %v37, %v69
  %v102 = vmax.f32 %v38, %v70
  %v103 = vmax.f32 %v39, %v71
  %v104 = vld [vmem:[%s0 + $0x2] sm:$0x1]
  %v105 = vld [vmem:[%s0 + $0x12] sm:$0x1]
  %v106 = vld [vmem:[%s0 + $0x22] sm:$0x1]
  %v107 = vld [vmem:[%s0 + $0x32] sm:$0x1]
  %v108 = vld [vmem:[%s0 + $0x42] sm:$0x1]
  %v109 = vld [vmem:[%s0 + $0x52] sm:$0x1]
  %v110 = vld [vmem:[%s0 + $0x62] sm:$0x1]
  %v111 = vld [vmem:[%s0 + $0x72] sm:$0x1]
  %v112 = vld [vmem:[%s0 + $0x82] sm:$0x1]
  %v113 = vld [vmem:[%s0 + $0x92] sm:$0x1]
  %v114 = vld [vmem:[%s0 + $0xa2] sm:$0x1]
  %v115 = vld [vmem:[%s0 + $0xb2] sm:$0x1]
  %v116 = vld [vmem:[%s0 + $0xc2] sm:$0x1]
  %v117 = vld [vmem:[%s0 + $0xd2] sm:$0x1]
  %v118 = vld [vmem:[%s0 + $0xe2] sm:$0x1]
  %v119 = vld [vmem:[%s0 + $0xf2] sm:$0x1]
  %v120 = vld [vmem:[%s0 + $0x102] sm:$0x1]
  %v121 = vld [vmem:[%s0 + $0x112] sm:$0x1]
  %v122 = vld [vmem:[%s0 + $0x122] sm:$0x1]
  %v123 = vld [vmem:[%s0 + $0x132] sm:$0x1]
  %v124 = vld [vmem:[%s0 + $0x142] sm:$0x1]
  %v125 = vld [vmem:[%s0 + $0x152] sm:$0x1]
  %v126 = vld [vmem:[%s0 + $0x162] sm:$0x1]
  %v127 = vld [vmem:[%s0 + $0x172] sm:$0x1]
  %v128 = vld [vmem:[%s0 + $0x182] sm:$0x1]
  %v129 = vld [vmem:[%s0 + $0x192] sm:$0x1]
  %v130 = vld [vmem:[%s0 + $0x1a2] sm:$0x1]
  %v131 = vld [vmem:[%s0 + $0x1b2] sm:$0x1]
  %v132 = vld [vmem:[%s0 + $0x1c2] sm:$0x1]
  %v133 = vld [vmem:[%s0 + $0x1d2] sm:$0x1]
  %v134 = vld [vmem:[%s0 + $0x1e2] sm:$0x1]
  %v135 = vld [vmem:[%s0 + $0x1f2] sm:$0x1]
  %v136 = vmax.f32 %v72, %v104
  %v137 = vmax.f32 %v73, %v105
  %v138 = vmax.f32 %v74, %v106
  %v139 = vmax.f32 %v75, %v107
  %v140 = vmax.f32 %v76, %v108
  %v141 = vmax.f32 %v77, %v109
  %v142 = vmax.f32 %v78, %v110
  %v143 = vmax.f32 %v79, %v111
  %v144 = vmax.f32 %v80, %v112
  %v145 = vmax.f32 %v81, %v113
  %v146 = vmax.f32 %v82, %v114
  %v147 = vmax.f32 %v83, %v115
  %v148 = vmax.f32 %v84, %v116
  %v149 = vmax.f32 %v85, %v117
  %v150 = vmax.f32 %v86, %v118
  %v151 = vmax.f32 %v87, %v119
  %v152 = vmax.f32 %v88, %v120
  %v153 = vmax.f32 %v89, %v121
  %v154 = vmax.f32 %v90, %v122
  %v155 = vmax.f32 %v91, %v123
  %v156 = vmax.f32 %v92, %v124
  %v157 = vmax.f32 %v93, %v125
  %v158 = vmax.f32 %v94, %v126
  %v159 = vmax.f32 %v95, %v127
  %v160 = vmax.f32 %v96, %v128
  %v161 = vmax.f32 %v97, %v129
  %v162 = vmax.f32 %v98, %v130
  %v163 = vmax.f32 %v99, %v131
  %v164 = vmax.f32 %v100, %v132
  %v165 = vmax.f32 %v101, %v133
  %v166 = vmax.f32 %v102, %v134
  %v167 = vmax.f32 %v103, %v135
  %v168 = vld [vmem:[%s0 + $0x3] sm:$0x1]
  %v169 = vld [vmem:[%s0 + $0x13] sm:$0x1]
  %v170 = vld [vmem:[%s0 + $0x23] sm:$0x1]
  %v171 = vld [vmem:[%s0 + $0x33] sm:$0x1]
  %v172 = vld [vmem:[%s0 + $0x43] sm:$0x1]
  %v173 = vld [vmem:[%s0 + $0x53] sm:$0x1]
  %v174 = vld [vmem:[%s0 + $0x63] sm:$0x1]
  %v175 = vld [vmem:[%s0 + $0x73] sm:$0x1]
  %v176 = vld [vmem:[%s0 + $0x83] sm:$0x1]
  %v177 = vld [vmem:[%s0 + $0x93] sm:$0x1]
  %v178 = vld [vmem:[%s0 + $0xa3] sm:$0x1]
  %v179 = vld [vmem:[%s0 + $0xb3] sm:$0x1]
  %v180 = vld [vmem:[%s0 + $0xc3] sm:$0x1]
  %v181 = vld [vmem:[%s0 + $0xd3] sm:$0x1]
  %v182 = vld [vmem:[%s0 + $0xe3] sm:$0x1]
  %v183 = vld [vmem:[%s0 + $0xf3] sm:$0x1]
  %v184 = vld [vmem:[%s0 + $0x103] sm:$0x1]
  %v185 = vld [vmem:[%s0 + $0x113] sm:$0x1]
  %v186 = vld [vmem:[%s0 + $0x123] sm:$0x1]
  %v187 = vld [vmem:[%s0 + $0x133] sm:$0x1]
  %v188 = vld [vmem:[%s0 + $0x143] sm:$0x1]
  %v189 = vld [vmem:[%s0 + $0x153] sm:$0x1]
  %v190 = vld [vmem:[%s0 + $0x163] sm:$0x1]
  %v191 = vld [vmem:[%s0 + $0x173] sm:$0x1]
  %v192 = vld [vmem:[%s0 + $0x183] sm:$0x1]
  %v193 = vld [vmem:[%s0 + $0x193] sm:$0x1]
  %v194 = vld [vmem:[%s0 + $0x1a3] sm:$0x1]
  %v195 = vld [vmem:[%s0 + $0x1b3] sm:$0x1]
  %v196 = vld [vmem:[%s0 + $0x1c3] sm:$0x1]
  %v197 = vld [vmem:[%s0 + $0x1d3] sm:$0x1]
  %v198 = vld [vmem:[%s0 + $0x1e3] sm:$0x1]
  %v199 = vld [vmem:[%s0 + $0x1f3] sm:$0x1]
  %v200 = vmax.f32 %v136, %v168
  %v201 = vmax.f32 %v137, %v169
  %v202 = vmax.f32 %v138, %v170
  %v203 = vmax.f32 %v139, %v171
  %v204 = vmax.f32 %v140, %v172
  %v205 = vmax.f32 %v141, %v173
  %v206 = vmax.f32 %v142, %v174
  %v207 = vmax.f32 %v143, %v175
  %v208 = vmax.f32 %v144, %v176
  %v209 = vmax.f32 %v145, %v177
  %v210 = vmax.f32 %v146, %v178
  %v211 = vmax.f32 %v147, %v179
  %v212 = vmax.f32 %v148, %v180
  %v213 = vmax.f32 %v149, %v181
  %v214 = vmax.f32 %v150, %v182
  %v215 = vmax.f32 %v151, %v183
  %v216 = vmax.f32 %v152, %v184
  %v217 = vmax.f32 %v153, %v185
  %v218 = vmax.f32 %v154, %v186
  %v219 = vmax.f32 %v155, %v187
  %v220 = vmax.f32 %v156, %v188
  %v221 = vmax.f32 %v157, %v189
  %v222 = vmax.f32 %v158, %v190
  %v223 = vmax.f32 %v159, %v191
  %v224 = vmax.f32 %v160, %v192
  %v225 = vmax.f32 %v161, %v193
  %v226 = vmax.f32 %v162, %v194
  %v227 = vmax.f32 %v163, %v195
  %v228 = vmax.f32 %v164, %v196
  %v229 = vmax.f32 %v165, %v197
  %v230 = vmax.f32 %v166, %v198
  %v231 = vmax.f32 %v167, %v199
  %v232 = vld [vmem:[%s0 + $0x4] sm:$0x1]
  %v233 = vld [vmem:[%s0 + $0x14] sm:$0x1]
  %v234 = vld [vmem:[%s0 + $0x24] sm:$0x1]
  %v235 = vld [vmem:[%s0 + $0x34] sm:$0x1]
  %v236 = vld [vmem:[%s0 + $0x44] sm:$0x1]
  %v237 = vld [vmem:[%s0 + $0x54] sm:$0x1]
  %v238 = vld [vmem:[%s0 + $0x64] sm:$0x1]
  %v239 = vld [vmem:[%s0 + $0x74] sm:$0x1]
  %v240 = vld [vmem:[%s0 + $0x84] sm:$0x1]
  %v241 = vld [vmem:[%s0 + $0x94] sm:$0x1]
  %v242 = vld [vmem:[%s0 + $0xa4] sm:$0x1]
  %v243 = vld [vmem:[%s0 + $0xb4] sm:$0x1]
  %v244 = vld [vmem:[%s0 + $0xc4] sm:$0x1]
  %v245 = vld [vmem:[%s0 + $0xd4] sm:$0x1]
  %v246 = vld [vmem:[%s0 + $0xe4] sm:$0x1]
  %v247 = vld [vmem:[%s0 + $0xf4] sm:$0x1]
  %v248 = vld [vmem:[%s0 + $0x104] sm:$0x1]
  %v249 = vld [vmem:[%s0 + $0x114] sm:$0x1]
  %v250 = vld [vmem:[%s0 + $0x124] sm:$0x1]
  %v251 = vld [vmem:[%s0 + $0x134] sm:$0x1]
  %v252 = vld [vmem:[%s0 + $0x144] sm:$0x1]
  %v253 = vld [vmem:[%s0 + $0x154] sm:$0x1]
  %v254 = vld [vmem:[%s0 + $0x164] sm:$0x1]
  %v255 = vld [vmem:[%s0 + $0x174] sm:$0x1]
  %v256 = vld [vmem:[%s0 + $0x184] sm:$0x1]
  %v257 = vld [vmem:[%s0 + $0x194] sm:$0x1]
  %v258 = vld [vmem:[%s0 + $0x1a4] sm:$0x1]
  %v259 = vld [vmem:[%s0 + $0x1b4] sm:$0x1]
  %v260 = vld [vmem:[%s0 + $0x1c4] sm:$0x1]
  %v261 = vld [vmem:[%s0 + $0x1d4] sm:$0x1]
  %v262 = vld [vmem:[%s0 + $0x1e4] sm:$0x1]
  %v263 = vld [vmem:[%s0 + $0x1f4] sm:$0x1]
  %v264 = vmax.f32 %v200, %v232
  %v265 = vmax.f32 %v201, %v233
  %v266 = vmax.f32 %v202, %v234
  %v267 = vmax.f32 %v203, %v235
  %v268 = vmax.f32 %v204, %v236
  %v269 = vmax.f32 %v205, %v237
  %v270 = vmax.f32 %v206, %v238
  %v271 = vmax.f32 %v207, %v239
  %v272 = vmax.f32 %v208, %v240
  %v273 = vmax.f32 %v209, %v241
  %v274 = vmax.f32 %v210, %v242
  %v275 = vmax.f32 %v211, %v243
  %v276 = vmax.f32 %v212, %v244
  %v277 = vmax.f32 %v213, %v245
  %v278 = vmax.f32 %v214, %v246
  %v279 = vmax.f32 %v215, %v247
  %v280 = vmax.f32 %v216, %v248
  %v281 = vmax.f32 %v217, %v249
  %v282 = vmax.f32 %v218, %v250
  %v283 = vmax.f32 %v219, %v251
  %v284 = vmax.f32 %v220, %v252
  %v285 = vmax.f32 %v221, %v253
  %v286 = vmax.f32 %v222, %v254
  %v287 = vmax.f32 %v223, %v255
  %v288 = vmax.f32 %v224, %v256
  %v289 = vmax.f32 %v225, %v257
  %v290 = vmax.f32 %v226, %v258
  %v291 = vmax.f32 %v227, %v259
  %v292 = vmax.f32 %v228, %v260
  %v293 = vmax.f32 %v229, %v261
  %v294 = vmax.f32 %v230, %v262
  %v295 = vmax.f32 %v231, %v263
  %v296 = vld [vmem:[%s0 + $0x5] sm:$0x1]
  %v297 = vld [vmem:[%s0 + $0x15] sm:$0x1]
  %v298 = vld [vmem:[%s0 + $0x25] sm:$0x1]
  %v299 = vld [vmem:[%s0 + $0x35] sm:$0x1]
  %v300 = vld [vmem:[%s0 + $0x45] sm:$0x1]
  %v301 = vld [vmem:[%s0 + $0x55] sm:$0x1]
  %v302 = vld [vmem:[%s0 + $0x65] sm:$0x1]
  %v303 = vld [vmem:[%s0 + $0x75] sm:$0x1]
  %v304 = vld [vmem:[%s0 + $0x85] sm:$0x1]
  %v305 = vld [vmem:[%s0 + $0x95] sm:$0x1]
  %v306 = vld [vmem:[%s0 + $0xa5] sm:$0x1]
  %v307 = vld [vmem:[%s0 + $0xb5] sm:$0x1]
  %v308 = vld [vmem:[%s0 + $0xc5] sm:$0x1]
  %v309 = vld [vmem:[%s0 + $0xd5] sm:$0x1]
  %v310 = vld [vmem:[%s0 + $0xe5] sm:$0x1]
  %v311 = vld [vmem:[%s0 + $0xf5] sm:$0x1]
  %v312 = vld [vmem:[%s0 + $0x105] sm:$0x1]
  %v313 = vld [vmem:[%s0 + $0x115] sm:$0x1]
  %v314 = vld [vmem:[%s0 + $0x125] sm:$0x1]
  %v315 = vld [vmem:[%s0 + $0x135] sm:$0x1]
  %v316 = vld [vmem:[%s0 + $0x145] sm:$0x1]
  %v317 = vld [vmem:[%s0 + $0x155] sm:$0x1]
  %v318 = vld [vmem:[%s0 + $0x165] sm:$0x1]
  %v319 = vld [vmem:[%s0 + $0x175] sm:$0x1]
  %v320 = vld [vmem:[%s0 + $0x185] sm:$0x1]
  %v321 = vld [vmem:[%s0 + $0x195] sm:$0x1]
  %v322 = vld [vmem:[%s0 + $0x1a5] sm:$0x1]
  %v323 = vld [vmem:[%s0 + $0x1b5] sm:$0x1]
  %v324 = vld [vmem:[%s0 + $0x1c5] sm:$0x1]
  %v325 = vld [vmem:[%s0 + $0x1d5] sm:$0x1]
  %v326 = vld [vmem:[%s0 + $0x1e5] sm:$0x1]
  %v327 = vld [vmem:[%s0 + $0x1f5] sm:$0x1]
  %v328 = vmax.f32 %v264, %v296
  %v329 = vmax.f32 %v265, %v297
  %v330 = vmax.f32 %v266, %v298
  %v331 = vmax.f32 %v267, %v299
  %v332 = vmax.f32 %v268, %v300
  %v333 = vmax.f32 %v269, %v301
  %v334 = vmax.f32 %v270, %v302
  %v335 = vmax.f32 %v271, %v303
  %v336 = vmax.f32 %v272, %v304
  %v337 = vmax.f32 %v273, %v305
  %v338 = vmax.f32 %v274, %v306
  %v339 = vmax.f32 %v275, %v307
  %v340 = vmax.f32 %v276, %v308
  %v341 = vmax.f32 %v277, %v309
  %v342 = vmax.f32 %v278, %v310
  %v343 = vmax.f32 %v279, %v311
  %v344 = vmax.f32 %v280, %v312
  %v345 = vmax.f32 %v281, %v313
  %v346 = vmax.f32 %v282, %v314
  %v347 = vmax.f32 %v283, %v315
  %v348 = vmax.f32 %v284, %v316
  %v349 = vmax.f32 %v285, %v317
  %v350 = vmax.f32 %v286, %v318
  %v351 = vmax.f32 %v287, %v319
  %v352 = vmax.f32 %v288, %v320
  %v353 = vmax.f32 %v289, %v321
  %v354 = vmax.f32 %v290, %v322
  %v355 = vmax.f32 %v291, %v323
  %v356 = vmax.f32 %v292, %v324
  %v357 = vmax.f32 %v293, %v325
  %v358 = vmax.f32 %v294, %v326
  %v359 = vmax.f32 %v295, %v327
  %v360 = vld [vmem:[%s0 + $0x6] sm:$0x1]
  %v361 = vld [vmem:[%s0 + $0x16] sm:$0x1]
  %v362 = vld [vmem:[%s0 + $0x26] sm:$0x1]
  %v363 = vld [vmem:[%s0 + $0x36] sm:$0x1]
  %v364 = vld [vmem:[%s0 + $0x46] sm:$0x1]
  %v365 = vld [vmem:[%s0 + $0x56] sm:$0x1]
  %v366 = vld [vmem:[%s0 + $0x66] sm:$0x1]
  %v367 = vld [vmem:[%s0 + $0x76] sm:$0x1]
  %v368 = vld [vmem:[%s0 + $0x86] sm:$0x1]
  %v369 = vld [vmem:[%s0 + $0x96] sm:$0x1]
  %v370 = vld [vmem:[%s0 + $0xa6] sm:$0x1]
  %v371 = vld [vmem:[%s0 + $0xb6] sm:$0x1]
  %v372 = vld [vmem:[%s0 + $0xc6] sm:$0x1]
  %v373 = vld [vmem:[%s0 + $0xd6] sm:$0x1]
  %v374 = vld [vmem:[%s0 + $0xe6] sm:$0x1]
  %v375 = vld [vmem:[%s0 + $0xf6] sm:$0x1]
  %v376 = vld [vmem:[%s0 + $0x106] sm:$0x1]
  %v377 = vld [vmem:[%s0 + $0x116] sm:$0x1]
  %v378 = vld [vmem:[%s0 + $0x126] sm:$0x1]
  %v379 = vld [vmem:[%s0 + $0x136] sm:$0x1]
  %v380 = vld [vmem:[%s0 + $0x146] sm:$0x1]
  %v381 = vld [vmem:[%s0 + $0x156] sm:$0x1]
  %v382 = vld [vmem:[%s0 + $0x166] sm:$0x1]
  %v383 = vld [vmem:[%s0 + $0x176] sm:$0x1]
  %v384 = vld [vmem:[%s0 + $0x186] sm:$0x1]
  %v385 = vld [vmem:[%s0 + $0x196] sm:$0x1]
  %v386 = vld [vmem:[%s0 + $0x1a6] sm:$0x1]
  %v387 = vld [vmem:[%s0 + $0x1b6] sm:$0x1]
  %v388 = vld [vmem:[%s0 + $0x1c6] sm:$0x1]
  %v389 = vld [vmem:[%s0 + $0x1d6] sm:$0x1]
  %v390 = vld [vmem:[%s0 + $0x1e6] sm:$0x1]
  %v391 = vld [vmem:[%s0 + $0x1f6] sm:$0x1]
  %v392 = vmax.f32 %v328, %v360
  %v393 = vmax.f32 %v329, %v361
  %v394 = vmax.f32 %v330, %v362
  %v395 = vmax.f32 %v331, %v363
  %v396 = vmax.f32 %v332, %v364
  %v397 = vmax.f32 %v333, %v365
  %v398 = vmax.f32 %v334, %v366
  %v399 = vmax.f32 %v335, %v367
  %v400 = vmax.f32 %v336, %v368
  %v401 = vmax.f32 %v337, %v369
  %v402 = vmax.f32 %v338, %v370
  %v403 = vmax.f32 %v339, %v371
  %v404 = vmax.f32 %v340, %v372
  %v405 = vmax.f32 %v341, %v373
  %v406 = vmax.f32 %v342, %v374
  %v407 = vmax.f32 %v343, %v375
  %v408 = vmax.f32 %v344, %v376
  %v409 = vmax.f32 %v345, %v377
  %v410 = vmax.f32 %v346, %v378
  %v411 = vmax.f32 %v347, %v379
  %v412 = vmax.f32 %v348, %v380
  %v413 = vmax.f32 %v349, %v381
  %v414 = vmax.f32 %v350, %v382
  %v415 = vmax.f32 %v351, %v383
  %v416 = vmax.f32 %v352, %v384
  %v417 = vmax.f32 %v353, %v385
  %v418 = vmax.f32 %v354, %v386
  %v419 = vmax.f32 %v355, %v387
  %v420 = vmax.f32 %v356, %v388
  %v421 = vmax.f32 %v357, %v389
  %v422 = vmax.f32 %v358, %v390
  %v423 = vmax.f32 %v359, %v391
  %v424 = vld [vmem:[%s0 + $0x7] sm:$0x1]
  %v425 = vld [vmem:[%s0 + $0x17] sm:$0x1]
  %v426 = vld [vmem:[%s0 + $0x27] sm:$0x1]
  %v427 = vld [vmem:[%s0 + $0x37] sm:$0x1]
  %v428 = vld [vmem:[%s0 + $0x47] sm:$0x1]
  %v429 = vld [vmem:[%s0 + $0x57] sm:$0x1]
  %v430 = vld [vmem:[%s0 + $0x67] sm:$0x1]
  %v431 = vld [vmem:[%s0 + $0x77] sm:$0x1]
  %v432 = vld [vmem:[%s0 + $0x87] sm:$0x1]
  %v433 = vld [vmem:[%s0 + $0x97] sm:$0x1]
  %v434 = vld [vmem:[%s0 + $0xa7] sm:$0x1]
  %v435 = vld [vmem:[%s0 + $0xb7] sm:$0x1]
  %v436 = vld [vmem:[%s0 + $0xc7] sm:$0x1]
  %v437 = vld [vmem:[%s0 + $0xd7] sm:$0x1]
  %v438 = vld [vmem:[%s0 + $0xe7] sm:$0x1]
  %v439 = vld [vmem:[%s0 + $0xf7] sm:$0x1]
  %v440 = vld [vmem:[%s0 + $0x107] sm:$0x1]
  %v441 = vld [vmem:[%s0 + $0x117] sm:$0x1]
  %v442 = vld [vmem:[%s0 + $0x127] sm:$0x1]
  %v443 = vld [vmem:[%s0 + $0x137] sm:$0x1]
  %v444 = vld [vmem:[%s0 + $0x147] sm:$0x1]
  %v445 = vld [vmem:[%s0 + $0x157] sm:$0x1]
  %v446 = vld [vmem:[%s0 + $0x167] sm:$0x1]
  %v447 = vld [vmem:[%s0 + $0x177] sm:$0x1]
  %v448 = vld [vmem:[%s0 + $0x187] sm:$0x1]
  %v449 = vld [vmem:[%s0 + $0x197] sm:$0x1]
  %v450 = vld [vmem:[%s0 + $0x1a7] sm:$0x1]
  %v451 = vld [vmem:[%s0 + $0x1b7] sm:$0x1]
  %v452 = vld [vmem:[%s0 + $0x1c7] sm:$0x1]
  %v453 = vld [vmem:[%s0 + $0x1d7] sm:$0x1]
  %v454 = vld [vmem:[%s0 + $0x1e7] sm:$0x1]
  %v455 = vld [vmem:[%s0 + $0x1f7] sm:$0x1]
  %v456 = vmax.f32 %v392, %v424
  %v457 = vmax.f32 %v393, %v425
  %v458 = vmax.f32 %v394, %v426
  %v459 = vmax.f32 %v395, %v427
  %v460 = vmax.f32 %v396, %v428
  %v461 = vmax.f32 %v397, %v429
  %v462 = vmax.f32 %v398, %v430
  %v463 = vmax.f32 %v399, %v431
  %v464 = vmax.f32 %v400, %v432
  %v465 = vmax.f32 %v401, %v433
  %v466 = vmax.f32 %v402, %v434
  %v467 = vmax.f32 %v403, %v435
  %v468 = vmax.f32 %v404, %v436
  %v469 = vmax.f32 %v405, %v437
  %v470 = vmax.f32 %v406, %v438
  %v471 = vmax.f32 %v407, %v439
  %v472 = vmax.f32 %v408, %v440
  %v473 = vmax.f32 %v409, %v441
  %v474 = vmax.f32 %v410, %v442
  %v475 = vmax.f32 %v411, %v443
  %v476 = vmax.f32 %v412, %v444
  %v477 = vmax.f32 %v413, %v445
  %v478 = vmax.f32 %v414, %v446
  %v479 = vmax.f32 %v415, %v447
  %v480 = vmax.f32 %v416, %v448
  %v481 = vmax.f32 %v417, %v449
  %v482 = vmax.f32 %v418, %v450
  %v483 = vmax.f32 %v419, %v451
  %v484 = vmax.f32 %v420, %v452
  %v485 = vmax.f32 %v421, %v453
  %v486 = vmax.f32 %v422, %v454
  %v487 = vmax.f32 %v423, %v455
  %v488 = vld [vmem:[%s0 + $0x8] sm:$0x1]
  %v489 = vld [vmem:[%s0 + $0x18] sm:$0x1]
  %v490 = vld [vmem:[%s0 + $0x28] sm:$0x1]
  %v491 = vld [vmem:[%s0 + $0x38] sm:$0x1]
  %v492 = vld [vmem:[%s0 + $0x48] sm:$0x1]
  %v493 = vld [vmem:[%s0 + $0x58] sm:$0x1]
  %v494 = vld [vmem:[%s0 + $0x68] sm:$0x1]
  %v495 = vld [vmem:[%s0 + $0x78] sm:$0x1]
  %v496 = vld [vmem:[%s0 + $0x88] sm:$0x1]
  %v497 = vld [vmem:[%s0 + $0x98] sm:$0x1]
  %v498 = vld [vmem:[%s0 + $0xa8] sm:$0x1]
  %v499 = vld [vmem:[%s0 + $0xb8] sm:$0x1]
  %v500 = vld [vmem:[%s0 + $0xc8] sm:$0x1]
  %v501 = vld [vmem:[%s0 + $0xd8] sm:$0x1]
  %v502 = vld [vmem:[%s0 + $0xe8] sm:$0x1]
  %v503 = vld [vmem:[%s0 + $0xf8] sm:$0x1]
  %v504 = vld [vmem:[%s0 + $0x108] sm:$0x1]
  %v505 = vld [vmem:[%s0 + $0x118] sm:$0x1]
  %v506 = vld [vmem:[%s0 + $0x128] sm:$0x1]
  %v507 = vld [vmem:[%s0 + $0x138] sm:$0x1]
  %v508 = vld [vmem:[%s0 + $0x148] sm:$0x1]
  %v509 = vld [vmem:[%s0 + $0x158] sm:$0x1]
  %v510 = vld [vmem:[%s0 + $0x168] sm:$0x1]
  %v511 = vld [vmem:[%s0 + $0x178] sm:$0x1]
  %v512 = vld [vmem:[%s0 + $0x188] sm:$0x1]
  %v513 = vld [vmem:[%s0 + $0x198] sm:$0x1]
  %v514 = vld [vmem:[%s0 + $0x1a8] sm:$0x1]
  %v515 = vld [vmem:[%s0 + $0x1b8] sm:$0x1]
  %v516 = vld [vmem:[%s0 + $0x1c8] sm:$0x1]
  %v517 = vld [vmem:[%s0 + $0x1d8] sm:$0x1]
  %v518 = vld [vmem:[%s0 + $0x1e8] sm:$0x1]
  %v519 = vld [vmem:[%s0 + $0x1f8] sm:$0x1]
  %v520 = vmax.f32 %v456, %v488
  %v521 = vmax.f32 %v457, %v489
  %v522 = vmax.f32 %v458, %v490
  %v523 = vmax.f32 %v459, %v491
  %v524 = vmax.f32 %v460, %v492
  %v525 = vmax.f32 %v461, %v493
  %v526 = vmax.f32 %v462, %v494
  %v527 = vmax.f32 %v463, %v495
  %v528 = vmax.f32 %v464, %v496
  %v529 = vmax.f32 %v465, %v497
  %v530 = vmax.f32 %v466, %v498
  %v531 = vmax.f32 %v467, %v499
  %v532 = vmax.f32 %v468, %v500
  %v533 = vmax.f32 %v469, %v501
  %v534 = vmax.f32 %v470, %v502
  %v535 = vmax.f32 %v471, %v503
  %v536 = vmax.f32 %v472, %v504
  %v537 = vmax.f32 %v473, %v505
  %v538 = vmax.f32 %v474, %v506
  %v539 = vmax.f32 %v475, %v507
  %v540 = vmax.f32 %v476, %v508
  %v541 = vmax.f32 %v477, %v509
  %v542 = vmax.f32 %v478, %v510
  %v543 = vmax.f32 %v479, %v511
  %v544 = vmax.f32 %v480, %v512
  %v545 = vmax.f32 %v481, %v513
  %v546 = vmax.f32 %v482, %v514
  %v547 = vmax.f32 %v483, %v515
  %v548 = vmax.f32 %v484, %v516
  %v549 = vmax.f32 %v485, %v517
  %v550 = vmax.f32 %v486, %v518
  %v551 = vmax.f32 %v487, %v519
  %v584 = vrot.slane %v521, 7
  %vm585 = vcmask 1041409
  %v586 = vsel %vm585, %v584, %v520
  %v587 = vrot.slane %v522, 6
  %vm588 = vcmask 1042434
  %v589 = vsel %vm588, %v587, %v586
  %v590 = vrot.slane %v523, 5
  %vm591 = vcmask 1043459
  %v592 = vsel %vm591, %v590, %v589
  %v593 = vrot.slane %v524, 4
  %vm594 = vcmask 1044484
  %v595 = vsel %vm594, %v593, %v592
  %v596 = vrot.slane %v525, 3
  %vm597 = vcmask 1045509
  %v598 = vsel %vm597, %v596, %v595
  %v599 = vrot.slane %v526, 2
  %vm600 = vcmask 1046534
  %v601 = vsel %vm600, %v599, %v598
  %v602 = vrot.slane %v527, 1
  %vm603 = vcmask 1047559
  %v604 = vsel %vm603, %v602, %v601
  %v605 = vrot.slane %v529, 7
  %v606 = vsel %vm585, %v605, %v528
  %v607 = vrot.slane %v530, 6
  %v608 = vsel %vm588, %v607, %v606
  %v609 = vrot.slane %v531, 5
  %v610 = vsel %vm591, %v609, %v608
  %v611 = vrot.slane %v532, 4
  %v612 = vsel %vm594, %v611, %v610
  %v613 = vrot.slane %v533, 3
  %v614 = vsel %vm597, %v613, %v612
  %v615 = vrot.slane %v534, 2
  %v616 = vsel %vm600, %v615, %v614
  %v617 = vrot.slane %v535, 1
  %v618 = vsel %vm603, %v617, %v616
  %v619 = vrot.slane %v537, 7
  %v620 = vsel %vm585, %v619, %v536
  %v621 = vrot.slane %v538, 6
  %v622 = vsel %vm588, %v621, %v620
  %v623 = vrot.slane %v539, 5
  %v624 = vsel %vm591, %v623, %v622
  %v625 = vrot.slane %v540, 4
  %v626 = vsel %vm594, %v625, %v624
  %v627 = vrot.slane %v541, 3
  %v628 = vsel %vm597, %v627, %v626
  %v629 = vrot.slane %v542, 2
  %v630 = vsel %vm600, %v629, %v628
  %v631 = vrot.slane %v543, 1
  %v632 = vsel %vm603, %v631, %v630
  %v633 = vrot.slane %v545, 7
  %v634 = vsel %vm585, %v633, %v544
  %v635 = vrot.slane %v546, 6
  %v636 = vsel %vm588, %v635, %v634
  %v637 = vrot.slane %v547, 5
  %v638 = vsel %vm591, %v637, %v636
  %v639 = vrot.slane %v548, 4
  %v640 = vsel %vm594, %v639, %v638
  %v641 = vrot.slane %v549, 3
  %v642 = vsel %vm597, %v641, %v640
  %v643 = vrot.slane %v550, 2
  %v644 = vsel %vm600, %v643, %v642
  %v645 = vrot.slane %v551, 1
  %v646 = vsel %vm603, %v645, %v644
  %vm651 = vcmask 523264
  %652 = vst.msk [vmem:[%s1] sm:$0xff] %vm651, %v604
  %653 = vst.msk [vmem:[%s1 + $0x8] sm:$0xff] %vm651, %v618
  %654 = vst.msk [vmem:[%s1 + $0x10] sm:$0xff] %vm651, %v632
  %655 = vst.msk [vmem:[%s1 + $0x18] sm:$0xff] %vm651, %v646
  // Predicated region
  $region6: #{basic_cnn_forward.9} parent=0 // pred_check
    _
  $region7: #{basic_cnn_forward.9} parent=0 // pred_check_branch
    %657 = sbr.rel (0) target = $region9
  $region8: #{basic_cnn_forward.9} parent=0 // pred_region
    _
  $region9: #{basic_cnn_forward.9} parent=0 // pred_fallthru
    _
  // Predicated region
  $region10: #{basic_cnn_forward.9} parent=0 // pred_check
    _
  $region11: #{basic_cnn_forward.9} parent=0 // pred_check_branch
    %659 = sbr.rel (0) target = $region13
  $region12: #{basic_cnn_forward.9} parent=0 // pred_region
    _
  $region13: #{basic_cnn_forward.9} parent=0 // pred_fallthru
    _

// kernel: basic_cnn_forward.10
$region0: #{basic_cnn_forward.10}
  #allocation0 [shape = 'u32[]', space=smem, size = 0x4, offset = 0x4, fixed_abs, tag = 'smem constant byte address 0x4 - core index']
  #allocation1 [shape = 'u32[72,128]{1,0:T(1,128)}', space=vmem, size = 0x9000, scoped, tag = 'internal scratch']
  %s0 = inlined_call_operand.vmem [shape: f32[8,576], index: 0, kind: input, shape index: {}]
  %s1 = inlined_call_operand.vmem [shape: f32[576,128], index: 1, kind: input, shape index: {}]
  %s2 = inlined_call_operand.vmem [shape: f32[1,128], index: 2, kind: input, shape index: {}]
  %s3 = inlined_call_operand.vmem [shape: f32[1,128], index: 3, kind: input, shape index: {}]
  %s4 = inlined_call_operand.vmem [shape: f32[8,128], index: 4, kind: output, shape index: {}]
  %s5 = sld [smem:[#allocation0]]
  $region26: #{basic_cnn_forward.10} parent=0
    _
  %s7 = ssub.s32 1, %s5
  %s8 = scalar_select 0, %s7, %s5
  // Predicated region
  $region2: #{basic_cnn_forward.10} parent=0 // pred_check
    _
  $region3: #{basic_cnn_forward.10} parent=0 // pred_check_branch
    %10 = sbr.rel (0) target = $region5
  $region4: #{basic_cnn_forward.10} parent=0 // pred_region
    _
  $region5: #{basic_cnn_forward.10} parent=0 // pred_fallthru
    _
  // Predicated region
  $region6: #{basic_cnn_forward.10} parent=0 // pred_check
    _
  $region7: #{basic_cnn_forward.10} parent=0 // pred_check_branch
    %12 = sbr.rel (0) target = $region9
  $region8: #{basic_cnn_forward.10} parent=0 // pred_region
    _
  $region9: #{basic_cnn_forward.10} parent=0 // pred_fallthru
    _
  // Predicated region
  $region10: #{basic_cnn_forward.10} parent=0 // pred_check
    _
  $region11: #{basic_cnn_forward.10} parent=0 // pred_check_branch
    %14 = sbr.rel (0) target = $region13
  $region12: #{basic_cnn_forward.10} parent=0 // pred_region
    _
  $region13: #{basic_cnn_forward.10} parent=0 // pred_fallthru
    _
  // Predicated region
  $region14: #{basic_cnn_forward.10} parent=0 // pred_check
    _
  $region15: #{basic_cnn_forward.10} parent=0 // pred_check_branch
    %16 = sbr.rel (0) target = $region17
  $region16: #{basic_cnn_forward.10} parent=0 // pred_region
    _
  $region17: #{basic_cnn_forward.10} parent=0 // pred_fallthru
    _
  %v17 = vld [vmem:[%s0] sm:$0xff]
  %v18 = vld [vmem:[%s0 + $0x8] sm:$0xff]
  %v19 = vld [vmem:[%s0 + $0x10] sm:$0xff]
  %v20 = vld [vmem:[%s0 + $0x18] sm:$0xff]
  %v21 = vld [vmem:[%s0 + $0x20] sm:$0xff]
  %v22 = vld [vmem:[%s1] sm:$0xff]
  %v23 = vld [vmem:[%s1 + $0x8] sm:$0xff]
  %v24 = vld [vmem:[%s1 + $0x10] sm:$0xff]
  %v25 = vld [vmem:[%s1 + $0x18] sm:$0xff]
  %v26 = vld [vmem:[%s1 + $0x20] sm:$0xff]
  %v27 = vld [vmem:[%s1 + $0x28] sm:$0xff]
  %v28 = vld [vmem:[%s1 + $0x30] sm:$0xff]
  %v29 = vld [vmem:[%s1 + $0x38] sm:$0xff]
  %v30 = vld [vmem:[%s1 + $0x40] sm:$0xff]
  %v31 = vld [vmem:[%s1 + $0x48] sm:$0xff]
  %v32 = vld [vmem:[%s1 + $0x50] sm:$0xff]
  %v33 = vld [vmem:[%s1 + $0x58] sm:$0xff]
  %v34 = vld [vmem:[%s1 + $0x60] sm:$0xff]
  %v35 = vld [vmem:[%s1 + $0x68] sm:$0xff]
  %v36 = vld [vmem:[%s1 + $0x70] sm:$0xff]
  %v37 = vld [vmem:[%s1 + $0x78] sm:$0xff]
  %v38 = vld [vmem:[%s1 + $0x80] sm:$0xff]
  %v39 = vld [vmem:[%s1 + $0x88] sm:$0xff]
  %v40 = vld [vmem:[%s1 + $0x90] sm:$0xff]
  %v41 = vld [vmem:[%s1 + $0x98] sm:$0xff]
  %v42 = vld [vmem:[%s1 + $0xa0] sm:$0xff]
  %v43 = vld [vmem:[%s1 + $0xa8] sm:$0xff]
  %v44 = vld [vmem:[%s1 + $0xb0] sm:$0xff]
  %v45 = vld [vmem:[%s1 + $0xb8] sm:$0xff]
  %v46 = vld [vmem:[%s1 + $0xc0] sm:$0xff]
  %v47 = vld [vmem:[%s1 + $0xc8] sm:$0xff]
  %v48 = vld [vmem:[%s1 + $0xd0] sm:$0xff]
  %v49 = vld [vmem:[%s1 + $0xd8] sm:$0xff]
  %v50 = vld [vmem:[%s1 + $0xe0] sm:$0xff]
  %v51 = vld [vmem:[%s1 + $0xe8] sm:$0xff]
  %v52 = vld [vmem:[%s1 + $0xf0] sm:$0xff]
  %v53 = vld [vmem:[%s1 + $0xf8] sm:$0xff]
  %v54 = vld [vmem:[%s1 + $0x100] sm:$0xff]
  %v55 = vld [vmem:[%s1 + $0x108] sm:$0xff]
  %v56 = vld [vmem:[%s1 + $0x110] sm:$0xff]
  %v57 = vld [vmem:[%s1 + $0x118] sm:$0xff]
  %v58 = vld [vmem:[%s1 + $0x120] sm:$0xff]
  %v59 = vld [vmem:[%s1 + $0x128] sm:$0xff]
  %v60 = vld [vmem:[%s1 + $0x130] sm:$0xff]
  %v61 = vld [vmem:[%s1 + $0x138] sm:$0xff]
  %v62 = vld [vmem:[%s1 + $0x140] sm:$0xff]
  %v63 = vld [vmem:[%s1 + $0x148] sm:$0xff]
  %v64 = vld [vmem:[%s1 + $0x150] sm:$0xff]
  %v65 = vld [vmem:[%s1 + $0x158] sm:$0xff]
  %v66 = vld [vmem:[%s1 + $0x160] sm:$0xff]
  %v67 = vld [vmem:[%s1 + $0x168] sm:$0xff]
  %v68 = vld [vmem:[%s1 + $0x170] sm:$0xff]
  %v69 = vld [vmem:[%s1 + $0x178] sm:$0xff]
  %v70 = vld [vmem:[%s1 + $0x180] sm:$0xff]
  %v71 = vld [vmem:[%s1 + $0x188] sm:$0xff]
  %v72 = vld [vmem:[%s1 + $0x190] sm:$0xff]
  %v73 = vld [vmem:[%s1 + $0x198] sm:$0xff]
  %v74 = vld [vmem:[%s1 + $0x1a0] sm:$0xff]
  %v75 = vld [vmem:[%s1 + $0x1a8] sm:$0xff]
  %v76 = vld [vmem:[%s1 + $0x1b0] sm:$0xff]
  %v77 = vld [vmem:[%s1 + $0x1b8] sm:$0xff]
  %v78 = vld [vmem:[%s1 + $0x1c0] sm:$0xff]
  %v79 = vld [vmem:[%s1 + $0x1c8] sm:$0xff]
  %v80 = vld [vmem:[%s1 + $0x1d0] sm:$0xff]
  %v81 = vld [vmem:[%s1 + $0x1d8] sm:$0xff]
  %v82 = vld [vmem:[%s1 + $0x1e0] sm:$0xff]
  %v83 = vld [vmem:[%s1 + $0x1e8] sm:$0xff]
  %v84 = vld [vmem:[%s1 + $0x1f0] sm:$0xff]
  %v85 = vld [vmem:[%s1 + $0x1f8] sm:$0xff]
  %v86 = vld [vmem:[%s1 + $0x200] sm:$0xff]
  %v87 = vld [vmem:[%s1 + $0x208] sm:$0xff]
  %v88 = vld [vmem:[%s1 + $0x210] sm:$0xff]
  %v89 = vld [vmem:[%s1 + $0x218] sm:$0xff]
  %v90 = vld [vmem:[%s1 + $0x220] sm:$0xff]
  %v91 = vld [vmem:[%s1 + $0x228] sm:$0xff]
  %v92 = vld [vmem:[%s1 + $0x230] sm:$0xff]
  %v93 = vld [vmem:[%s1 + $0x238] sm:$0xff]
  %vm94 = vcmask 523264
  %v96 = vsel %vm94, %v21, 0
  %98 = vmatpush.msra.mxu0 %v37
  %99 = vmatpush.msra.mxu0 %v36
  %100 = vmatpush.msra.mxu0 %v35
  %101 = vmatpush.msra.mxu0 %v34
  %102 = vmatpush.msra.mxu0 %v33
  %103 = vmatpush.msra.mxu0 %v32
  %104 = vmatpush.msra.mxu0 %v31
  %105 = vmatpush.msra.mxu0 %v30
  %106 = vmatpush.msra.mxu0 %v29
  %107 = vmatpush.msra.mxu0 %v28
  %108 = vmatpush.msra.mxu0 %v27
  %109 = vmatpush.msra.mxu0 %v26
  %110 = vmatpush.msra.mxu0 %v25
  %111 = vmatpush.msra.mxu0 %v24
  %112 = vmatpush.msra.mxu0 %v23
  %113 = vmatpush.msra.mxu0 %v22
  %114 = vmatmul.f32.gmra.mxu0 %v17
  %v115 = vpop.f32.mrf.mxu0
  %v116 = vadd.f32 0.0, %v115
  %117 = vdwg.mxu0
  %118 = vmatpush.msra.mxu0 %v53
  %119 = vmatpush.msra.mxu0 %v52
  %120 = vmatpush.msra.mxu0 %v51
  %121 = vmatpush.msra.mxu0 %v50
  %122 = vmatpush.msra.mxu0 %v49
  %123 = vmatpush.msra.mxu0 %v48
  %124 = vmatpush.msra.mxu0 %v47
  %125 = vmatpush.msra.mxu0 %v46
  %126 = vmatpush.msra.mxu0 %v45
  %127 = vmatpush.msra.mxu0 %v44
  %128 = vmatpush.msra.mxu0 %v43
  %129 = vmatpush.msra.mxu0 %v42
  %130 = vmatpush.msra.mxu0 %v41
  %131 = vmatpush.msra.mxu0 %v40
  %132 = vmatpush.msra.mxu0 %v39
  %133 = vmatpush.msra.mxu0 %v38
  %134 = vmatmul.f32.gmra.mxu0 %v18
  %v135 = vpop.f32.mrf.mxu0
  %v136 = vadd.f32 %v116, %v135
  %137 = vdwg.mxu0
  %138 = vmatpush.msra.mxu0 %v69
  %139 = vmatpush.msra.mxu0 %v68
  %140 = vmatpush.msra.mxu0 %v67
  %141 = vmatpush.msra.mxu0 %v66
  %142 = vmatpush.msra.mxu0 %v65
  %143 = vmatpush.msra.mxu0 %v64
  %144 = vmatpush.msra.mxu0 %v63
  %145 = vmatpush.msra.mxu0 %v62
  %146 = vmatpush.msra.mxu0 %v61
  %147 = vmatpush.msra.mxu0 %v60
  %148 = vmatpush.msra.mxu0 %v59
  %149 = vmatpush.msra.mxu0 %v58
  %150 = vmatpush.msra.mxu0 %v57
  %151 = vmatpush.msra.mxu0 %v56
  %152 = vmatpush.msra.mxu0 %v55
  %153 = vmatpush.msra.mxu0 %v54
  %154 = vmatmul.f32.gmra.mxu0 %v19
  %v155 = vpop.f32.mrf.mxu0
  %v156 = vadd.f32 %v136, %v155
  %157 = vdwg.mxu0
  %158 = vmatpush.msra.mxu0 %v85
  %159 = vmatpush.msra.mxu0 %v84
  %160 = vmatpush.msra.mxu0 %v83
  %161 = vmatpush.msra.mxu0 %v82
  %162 = vmatpush.msra.mxu0 %v81
  %163 = vmatpush.msra.mxu0 %v80
  %164 = vmatpush.msra.mxu0 %v79
  %165 = vmatpush.msra.mxu0 %v78
  %166 = vmatpush.msra.mxu0 %v77
  %167 = vmatpush.msra.mxu0 %v76
  %168 = vmatpush.msra.mxu0 %v75
  %169 = vmatpush.msra.mxu0 %v74
  %170 = vmatpush.msra.mxu0 %v73
  %171 = vmatpush.msra.mxu0 %v72
  %172 = vmatpush.msra.mxu0 %v71
  %173 = vmatpush.msra.mxu0 %v70
  %174 = vmatmul.f32.gmra.mxu0 %v20
  %v175 = vpop.f32.mrf.mxu0
  %v176 = vadd.f32 %v156, %v175
  %177 = vdwg.mxu0
  %178 = vmatpush.msra.mxu0 0.0
  %179 = vmatpush.msra.mxu0 0.0
  %180 = vmatpush.msra.mxu0 0.0
  %181 = vmatpush.msra.mxu0 0.0
  %182 = vmatpush.msra.mxu0 0.0
  %183 = vmatpush.msra.mxu0 0.0
  %184 = vmatpush.msra.mxu0 0.0
  %185 = vmatpush.msra.mxu0 0.0
  %186 = vmatpush.msra.mxu0 %v93
  %187 = vmatpush.msra.mxu0 %v92
  %188 = vmatpush.msra.mxu0 %v91
  %189 = vmatpush.msra.mxu0 %v90
  %190 = vmatpush.msra.mxu0 %v89
  %191 = vmatpush.msra.mxu0 %v88
  %192 = vmatpush.msra.mxu0 %v87
  %193 = vmatpush.msra.mxu0 %v86
  %194 = vmatmul.f32.gmra.mxu0 %v96
  %v195 = vpop.f32.mrf.mxu0
  %v196 = vadd.f32 %v176, %v195
  %197 = vdwg.mxu0
  %v198 = vld [vmem:[%s2] sm:$0x1]
  %v200 = vperm.slane %v198, 0
  %v202 = vmul.f32 %v196, %v200
  %v203 = vld [vmem:[%s3] sm:$0x1]
  %v205 = vperm.slane %v203, 0
  %v207 = vadd.f32 %v202, %v205
  %v208 = vmax.f32 %v207, 0.0
  %209 = vst [vmem:[%s4] sm:$0xff] %v208
  // Predicated region
  $region18: #{basic_cnn_forward.10} parent=0 // pred_check
    _
  $region19: #{basic_cnn_forward.10} parent=0 // pred_check_branch
    %211 = sbr.rel (0) target = $region21
  $region20: #{basic_cnn_forward.10} parent=0 // pred_region
    _
  $region21: #{basic_cnn_forward.10} parent=0 // pred_fallthru
    _
  // Predicated region
  $region22: #{basic_cnn_forward.10} parent=0 // pred_check
    _
  $region23: #{basic_cnn_forward.10} parent=0 // pred_check_branch
    %213 = sbr.rel (0) target = $region25
  $region24: #{basic_cnn_forward.10} parent=0 // pred_region
    _
  $region25: #{basic_cnn_forward.10} parent=0 // pred_fallthru
    _

// kernel: basic_cnn_forward.14
$region0: #{basic_cnn_forward.14}
  #allocation0 [shape = 'u32[]', space=smem, size = 0x4, offset = 0x4, fixed_abs, tag = 'smem constant byte address 0x4 - core index']
  #allocation1 [shape = 'u32[72,128]{1,0:T(1,128)}', space=vmem, size = 0x9000, scoped, tag = 'internal scratch']
  %s0 = inlined_call_operand.vmem [shape: f32[2,1,1,9,256], index: 0, kind: input, shape index: {}, may-alias: {0,5}]
  %s1 = inlined_call_operand.vmem [shape: f32[2,1152], index: 1, kind: input, shape index: {}]
  %s2 = inlined_call_operand.vmem [shape: f32[1152,256], index: 2, kind: input, shape index: {}]
  %s3 = inlined_call_operand.vmem [shape: f32[1,256], index: 3, kind: input, shape index: {}]
  %s4 = inlined_call_operand.vmem [shape: f32[1,256], index: 4, kind: input, shape index: {}]
  %s5 = inlined_call_operand.vmem [shape: f32[2,1,1,9,256], index: 5, kind: output, shape index: {}, may-alias: {0,5}]
  %s6 = scalar_lea.vmem %s5, 16
  %s7 = sld [smem:[#allocation0]]
  $region56: #{basic_cnn_forward.14} parent=0
    _
  %s9 = ssub.s32 1, %s7
  %s10 = scalar_select 0, %s9, %s7
  $region1: #{basic_cnn_forward.14} parent=0
    #allocation2 [shape = 'u8[2048]{0}', space=vmem, size = 0x800, scoped, tag = 'output window, operand 0, single buffered']
    // Predicated region
    $region2: #{basic_cnn_forward.14} parent=1 // pred_check
      _
    $region3: #{basic_cnn_forward.14} parent=1 // pred_check_branch
      %12 = sbr.rel (0) target = $region5
    $region4: #{basic_cnn_forward.14} parent=1 // pred_region
      _
    $region5: #{basic_cnn_forward.14} parent=1 // pred_fallthru
      _
    // Predicated region
    $region6: #{basic_cnn_forward.14} parent=1 // pred_check
      _
    $region7: #{basic_cnn_forward.14} parent=1 // pred_check_branch
      %14 = sbr.rel (0) target = $region9
    $region8: #{basic_cnn_forward.14} parent=1 // pred_region
      _
    $region9: #{basic_cnn_forward.14} parent=1 // pred_fallthru
      _
    // Predicated region
    $region10: #{basic_cnn_forward.14} parent=1 // pred_check
      _
    $region11: #{basic_cnn_forward.14} parent=1 // pred_check_branch
      %16 = sbr.rel (0) target = $region13
    $region12: #{basic_cnn_forward.14} parent=1 // pred_region
      _
    $region13: #{basic_cnn_forward.14} parent=1 // pred_fallthru
      _
    // Predicated region
    $region14: #{basic_cnn_forward.14} parent=1 // pred_check
      _
    $region15: #{basic_cnn_forward.14} parent=1 // pred_check_branch
      %18 = sbr.rel (0) target = $region17
    $region16: #{basic_cnn_forward.14} parent=1 // pred_region
      _
    $region17: #{basic_cnn_forward.14} parent=1 // pred_fallthru
      _
    %v19 = vld [vmem:[%s1] sm:$0xff]
    %v20 = vld [vmem:[%s1 + $0x8] sm:$0xff]
    %v21 = vld [vmem:[%s1 + $0x10] sm:$0x3]
    %v22 = vld [vmem:[%s2] sm:$0xff]
    %v23 = vld [vmem:[%s2 + $0x8] sm:$0xff]
    %v24 = vld [vmem:[%s2 + $0x10] sm:$0xff]
    %v25 = vld [vmem:[%s2 + $0x18] sm:$0xff]
    %v26 = vld [vmem:[%s2 + $0x20] sm:$0xff]
    %v27 = vld [vmem:[%s2 + $0x28] sm:$0xff]
    %v28 = vld [vmem:[%s2 + $0x30] sm:$0xff]
    %v29 = vld [vmem:[%s2 + $0x38] sm:$0xff]
    %v30 = vld [vmem:[%s2 + $0x40] sm:$0xff]
    %v31 = vld [vmem:[%s2 + $0x48] sm:$0xff]
    %v32 = vld [vmem:[%s2 + $0x50] sm:$0xff]
    %v33 = vld [vmem:[%s2 + $0x58] sm:$0xff]
    %v34 = vld [vmem:[%s2 + $0x60] sm:$0xff]
    %v35 = vld [vmem:[%s2 + $0x68] sm:$0xff]
    %v36 = vld [vmem:[%s2 + $0x70] sm:$0xff]
    %v37 = vld [vmem:[%s2 + $0x78] sm:$0xff]
    %v38 = vld [vmem:[%s2 + $0x80] sm:$0xff]
    %v39 = vld [vmem:[%s2 + $0x88] sm:$0xff]
    %v40 = vld [vmem:[%s2 + $0x90] sm:$0xff]
    %v41 = vld [vmem:[%s2 + $0x98] sm:$0xff]
    %v42 = vld [vmem:[%s2 + $0xa0] sm:$0xff]
    %v43 = vld [vmem:[%s2 + $0xa8] sm:$0xff]
    %v44 = vld [vmem:[%s2 + $0xb0] sm:$0xff]
    %v45 = vld [vmem:[%s2 + $0xb8] sm:$0xff]
    %v46 = vld [vmem:[%s2 + $0xc0] sm:$0xff]
    %v47 = vld [vmem:[%s2 + $0xc8] sm:$0xff]
    %v48 = vld [vmem:[%s2 + $0xd0] sm:$0xff]
    %v49 = vld [vmem:[%s2 + $0xd8] sm:$0xff]
    %v50 = vld [vmem:[%s2 + $0xe0] sm:$0xff]
    %v51 = vld [vmem:[%s2 + $0xe8] sm:$0xff]
    %v52 = vld [vmem:[%s2 + $0xf0] sm:$0xff]
    %v53 = vld [vmem:[%s2 + $0xf8] sm:$0xff]
    %v54 = vld [vmem:[%s2 + $0x100] sm:$0xff]
    %v55 = vld [vmem:[%s2 + $0x108] sm:$0xff]
    %v56 = vld [vmem:[%s2 + $0x110] sm:$0xff]
    %v57 = vld [vmem:[%s2 + $0x118] sm:$0xff]
    %v58 = vld [vmem:[%s2 + $0x120] sm:$0xff]
    %v59 = vld [vmem:[%s2 + $0x128] sm:$0xff]
    %v60 = vld [vmem:[%s2 + $0x130] sm:$0xff]
    %v61 = vld [vmem:[%s2 + $0x138] sm:$0xff]
    %v62 = vld [vmem:[%s2 + $0x140] sm:$0xff]
    %v63 = vld [vmem:[%s2 + $0x148] sm:$0xff]
    %v64 = vld [vmem:[%s2 + $0x150] sm:$0xff]
    %v65 = vld [vmem:[%s2 + $0x158] sm:$0xff]
    %v66 = vld [vmem:[%s2 + $0x160] sm:$0xff]
    %v67 = vld [vmem:[%s2 + $0x168] sm:$0xff]
    %v68 = vld [vmem:[%s2 + $0x170] sm:$0xff]
    %v69 = vld [vmem:[%s2 + $0x178] sm:$0xff]
    %v70 = vld [vmem:[%s2 + $0x180] sm:$0xff]
    %v71 = vld [vmem:[%s2 + $0x188] sm:$0xff]
    %v72 = vld [vmem:[%s2 + $0x190] sm:$0xff]
    %v73 = vld [vmem:[%s2 + $0x198] sm:$0xff]
    %v74 = vld [vmem:[%s2 + $0x1a0] sm:$0xff]
    %v75 = vld [vmem:[%s2 + $0x1a8] sm:$0xff]
    %v76 = vld [vmem:[%s2 + $0x1b0] sm:$0xff]
    %v77 = vld [vmem:[%s2 + $0x1b8] sm:$0xff]
    %v78 = vld [vmem:[%s2 + $0x1c0] sm:$0xff]
    %v79 = vld [vmem:[%s2 + $0x1c8] sm:$0xff]
    %v80 = vld [vmem:[%s2 + $0x1d0] sm:$0xff]
    %v81 = vld [vmem:[%s2 + $0x1d8] sm:$0xff]
    %v82 = vld [vmem:[%s2 + $0x1e0] sm:$0xff]
    %v83 = vld [vmem:[%s2 + $0x1e8] sm:$0xff]
    %v84 = vld [vmem:[%s2 + $0x1f0] sm:$0xff]
    %v85 = vld [vmem:[%s2 + $0x1f8] sm:$0xff]
    %v86 = vld [vmem:[%s2 + $0x200] sm:$0xff]
    %v87 = vld [vmem:[%s2 + $0x208] sm:$0xff]
    %v88 = vld [vmem:[%s2 + $0x210] sm:$0xff]
    %v89 = vld [vmem:[%s2 + $0x218] sm:$0xff]
    %v90 = vld [vmem:[%s2 + $0x220] sm:$0xff]
    %v91 = vld [vmem:[%s2 + $0x228] sm:$0xff]
    %v92 = vld [vmem:[%s2 + $0x230] sm:$0xff]
    %v93 = vld [vmem:[%s2 + $0x238] sm:$0xff]
    %v94 = vld [vmem:[%s2 + $0x240] sm:$0xff]
    %v95 = vld [vmem:[%s2 + $0x248] sm:$0xff]
    %v96 = vld [vmem:[%s2 + $0x250] sm:$0xff]
    %v97 = vld [vmem:[%s2 + $0x258] sm:$0xff]
    %v98 = vld [vmem:[%s2 + $0x260] sm:$0xff]
    %v99 = vld [vmem:[%s2 + $0x268] sm:$0xff]
    %v100 = vld [vmem:[%s2 + $0x270] sm:$0xff]
    %v101 = vld [vmem:[%s2 + $0x278] sm:$0xff]
    %v102 = vld [vmem:[%s2 + $0x280] sm:$0xff]
    %v103 = vld [vmem:[%s2 + $0x288] sm:$0xff]
    %v104 = vld [vmem:[%s2 + $0x290] sm:$0xff]
    %v105 = vld [vmem:[%s2 + $0x298] sm:$0xff]
    %v106 = vld [vmem:[%s2 + $0x2a0] sm:$0xff]
    %v107 = vld [vmem:[%s2 + $0x2a8] sm:$0xff]
    %v108 = vld [vmem:[%s2 + $0x2b0] sm:$0xff]
    %v109 = vld [vmem:[%s2 + $0x2b8] sm:$0xff]
    %v110 = vld [vmem:[%s2 + $0x2c0] sm:$0xff]
    %v111 = vld [vmem:[%s2 + $0x2c8] sm:$0xff]
    %v112 = vld [vmem:[%s2 + $0x2d0] sm:$0xff]
    %v113 = vld [vmem:[%s2 + $0x2d8] sm:$0xff]
    %v114 = vld [vmem:[%s2 + $0x2e0] sm:$0xff]
    %v115 = vld [vmem:[%s2 + $0x2e8] sm:$0xff]
    %v116 = vld [vmem:[%s2 + $0x2f0] sm:$0xff]
    %v117 = vld [vmem:[%s2 + $0x2f8] sm:$0xff]
    %v118 = vld [vmem:[%s2 + $0x300] sm:$0xff]
    %v119 = vld [vmem:[%s2 + $0x308] sm:$0xff]
    %v120 = vld [vmem:[%s2 + $0x310] sm:$0xff]
    %v121 = vld [vmem:[%s2 + $0x318] sm:$0xff]
    %v122 = vld [vmem:[%s2 + $0x320] sm:$0xff]
    %v123 = vld [vmem:[%s2 + $0x328] sm:$0xff]
    %v124 = vld [vmem:[%s2 + $0x330] sm:$0xff]
    %v125 = vld [vmem:[%s2 + $0x338] sm:$0xff]
    %v126 = vld [vmem:[%s2 + $0x340] sm:$0xff]
    %v127 = vld [vmem:[%s2 + $0x348] sm:$0xff]
    %v128 = vld [vmem:[%s2 + $0x350] sm:$0xff]
    %v129 = vld [vmem:[%s2 + $0x358] sm:$0xff]
    %v130 = vld [vmem:[%s2 + $0x360] sm:$0xff]
    %v131 = vld [vmem:[%s2 + $0x368] sm:$0xff]
    %v132 = vld [vmem:[%s2 + $0x370] sm:$0xff]
    %v133 = vld [vmem:[%s2 + $0x378] sm:$0xff]
    %v134 = vld [vmem:[%s2 + $0x380] sm:$0xff]
    %v135 = vld [vmem:[%s2 + $0x388] sm:$0xff]
    %v136 = vld [vmem:[%s2 + $0x390] sm:$0xff]
    %v137 = vld [vmem:[%s2 + $0x398] sm:$0xff]
    %v138 = vld [vmem:[%s2 + $0x3a0] sm:$0xff]
    %v139 = vld [vmem:[%s2 + $0x3a8] sm:$0xff]
    %v140 = vld [vmem:[%s2 + $0x3b0] sm:$0xff]
    %v141 = vld [vmem:[%s2 + $0x3b8] sm:$0xff]
    %v142 = vld [vmem:[%s2 + $0x3c0] sm:$0xff]
    %v143 = vld [vmem:[%s2 + $0x3c8] sm:$0xff]
    %v144 = vld [vmem:[%s2 + $0x3d0] sm:$0xff]
    %v145 = vld [vmem:[%s2 + $0x3d8] sm:$0xff]
    %v146 = vld [vmem:[%s2 + $0x3e0] sm:$0xff]
    %v147 = vld [vmem:[%s2 + $0x3e8] sm:$0xff]
    %v148 = vld [vmem:[%s2 + $0x3f0] sm:$0xff]
    %v149 = vld [vmem:[%s2 + $0x3f8] sm:$0xff]
    %v150 = vld [vmem:[%s2 + $0x400] sm:$0xff]
    %v151 = vld [vmem:[%s2 + $0x408] sm:$0xff]
    %v152 = vld [vmem:[%s2 + $0x410] sm:$0xff]
    %v153 = vld [vmem:[%s2 + $0x418] sm:$0xff]
    %v154 = vld [vmem:[%s2 + $0x420] sm:$0xff]
    %v155 = vld [vmem:[%s2 + $0x428] sm:$0xff]
    %v156 = vld [vmem:[%s2 + $0x430] sm:$0xff]
    %v157 = vld [vmem:[%s2 + $0x438] sm:$0xff]
    %v158 = vld [vmem:[%s2 + $0x440] sm:$0xff]
    %v159 = vld [vmem:[%s2 + $0x448] sm:$0xff]
    %v160 = vld [vmem:[%s2 + $0x450] sm:$0xff]
    %v161 = vld [vmem:[%s2 + $0x458] sm:$0xff]
    %v162 = vld [vmem:[%s2 + $0x460] sm:$0xff]
    %v163 = vld [vmem:[%s2 + $0x468] sm:$0xff]
    %v164 = vld [vmem:[%s2 + $0x470] sm:$0xff]
    %v165 = vld [vmem:[%s2 + $0x478] sm:$0xff]
    %v166 = vld [vmem:[%s2 + $0x480] sm:$0xff]
    %v167 = vld [vmem:[%s2 + $0x488] sm:$0xff]
    %v168 = vld [vmem:[%s2 + $0x490] sm:$0xff]
    %v169 = vld [vmem:[%s2 + $0x498] sm:$0xff]
    %v170 = vld [vmem:[%s2 + $0x4a0] sm:$0xff]
    %v171 = vld [vmem:[%s2 + $0x4a8] sm:$0xff]
    %v172 = vld [vmem:[%s2 + $0x4b0] sm:$0xff]
    %v173 = vld [vmem:[%s2 + $0x4b8] sm:$0xff]
    %v174 = vld [vmem:[%s2 + $0x4c0] sm:$0xff]
    %v175 = vld [vmem:[%s2 + $0x4c8] sm:$0xff]
    %v176 = vld [vmem:[%s2 + $0x4d0] sm:$0xff]
    %v177 = vld [vmem:[%s2 + $0x4d8] sm:$0xff]
    %v178 = vld [vmem:[%s2 + $0x4e0] sm:$0xff]
    %v179 = vld [vmem:[%s2 + $0x4e8] sm:$0xff]
    %v180 = vld [vmem:[%s2 + $0x4f0] sm:$0xff]
    %v181 = vld [vmem:[%s2 + $0x4f8] sm:$0xff]
    %v182 = vld [vmem:[%s2 + $0x500] sm:$0xff]
    %v183 = vld [vmem:[%s2 + $0x508] sm:$0xff]
    %v184 = vld [vmem:[%s2 + $0x510] sm:$0xff]
    %v185 = vld [vmem:[%s2 + $0x518] sm:$0xff]
    %v186 = vld [vmem:[%s2 + $0x520] sm:$0xff]
    %v187 = vld [vmem:[%s2 + $0x528] sm:$0xff]
    %v188 = vld [vmem:[%s2 + $0x530] sm:$0xff]
    %v189 = vld [vmem:[%s2 + $0x538] sm:$0xff]
    %v190 = vld [vmem:[%s2 + $0x540] sm:$0xff]
    %v191 = vld [vmem:[%s2 + $0x548] sm:$0xff]
    %v192 = vld [vmem:[%s2 + $0x550] sm:$0xff]
    %v193 = vld [vmem:[%s2 + $0x558] sm:$0xff]
    %v194 = vld [vmem:[%s2 + $0x560] sm:$0xff]
    %v195 = vld [vmem:[%s2 + $0x568] sm:$0xff]
    %v196 = vld [vmem:[%s2 + $0x570] sm:$0xff]
    %v197 = vld [vmem:[%s2 + $0x578] sm:$0xff]
    %v198 = vld [vmem:[%s2 + $0x580] sm:$0xff]
    %v199 = vld [vmem:[%s2 + $0x588] sm:$0xff]
    %v200 = vld [vmem:[%s2 + $0x590] sm:$0xff]
    %v201 = vld [vmem:[%s2 + $0x598] sm:$0xff]
    %v202 = vld [vmem:[%s2 + $0x5a0] sm:$0xff]
    %v203 = vld [vmem:[%s2 + $0x5a8] sm:$0xff]
    %v204 = vld [vmem:[%s2 + $0x5b0] sm:$0xff]
    %v205 = vld [vmem:[%s2 + $0x5b8] sm:$0xff]
    %v206 = vld [vmem:[%s2 + $0x5c0] sm:$0xff]
    %v207 = vld [vmem:[%s2 + $0x5c8] sm:$0xff]
    %v208 = vld [vmem:[%s2 + $0x5d0] sm:$0xff]
    %v209 = vld [vmem:[%s2 + $0x5d8] sm:$0xff]
    %v210 = vld [vmem:[%s2 + $0x5e0] sm:$0xff]
    %v211 = vld [vmem:[%s2 + $0x5e8] sm:$0xff]
    %v212 = vld [vmem:[%s2 + $0x5f0] sm:$0xff]
    %v213 = vld [vmem:[%s2 + $0x5f8] sm:$0xff]
    %v214 = vld [vmem:[%s2 + $0x600] sm:$0xff]
    %v215 = vld [vmem:[%s2 + $0x608] sm:$0xff]
    %v216 = vld [vmem:[%s2 + $0x610] sm:$0xff]
    %v217 = vld [vmem:[%s2 + $0x618] sm:$0xff]
    %v218 = vld [vmem:[%s2 + $0x620] sm:$0xff]
    %v219 = vld [vmem:[%s2 + $0x628] sm:$0xff]
    %v220 = vld [vmem:[%s2 + $0x630] sm:$0xff]
    %v221 = vld [vmem:[%s2 + $0x638] sm:$0xff]
    %v222 = vld [vmem:[%s2 + $0x640] sm:$0xff]
    %v223 = vld [vmem:[%s2 + $0x648] sm:$0xff]
    %v224 = vld [vmem:[%s2 + $0x650] sm:$0xff]
    %v225 = vld [vmem:[%s2 + $0x658] sm:$0xff]
    %v226 = vld [vmem:[%s2 + $0x660] sm:$0xff]
    %v227 = vld [vmem:[%s2 + $0x668] sm:$0xff]
    %v228 = vld [vmem:[%s2 + $0x670] sm:$0xff]
    %v229 = vld [vmem:[%s2 + $0x678] sm:$0xff]
    %v230 = vld [vmem:[%s2 + $0x680] sm:$0xff]
    %v231 = vld [vmem:[%s2 + $0x688] sm:$0xff]
    %v232 = vld [vmem:[%s2 + $0x690] sm:$0xff]
    %v233 = vld [vmem:[%s2 + $0x698] sm:$0xff]
    %v234 = vld [vmem:[%s2 + $0x6a0] sm:$0xff]
    %v235 = vld [vmem:[%s2 + $0x6a8] sm:$0xff]
    %v236 = vld [vmem:[%s2 + $0x6b0] sm:$0xff]
    %v237 = vld [vmem:[%s2 + $0x6b8] sm:$0xff]
    %v238 = vld [vmem:[%s2 + $0x6c0] sm:$0xff]
    %v239 = vld [vmem:[%s2 + $0x6c8] sm:$0xff]
    %v240 = vld [vmem:[%s2 + $0x6d0] sm:$0xff]
    %v241 = vld [vmem:[%s2 + $0x6d8] sm:$0xff]
    %v242 = vld [vmem:[%s2 + $0x6e0] sm:$0xff]
    %v243 = vld [vmem:[%s2 + $0x6e8] sm:$0xff]
    %v244 = vld [vmem:[%s2 + $0x6f0] sm:$0xff]
    %v245 = vld [vmem:[%s2 + $0x6f8] sm:$0xff]
    %v246 = vld [vmem:[%s2 + $0x700] sm:$0xff]
    %v247 = vld [vmem:[%s2 + $0x708] sm:$0xff]
    %v248 = vld [vmem:[%s2 + $0x710] sm:$0xff]
    %v249 = vld [vmem:[%s2 + $0x718] sm:$0xff]
    %v250 = vld [vmem:[%s2 + $0x720] sm:$0xff]
    %v251 = vld [vmem:[%s2 + $0x728] sm:$0xff]
    %v252 = vld [vmem:[%s2 + $0x730] sm:$0xff]
    %v253 = vld [vmem:[%s2 + $0x738] sm:$0xff]
    %v254 = vld [vmem:[%s2 + $0x740] sm:$0xff]
    %v255 = vld [vmem:[%s2 + $0x748] sm:$0xff]
    %v256 = vld [vmem:[%s2 + $0x750] sm:$0xff]
    %v257 = vld [vmem:[%s2 + $0x758] sm:$0xff]
    %v258 = vld [vmem:[%s2 + $0x760] sm:$0xff]
    %v259 = vld [vmem:[%s2 + $0x768] sm:$0xff]
    %v260 = vld [vmem:[%s2 + $0x770] sm:$0xff]
    %v261 = vld [vmem:[%s2 + $0x778] sm:$0xff]
    %v262 = vld [vmem:[%s2 + $0x780] sm:$0xff]
    %v263 = vld [vmem:[%s2 + $0x788] sm:$0xff]
    %v264 = vld [vmem:[%s2 + $0x790] sm:$0xff]
    %v265 = vld [vmem:[%s2 + $0x798] sm:$0xff]
    %v266 = vld [vmem:[%s2 + $0x7a0] sm:$0xff]
    %v267 = vld [vmem:[%s2 + $0x7a8] sm:$0xff]
    %v268 = vld [vmem:[%s2 + $0x7b0] sm:$0xff]
    %v269 = vld [vmem:[%s2 + $0x7b8] sm:$0xff]
    %v270 = vld [vmem:[%s2 + $0x7c0] sm:$0xff]
    %v271 = vld [vmem:[%s2 + $0x7c8] sm:$0xff]
    %v272 = vld [vmem:[%s2 + $0x7d0] sm:$0xff]
    %v273 = vld [vmem:[%s2 + $0x7d8] sm:$0xff]
    %v274 = vld [vmem:[%s2 + $0x7e0] sm:$0xff]
    %v275 = vld [vmem:[%s2 + $0x7e8] sm:$0xff]
    %v276 = vld [vmem:[%s2 + $0x7f0] sm:$0xff]
    %v277 = vld [vmem:[%s2 + $0x7f8] sm:$0xff]
    %v278 = vld [vmem:[%s2 + $0x800] sm:$0xff]
    %v279 = vld [vmem:[%s2 + $0x808] sm:$0xff]
    %v280 = vld [vmem:[%s2 + $0x810] sm:$0xff]
    %v281 = vld [vmem:[%s2 + $0x818] sm:$0xff]
    %v282 = vld [vmem:[%s2 + $0x820] sm:$0xff]
    %v283 = vld [vmem:[%s2 + $0x828] sm:$0xff]
    %v284 = vld [vmem:[%s2 + $0x830] sm:$0xff]
    %v285 = vld [vmem:[%s2 + $0x838] sm:$0xff]
    %v286 = vld [vmem:[%s2 + $0x840] sm:$0xff]
    %v287 = vld [vmem:[%s2 + $0x848] sm:$0xff]
    %v288 = vld [vmem:[%s2 + $0x850] sm:$0xff]
    %v289 = vld [vmem:[%s2 + $0x858] sm:$0xff]
    %v290 = vld [vmem:[%s2 + $0x860] sm:$0xff]
    %v291 = vld [vmem:[%s2 + $0x868] sm:$0xff]
    %v292 = vld [vmem:[%s2 + $0x870] sm:$0xff]
    %v293 = vld [vmem:[%s2 + $0x878] sm:$0xff]
    %v294 = vld [vmem:[%s2 + $0x880] sm:$0xff]
    %v295 = vld [vmem:[%s2 + $0x888] sm:$0xff]
    %v296 = vld [vmem:[%s2 + $0x890] sm:$0xff]
    %v297 = vld [vmem:[%s2 + $0x898] sm:$0xff]
    %v298 = vld [vmem:[%s2 + $0x8a0] sm:$0xff]
    %v299 = vld [vmem:[%s2 + $0x8a8] sm:$0xff]
    %v300 = vld [vmem:[%s2 + $0x8b0] sm:$0xff]
    %v301 = vld [vmem:[%s2 + $0x8b8] sm:$0xff]
    %v302 = vld [vmem:[%s2 + $0x8c0] sm:$0xff]
    %v303 = vld [vmem:[%s2 + $0x8c8] sm:$0xff]
    %v304 = vld [vmem:[%s2 + $0x8d0] sm:$0xff]
    %v305 = vld [vmem:[%s2 + $0x8d8] sm:$0xff]
    %v306 = vld [vmem:[%s2 + $0x8e0] sm:$0xff]
    %v307 = vld [vmem:[%s2 + $0x8e8] sm:$0xff]
    %v308 = vld [vmem:[%s2 + $0x8f0] sm:$0xff]
    %v309 = vld [vmem:[%s2 + $0x8f8] sm:$0xff]
    %313 = vst [vmem:[#allocation1] ss:$4 sm:$0xff] %v19
    %s314 = scalar_lea.vmem [#allocation1], 32
    %315 = vst [vmem:[%s314] ss:$4 sm:$0xff] %v20
    %v316 = vld.sshfl [vmem:[#allocation1] sm:$0xff pattern:$0x73625140]
    %v317 = vld.sshfl [vmem:[#allocation1 + $0x8] sm:$0xff pattern:$0x73625140]
    %v318 = vld.sshfl [vmem:[#allocation1 + $0x10] sm:$0xff pattern:$0x73625140]
    %v319 = vld.sshfl [vmem:[#allocation1 + $0x18] sm:$0xff pattern:$0x73625140]
    %v320 = vld.sshfl [vmem:[#allocation1 + $0x20] sm:$0xff pattern:$0x73625140]
    %v321 = vld.sshfl [vmem:[#allocation1 + $0x28] sm:$0xff pattern:$0x73625140]
    %v322 = vld.sshfl [vmem:[#allocation1 + $0x30] sm:$0xff pattern:$0x73625140]
    %v323 = vld.sshfl [vmem:[#allocation1 + $0x38] sm:$0xff pattern:$0x73625140]
    %324 = vst [vmem:[#allocation1] ss:$4 sm:$0xff] %v21
    %v325 = vld.sshfl [vmem:[#allocation1] sm:$0xff pattern:$0x73625140]
    %335 = vmatpush.msra.mxu0 %v52
    %336 = vmatpush.msra.mxu0 %v50
    %337 = vmatpush.msra.mxu0 %v48
    %338 = vmatpush.msra.mxu0 %v46
    %339 = vmatpush.msra.mxu0 %v44
    %340 = vmatpush.msra.mxu0 %v42
    %341 = vmatpush.msra.mxu0 %v40
    %342 = vmatpush.msra.mxu0 %v38
    %343 = vmatpush.msra.mxu0 %v36
    %344 = vmatpush.msra.mxu0 %v34
    %345 = vmatpush.msra.mxu0 %v32
    %346 = vmatpush.msra.mxu0 %v30
    %347 = vmatpush.msra.mxu0 %v28
    %348 = vmatpush.msra.mxu0 %v26
    %349 = vmatpush.msra.mxu0 %v24
    %350 = vmatpush.msra.mxu0 %v22
    %351 = vmatmul.f32.gmra.mxu0 %v316
    %v352 = vpop.f32.mrf.mxu0
    %v353 = vadd.f32 0.0, %v352
    %354 = vdwg.mxu0
    %355 = vmatpush.msra.mxu0 %v84
    %356 = vmatpush.msra.mxu0 %v82
    %357 = vmatpush.msra.mxu0 %v80
    %358 = vmatpush.msra.mxu0 %v78
    %359 = vmatpush.msra.mxu0 %v76
    %360 = vmatpush.msra.mxu0 %v74
    %361 = vmatpush.msra.mxu0 %v72
    %362 = vmatpush.msra.mxu0 %v70
    %363 = vmatpush.msra.mxu0 %v68
    %364 = vmatpush.msra.mxu0 %v66
    %365 = vmatpush.msra.mxu0 %v64
    %366 = vmatpush.msra.mxu0 %v62
    %367 = vmatpush.msra.mxu0 %v60
    %368 = vmatpush.msra.mxu0 %v58
    %369 = vmatpush.msra.mxu0 %v56
    %370 = vmatpush.msra.mxu0 %v54
    %371 = vmatmul.f32.gmra.mxu0 %v317
    %v372 = vpop.f32.mrf.mxu0
    %v373 = vadd.f32 %v353, %v372
    %374 = vdwg.mxu0
    %375 = vmatpush.msra.mxu0 %v116
    %376 = vmatpush.msra.mxu0 %v114
    %377 = vmatpush.msra.mxu0 %v112
    %378 = vmatpush.msra.mxu0 %v110
    %379 = vmatpush.msra.mxu0 %v108
    %380 = vmatpush.msra.mxu0 %v106
    %381 = vmatpush.msra.mxu0 %v104
    %382 = vmatpush.msra.mxu0 %v102
    %383 = vmatpush.msra.mxu0 %v100
    %384 = vmatpush.msra.mxu0 %v98
    %385 = vmatpush.msra.mxu0 %v96
    %386 = vmatpush.msra.mxu0 %v94
    %387 = vmatpush.msra.mxu0 %v92
    %388 = vmatpush.msra.mxu0 %v90
    %389 = vmatpush.msra.mxu0 %v88
    %390 = vmatpush.msra.mxu0 %v86
    %391 = vmatmul.f32.gmra.mxu0 %v318
    %v392 = vpop.f32.mrf.mxu0
    %v393 = vadd.f32 %v373, %v392
    %394 = vdwg.mxu0
    %395 = vmatpush.msra.mxu0 %v148
    %396 = vmatpush.msra.mxu0 %v146
    %397 = vmatpush.msra.mxu0 %v144
    %398 = vmatpush.msra.mxu0 %v142
    %399 = vmatpush.msra.mxu0 %v140
    %400 = vmatpush.msra.mxu0 %v138
    %401 = vmatpush.msra.mxu0 %v136
    %402 = vmatpush.msra.mxu0 %v134
    %403 = vmatpush.msra.mxu0 %v132
    %404 = vmatpush.msra.mxu0 %v130
    %405 = vmatpush.msra.mxu0 %v128
    %406 = vmatpush.msra.mxu0 %v126
    %407 = vmatpush.msra.mxu0 %v124
    %408 = vmatpush.msra.mxu0 %v122
    %409 = vmatpush.msra.mxu0 %v120
    %410 = vmatpush.msra.mxu0 %v118
    %411 = vmatmul.f32.gmra.mxu0 %v319
    %v412 = vpop.f32.mrf.mxu0
    %v413 = vadd.f32 %v393, %v412
    %414 = vdwg.mxu0
    %415 = vmatpush.msra.mxu0 %v180
    %416 = vmatpush.msra.mxu0 %v178
    %417 = vmatpush.msra.mxu0 %v176
    %418 = vmatpush.msra.mxu0 %v174
    %419 = vmatpush.msra.mxu0 %v172
    %420 = vmatpush.msra.mxu0 %v170
    %421 = vmatpush.msra.mxu0 %v168
    %422 = vmatpush.msra.mxu0 %v166
    %423 = vmatpush.msra.mxu0 %v164
    %424 = vmatpush.msra.mxu0 %v162
    %425 = vmatpush.msra.mxu0 %v160
    %426 = vmatpush.msra.mxu0 %v158
    %427 = vmatpush.msra.mxu0 %v156
    %428 = vmatpush.msra.mxu0 %v154
    %429 = vmatpush.msra.mxu0 %v152
    %430 = vmatpush.msra.mxu0 %v150
    %431 = vmatmul.f32.gmra.mxu0 %v320
    %v432 = vpop.f32.mrf.mxu0
    %v433 = vadd.f32 %v413, %v432
    %434 = vdwg.mxu0
    %435 = vmatpush.msra.mxu0 %v212
    %436 = vmatpush.msra.mxu0 %v210
    %437 = vmatpush.msra.mxu0 %v208
    %438 = vmatpush.msra.mxu0 %v206
    %439 = vmatpush.msra.mxu0 %v204
    %440 = vmatpush.msra.mxu0 %v202
    %441 = vmatpush.msra.mxu0 %v200
    %442 = vmatpush.msra.mxu0 %v198
    %443 = vmatpush.msra.mxu0 %v196
    %444 = vmatpush.msra.mxu0 %v194
    %445 = vmatpush.msra.mxu0 %v192
    %446 = vmatpush.msra.mxu0 %v190
    %447 = vmatpush.msra.mxu0 %v188
    %448 = vmatpush.msra.mxu0 %v186
    %449 = vmatpush.msra.mxu0 %v184
    %450 = vmatpush.msra.mxu0 %v182
    %451 = vmatmul.f32.gmra.mxu0 %v321
    %v452 = vpop.f32.mrf.mxu0
    %v453 = vadd.f32 %v433, %v452
    %454 = vdwg.mxu0
    %455 = vmatpush.msra.mxu0 %v244
    %456 = vmatpush.msra.mxu0 %v242
    %457 = vmatpush.msra.mxu0 %v240
    %458 = vmatpush.msra.mxu0 %v238
    %459 = vmatpush.msra.mxu0 %v236
    %460 = vmatpush.msra.mxu0 %v234
    %461 = vmatpush.msra.mxu0 %v232
    %462 = vmatpush.msra.mxu0 %v230
    %463 = vmatpush.msra.mxu0 %v228
    %464 = vmatpush.msra.mxu0 %v226
    %465 = vmatpush.msra.mxu0 %v224
    %466 = vmatpush.msra.mxu0 %v222
    %467 = vmatpush.msra.mxu0 %v220
    %468 = vmatpush.msra.mxu0 %v218
    %469 = vmatpush.msra.mxu0 %v216
    %470 = vmatpush.msra.mxu0 %v214
    %471 = vmatmul.f32.gmra.mxu0 %v322
    %v472 = vpop.f32.mrf.mxu0
    %v473 = vadd.f32 %v453, %v472
    %474 = vdwg.mxu0
    %475 = vmatpush.msra.mxu0 %v276
    %476 = vmatpush.msra.mxu0 %v274
    %477 = vmatpush.msra.mxu0 %v272
    %478 = vmatpush.msra.mxu0 %v270
    %479 = vmatpush.msra.mxu0 %v268
    %480 = vmatpush.msra.mxu0 %v266
    %481 = vmatpush.msra.mxu0 %v264
    %482 = vmatpush.msra.mxu0 %v262
    %483 = vmatpush.msra.mxu0 %v260
    %484 = vmatpush.msra.mxu0 %v258
    %485 = vmatpush.msra.mxu0 %v256
    %486 = vmatpush.msra.mxu0 %v254
    %487 = vmatpush.msra.mxu0 %v252
    %488 = vmatpush.msra.mxu0 %v250
    %489 = vmatpush.msra.mxu0 %v248
    %490 = vmatpush.msra.mxu0 %v246
    %491 = vmatmul.f32.gmra.mxu0 %v323
    %v492 = vpop.f32.mrf.mxu0
    %v493 = vadd.f32 %v473, %v492
    %494 = vdwg.mxu0
    %495 = vmatpush.msra.mxu0 %v308
    %496 = vmatpush.msra.mxu0 %v306
    %497 = vmatpush.msra.mxu0 %v304
    %498 = vmatpush.msra.mxu0 %v302
    %499 = vmatpush.msra.mxu0 %v300
    %500 = vmatpush.msra.mxu0 %v298
    %501 = vmatpush.msra.mxu0 %v296
    %502 = vmatpush.msra.mxu0 %v294
    %503 = vmatpush.msra.mxu0 %v292
    %504 = vmatpush.msra.mxu0 %v290
    %505 = vmatpush.msra.mxu0 %v288
    %506 = vmatpush.msra.mxu0 %v286
    %507 = vmatpush.msra.mxu0 %v284
    %508 = vmatpush.msra.mxu0 %v282
    %509 = vmatpush.msra.mxu0 %v280
    %510 = vmatpush.msra.mxu0 %v278
    %511 = vmatmul.f32.gmra.mxu0 %v325
    %v512 = vpop.f32.mrf.mxu0
    %v513 = vadd.f32 %v493, %v512
    %514 = vdwg.mxu0
    %515 = vmatpush.msra.mxu0 %v53
    %516 = vmatpush.msra.mxu0 %v51
    %517 = vmatpush.msra.mxu0 %v49
    %518 = vmatpush.msra.mxu0 %v47
    %519 = vmatpush.msra.mxu0 %v45
    %520 = vmatpush.msra.mxu0 %v43
    %521 = vmatpush.msra.mxu0 %v41
    %522 = vmatpush.msra.mxu0 %v39
    %523 = vmatpush.msra.mxu0 %v37
    %524 = vmatpush.msra.mxu0 %v35
    %525 = vmatpush.msra.mxu0 %v33
    %526 = vmatpush.msra.mxu0 %v31
    %527 = vmatpush.msra.mxu0 %v29
    %528 = vmatpush.msra.mxu0 %v27
    %529 = vmatpush.msra.mxu0 %v25
    %530 = vmatpush.msra.mxu0 %v23
    %531 = vmatmul.f32.gmra.mxu0 %v316
    %v532 = vpop.f32.mrf.mxu0
    %v533 = vadd.f32 0.0, %v532
    %534 = vdwg.mxu0
    %535 = vmatpush.msra.mxu0 %v85
    %536 = vmatpush.msra.mxu0 %v83
    %537 = vmatpush.msra.mxu0 %v81
    %538 = vmatpush.msra.mxu0 %v79
    %539 = vmatpush.msra.mxu0 %v77
    %540 = vmatpush.msra.mxu0 %v75
    %541 = vmatpush.msra.mxu0 %v73
    %542 = vmatpush.msra.mxu0 %v71
    %543 = vmatpush.msra.mxu0 %v69
    %544 = vmatpush.msra.mxu0 %v67
    %545 = vmatpush.msra.mxu0 %v65
    %546 = vmatpush.msra.mxu0 %v63
    %547 = vmatpush.msra.mxu0 %v61
    %548 = vmatpush.msra.mxu0 %v59
    %549 = vmatpush.msra.mxu0 %v57
    %550 = vmatpush.msra.mxu0 %v55
    %551 = vmatmul.f32.gmra.mxu0 %v317
    %v552 = vpop.f32.mrf.mxu0
    %v553 = vadd.f32 %v533, %v552
    %554 = vdwg.mxu0
    %555 = vmatpush.msra.mxu0 %v117
    %556 = vmatpush.msra.mxu0 %v115
    %557 = vmatpush.msra.mxu0 %v113
    %558 = vmatpush.msra.mxu0 %v111
    %559 = vmatpush.msra.mxu0 %v109
    %560 = vmatpush.msra.mxu0 %v107
    %561 = vmatpush.msra.mxu0 %v105
    %562 = vmatpush.msra.mxu0 %v103
    %563 = vmatpush.msra.mxu0 %v101
    %564 = vmatpush.msra.mxu0 %v99
    %565 = vmatpush.msra.mxu0 %v97
    %566 = vmatpush.msra.mxu0 %v95
    %567 = vmatpush.msra.mxu0 %v93
    %568 = vmatpush.msra.mxu0 %v91
    %569 = vmatpush.msra.mxu0 %v89
    %570 = vmatpush.msra.mxu0 %v87
    %571 = vmatmul.f32.gmra.mxu0 %v318
    %v572 = vpop.f32.mrf.mxu0
    %v573 = vadd.f32 %v553, %v572
    %574 = vdwg.mxu0
    %575 = vmatpush.msra.mxu0 %v149
    %576 = vmatpush.msra.mxu0 %v147
    %577 = vmatpush.msra.mxu0 %v145
    %578 = vmatpush.msra.mxu0 %v143
    %579 = vmatpush.msra.mxu0 %v141
    %580 = vmatpush.msra.mxu0 %v139
    %581 = vmatpush.msra.mxu0 %v137
    %582 = vmatpush.msra.mxu0 %v135
    %583 = vmatpush.msra.mxu0 %v133
    %584 = vmatpush.msra.mxu0 %v131
    %585 = vmatpush.msra.mxu0 %v129
    %586 = vmatpush.msra.mxu0 %v127
    %587 = vmatpush.msra.mxu0 %v125
    %588 = vmatpush.msra.mxu0 %v123
    %589 = vmatpush.msra.mxu0 %v121
    %590 = vmatpush.msra.mxu0 %v119
    %591 = vmatmul.f32.gmra.mxu0 %v319
    %v592 = vpop.f32.mrf.mxu0
    %v593 = vadd.f32 %v573, %v592
    %594 = vdwg.mxu0
    %595 = vmatpush.msra.mxu0 %v181
    %596 = vmatpush.msra.mxu0 %v179
    %597 = vmatpush.msra.mxu0 %v177
    %598 = vmatpush.msra.mxu0 %v175
    %599 = vmatpush.msra.mxu0 %v173
    %600 = vmatpush.msra.mxu0 %v171
    %601 = vmatpush.msra.mxu0 %v169
    %602 = vmatpush.msra.mxu0 %v167
    %603 = vmatpush.msra.mxu0 %v165
    %604 = vmatpush.msra.mxu0 %v163
    %605 = vmatpush.msra.mxu0 %v161
    %606 = vmatpush.msra.mxu0 %v159
    %607 = vmatpush.msra.mxu0 %v157
    %608 = vmatpush.msra.mxu0 %v155
    %609 = vmatpush.msra.mxu0 %v153
    %610 = vmatpush.msra.mxu0 %v151
    %611 = vmatmul.f32.gmra.mxu0 %v320
    %v612 = vpop.f32.mrf.mxu0
    %v613 = vadd.f32 %v593, %v612
    %614 = vdwg.mxu0
    %615 = vmatpush.msra.mxu0 %v213
    %616 = vmatpush.msra.mxu0 %v211
    %617 = vmatpush.msra.mxu0 %v209
    %618 = vmatpush.msra.mxu0 %v207
    %619 = vmatpush.msra.mxu0 %v205
    %620 = vmatpush.msra.mxu0 %v203
    %621 = vmatpush.msra.mxu0 %v201
    %622 = vmatpush.msra.mxu0 %v199
    %623 = vmatpush.msra.mxu0 %v197
    %624 = vmatpush.msra.mxu0 %v195
    %625 = vmatpush.msra.mxu0 %v193
    %626 = vmatpush.msra.mxu0 %v191
    %627 = vmatpush.msra.mxu0 %v189
    %628 = vmatpush.msra.mxu0 %v187
    %629 = vmatpush.msra.mxu0 %v185
    %630 = vmatpush.msra.mxu0 %v183
    %631 = vmatmul.f32.gmra.mxu0 %v321
    %v632 = vpop.f32.mrf.mxu0
    %v633 = vadd.f32 %v613, %v632
    %634 = vdwg.mxu0
    %635 = vmatpush.msra.mxu0 %v245
    %636 = vmatpush.msra.mxu0 %v243
    %637 = vmatpush.msra.mxu0 %v241
    %638 = vmatpush.msra.mxu0 %v239
    %639 = vmatpush.msra.mxu0 %v237
    %640 = vmatpush.msra.mxu0 %v235
    %641 = vmatpush.msra.mxu0 %v233
    %642 = vmatpush.msra.mxu0 %v231
    %643 = vmatpush.msra.mxu0 %v229
    %644 = vmatpush.msra.mxu0 %v227
    %645 = vmatpush.msra.mxu0 %v225
    %646 = vmatpush.msra.mxu0 %v223
    %647 = vmatpush.msra.mxu0 %v221
    %648 = vmatpush.msra.mxu0 %v219
    %649 = vmatpush.msra.mxu0 %v217
    %650 = vmatpush.msra.mxu0 %v215
    %651 = vmatmul.f32.gmra.mxu0 %v322
    %v652 = vpop.f32.mrf.mxu0
    %v653 = vadd.f32 %v633, %v652
    %654 = vdwg.mxu0
    %655 = vmatpush.msra.mxu0 %v277
    %656 = vmatpush.msra.mxu0 %v275
    %657 = vmatpush.msra.mxu0 %v273
    %658 = vmatpush.msra.mxu0 %v271
    %659 = vmatpush.msra.mxu0 %v269
    %660 = vmatpush.msra.mxu0 %v267
    %661 = vmatpush.msra.mxu0 %v265
    %662 = vmatpush.msra.mxu0 %v263
    %663 = vmatpush.msra.mxu0 %v261
    %664 = vmatpush.msra.mxu0 %v259
    %665 = vmatpush.msra.mxu0 %v257
    %666 = vmatpush.msra.mxu0 %v255
    %667 = vmatpush.msra.mxu0 %v253
    %668 = vmatpush.msra.mxu0 %v251
    %669 = vmatpush.msra.mxu0 %v249
    %670 = vmatpush.msra.mxu0 %v247
    %671 = vmatmul.f32.gmra.mxu0 %v323
    %v672 = vpop.f32.mrf.mxu0
    %v673 = vadd.f32 %v653, %v672
    %674 = vdwg.mxu0
    %675 = vmatpush.msra.mxu0 %v309
    %676 = vmatpush.msra.mxu0 %v307
    %677 = vmatpush.msra.mxu0 %v305
    %678 = vmatpush.msra.mxu0 %v303
    %679 = vmatpush.msra.mxu0 %v301
    %680 = vmatpush.msra.mxu0 %v299
    %681 = vmatpush.msra.mxu0 %v297
    %682 = vmatpush.msra.mxu0 %v295
    %683 = vmatpush.msra.mxu0 %v293
    %684 = vmatpush.msra.mxu0 %v291
    %685 = vmatpush.msra.mxu0 %v289
    %686 = vmatpush.msra.mxu0 %v287
    %687 = vmatpush.msra.mxu0 %v285
    %688 = vmatpush.msra.mxu0 %v283
    %689 = vmatpush.msra.mxu0 %v281
    %690 = vmatpush.msra.mxu0 %v279
    %691 = vmatmul.f32.gmra.mxu0 %v325
    %v692 = vpop.f32.mrf.mxu0
    %v693 = vadd.f32 %v673, %v692
    %694 = vdwg.mxu0
    %v695 = vld [vmem:[%s3] sm:$0x3]
    %v697 = vperm.slane %v695, 0
    %v698 = vperm.slane %v695, 1
    %v701 = vmul.f32 %v513, %v697
    %v702 = vmul.f32 %v693, %v698
    %v703 = vld [vmem:[%s4] sm:$0x3]
    %v705 = vperm.slane %v703, 0
    %v706 = vperm.slane %v703, 1
    %v709 = vadd.f32 %v701, %v705
    %v710 = vadd.f32 %v702, %v706
    %v711 = vmax.f32 %v709, 0.0
    %v712 = vmax.f32 %v710, 0.0
    %v715 = vrot.slane %v712, 6
    %vm716 = vcmask 1041408
    %v717 = vsel %vm716, %v711, %v715
    %719 = vst [vmem:[#allocation2] sm:$0xf] %v717
    // Predicated region
    $region18: #{basic_cnn_forward.14} parent=1 // pred_check
      _
    $region19: #{basic_cnn_forward.14} parent=1 // pred_check_branch
      %721 = sbr.rel (0) target = $region21
    $region20: #{basic_cnn_forward.14} parent=1 // pred_region
      // Predicated region
      $region22: #{basic_cnn_forward.14} parent=20 // pred_check
        _
      $region23: #{basic_cnn_forward.14} parent=20 // pred_check_branch
        %723 = sbr.rel (0) target = $region25
      $region24: #{basic_cnn_forward.14} parent=20 // pred_region
        // Predicated region
        $region26: #{basic_cnn_forward.14} parent=24 // pred_check
          _
        $region27: #{basic_cnn_forward.14} parent=24 // pred_check_branch
          %725 = sbr.rel target = $region29
        $region28: #{basic_cnn_forward.14} parent=24 // pred_region
          // Predicated region
          $region41: #{basic_cnn_forward.14} parent=28 // pred_check
            _
          $region42: #{basic_cnn_forward.14} parent=28 // pred_check_branch
            %741 = sbr.rel (0) target = $region44
          $region43: #{basic_cnn_forward.14} parent=28 // pred_region
            %s743 = ssub.s32 16, 1
            loop: start=0, step=1, limit=1
            $region45: #{basic_cnn_forward.14} parent=43 // loop_pre_header
              _
            $region46: #{basic_cnn_forward.14} parent=43 // loop_header
              %s745 = sphi 0, %s749
              %p746 = scmp.ge.s32.totalorder %s745, 1
              %s750 = sphi [#allocation2], [#allocation2]
              %s751 = sphi %s6, %s6
            $region47: #{basic_cnn_forward.14} parent=43 // loop_header_branch
              %748 = sbr.rel (%p746) target = $region51
            $region48: #{basic_cnn_forward.14} parent=43 // loop_body
              %v752 = vld [vmem:[%s750] sm:%s743]
              %753 = vst [vmem:[%s751] sm:%s743] %v752
            $region49: #{basic_cnn_forward.14} parent=43 // loop_footer
              %s749 = sadd.s32 1, %s745
            $region50: #{basic_cnn_forward.14} parent=43 // loop_footer_branch
              %744 = sbr.rel target = $region46
            $region51: #{basic_cnn_forward.14} parent=43 // loop_exit
              _
          $region44: #{basic_cnn_forward.14} parent=28 // pred_fallthru
            _
        $region29: #{basic_cnn_forward.14} parent=24 // pred_fallthru
          _
        // Predicated region
        $region30: #{basic_cnn_forward.14} parent=24 // pred_check
          _
        $region31: #{basic_cnn_forward.14} parent=24 // pred_check_branch
          %727 = sbr.rel (0) target = $region33
        $region32: #{basic_cnn_forward.14} parent=24 // pred_region
          %s729 = ssub.s32 16, 1
          loop: start=0, step=1, limit=1
          $region34: #{basic_cnn_forward.14} parent=32 // loop_pre_header
            _
          $region35: #{basic_cnn_forward.14} parent=32 // loop_header
            %s731 = sphi 0, %s735
            %p732 = scmp.ge.s32.totalorder %s731, 1
            %s736 = sphi [#allocation2], [#allocation2]
            %s737 = sphi %s6, %s6
          $region36: #{basic_cnn_forward.14} parent=32 // loop_header_branch
            %734 = sbr.rel (%p732) target = $region40
          $region37: #{basic_cnn_forward.14} parent=32 // loop_body
            %v738 = vld [vmem:[%s736] sm:%s729]
            %739 = vst [vmem:[%s737] sm:%s729] %v738
          $region38: #{basic_cnn_forward.14} parent=32 // loop_footer
            %s735 = sadd.s32 1, %s731
          $region39: #{basic_cnn_forward.14} parent=32 // loop_footer_branch
            %730 = sbr.rel target = $region35
          $region40: #{basic_cnn_forward.14} parent=32 // loop_exit
            _
        $region33: #{basic_cnn_forward.14} parent=24 // pred_fallthru
          _
      $region25: #{basic_cnn_forward.14} parent=20 // pred_fallthru
        _
      %754 = vnop
    $region21: #{basic_cnn_forward.14} parent=1 // pred_fallthru
      _
    // Predicated region
    $region52: #{basic_cnn_forward.14} parent=1 // pred_check
      _
    $region53: #{basic_cnn_forward.14} parent=1 // pred_check_branch
      %756 = sbr.rel (0) target = $region55
    $region54: #{basic_cnn_forward.14} parent=1 // pred_region
      _
    $region55: #{basic_cnn_forward.14} parent=1 // pred_fallthru
      _

// kernel: basic_cnn_forward.12
$region0: #{basic_cnn_forward.12}
  #allocation0 [shape = 'u32[]', space=smem, size = 0x4, offset = 0x4, fixed_abs, tag = 'smem constant byte address 0x4 - core index']
  #allocation1 [shape = 'u32[72,128]{1,0:T(1,128)}', space=vmem, size = 0x9000, scoped, tag = 'internal scratch']
  %s0 = inlined_call_operand.vmem [shape: f32[2,1,512], index: 0, kind: input, shape index: {}]
  %s1 = inlined_call_operand.vmem [shape: f32[2,512], index: 1, kind: output, shape index: {}]
  %s2 = sld [smem:[#allocation0]]
  $region14: #{basic_cnn_forward.12} parent=0
    _
  %s4 = ssub.s32 1, %s2
  %s5 = scalar_select 0, %s4, %s2
  // Predicated region
  $region2: #{basic_cnn_forward.12} parent=0 // pred_check
    _
  $region3: #{basic_cnn_forward.12} parent=0 // pred_check_branch
    %7 = sbr.rel (0) target = $region5
  $region4: #{basic_cnn_forward.12} parent=0 // pred_region
    _
  $region5: #{basic_cnn_forward.12} parent=0 // pred_fallthru
    _
  %v8 = vld [vmem:[%s0] sm:$0xf]
  %v9 = vld [vmem:[%s0 + $0x4] sm:$0xf]
  %12 = vst [vmem:[#allocation1] ss:$2 sm:$0xff] %v8
  %s13 = scalar_lea.vmem [#allocation1], 1
  %14 = vst [vmem:[%s13] ss:$2 sm:$0xff] %v9
  %v15 = vld [vmem:[#allocation1] sm:$0xff]
  %17 = vst [vmem:[%s1] sm:$0xff] %v15
  // Predicated region
  $region6: #{basic_cnn_forward.12} parent=0 // pred_check
    _
  $region7: #{basic_cnn_forward.12} parent=0 // pred_check_branch
    %19 = sbr.rel (0) target = $region9
  $region8: #{basic_cnn_forward.12} parent=0 // pred_region
    _
  $region9: #{basic_cnn_forward.12} parent=0 // pred_fallthru
    _
  // Predicated region
  $region10: #{basic_cnn_forward.12} parent=0 // pred_check
    _
  $region11: #{basic_cnn_forward.12} parent=0 // pred_check_branch
    %21 = sbr.rel (0) target = $region13
  $region12: #{basic_cnn_forward.12} parent=0 // pred_region
    _
  $region13: #{basic_cnn_forward.12} parent=0 // pred_fallthru
    _

// kernel: basic_cnn_forward.11
$region0: #{basic_cnn_forward.11}
  #allocation0 [shape = 'u32[]', space=smem, size = 0x4, offset = 0x4, fixed_abs, tag = 'smem constant byte address 0x4 - core index']
  #allocation1 [shape = 'u32[72,128]{1,0:T(1,128)}', space=vmem, size = 0x9000, scoped, tag = 'internal scratch']
  %s0 = inlined_call_operand.vmem [shape: f32[2,2304], index: 0, kind: input, shape index: {}]
  %s1 = inlined_call_operand.vmem [shape: f32[2304,512], index: 1, kind: input, shape index: {}]
  %s2 = inlined_call_operand.vmem [shape: f32[1,512], index: 2, kind: input, shape index: {}]
  %s3 = inlined_call_operand.vmem [shape: f32[1,512], index: 3, kind: input, shape index: {}]
  %s4 = inlined_call_operand.vmem [shape: f32[2,512], index: 4, kind: output, shape index: {}]
  %s5 = sld [smem:[#allocation0]]
  $region26: #{basic_cnn_forward.11} parent=0
    _
  %s7 = ssub.s32 1, %s5
  %s8 = scalar_select 0, %s7, %s5
  // Predicated region
  $region2: #{basic_cnn_forward.11} parent=0 // pred_check
    _
  $region3: #{basic_cnn_forward.11} parent=0 // pred_check_branch
    %10 = sbr.rel (0) target = $region5
  $region4: #{basic_cnn_forward.11} parent=0 // pred_region
    _
  $region5: #{basic_cnn_forward.11} parent=0 // pred_fallthru
    _
  // Predicated region
  $region6: #{basic_cnn_forward.11} parent=0 // pred_check
    _
  $region7: #{basic_cnn_forward.11} parent=0 // pred_check_branch
    %12 = sbr.rel (0) target = $region9
  $region8: #{basic_cnn_forward.11} parent=0 // pred_region
    _
  $region9: #{basic_cnn_forward.11} parent=0 // pred_fallthru
    _
  // Predicated region
  $region10: #{basic_cnn_forward.11} parent=0 // pred_check
    _
  $region11: #{basic_cnn_forward.11} parent=0 // pred_check_branch
    %14 = sbr.rel (0) target = $region13
  $region12: #{basic_cnn_forward.11} parent=0 // pred_region
    _
  $region13: #{basic_cnn_forward.11} parent=0 // pred_fallthru
    _
  // Predicated region
  $region14: #{basic_cnn_forward.11} parent=0 // pred_check
    _
  $region15: #{basic_cnn_forward.11} parent=0 // pred_check_branch
    %16 = sbr.rel (0) target = $region17
  $region16: #{basic_cnn_forward.11} parent=0 // pred_region
    _
  $region17: #{basic_cnn_forward.11} parent=0 // pred_fallthru
    _
  %v17 = vld [vmem:[%s0] sm:$0xff]
  %v18 = vld [vmem:[%s0 + $0x8] sm:$0xff]
  %v19 = vld [vmem:[%s0 + $0x10] sm:$0xff]
  %v20 = vld [vmem:[%s0 + $0x18] sm:$0xff]
  %v21 = vld [vmem:[%s0 + $0x20] sm:$0xf]
  %v22 = vld [vmem:[%s1] sm:$0xff]
  %v23 = vld [vmem:[%s1 + $0x8] sm:$0xff]
  %v24 = vld [vmem:[%s1 + $0x10] sm:$0xff]
  %v25 = vld [vmem:[%s1 + $0x18] sm:$0xff]
  %v26 = vld [vmem:[%s1 + $0x20] sm:$0xff]
  %v27 = vld [vmem:[%s1 + $0x28] sm:$0xff]
  %v28 = vld [vmem:[%s1 + $0x30] sm:$0xff]
  %v29 = vld [vmem:[%s1 + $0x38] sm:$0xff]
  %v30 = vld [vmem:[%s1 + $0x40] sm:$0xff]
  %v31 = vld [vmem:[%s1 + $0x48] sm:$0xff]
  %v32 = vld [vmem:[%s1 + $0x50] sm:$0xff]
  %v33 = vld [vmem:[%s1 + $0x58] sm:$0xff]
  %v34 = vld [vmem:[%s1 + $0x60] sm:$0xff]
  %v35 = vld [vmem:[%s1 + $0x68] sm:$0xff]
  %v36 = vld [vmem:[%s1 + $0x70] sm:$0xff]
  %v37 = vld [vmem:[%s1 + $0x78] sm:$0xff]
  %v38 = vld [vmem:[%s1 + $0x80] sm:$0xff]
  %v39 = vld [vmem:[%s1 + $0x88] sm:$0xff]
  %v40 = vld [vmem:[%s1 + $0x90] sm:$0xff]
  %v41 = vld [vmem:[%s1 + $0x98] sm:$0xff]
  %v42 = vld [vmem:[%s1 + $0xa0] sm:$0xff]
  %v43 = vld [vmem:[%s1 + $0xa8] sm:$0xff]
  %v44 = vld [vmem:[%s1 + $0xb0] sm:$0xff]
  %v45 = vld [vmem:[%s1 + $0xb8] sm:$0xff]
  %v46 = vld [vmem:[%s1 + $0xc0] sm:$0xff]
  %v47 = vld [vmem:[%s1 + $0xc8] sm:$0xff]
  %v48 = vld [vmem:[%s1 + $0xd0] sm:$0xff]
  %v49 = vld [vmem:[%s1 + $0xd8] sm:$0xff]
  %v50 = vld [vmem:[%s1 + $0xe0] sm:$0xff]
  %v51 = vld [vmem:[%s1 + $0xe8] sm:$0xff]
  %v52 = vld [vmem:[%s1 + $0xf0] sm:$0xff]
  %v53 = vld [vmem:[%s1 + $0xf8] sm:$0xff]
  %v54 = vld [vmem:[%s1 + $0x100] sm:$0xff]
  %v55 = vld [vmem:[%s1 + $0x108] sm:$0xff]
  %v56 = vld [vmem:[%s1 + $0x110] sm:$0xff]
  %v57 = vld [vmem:[%s1 + $0x118] sm:$0xff]
  %v58 = vld [vmem:[%s1 + $0x120] sm:$0xff]
  %v59 = vld [vmem:[%s1 + $0x128] sm:$0xff]
  %v60 = vld [vmem:[%s1 + $0x130] sm:$0xff]
  %v61 = vld [vmem:[%s1 + $0x138] sm:$0xff]
  %v62 = vld [vmem:[%s1 + $0x140] sm:$0xff]
  %v63 = vld [vmem:[%s1 + $0x148] sm:$0xff]
  %v64 = vld [vmem:[%s1 + $0x150] sm:$0xff]
  %v65 = vld [vmem:[%s1 + $0x158] sm:$0xff]
  %v66 = vld [vmem:[%s1 + $0x160] sm:$0xff]
  %v67 = vld [vmem:[%s1 + $0x168] sm:$0xff]
  %v68 = vld [vmem:[%s1 + $0x170] sm:$0xff]
  %v69 = vld [vmem:[%s1 + $0x178] sm:$0xff]
  %v70 = vld [vmem:[%s1 + $0x180] sm:$0xff]
  %v71 = vld [vmem:[%s1 + $0x188] sm:$0xff]
  %v72 = vld [vmem:[%s1 + $0x190] sm:$0xff]
  %v73 = vld [vmem:[%s1 + $0x198] sm:$0xff]
  %v74 = vld [vmem:[%s1 + $0x1a0] sm:$0xff]
  %v75 = vld [vmem:[%s1 + $0x1a8] sm:$0xff]
  %v76 = vld [vmem:[%s1 + $0x1b0] sm:$0xff]
  %v77 = vld [vmem:[%s1 + $0x1b8] sm:$0xff]
  %v78 = vld [vmem:[%s1 + $0x1c0] sm:$0xff]
  %v79 = vld [vmem:[%s1 + $0x1c8] sm:$0xff]
  %v80 = vld [vmem:[%s1 + $0x1d0] sm:$0xff]
  %v81 = vld [vmem:[%s1 + $0x1d8] sm:$0xff]
  %v82 = vld [vmem:[%s1 + $0x1e0] sm:$0xff]
  %v83 = vld [vmem:[%s1 + $0x1e8] sm:$0xff]
  %v84 = vld [vmem:[%s1 + $0x1f0] sm:$0xff]
  %v85 = vld [vmem:[%s1 + $0x1f8] sm:$0xff]
  %v86 = vld [vmem:[%s1 + $0x200] sm:$0xff]
  %v87 = vld [vmem:[%s1 + $0x208] sm:$0xff]
  %v88 = vld [vmem:[%s1 + $0x210] sm:$0xff]
  %v89 = vld [vmem:[%s1 + $0x218] sm:$0xff]
  %v90 = vld [vmem:[%s1 + $0x220] sm:$0xff]
  %v91 = vld [vmem:[%s1 + $0x228] sm:$0xff]
  %v92 = vld [vmem:[%s1 + $0x230] sm:$0xff]
  %v93 = vld [vmem:[%s1 + $0x238] sm:$0xff]
  %v94 = vld [vmem:[%s1 + $0x240] sm:$0xff]
  %v95 = vld [vmem:[%s1 + $0x248] sm:$0xff]
  %v96 = vld [vmem:[%s1 + $0x250] sm:$0xff]
  %v97 = vld [vmem:[%s1 + $0x258] sm:$0xff]
  %v98 = vld [vmem:[%s1 + $0x260] sm:$0xff]
  %v99 = vld [vmem:[%s1 + $0x268] sm:$0xff]
  %v100 = vld [vmem:[%s1 + $0x270] sm:$0xff]
  %v101 = vld [vmem:[%s1 + $0x278] sm:$0xff]
  %v102 = vld [vmem:[%s1 + $0x280] sm:$0xff]
  %v103 = vld [vmem:[%s1 + $0x288] sm:$0xff]
  %v104 = vld [vmem:[%s1 + $0x290] sm:$0xff]
  %v105 = vld [vmem:[%s1 + $0x298] sm:$0xff]
  %v106 = vld [vmem:[%s1 + $0x2a0] sm:$0xff]
  %v107 = vld [vmem:[%s1 + $0x2a8] sm:$0xff]
  %v108 = vld [vmem:[%s1 + $0x2b0] sm:$0xff]
  %v109 = vld [vmem:[%s1 + $0x2b8] sm:$0xff]
  %v110 = vld [vmem:[%s1 + $0x2c0] sm:$0xff]
  %v111 = vld [vmem:[%s1 + $0x2c8] sm:$0xff]
  %v112 = vld [vmem:[%s1 + $0x2d0] sm:$0xff]
  %v113 = vld [vmem:[%s1 + $0x2d8] sm:$0xff]
  %v114 = vld [vmem:[%s1 + $0x2e0] sm:$0xff]
  %v115 = vld [vmem:[%s1 + $0x2e8] sm:$0xff]
  %v116 = vld [vmem:[%s1 + $0x2f0] sm:$0xff]
  %v117 = vld [vmem:[%s1 + $0x2f8] sm:$0xff]
  %v118 = vld [vmem:[%s1 + $0x300] sm:$0xff]
  %v119 = vld [vmem:[%s1 + $0x308] sm:$0xff]
  %v120 = vld [vmem:[%s1 + $0x310] sm:$0xff]
  %v121 = vld [vmem:[%s1 + $0x318] sm:$0xff]
  %v122 = vld [vmem:[%s1 + $0x320] sm:$0xff]
  %v123 = vld [vmem:[%s1 + $0x328] sm:$0xff]
  %v124 = vld [vmem:[%s1 + $0x330] sm:$0xff]
  %v125 = vld [vmem:[%s1 + $0x338] sm:$0xff]
  %v126 = vld [vmem:[%s1 + $0x340] sm:$0xff]
  %v127 = vld [vmem:[%s1 + $0x348] sm:$0xff]
  %v128 = vld [vmem:[%s1 + $0x350] sm:$0xff]
  %v129 = vld [vmem:[%s1 + $0x358] sm:$0xff]
  %v130 = vld [vmem:[%s1 + $0x360] sm:$0xff]
  %v131 = vld [vmem:[%s1 + $0x368] sm:$0xff]
  %v132 = vld [vmem:[%s1 + $0x370] sm:$0xff]
  %v133 = vld [vmem:[%s1 + $0x378] sm:$0xff]
  %v134 = vld [vmem:[%s1 + $0x380] sm:$0xff]
  %v135 = vld [vmem:[%s1 + $0x388] sm:$0xff]
  %v136 = vld [vmem:[%s1 + $0x390] sm:$0xff]
  %v137 = vld [vmem:[%s1 + $0x398] sm:$0xff]
  %v138 = vld [vmem:[%s1 + $0x3a0] sm:$0xff]
  %v139 = vld [vmem:[%s1 + $0x3a8] sm:$0xff]
  %v140 = vld [vmem:[%s1 + $0x3b0] sm:$0xff]
  %v141 = vld [vmem:[%s1 + $0x3b8] sm:$0xff]
  %v142 = vld [vmem:[%s1 + $0x3c0] sm:$0xff]
  %v143 = vld [vmem:[%s1 + $0x3c8] sm:$0xff]
  %v144 = vld [vmem:[%s1 + $0x3d0] sm:$0xff]
  %v145 = vld [vmem:[%s1 + $0x3d8] sm:$0xff]
  %v146 = vld [vmem:[%s1 + $0x3e0] sm:$0xff]
  %v147 = vld [vmem:[%s1 + $0x3e8] sm:$0xff]
  %v148 = vld [vmem:[%s1 + $0x3f0] sm:$0xff]
  %v149 = vld [vmem:[%s1 + $0x3f8] sm:$0xff]
  %v150 = vld [vmem:[%s1 + $0x400] sm:$0xff]
  %v151 = vld [vmem:[%s1 + $0x408] sm:$0xff]
  %v152 = vld [vmem:[%s1 + $0x410] sm:$0xff]
  %v153 = vld [vmem:[%s1 + $0x418] sm:$0xff]
  %v154 = vld [vmem:[%s1 + $0x420] sm:$0xff]
  %v155 = vld [vmem:[%s1 + $0x428] sm:$0xff]
  %v156 = vld [vmem:[%s1 + $0x430] sm:$0xff]
  %v157 = vld [vmem:[%s1 + $0x438] sm:$0xff]
  %v158 = vld [vmem:[%s1 + $0x440] sm:$0xff]
  %v159 = vld [vmem:[%s1 + $0x448] sm:$0xff]
  %v160 = vld [vmem:[%s1 + $0x450] sm:$0xff]
  %v161 = vld [vmem:[%s1 + $0x458] sm:$0xff]
  %v162 = vld [vmem:[%s1 + $0x460] sm:$0xff]
  %v163 = vld [vmem:[%s1 + $0x468] sm:$0xff]
  %v164 = vld [vmem:[%s1 + $0x470] sm:$0xff]
  %v165 = vld [vmem:[%s1 + $0x478] sm:$0xff]
  %v166 = vld [vmem:[%s1 + $0x480] sm:$0xff]
  %v167 = vld [vmem:[%s1 + $0x488] sm:$0xff]
  %v168 = vld [vmem:[%s1 + $0x490] sm:$0xff]
  %v169 = vld [vmem:[%s1 + $0x498] sm:$0xff]
  %v170 = vld [vmem:[%s1 + $0x4a0] sm:$0xff]
  %v171 = vld [vmem:[%s1 + $0x4a8] sm:$0xff]
  %v172 = vld [vmem:[%s1 + $0x4b0] sm:$0xff]
  %v173 = vld [vmem:[%s1 + $0x4b8] sm:$0xff]
  %v174 = vld [vmem:[%s1 + $0x4c0] sm:$0xff]
  %v175 = vld [vmem:[%s1 + $0x4c8] sm:$0xff]
  %v176 = vld [vmem:[%s1 + $0x4d0] sm:$0xff]
  %v177 = vld [vmem:[%s1 + $0x4d8] sm:$0xff]
  %v178 = vld [vmem:[%s1 + $0x4e0] sm:$0xff]
  %v179 = vld [vmem:[%s1 + $0x4e8] sm:$0xff]
  %v180 = vld [vmem:[%s1 + $0x4f0] sm:$0xff]
  %v181 = vld [vmem:[%s1 + $0x4f8] sm:$0xff]
  %v182 = vld [vmem:[%s1 + $0x500] sm:$0xff]
  %v183 = vld [vmem:[%s1 + $0x508] sm:$0xff]
  %v184 = vld [vmem:[%s1 + $0x510] sm:$0xff]
  %v185 = vld [vmem:[%s1 + $0x518] sm:$0xff]
  %v186 = vld [vmem:[%s1 + $0x520] sm:$0xff]
  %v187 = vld [vmem:[%s1 + $0x528] sm:$0xff]
  %v188 = vld [vmem:[%s1 + $0x530] sm:$0xff]
  %v189 = vld [vmem:[%s1 + $0x538] sm:$0xff]
  %v190 = vld [vmem:[%s1 + $0x540] sm:$0xff]
  %v191 = vld [vmem:[%s1 + $0x548] sm:$0xff]
  %v192 = vld [vmem:[%s1 + $0x550] sm:$0xff]
  %v193 = vld [vmem:[%s1 + $0x558] sm:$0xff]
  %v194 = vld [vmem:[%s1 + $0x560] sm:$0xff]
  %v195 = vld [vmem:[%s1 + $0x568] sm:$0xff]
  %v196 = vld [vmem:[%s1 + $0x570] sm:$0xff]
  %v197 = vld [vmem:[%s1 + $0x578] sm:$0xff]
  %v198 = vld [vmem:[%s1 + $0x580] sm:$0xff]
  %v199 = vld [vmem:[%s1 + $0x588] sm:$0xff]
  %v200 = vld [vmem:[%s1 + $0x590] sm:$0xff]
  %v201 = vld [vmem:[%s1 + $0x598] sm:$0xff]
  %v202 = vld [vmem:[%s1 + $0x5a0] sm:$0xff]
  %v203 = vld [vmem:[%s1 + $0x5a8] sm:$0xff]
  %v204 = vld [vmem:[%s1 + $0x5b0] sm:$0xff]
  %v205 = vld [vmem:[%s1 + $0x5b8] sm:$0xff]
  %v206 = vld [vmem:[%s1 + $0x5c0] sm:$0xff]
  %v207 = vld [vmem:[%s1 + $0x5c8] sm:$0xff]
  %v208 = vld [vmem:[%s1 + $0x5d0] sm:$0xff]
  %v209 = vld [vmem:[%s1 + $0x5d8] sm:$0xff]
  %v210 = vld [vmem:[%s1 + $0x5e0] sm:$0xff]
  %v211 = vld [vmem:[%s1 + $0x5e8] sm:$0xff]
  %v212 = vld [vmem:[%s1 + $0x5f0] sm:$0xff]
  %v213 = vld [vmem:[%s1 + $0x5f8] sm:$0xff]
  %v214 = vld [vmem:[%s1 + $0x600] sm:$0xff]
  %v215 = vld [vmem:[%s1 + $0x608] sm:$0xff]
  %v216 = vld [vmem:[%s1 + $0x610] sm:$0xff]
  %v217 = vld [vmem:[%s1 + $0x618] sm:$0xff]
  %v218 = vld [vmem:[%s1 + $0x620] sm:$0xff]
  %v219 = vld [vmem:[%s1 + $0x628] sm:$0xff]
  %v220 = vld [vmem:[%s1 + $0x630] sm:$0xff]
  %v221 = vld [vmem:[%s1 + $0x638] sm:$0xff]
  %v222 = vld [vmem:[%s1 + $0x640] sm:$0xff]
  %v223 = vld [vmem:[%s1 + $0x648] sm:$0xff]
  %v224 = vld [vmem:[%s1 + $0x650] sm:$0xff]
  %v225 = vld [vmem:[%s1 + $0x658] sm:$0xff]
  %v226 = vld [vmem:[%s1 + $0x660] sm:$0xff]
  %v227 = vld [vmem:[%s1 + $0x668] sm:$0xff]
  %v228 = vld [vmem:[%s1 + $0x670] sm:$0xff]
  %v229 = vld [vmem:[%s1 + $0x678] sm:$0xff]
  %v230 = vld [vmem:[%s1 + $0x680] sm:$0xff]
  %v231 = vld [vmem:[%s1 + $0x688] sm:$0xff]
  %v232 = vld [vmem:[%s1 + $0x690] sm:$0xff]
  %v233 = vld [vmem:[%s1 + $0x698] sm:$0xff]
  %v234 = vld [vmem:[%s1 + $0x6a0] sm:$0xff]
  %v235 = vld [vmem:[%s1 + $0x6a8] sm:$0xff]
  %v236 = vld [vmem:[%s1 + $0x6b0] sm:$0xff]
  %v237 = vld [vmem:[%s1 + $0x6b8] sm:$0xff]
  %v238 = vld [vmem:[%s1 + $0x6c0] sm:$0xff]
  %v239 = vld [vmem:[%s1 + $0x6c8] sm:$0xff]
  %v240 = vld [vmem:[%s1 + $0x6d0] sm:$0xff]
  %v241 = vld [vmem:[%s1 + $0x6d8] sm:$0xff]
  %v242 = vld [vmem:[%s1 + $0x6e0] sm:$0xff]
  %v243 = vld [vmem:[%s1 + $0x6e8] sm:$0xff]
  %v244 = vld [vmem:[%s1 + $0x6f0] sm:$0xff]
  %v245 = vld [vmem:[%s1 + $0x6f8] sm:$0xff]
  %v246 = vld [vmem:[%s1 + $0x700] sm:$0xff]
  %v247 = vld [vmem:[%s1 + $0x708] sm:$0xff]
  %v248 = vld [vmem:[%s1 + $0x710] sm:$0xff]
  %v249 = vld [vmem:[%s1 + $0x718] sm:$0xff]
  %v250 = vld [vmem:[%s1 + $0x720] sm:$0xff]
  %v251 = vld [vmem:[%s1 + $0x728] sm:$0xff]
  %v252 = vld [vmem:[%s1 + $0x730] sm:$0xff]
  %v253 = vld [vmem:[%s1 + $0x738] sm:$0xff]
  %v254 = vld [vmem:[%s1 + $0x740] sm:$0xff]
  %v255 = vld [vmem:[%s1 + $0x748] sm:$0xff]
  %v256 = vld [vmem:[%s1 + $0x750] sm:$0xff]
  %v257 = vld [vmem:[%s1 + $0x758] sm:$0xff]
  %v258 = vld [vmem:[%s1 + $0x760] sm:$0xff]
  %v259 = vld [vmem:[%s1 + $0x768] sm:$0xff]
  %v260 = vld [vmem:[%s1 + $0x770] sm:$0xff]
  %v261 = vld [vmem:[%s1 + $0x778] sm:$0xff]
  %v262 = vld [vmem:[%s1 + $0x780] sm:$0xff]
  %v263 = vld [vmem:[%s1 + $0x788] sm:$0xff]
  %v264 = vld [vmem:[%s1 + $0x790] sm:$0xff]
  %v265 = vld [vmem:[%s1 + $0x798] sm:$0xff]
  %v266 = vld [vmem:[%s1 + $0x7a0] sm:$0xff]
  %v267 = vld [vmem:[%s1 + $0x7a8] sm:$0xff]
  %v268 = vld [vmem:[%s1 + $0x7b0] sm:$0xff]
  %v269 = vld [vmem:[%s1 + $0x7b8] sm:$0xff]
  %v270 = vld [vmem:[%s1 + $0x7c0] sm:$0xff]
  %v271 = vld [vmem:[%s1 + $0x7c8] sm:$0xff]
  %v272 = vld [vmem:[%s1 + $0x7d0] sm:$0xff]
  %v273 = vld [vmem:[%s1 + $0x7d8] sm:$0xff]
  %v274 = vld [vmem:[%s1 + $0x7e0] sm:$0xff]
  %v275 = vld [vmem:[%s1 + $0x7e8] sm:$0xff]
  %v276 = vld [vmem:[%s1 + $0x7f0] sm:$0xff]
  %v277 = vld [vmem:[%s1 + $0x7f8] sm:$0xff]
  %v278 = vld [vmem:[%s1 + $0x800] sm:$0xff]
  %v279 = vld [vmem:[%s1 + $0x808] sm:$0xff]
  %v280 = vld [vmem:[%s1 + $0x810] sm:$0xff]
  %v281 = vld [vmem:[%s1 + $0x818] sm:$0xff]
  %v282 = vld [vmem:[%s1 + $0x820] sm:$0xff]
  %v283 = vld [vmem:[%s1 + $0x828] sm:$0xff]
  %v284 = vld [vmem:[%s1 + $0x830] sm:$0xff]
  %v285 = vld [vmem:[%s1 + $0x838] sm:$0xff]
  %v286 = vld [vmem:[%s1 + $0x840] sm:$0xff]
  %v287 = vld [vmem:[%s1 + $0x848] sm:$0xff]
  %v288 = vld [vmem:[%s1 + $0x850] sm:$0xff]
  %v289 = vld [vmem:[%s1 + $0x858] sm:$0xff]
  %v290 = vld [vmem:[%s1 + $0x860] sm:$0xff]
  %v291 = vld [vmem:[%s1 + $0x868] sm:$0xff]
  %v292 = vld [vmem:[%s1 + $0x870] sm:$0xff]
  %v293 = vld [vmem:[%s1 + $0x878] sm:$0xff]
  %v294 = vld [vmem:[%s1 + $0x880] sm:$0xff]
  %v295 = vld [vmem:[%s1 + $0x888] sm:$0xff]
  %v296 = vld [vmem:[%s1 + $0x890] sm:$0xff]
  %v297 = vld [vmem:[%s1 + $0x898] sm:$0xff]
  %v298 = vld [vmem:[%s1 + $0x8a0] sm:$0xff]
  %v299 = vld [vmem:[%s1 + $0x8a8] sm:$0xff]
  %v300 = vld [vmem:[%s1 + $0x8b0] sm:$0xff]
  %v301 = vld [vmem:[%s1 + $0x8b8] sm:$0xff]
  %v302 = vld [vmem:[%s1 + $0x8c0] sm:$0xff]
  %v303 = vld [vmem:[%s1 + $0x8c8] sm:$0xff]
  %v304 = vld [vmem:[%s1 + $0x8d0] sm:$0xff]
  %v305 = vld [vmem:[%s1 + $0x8d8] sm:$0xff]
  %v306 = vld [vmem:[%s1 + $0x8e0] sm:$0xff]
  %v307 = vld [vmem:[%s1 + $0x8e8] sm:$0xff]
  %v308 = vld [vmem:[%s1 + $0x8f0] sm:$0xff]
  %v309 = vld [vmem:[%s1 + $0x8f8] sm:$0xff]
  %v310 = vld [vmem:[%s1 + $0x900] sm:$0xff]
  %v311 = vld [vmem:[%s1 + $0x908] sm:$0xff]
  %v312 = vld [vmem:[%s1 + $0x910] sm:$0xff]
  %v313 = vld [vmem:[%s1 + $0x918] sm:$0xff]
  %v314 = vld [vmem:[%s1 + $0x920] sm:$0xff]
  %v315 = vld [vmem:[%s1 + $0x928] sm:$0xff]
  %v316 = vld [vmem:[%s1 + $0x930] sm:$0xff]
  %v317 = vld [vmem:[%s1 + $0x938] sm:$0xff]
  %v318 = vld [vmem:[%s1 + $0x940] sm:$0xff]
  %v319 = vld [vmem:[%s1 + $0x948] sm:$0xff]
  %v320 = vld [vmem:[%s1 + $0x950] sm:$0xff]
  %v321 = vld [vmem:[%s1 + $0x958] sm:$0xff]
  %v322 = vld [vmem:[%s1 + $0x960] sm:$0xff]
  %v323 = vld [vmem:[%s1 + $0x968] sm:$0xff]
  %v324 = vld [vmem:[%s1 + $0x970] sm:$0xff]
  %v325 = vld [vmem:[%s1 + $0x978] sm:$0xff]
  %v326 = vld [vmem:[%s1 + $0x980] sm:$0xff]
  %v327 = vld [vmem:[%s1 + $0x988] sm:$0xff]
  %v328 = vld [vmem:[%s1 + $0x990] sm:$0xff]
  %v329 = vld [vmem:[%s1 + $0x998] sm:$0xff]
  %v330 = vld [vmem:[%s1 + $0x9a0] sm:$0xff]
  %v331 = vld [vmem:[%s1 + $0x9a8] sm:$0xff]
  %v332 = vld [vmem:[%s1 + $0x9b0] sm:$0xff]
  %v333 = vld [vmem:[%s1 + $0x9b8] sm:$0xff]
  %v334 = vld [vmem:[%s1 + $0x9c0] sm:$0xff]
  %v335 = vld [vmem:[%s1 + $0x9c8] sm:$0xff]
  %v336 = vld [vmem:[%s1 + $0x9d0] sm:$0xff]
  %v337 = vld [vmem:[%s1 + $0x9d8] sm:$0xff]
  %v338 = vld [vmem:[%s1 + $0x9e0] sm:$0xff]
  %v339 = vld [vmem:[%s1 + $0x9e8] sm:$0xff]
  %v340 = vld [vmem:[%s1 + $0x9f0] sm:$0xff]
  %v341 = vld [vmem:[%s1 + $0x9f8] sm:$0xff]
  %v342 = vld [vmem:[%s1 + $0xa00] sm:$0xff]
  %v343 = vld [vmem:[%s1 + $0xa08] sm:$0xff]
  %v344 = vld [vmem:[%s1 + $0xa10] sm:$0xff]
  %v345 = vld [vmem:[%s1 + $0xa18] sm:$0xff]
  %v346 = vld [vmem:[%s1 + $0xa20] sm:$0xff]
  %v347 = vld [vmem:[%s1 + $0xa28] sm:$0xff]
  %v348 = vld [vmem:[%s1 + $0xa30] sm:$0xff]
  %v349 = vld [vmem:[%s1 + $0xa38] sm:$0xff]
  %v350 = vld [vmem:[%s1 + $0xa40] sm:$0xff]
  %v351 = vld [vmem:[%s1 + $0xa48] sm:$0xff]
  %v352 = vld [vmem:[%s1 + $0xa50] sm:$0xff]
  %v353 = vld [vmem:[%s1 + $0xa58] sm:$0xff]
  %v354 = vld [vmem:[%s1 + $0xa60] sm:$0xff]
  %v355 = vld [vmem:[%s1 + $0xa68] sm:$0xff]
  %v356 = vld [vmem:[%s1 + $0xa70] sm:$0xff]
  %v357 = vld [vmem:[%s1 + $0xa78] sm:$0xff]
  %v358 = vld [vmem:[%s1 + $0xa80] sm:$0xff]
  %v359 = vld [vmem:[%s1 + $0xa88] sm:$0xff]
  %v360 = vld [vmem:[%s1 + $0xa90] sm:$0xff]
  %v361 = vld [vmem:[%s1 + $0xa98] sm:$0xff]
  %v362 = vld [vmem:[%s1 + $0xaa0] sm:$0xff]
  %v363 = vld [vmem:[%s1 + $0xaa8] sm:$0xff]
  %v364 = vld [vmem:[%s1 + $0xab0] sm:$0xff]
  %v365 = vld [vmem:[%s1 + $0xab8] sm:$0xff]
  %v366 = vld [vmem:[%s1 + $0xac0] sm:$0xff]
  %v367 = vld [vmem:[%s1 + $0xac8] sm:$0xff]
  %v368 = vld [vmem:[%s1 + $0xad0] sm:$0xff]
  %v369 = vld [vmem:[%s1 + $0xad8] sm:$0xff]
  %v370 = vld [vmem:[%s1 + $0xae0] sm:$0xff]
  %v371 = vld [vmem:[%s1 + $0xae8] sm:$0xff]
  %v372 = vld [vmem:[%s1 + $0xaf0] sm:$0xff]
  %v373 = vld [vmem:[%s1 + $0xaf8] sm:$0xff]
  %v374 = vld [vmem:[%s1 + $0xb00] sm:$0xff]
  %v375 = vld [vmem:[%s1 + $0xb08] sm:$0xff]
  %v376 = vld [vmem:[%s1 + $0xb10] sm:$0xff]
  %v377 = vld [vmem:[%s1 + $0xb18] sm:$0xff]
  %v378 = vld [vmem:[%s1 + $0xb20] sm:$0xff]
  %v379 = vld [vmem:[%s1 + $0xb28] sm:$0xff]
  %v380 = vld [vmem:[%s1 + $0xb30] sm:$0xff]
  %v381 = vld [vmem:[%s1 + $0xb38] sm:$0xff]
  %v382 = vld [vmem:[%s1 + $0xb40] sm:$0xff]
  %v383 = vld [vmem:[%s1 + $0xb48] sm:$0xff]
  %v384 = vld [vmem:[%s1 + $0xb50] sm:$0xff]
  %v385 = vld [vmem:[%s1 + $0xb58] sm:$0xff]
  %v386 = vld [vmem:[%s1 + $0xb60] sm:$0xff]
  %v387 = vld [vmem:[%s1 + $0xb68] sm:$0xff]
  %v388 = vld [vmem:[%s1 + $0xb70] sm:$0xff]
  %v389 = vld [vmem:[%s1 + $0xb78] sm:$0xff]
  %v390 = vld [vmem:[%s1 + $0xb80] sm:$0xff]
  %v391 = vld [vmem:[%s1 + $0xb88] sm:$0xff]
  %v392 = vld [vmem:[%s1 + $0xb90] sm:$0xff]
  %v393 = vld [vmem:[%s1 + $0xb98] sm:$0xff]
  %v394 = vld [vmem:[%s1 + $0xba0] sm:$0xff]
  %v395 = vld [vmem:[%s1 + $0xba8] sm:$0xff]
  %v396 = vld [vmem:[%s1 + $0xbb0] sm:$0xff]
  %v397 = vld [vmem:[%s1 + $0xbb8] sm:$0xff]
  %v398 = vld [vmem:[%s1 + $0xbc0] sm:$0xff]
  %v399 = vld [vmem:[%s1 + $0xbc8] sm:$0xff]
  %v400 = vld [vmem:[%s1 + $0xbd0] sm:$0xff]
  %v401 = vld [vmem:[%s1 + $0xbd8] sm:$0xff]
  %v402 = vld [vmem:[%s1 + $0xbe0] sm:$0xff]
  %v403 = vld [vmem:[%s1 + $0xbe8] sm:$0xff]
  %v404 = vld [vmem:[%s1 + $0xbf0] sm:$0xff]
  %v405 = vld [vmem:[%s1 + $0xbf8] sm:$0xff]
  %v406 = vld [vmem:[%s1 + $0xc00] sm:$0xff]
  %v407 = vld [vmem:[%s1 + $0xc08] sm:$0xff]
  %v408 = vld [vmem:[%s1 + $0xc10] sm:$0xff]
  %v409 = vld [vmem:[%s1 + $0xc18] sm:$0xff]
  %v410 = vld [vmem:[%s1 + $0xc20] sm:$0xff]
  %v411 = vld [vmem:[%s1 + $0xc28] sm:$0xff]
  %v412 = vld [vmem:[%s1 + $0xc30] sm:$0xff]
  %v413 = vld [vmem:[%s1 + $0xc38] sm:$0xff]
  %v414 = vld [vmem:[%s1 + $0xc40] sm:$0xff]
  %v415 = vld [vmem:[%s1 + $0xc48] sm:$0xff]
  %v416 = vld [vmem:[%s1 + $0xc50] sm:$0xff]
  %v417 = vld [vmem:[%s1 + $0xc58] sm:$0xff]
  %v418 = vld [vmem:[%s1 + $0xc60] sm:$0xff]
  %v419 = vld [vmem:[%s1 + $0xc68] sm:$0xff]
  %v420 = vld [vmem:[%s1 + $0xc70] sm:$0xff]
  %v421 = vld [vmem:[%s1 + $0xc78] sm:$0xff]
  %v422 = vld [vmem:[%s1 + $0xc80] sm:$0xff]
  %v423 = vld [vmem:[%s1 + $0xc88] sm:$0xff]
  %v424 = vld [vmem:[%s1 + $0xc90] sm:$0xff]
  %v425 = vld [vmem:[%s1 + $0xc98] sm:$0xff]
  %v426 = vld [vmem:[%s1 + $0xca0] sm:$0xff]
  %v427 = vld [vmem:[%s1 + $0xca8] sm:$0xff]
  %v428 = vld [vmem:[%s1 + $0xcb0] sm:$0xff]
  %v429 = vld [vmem:[%s1 + $0xcb8] sm:$0xff]
  %v430 = vld [vmem:[%s1 + $0xcc0] sm:$0xff]
  %v431 = vld [vmem:[%s1 + $0xcc8] sm:$0xff]
  %v432 = vld [vmem:[%s1 + $0xcd0] sm:$0xff]
  %v433 = vld [vmem:[%s1 + $0xcd8] sm:$0xff]
  %v434 = vld [vmem:[%s1 + $0xce0] sm:$0xff]
  %v435 = vld [vmem:[%s1 + $0xce8] sm:$0xff]
  %v436 = vld [vmem:[%s1 + $0xcf0] sm:$0xff]
  %v437 = vld [vmem:[%s1 + $0xcf8] sm:$0xff]
  %v438 = vld [vmem:[%s1 + $0xd00] sm:$0xff]
  %v439 = vld [vmem:[%s1 + $0xd08] sm:$0xff]
  %v440 = vld [vmem:[%s1 + $0xd10] sm:$0xff]
  %v441 = vld [vmem:[%s1 + $0xd18] sm:$0xff]
  %v442 = vld [vmem:[%s1 + $0xd20] sm:$0xff]
  %v443 = vld [vmem:[%s1 + $0xd28] sm:$0xff]
  %v444 = vld [vmem:[%s1 + $0xd30] sm:$0xff]
  %v445 = vld [vmem:[%s1 + $0xd38] sm:$0xff]
  %v446 = vld [vmem:[%s1 + $0xd40] sm:$0xff]
  %v447 = vld [vmem:[%s1 + $0xd48] sm:$0xff]
  %v448 = vld [vmem:[%s1 + $0xd50] sm:$0xff]
  %v449 = vld [vmem:[%s1 + $0xd58] sm:$0xff]
  %v450 = vld [vmem:[%s1 + $0xd60] sm:$0xff]
  %v451 = vld [vmem:[%s1 + $0xd68] sm:$0xff]
  %v452 = vld [vmem:[%s1 + $0xd70] sm:$0xff]
  %v453 = vld [vmem:[%s1 + $0xd78] sm:$0xff]
  %v454 = vld [vmem:[%s1 + $0xd80] sm:$0xff]
  %v455 = vld [vmem:[%s1 + $0xd88] sm:$0xff]
  %v456 = vld [vmem:[%s1 + $0xd90] sm:$0xff]
  %v457 = vld [vmem:[%s1 + $0xd98] sm:$0xff]
  %v458 = vld [vmem:[%s1 + $0xda0] sm:$0xff]
  %v459 = vld [vmem:[%s1 + $0xda8] sm:$0xff]
  %v460 = vld [vmem:[%s1 + $0xdb0] sm:$0xff]
  %v461 = vld [vmem:[%s1 + $0xdb8] sm:$0xff]
  %v462 = vld [vmem:[%s1 + $0xdc0] sm:$0xff]
  %v463 = vld [vmem:[%s1 + $0xdc8] sm:$0xff]
  %v464 = vld [vmem:[%s1 + $0xdd0] sm:$0xff]
  %v465 = vld [vmem:[%s1 + $0xdd8] sm:$0xff]
  %v466 = vld [vmem:[%s1 + $0xde0] sm:$0xff]
  %v467 = vld [vmem:[%s1 + $0xde8] sm:$0xff]
  %v468 = vld [vmem:[%s1 + $0xdf0] sm:$0xff]
  %v469 = vld [vmem:[%s1 + $0xdf8] sm:$0xff]
  %v470 = vld [vmem:[%s1 + $0xe00] sm:$0xff]
  %v471 = vld [vmem:[%s1 + $0xe08] sm:$0xff]
  %v472 = vld [vmem:[%s1 + $0xe10] sm:$0xff]
  %v473 = vld [vmem:[%s1 + $0xe18] sm:$0xff]
  %v474 = vld [vmem:[%s1 + $0xe20] sm:$0xff]
  %v475 = vld [vmem:[%s1 + $0xe28] sm:$0xff]
  %v476 = vld [vmem:[%s1 + $0xe30] sm:$0xff]
  %v477 = vld [vmem:[%s1 + $0xe38] sm:$0xff]
  %v478 = vld [vmem:[%s1 + $0xe40] sm:$0xff]
  %v479 = vld [vmem:[%s1 + $0xe48] sm:$0xff]
  %v480 = vld [vmem:[%s1 + $0xe50] sm:$0xff]
  %v481 = vld [vmem:[%s1 + $0xe58] sm:$0xff]
  %v482 = vld [vmem:[%s1 + $0xe60] sm:$0xff]
  %v483 = vld [vmem:[%s1 + $0xe68] sm:$0xff]
  %v484 = vld [vmem:[%s1 + $0xe70] sm:$0xff]
  %v485 = vld [vmem:[%s1 + $0xe78] sm:$0xff]
  %v486 = vld [vmem:[%s1 + $0xe80] sm:$0xff]
  %v487 = vld [vmem:[%s1 + $0xe88] sm:$0xff]
  %v488 = vld [vmem:[%s1 + $0xe90] sm:$0xff]
  %v489 = vld [vmem:[%s1 + $0xe98] sm:$0xff]
  %v490 = vld [vmem:[%s1 + $0xea0] sm:$0xff]
  %v491 = vld [vmem:[%s1 + $0xea8] sm:$0xff]
  %v492 = vld [vmem:[%s1 + $0xeb0] sm:$0xff]
  %v493 = vld [vmem:[%s1 + $0xeb8] sm:$0xff]
  %v494 = vld [vmem:[%s1 + $0xec0] sm:$0xff]
  %v495 = vld [vmem:[%s1 + $0xec8] sm:$0xff]
  %v496 = vld [vmem:[%s1 + $0xed0] sm:$0xff]
  %v497 = vld [vmem:[%s1 + $0xed8] sm:$0xff]
  %v498 = vld [vmem:[%s1 + $0xee0] sm:$0xff]
  %v499 = vld [vmem:[%s1 + $0xee8] sm:$0xff]
  %v500 = vld [vmem:[%s1 + $0xef0] sm:$0xff]
  %v501 = vld [vmem:[%s1 + $0xef8] sm:$0xff]
  %v502 = vld [vmem:[%s1 + $0xf00] sm:$0xff]
  %v503 = vld [vmem:[%s1 + $0xf08] sm:$0xff]
  %v504 = vld [vmem:[%s1 + $0xf10] sm:$0xff]
  %v505 = vld [vmem:[%s1 + $0xf18] sm:$0xff]
  %v506 = vld [vmem:[%s1 + $0xf20] sm:$0xff]
  %v507 = vld [vmem:[%s1 + $0xf28] sm:$0xff]
  %v508 = vld [vmem:[%s1 + $0xf30] sm:$0xff]
  %v509 = vld [vmem:[%s1 + $0xf38] sm:$0xff]
  %v510 = vld [vmem:[%s1 + $0xf40] sm:$0xff]
  %v511 = vld [vmem:[%s1 + $0xf48] sm:$0xff]
  %v512 = vld [vmem:[%s1 + $0xf50] sm:$0xff]
  %v513 = vld [vmem:[%s1 + $0xf58] sm:$0xff]
  %v514 = vld [vmem:[%s1 + $0xf60] sm:$0xff]
  %v515 = vld [vmem:[%s1 + $0xf68] sm:$0xff]
  %v516 = vld [vmem:[%s1 + $0xf70] sm:$0xff]
  %v517 = vld [vmem:[%s1 + $0xf78] sm:$0xff]
  %v518 = vld [vmem:[%s1 + $0xf80] sm:$0xff]
  %v519 = vld [vmem:[%s1 + $0xf88] sm:$0xff]
  %v520 = vld [vmem:[%s1 + $0xf90] sm:$0xff]
  %v521 = vld [vmem:[%s1 + $0xf98] sm:$0xff]
  %v522 = vld [vmem:[%s1 + $0xfa0] sm:$0xff]
  %v523 = vld [vmem:[%s1 + $0xfa8] sm:$0xff]
  %v524 = vld [vmem:[%s1 + $0xfb0] sm:$0xff]
  %v525 = vld [vmem:[%s1 + $0xfb8] sm:$0xff]
  %v526 = vld [vmem:[%s1 + $0xfc0] sm:$0xff]
  %v527 = vld [vmem:[%s1 + $0xfc8] sm:$0xff]
  %v528 = vld [vmem:[%s1 + $0xfd0] sm:$0xff]
  %v529 = vld [vmem:[%s1 + $0xfd8] sm:$0xff]
  %v530 = vld [vmem:[%s1 + $0xfe0] sm:$0xff]
  %v531 = vld [vmem:[%s1 + $0xfe8] sm:$0xff]
  %v532 = vld [vmem:[%s1 + $0xff0] sm:$0xff]
  %v533 = vld [vmem:[%s1 + $0xff8] sm:$0xff]
  %v534 = vld [vmem:[%s1 + $0x1000] sm:$0xff]
  %v535 = vld [vmem:[%s1 + $0x1008] sm:$0xff]
  %v536 = vld [vmem:[%s1 + $0x1010] sm:$0xff]
  %v537 = vld [vmem:[%s1 + $0x1018] sm:$0xff]
  %v538 = vld [vmem:[%s1 + $0x1020] sm:$0xff]
  %v539 = vld [vmem:[%s1 + $0x1028] sm:$0xff]
  %v540 = vld [vmem:[%s1 + $0x1030] sm:$0xff]
  %v541 = vld [vmem:[%s1 + $0x1038] sm:$0xff]
  %v542 = vld [vmem:[%s1 + $0x1040] sm:$0xff]
  %v543 = vld [vmem:[%s1 + $0x1048] sm:$0xff]
  %v544 = vld [vmem:[%s1 + $0x1050] sm:$0xff]
  %v545 = vld [vmem:[%s1 + $0x1058] sm:$0xff]
  %v546 = vld [vmem:[%s1 + $0x1060] sm:$0xff]
  %v547 = vld [vmem:[%s1 + $0x1068] sm:$0xff]
  %v548 = vld [vmem:[%s1 + $0x1070] sm:$0xff]
  %v549 = vld [vmem:[%s1 + $0x1078] sm:$0xff]
  %v550 = vld [vmem:[%s1 + $0x1080] sm:$0xff]
  %v551 = vld [vmem:[%s1 + $0x1088] sm:$0xff]
  %v552 = vld [vmem:[%s1 + $0x1090] sm:$0xff]
  %v553 = vld [vmem:[%s1 + $0x1098] sm:$0xff]
  %v554 = vld [vmem:[%s1 + $0x10a0] sm:$0xff]
  %v555 = vld [vmem:[%s1 + $0x10a8] sm:$0xff]
  %v556 = vld [vmem:[%s1 + $0x10b0] sm:$0xff]
  %v557 = vld [vmem:[%s1 + $0x10b8] sm:$0xff]
  %v558 = vld [vmem:[%s1 + $0x10c0] sm:$0xff]
  %v559 = vld [vmem:[%s1 + $0x10c8] sm:$0xff]
  %v560 = vld [vmem:[%s1 + $0x10d0] sm:$0xff]
  %v561 = vld [vmem:[%s1 + $0x10d8] sm:$0xff]
  %v562 = vld [vmem:[%s1 + $0x10e0] sm:$0xff]
  %v563 = vld [vmem:[%s1 + $0x10e8] sm:$0xff]
  %v564 = vld [vmem:[%s1 + $0x10f0] sm:$0xff]
  %v565 = vld [vmem:[%s1 + $0x10f8] sm:$0xff]
  %v566 = vld [vmem:[%s1 + $0x1100] sm:$0xff]
  %v567 = vld [vmem:[%s1 + $0x1108] sm:$0xff]
  %v568 = vld [vmem:[%s1 + $0x1110] sm:$0xff]
  %v569 = vld [vmem:[%s1 + $0x1118] sm:$0xff]
  %v570 = vld [vmem:[%s1 + $0x1120] sm:$0xff]
  %v571 = vld [vmem:[%s1 + $0x1128] sm:$0xff]
  %v572 = vld [vmem:[%s1 + $0x1130] sm:$0xff]
  %v573 = vld [vmem:[%s1 + $0x1138] sm:$0xff]
  %v574 = vld [vmem:[%s1 + $0x1140] sm:$0xff]
  %v575 = vld [vmem:[%s1 + $0x1148] sm:$0xff]
  %v576 = vld [vmem:[%s1 + $0x1150] sm:$0xff]
  %v577 = vld [vmem:[%s1 + $0x1158] sm:$0xff]
  %v578 = vld [vmem:[%s1 + $0x1160] sm:$0xff]
  %v579 = vld [vmem:[%s1 + $0x1168] sm:$0xff]
  %v580 = vld [vmem:[%s1 + $0x1170] sm:$0xff]
  %v581 = vld [vmem:[%s1 + $0x1178] sm:$0xff]
  %v582 = vld [vmem:[%s1 + $0x1180] sm:$0xff]
  %v583 = vld [vmem:[%s1 + $0x1188] sm:$0xff]
  %v584 = vld [vmem:[%s1 + $0x1190] sm:$0xff]
  %v585 = vld [vmem:[%s1 + $0x1198] sm:$0xff]
  %v586 = vld [vmem:[%s1 + $0x11a0] sm:$0xff]
  %v587 = vld [vmem:[%s1 + $0x11a8] sm:$0xff]
  %v588 = vld [vmem:[%s1 + $0x11b0] sm:$0xff]
  %v589 = vld [vmem:[%s1 + $0x11b8] sm:$0xff]
  %v590 = vld [vmem:[%s1 + $0x11c0] sm:$0xff]
  %v591 = vld [vmem:[%s1 + $0x11c8] sm:$0xff]
  %v592 = vld [vmem:[%s1 + $0x11d0] sm:$0xff]
  %v593 = vld [vmem:[%s1 + $0x11d8] sm:$0xff]
  %v594 = vld [vmem:[%s1 + $0x11e0] sm:$0xff]
  %v595 = vld [vmem:[%s1 + $0x11e8] sm:$0xff]
  %v596 = vld [vmem:[%s1 + $0x11f0] sm:$0xff]
  %v597 = vld [vmem:[%s1 + $0x11f8] sm:$0xff]
  %v598 = vld [vmem:[%s1 + $0x1200] sm:$0xff]
  %v599 = vld [vmem:[%s1 + $0x1208] sm:$0xff]
  %v600 = vld [vmem:[%s1 + $0x1210] sm:$0xff]
  %v601 = vld [vmem:[%s1 + $0x1218] sm:$0xff]
  %v602 = vld [vmem:[%s1 + $0x1220] sm:$0xff]
  %v603 = vld [vmem:[%s1 + $0x1228] sm:$0xff]
  %v604 = vld [vmem:[%s1 + $0x1230] sm:$0xff]
  %v605 = vld [vmem:[%s1 + $0x1238] sm:$0xff]
  %v606 = vld [vmem:[%s1 + $0x1240] sm:$0xff]
  %v607 = vld [vmem:[%s1 + $0x1248] sm:$0xff]
  %v608 = vld [vmem:[%s1 + $0x1250] sm:$0xff]
  %v609 = vld [vmem:[%s1 + $0x1258] sm:$0xff]
  %v610 = vld [vmem:[%s1 + $0x1260] sm:$0xff]
  %v611 = vld [vmem:[%s1 + $0x1268] sm:$0xff]
  %v612 = vld [vmem:[%s1 + $0x1270] sm:$0xff]
  %v613 = vld [vmem:[%s1 + $0x1278] sm:$0xff]
  %v614 = vld [vmem:[%s1 + $0x1280] sm:$0xff]
  %v615 = vld [vmem:[%s1 + $0x1288] sm:$0xff]
  %v616 = vld [vmem:[%s1 + $0x1290] sm:$0xff]
  %v617 = vld [vmem:[%s1 + $0x1298] sm:$0xff]
  %v618 = vld [vmem:[%s1 + $0x12a0] sm:$0xff]
  %v619 = vld [vmem:[%s1 + $0x12a8] sm:$0xff]
  %v620 = vld [vmem:[%s1 + $0x12b0] sm:$0xff]
  %v621 = vld [vmem:[%s1 + $0x12b8] sm:$0xff]
  %v622 = vld [vmem:[%s1 + $0x12c0] sm:$0xff]
  %v623 = vld [vmem:[%s1 + $0x12c8] sm:$0xff]
  %v624 = vld [vmem:[%s1 + $0x12d0] sm:$0xff]
  %v625 = vld [vmem:[%s1 + $0x12d8] sm:$0xff]
  %v626 = vld [vmem:[%s1 + $0x12e0] sm:$0xff]
  %v627 = vld [vmem:[%s1 + $0x12e8] sm:$0xff]
  %v628 = vld [vmem:[%s1 + $0x12f0] sm:$0xff]
  %v629 = vld [vmem:[%s1 + $0x12f8] sm:$0xff]
  %v630 = vld [vmem:[%s1 + $0x1300] sm:$0xff]
  %v631 = vld [vmem:[%s1 + $0x1308] sm:$0xff]
  %v632 = vld [vmem:[%s1 + $0x1310] sm:$0xff]
  %v633 = vld [vmem:[%s1 + $0x1318] sm:$0xff]
  %v634 = vld [vmem:[%s1 + $0x1320] sm:$0xff]
  %v635 = vld [vmem:[%s1 + $0x1328] sm:$0xff]
  %v636 = vld [vmem:[%s1 + $0x1330] sm:$0xff]
  %v637 = vld [vmem:[%s1 + $0x1338] sm:$0xff]
  %v638 = vld [vmem:[%s1 + $0x1340] sm:$0xff]
  %v639 = vld [vmem:[%s1 + $0x1348] sm:$0xff]
  %v640 = vld [vmem:[%s1 + $0x1350] sm:$0xff]
  %v641 = vld [vmem:[%s1 + $0x1358] sm:$0xff]
  %v642 = vld [vmem:[%s1 + $0x1360] sm:$0xff]
  %v643 = vld [vmem:[%s1 + $0x1368] sm:$0xff]
  %v644 = vld [vmem:[%s1 + $0x1370] sm:$0xff]
  %v645 = vld [vmem:[%s1 + $0x1378] sm:$0xff]
  %v646 = vld [vmem:[%s1 + $0x1380] sm:$0xff]
  %v647 = vld [vmem:[%s1 + $0x1388] sm:$0xff]
  %v648 = vld [vmem:[%s1 + $0x1390] sm:$0xff]
  %v649 = vld [vmem:[%s1 + $0x1398] sm:$0xff]
  %v650 = vld [vmem:[%s1 + $0x13a0] sm:$0xff]
  %v651 = vld [vmem:[%s1 + $0x13a8] sm:$0xff]
  %v652 = vld [vmem:[%s1 + $0x13b0] sm:$0xff]
  %v653 = vld [vmem:[%s1 + $0x13b8] sm:$0xff]
  %v654 = vld [vmem:[%s1 + $0x13c0] sm:$0xff]
  %v655 = vld [vmem:[%s1 + $0x13c8] sm:$0xff]
  %v656 = vld [vmem:[%s1 + $0x13d0] sm:$0xff]
  %v657 = vld [vmem:[%s1 + $0x13d8] sm:$0xff]
  %v658 = vld [vmem:[%s1 + $0x13e0] sm:$0xff]
  %v659 = vld [vmem:[%s1 + $0x13e8] sm:$0xff]
  %v660 = vld [vmem:[%s1 + $0x13f0] sm:$0xff]
  %v661 = vld [vmem:[%s1 + $0x13f8] sm:$0xff]
  %v662 = vld [vmem:[%s1 + $0x1400] sm:$0xff]
  %v663 = vld [vmem:[%s1 + $0x1408] sm:$0xff]
  %v664 = vld [vmem:[%s1 + $0x1410] sm:$0xff]
  %v665 = vld [vmem:[%s1 + $0x1418] sm:$0xff]
  %v666 = vld [vmem:[%s1 + $0x1420] sm:$0xff]
  %v667 = vld [vmem:[%s1 + $0x1428] sm:$0xff]
  %v668 = vld [vmem:[%s1 + $0x1430] sm:$0xff]
  %v669 = vld [vmem:[%s1 + $0x1438] sm:$0xff]
  %v670 = vld [vmem:[%s1 + $0x1440] sm:$0xff]
  %v671 = vld [vmem:[%s1 + $0x1448] sm:$0xff]
  %v672 = vld [vmem:[%s1 + $0x1450] sm:$0xff]
  %v673 = vld [vmem:[%s1 + $0x1458] sm:$0xff]
  %v674 = vld [vmem:[%s1 + $0x1460] sm:$0xff]
  %v675 = vld [vmem:[%s1 + $0x1468] sm:$0xff]
  %v676 = vld [vmem:[%s1 + $0x1470] sm:$0xff]
  %v677 = vld [vmem:[%s1 + $0x1478] sm:$0xff]
  %v678 = vld [vmem:[%s1 + $0x1480] sm:$0xff]
  %v679 = vld [vmem:[%s1 + $0x1488] sm:$0xff]
  %v680 = vld [vmem:[%s1 + $0x1490] sm:$0xff]
  %v681 = vld [vmem:[%s1 + $0x1498] sm:$0xff]
  %v682 = vld [vmem:[%s1 + $0x14a0] sm:$0xff]
  %v683 = vld [vmem:[%s1 + $0x14a8] sm:$0xff]
  %v684 = vld [vmem:[%s1 + $0x14b0] sm:$0xff]
  %v685 = vld [vmem:[%s1 + $0x14b8] sm:$0xff]
  %v686 = vld [vmem:[%s1 + $0x14c0] sm:$0xff]
  %v687 = vld [vmem:[%s1 + $0x14c8] sm:$0xff]
  %v688 = vld [vmem:[%s1 + $0x14d0] sm:$0xff]
  %v689 = vld [vmem:[%s1 + $0x14d8] sm:$0xff]
  %v690 = vld [vmem:[%s1 + $0x14e0] sm:$0xff]
  %v691 = vld [vmem:[%s1 + $0x14e8] sm:$0xff]
  %v692 = vld [vmem:[%s1 + $0x14f0] sm:$0xff]
  %v693 = vld [vmem:[%s1 + $0x14f8] sm:$0xff]
  %v694 = vld [vmem:[%s1 + $0x1500] sm:$0xff]
  %v695 = vld [vmem:[%s1 + $0x1508] sm:$0xff]
  %v696 = vld [vmem:[%s1 + $0x1510] sm:$0xff]
  %v697 = vld [vmem:[%s1 + $0x1518] sm:$0xff]
  %v698 = vld [vmem:[%s1 + $0x1520] sm:$0xff]
  %v699 = vld [vmem:[%s1 + $0x1528] sm:$0xff]
  %v700 = vld [vmem:[%s1 + $0x1530] sm:$0xff]
  %v701 = vld [vmem:[%s1 + $0x1538] sm:$0xff]
  %v702 = vld [vmem:[%s1 + $0x1540] sm:$0xff]
  %v703 = vld [vmem:[%s1 + $0x1548] sm:$0xff]
  %v704 = vld [vmem:[%s1 + $0x1550] sm:$0xff]
  %v705 = vld [vmem:[%s1 + $0x1558] sm:$0xff]
  %v706 = vld [vmem:[%s1 + $0x1560] sm:$0xff]
  %v707 = vld [vmem:[%s1 + $0x1568] sm:$0xff]
  %v708 = vld [vmem:[%s1 + $0x1570] sm:$0xff]
  %v709 = vld [vmem:[%s1 + $0x1578] sm:$0xff]
  %v710 = vld [vmem:[%s1 + $0x1580] sm:$0xff]
  %v711 = vld [vmem:[%s1 + $0x1588] sm:$0xff]
  %v712 = vld [vmem:[%s1 + $0x1590] sm:$0xff]
  %v713 = vld [vmem:[%s1 + $0x1598] sm:$0xff]
  %v714 = vld [vmem:[%s1 + $0x15a0] sm:$0xff]
  %v715 = vld [vmem:[%s1 + $0x15a8] sm:$0xff]
  %v716 = vld [vmem:[%s1 + $0x15b0] sm:$0xff]
  %v717 = vld [vmem:[%s1 + $0x15b8] sm:$0xff]
  %v718 = vld [vmem:[%s1 + $0x15c0] sm:$0xff]
  %v719 = vld [vmem:[%s1 + $0x15c8] sm:$0xff]
  %v720 = vld [vmem:[%s1 + $0x15d0] sm:$0xff]
  %v721 = vld [vmem:[%s1 + $0x15d8] sm:$0xff]
  %v722 = vld [vmem:[%s1 + $0x15e0] sm:$0xff]
  %v723 = vld [vmem:[%s1 + $0x15e8] sm:$0xff]
  %v724 = vld [vmem:[%s1 + $0x15f0] sm:$0xff]
  %v725 = vld [vmem:[%s1 + $0x15f8] sm:$0xff]
  %v726 = vld [vmem:[%s1 + $0x1600] sm:$0xff]
  %v727 = vld [vmem:[%s1 + $0x1608] sm:$0xff]
  %v728 = vld [vmem:[%s1 + $0x1610] sm:$0xff]
  %v729 = vld [vmem:[%s1 + $0x1618] sm:$0xff]
  %v730 = vld [vmem:[%s1 + $0x1620] sm:$0xff]
  %v731 = vld [vmem:[%s1 + $0x1628] sm:$0xff]
  %v732 = vld [vmem:[%s1 + $0x1630] sm:$0xff]
  %v733 = vld [vmem:[%s1 + $0x1638] sm:$0xff]
  %v734 = vld [vmem:[%s1 + $0x1640] sm:$0xff]
  %v735 = vld [vmem:[%s1 + $0x1648] sm:$0xff]
  %v736 = vld [vmem:[%s1 + $0x1650] sm:$0xff]
  %v737 = vld [vmem:[%s1 + $0x1658] sm:$0xff]
  %v738 = vld [vmem:[%s1 + $0x1660] sm:$0xff]
  %v739 = vld [vmem:[%s1 + $0x1668] sm:$0xff]
  %v740 = vld [vmem:[%s1 + $0x1670] sm:$0xff]
  %v741 = vld [vmem:[%s1 + $0x1678] sm:$0xff]
  %v742 = vld [vmem:[%s1 + $0x1680] sm:$0xff]
  %v743 = vld [vmem:[%s1 + $0x1688] sm:$0xff]
  %v744 = vld [vmem:[%s1 + $0x1690] sm:$0xff]
  %v745 = vld [vmem:[%s1 + $0x1698] sm:$0xff]
  %v746 = vld [vmem:[%s1 + $0x16a0] sm:$0xff]
  %v747 = vld [vmem:[%s1 + $0x16a8] sm:$0xff]
  %v748 = vld [vmem:[%s1 + $0x16b0] sm:$0xff]
  %v749 = vld [vmem:[%s1 + $0x16b8] sm:$0xff]
  %v750 = vld [vmem:[%s1 + $0x16c0] sm:$0xff]
  %v751 = vld [vmem:[%s1 + $0x16c8] sm:$0xff]
  %v752 = vld [vmem:[%s1 + $0x16d0] sm:$0xff]
  %v753 = vld [vmem:[%s1 + $0x16d8] sm:$0xff]
  %v754 = vld [vmem:[%s1 + $0x16e0] sm:$0xff]
  %v755 = vld [vmem:[%s1 + $0x16e8] sm:$0xff]
  %v756 = vld [vmem:[%s1 + $0x16f0] sm:$0xff]
  %v757 = vld [vmem:[%s1 + $0x16f8] sm:$0xff]
  %v758 = vld [vmem:[%s1 + $0x1700] sm:$0xff]
  %v759 = vld [vmem:[%s1 + $0x1708] sm:$0xff]
  %v760 = vld [vmem:[%s1 + $0x1710] sm:$0xff]
  %v761 = vld [vmem:[%s1 + $0x1718] sm:$0xff]
  %v762 = vld [vmem:[%s1 + $0x1720] sm:$0xff]
  %v763 = vld [vmem:[%s1 + $0x1728] sm:$0xff]
  %v764 = vld [vmem:[%s1 + $0x1730] sm:$0xff]
  %v765 = vld [vmem:[%s1 + $0x1738] sm:$0xff]
  %v766 = vld [vmem:[%s1 + $0x1740] sm:$0xff]
  %v767 = vld [vmem:[%s1 + $0x1748] sm:$0xff]
  %v768 = vld [vmem:[%s1 + $0x1750] sm:$0xff]
  %v769 = vld [vmem:[%s1 + $0x1758] sm:$0xff]
  %v770 = vld [vmem:[%s1 + $0x1760] sm:$0xff]
  %v771 = vld [vmem:[%s1 + $0x1768] sm:$0xff]
  %v772 = vld [vmem:[%s1 + $0x1770] sm:$0xff]
  %v773 = vld [vmem:[%s1 + $0x1778] sm:$0xff]
  %v774 = vld [vmem:[%s1 + $0x1780] sm:$0xff]
  %v775 = vld [vmem:[%s1 + $0x1788] sm:$0xff]
  %v776 = vld [vmem:[%s1 + $0x1790] sm:$0xff]
  %v777 = vld [vmem:[%s1 + $0x1798] sm:$0xff]
  %v778 = vld [vmem:[%s1 + $0x17a0] sm:$0xff]
  %v779 = vld [vmem:[%s1 + $0x17a8] sm:$0xff]
  %v780 = vld [vmem:[%s1 + $0x17b0] sm:$0xff]
  %v781 = vld [vmem:[%s1 + $0x17b8] sm:$0xff]
  %v782 = vld [vmem:[%s1 + $0x17c0] sm:$0xff]
  %v783 = vld [vmem:[%s1 + $0x17c8] sm:$0xff]
  %v784 = vld [vmem:[%s1 + $0x17d0] sm:$0xff]
  %v785 = vld [vmem:[%s1 + $0x17d8] sm:$0xff]
  %v786 = vld [vmem:[%s1 + $0x17e0] sm:$0xff]
  %v787 = vld [vmem:[%s1 + $0x17e8] sm:$0xff]
  %v788 = vld [vmem:[%s1 + $0x17f0] sm:$0xff]
  %v789 = vld [vmem:[%s1 + $0x17f8] sm:$0xff]
  %v790 = vld [vmem:[%s1 + $0x1800] sm:$0xff]
  %v791 = vld [vmem:[%s1 + $0x1808] sm:$0xff]
  %v792 = vld [vmem:[%s1 + $0x1810] sm:$0xff]
  %v793 = vld [vmem:[%s1 + $0x1818] sm:$0xff]
  %v794 = vld [vmem:[%s1 + $0x1820] sm:$0xff]
  %v795 = vld [vmem:[%s1 + $0x1828] sm:$0xff]
  %v796 = vld [vmem:[%s1 + $0x1830] sm:$0xff]
  %v797 = vld [vmem:[%s1 + $0x1838] sm:$0xff]
  %v798 = vld [vmem:[%s1 + $0x1840] sm:$0xff]
  %v799 = vld [vmem:[%s1 + $0x1848] sm:$0xff]
  %v800 = vld [vmem:[%s1 + $0x1850] sm:$0xff]
  %v801 = vld [vmem:[%s1 + $0x1858] sm:$0xff]
  %v802 = vld [vmem:[%s1 + $0x1860] sm:$0xff]
  %v803 = vld [vmem:[%s1 + $0x1868] sm:$0xff]
  %v804 = vld [vmem:[%s1 + $0x1870] sm:$0xff]
  %v805 = vld [vmem:[%s1 + $0x1878] sm:$0xff]
  %v806 = vld [vmem:[%s1 + $0x1880] sm:$0xff]
  %v807 = vld [vmem:[%s1 + $0x1888] sm:$0xff]
  %v808 = vld [vmem:[%s1 + $0x1890] sm:$0xff]
  %v809 = vld [vmem:[%s1 + $0x1898] sm:$0xff]
  %v810 = vld [vmem:[%s1 + $0x18a0] sm:$0xff]
  %v811 = vld [vmem:[%s1 + $0x18a8] sm:$0xff]
  %v812 = vld [vmem:[%s1 + $0x18b0] sm:$0xff]
  %v813 = vld [vmem:[%s1 + $0x18b8] sm:$0xff]
  %v814 = vld [vmem:[%s1 + $0x18c0] sm:$0xff]
  %v815 = vld [vmem:[%s1 + $0x18c8] sm:$0xff]
  %v816 = vld [vmem:[%s1 + $0x18d0] sm:$0xff]
  %v817 = vld [vmem:[%s1 + $0x18d8] sm:$0xff]
  %v818 = vld [vmem:[%s1 + $0x18e0] sm:$0xff]
  %v819 = vld [vmem:[%s1 + $0x18e8] sm:$0xff]
  %v820 = vld [vmem:[%s1 + $0x18f0] sm:$0xff]
  %v821 = vld [vmem:[%s1 + $0x18f8] sm:$0xff]
  %v822 = vld [vmem:[%s1 + $0x1900] sm:$0xff]
  %v823 = vld [vmem:[%s1 + $0x1908] sm:$0xff]
  %v824 = vld [vmem:[%s1 + $0x1910] sm:$0xff]
  %v825 = vld [vmem:[%s1 + $0x1918] sm:$0xff]
  %v826 = vld [vmem:[%s1 + $0x1920] sm:$0xff]
  %v827 = vld [vmem:[%s1 + $0x1928] sm:$0xff]
  %v828 = vld [vmem:[%s1 + $0x1930] sm:$0xff]
  %v829 = vld [vmem:[%s1 + $0x1938] sm:$0xff]
  %v830 = vld [vmem:[%s1 + $0x1940] sm:$0xff]
  %v831 = vld [vmem:[%s1 + $0x1948] sm:$0xff]
  %v832 = vld [vmem:[%s1 + $0x1950] sm:$0xff]
  %v833 = vld [vmem:[%s1 + $0x1958] sm:$0xff]
  %v834 = vld [vmem:[%s1 + $0x1960] sm:$0xff]
  %v835 = vld [vmem:[%s1 + $0x1968] sm:$0xff]
  %v836 = vld [vmem:[%s1 + $0x1970] sm:$0xff]
  %v837 = vld [vmem:[%s1 + $0x1978] sm:$0xff]
  %v838 = vld [vmem:[%s1 + $0x1980] sm:$0xff]
  %v839 = vld [vmem:[%s1 + $0x1988] sm:$0xff]
  %v840 = vld [vmem:[%s1 + $0x1990] sm:$0xff]
  %v841 = vld [vmem:[%s1 + $0x1998] sm:$0xff]
  %v842 = vld [vmem:[%s1 + $0x19a0] sm:$0xff]
  %v843 = vld [vmem:[%s1 + $0x19a8] sm:$0xff]
  %v844 = vld [vmem:[%s1 + $0x19b0] sm:$0xff]
  %v845 = vld [vmem:[%s1 + $0x19b8] sm:$0xff]
  %v846 = vld [vmem:[%s1 + $0x19c0] sm:$0xff]
  %v847 = vld [vmem:[%s1 + $0x19c8] sm:$0xff]
  %v848 = vld [vmem:[%s1 + $0x19d0] sm:$0xff]
  %v849 = vld [vmem:[%s1 + $0x19d8] sm:$0xff]
  %v850 = vld [vmem:[%s1 + $0x19e0] sm:$0xff]
  %v851 = vld [vmem:[%s1 + $0x19e8] sm:$0xff]
  %v852 = vld [vmem:[%s1 + $0x19f0] sm:$0xff]
  %v853 = vld [vmem:[%s1 + $0x19f8] sm:$0xff]
  %v854 = vld [vmem:[%s1 + $0x1a00] sm:$0xff]
  %v855 = vld [vmem:[%s1 + $0x1a08] sm:$0xff]
  %v856 = vld [vmem:[%s1 + $0x1a10] sm:$0xff]
  %v857 = vld [vmem:[%s1 + $0x1a18] sm:$0xff]
  %v858 = vld [vmem:[%s1 + $0x1a20] sm:$0xff]
  %v859 = vld [vmem:[%s1 + $0x1a28] sm:$0xff]
  %v860 = vld [vmem:[%s1 + $0x1a30] sm:$0xff]
  %v861 = vld [vmem:[%s1 + $0x1a38] sm:$0xff]
  %v862 = vld [vmem:[%s1 + $0x1a40] sm:$0xff]
  %v863 = vld [vmem:[%s1 + $0x1a48] sm:$0xff]
  %v864 = vld [vmem:[%s1 + $0x1a50] sm:$0xff]
  %v865 = vld [vmem:[%s1 + $0x1a58] sm:$0xff]
  %v866 = vld [vmem:[%s1 + $0x1a60] sm:$0xff]
  %v867 = vld [vmem:[%s1 + $0x1a68] sm:$0xff]
  %v868 = vld [vmem:[%s1 + $0x1a70] sm:$0xff]
  %v869 = vld [vmem:[%s1 + $0x1a78] sm:$0xff]
  %v870 = vld [vmem:[%s1 + $0x1a80] sm:$0xff]
  %v871 = vld [vmem:[%s1 + $0x1a88] sm:$0xff]
  %v872 = vld [vmem:[%s1 + $0x1a90] sm:$0xff]
  %v873 = vld [vmem:[%s1 + $0x1a98] sm:$0xff]
  %v874 = vld [vmem:[%s1 + $0x1aa0] sm:$0xff]
  %v875 = vld [vmem:[%s1 + $0x1aa8] sm:$0xff]
  %v876 = vld [vmem:[%s1 + $0x1ab0] sm:$0xff]
  %v877 = vld [vmem:[%s1 + $0x1ab8] sm:$0xff]
  %v878 = vld [vmem:[%s1 + $0x1ac0] sm:$0xff]
  %v879 = vld [vmem:[%s1 + $0x1ac8] sm:$0xff]
  %v880 = vld [vmem:[%s1 + $0x1ad0] sm:$0xff]
  %v881 = vld [vmem:[%s1 + $0x1ad8] sm:$0xff]
  %v882 = vld [vmem:[%s1 + $0x1ae0] sm:$0xff]
  %v883 = vld [vmem:[%s1 + $0x1ae8] sm:$0xff]
  %v884 = vld [vmem:[%s1 + $0x1af0] sm:$0xff]
  %v885 = vld [vmem:[%s1 + $0x1af8] sm:$0xff]
  %v886 = vld [vmem:[%s1 + $0x1b00] sm:$0xff]
  %v887 = vld [vmem:[%s1 + $0x1b08] sm:$0xff]
  %v888 = vld [vmem:[%s1 + $0x1b10] sm:$0xff]
  %v889 = vld [vmem:[%s1 + $0x1b18] sm:$0xff]
  %v890 = vld [vmem:[%s1 + $0x1b20] sm:$0xff]
  %v891 = vld [vmem:[%s1 + $0x1b28] sm:$0xff]
  %v892 = vld [vmem:[%s1 + $0x1b30] sm:$0xff]
  %v893 = vld [vmem:[%s1 + $0x1b38] sm:$0xff]
  %v894 = vld [vmem:[%s1 + $0x1b40] sm:$0xff]
  %v895 = vld [vmem:[%s1 + $0x1b48] sm:$0xff]
  %v896 = vld [vmem:[%s1 + $0x1b50] sm:$0xff]
  %v897 = vld [vmem:[%s1 + $0x1b58] sm:$0xff]
  %v898 = vld [vmem:[%s1 + $0x1b60] sm:$0xff]
  %v899 = vld [vmem:[%s1 + $0x1b68] sm:$0xff]
  %v900 = vld [vmem:[%s1 + $0x1b70] sm:$0xff]
  %v901 = vld [vmem:[%s1 + $0x1b78] sm:$0xff]
  %v902 = vld [vmem:[%s1 + $0x1b80] sm:$0xff]
  %v903 = vld [vmem:[%s1 + $0x1b88] sm:$0xff]
  %v904 = vld [vmem:[%s1 + $0x1b90] sm:$0xff]
  %v905 = vld [vmem:[%s1 + $0x1b98] sm:$0xff]
  %v906 = vld [vmem:[%s1 + $0x1ba0] sm:$0xff]
  %v907 = vld [vmem:[%s1 + $0x1ba8] sm:$0xff]
  %v908 = vld [vmem:[%s1 + $0x1bb0] sm:$0xff]
  %v909 = vld [vmem:[%s1 + $0x1bb8] sm:$0xff]
  %v910 = vld [vmem:[%s1 + $0x1bc0] sm:$0xff]
  %v911 = vld [vmem:[%s1 + $0x1bc8] sm:$0xff]
  %v912 = vld [vmem:[%s1 + $0x1bd0] sm:$0xff]
  %v913 = vld [vmem:[%s1 + $0x1bd8] sm:$0xff]
  %v914 = vld [vmem:[%s1 + $0x1be0] sm:$0xff]
  %v915 = vld [vmem:[%s1 + $0x1be8] sm:$0xff]
  %v916 = vld [vmem:[%s1 + $0x1bf0] sm:$0xff]
  %v917 = vld [vmem:[%s1 + $0x1bf8] sm:$0xff]
  %v918 = vld [vmem:[%s1 + $0x1c00] sm:$0xff]
  %v919 = vld [vmem:[%s1 + $0x1c08] sm:$0xff]
  %v920 = vld [vmem:[%s1 + $0x1c10] sm:$0xff]
  %v921 = vld [vmem:[%s1 + $0x1c18] sm:$0xff]
  %v922 = vld [vmem:[%s1 + $0x1c20] sm:$0xff]
  %v923 = vld [vmem:[%s1 + $0x1c28] sm:$0xff]
  %v924 = vld [vmem:[%s1 + $0x1c30] sm:$0xff]
  %v925 = vld [vmem:[%s1 + $0x1c38] sm:$0xff]
  %v926 = vld [vmem:[%s1 + $0x1c40] sm:$0xff]
  %v927 = vld [vmem:[%s1 + $0x1c48] sm:$0xff]
  %v928 = vld [vmem:[%s1 + $0x1c50] sm:$0xff]
  %v929 = vld [vmem:[%s1 + $0x1c58] sm:$0xff]
  %v930 = vld [vmem:[%s1 + $0x1c60] sm:$0xff]
  %v931 = vld [vmem:[%s1 + $0x1c68] sm:$0xff]
  %v932 = vld [vmem:[%s1 + $0x1c70] sm:$0xff]
  %v933 = vld [vmem:[%s1 + $0x1c78] sm:$0xff]
  %v934 = vld [vmem:[%s1 + $0x1c80] sm:$0xff]
  %v935 = vld [vmem:[%s1 + $0x1c88] sm:$0xff]
  %v936 = vld [vmem:[%s1 + $0x1c90] sm:$0xff]
  %v937 = vld [vmem:[%s1 + $0x1c98] sm:$0xff]
  %v938 = vld [vmem:[%s1 + $0x1ca0] sm:$0xff]
  %v939 = vld [vmem:[%s1 + $0x1ca8] sm:$0xff]
  %v940 = vld [vmem:[%s1 + $0x1cb0] sm:$0xff]
  %v941 = vld [vmem:[%s1 + $0x1cb8] sm:$0xff]
  %v942 = vld [vmem:[%s1 + $0x1cc0] sm:$0xff]
  %v943 = vld [vmem:[%s1 + $0x1cc8] sm:$0xff]
  %v944 = vld [vmem:[%s1 + $0x1cd0] sm:$0xff]
  %v945 = vld [vmem:[%s1 + $0x1cd8] sm:$0xff]
  %v946 = vld [vmem:[%s1 + $0x1ce0] sm:$0xff]
  %v947 = vld [vmem:[%s1 + $0x1ce8] sm:$0xff]
  %v948 = vld [vmem:[%s1 + $0x1cf0] sm:$0xff]
  %v949 = vld [vmem:[%s1 + $0x1cf8] sm:$0xff]
  %v950 = vld [vmem:[%s1 + $0x1d00] sm:$0xff]
  %v951 = vld [vmem:[%s1 + $0x1d08] sm:$0xff]
  %v952 = vld [vmem:[%s1 + $0x1d10] sm:$0xff]
  %v953 = vld [vmem:[%s1 + $0x1d18] sm:$0xff]
  %v954 = vld [vmem:[%s1 + $0x1d20] sm:$0xff]
  %v955 = vld [vmem:[%s1 + $0x1d28] sm:$0xff]
  %v956 = vld [vmem:[%s1 + $0x1d30] sm:$0xff]
  %v957 = vld [vmem:[%s1 + $0x1d38] sm:$0xff]
  %v958 = vld [vmem:[%s1 + $0x1d40] sm:$0xff]
  %v959 = vld [vmem:[%s1 + $0x1d48] sm:$0xff]
  %v960 = vld [vmem:[%s1 + $0x1d50] sm:$0xff]
  %v961 = vld [vmem:[%s1 + $0x1d58] sm:$0xff]
  %v962 = vld [vmem:[%s1 + $0x1d60] sm:$0xff]
  %v963 = vld [vmem:[%s1 + $0x1d68] sm:$0xff]
  %v964 = vld [vmem:[%s1 + $0x1d70] sm:$0xff]
  %v965 = vld [vmem:[%s1 + $0x1d78] sm:$0xff]
  %v966 = vld [vmem:[%s1 + $0x1d80] sm:$0xff]
  %v967 = vld [vmem:[%s1 + $0x1d88] sm:$0xff]
  %v968 = vld [vmem:[%s1 + $0x1d90] sm:$0xff]
  %v969 = vld [vmem:[%s1 + $0x1d98] sm:$0xff]
  %v970 = vld [vmem:[%s1 + $0x1da0] sm:$0xff]
  %v971 = vld [vmem:[%s1 + $0x1da8] sm:$0xff]
  %v972 = vld [vmem:[%s1 + $0x1db0] sm:$0xff]
  %v973 = vld [vmem:[%s1 + $0x1db8] sm:$0xff]
  %v974 = vld [vmem:[%s1 + $0x1dc0] sm:$0xff]
  %v975 = vld [vmem:[%s1 + $0x1dc8] sm:$0xff]
  %v976 = vld [vmem:[%s1 + $0x1dd0] sm:$0xff]
  %v977 = vld [vmem:[%s1 + $0x1dd8] sm:$0xff]
  %v978 = vld [vmem:[%s1 + $0x1de0] sm:$0xff]
  %v979 = vld [vmem:[%s1 + $0x1de8] sm:$0xff]
  %v980 = vld [vmem:[%s1 + $0x1df0] sm:$0xff]
  %v981 = vld [vmem:[%s1 + $0x1df8] sm:$0xff]
  %v982 = vld [vmem:[%s1 + $0x1e00] sm:$0xff]
  %v983 = vld [vmem:[%s1 + $0x1e08] sm:$0xff]
  %v984 = vld [vmem:[%s1 + $0x1e10] sm:$0xff]
  %v985 = vld [vmem:[%s1 + $0x1e18] sm:$0xff]
  %v986 = vld [vmem:[%s1 + $0x1e20] sm:$0xff]
  %v987 = vld [vmem:[%s1 + $0x1e28] sm:$0xff]
  %v988 = vld [vmem:[%s1 + $0x1e30] sm:$0xff]
  %v989 = vld [vmem:[%s1 + $0x1e38] sm:$0xff]
  %v990 = vld [vmem:[%s1 + $0x1e40] sm:$0xff]
  %v991 = vld [vmem:[%s1 + $0x1e48] sm:$0xff]
  %v992 = vld [vmem:[%s1 + $0x1e50] sm:$0xff]
  %v993 = vld [vmem:[%s1 + $0x1e58] sm:$0xff]
  %v994 = vld [vmem:[%s1 + $0x1e60] sm:$0xff]
  %v995 = vld [vmem:[%s1 + $0x1e68] sm:$0xff]
  %v996 = vld [vmem:[%s1 + $0x1e70] sm:$0xff]
  %v997 = vld [vmem:[%s1 + $0x1e78] sm:$0xff]
  %v998 = vld [vmem:[%s1 + $0x1e80] sm:$0xff]
  %v999 = vld [vmem:[%s1 + $0x1e88] sm:$0xff]
  %v1000 = vld [vmem:[%s1 + $0x1e90] sm:$0xff]
  %v1001 = vld [vmem:[%s1 + $0x1e98] sm:$0xff]
  %v1002 = vld [vmem:[%s1 + $0x1ea0] sm:$0xff]
  %v1003 = vld [vmem:[%s1 + $0x1ea8] sm:$0xff]
  %v1004 = vld [vmem:[%s1 + $0x1eb0] sm:$0xff]
  %v1005 = vld [vmem:[%s1 + $0x1eb8] sm:$0xff]
  %v1006 = vld [vmem:[%s1 + $0x1ec0] sm:$0xff]
  %v1007 = vld [vmem:[%s1 + $0x1ec8] sm:$0xff]
  %v1008 = vld [vmem:[%s1 + $0x1ed0] sm:$0xff]
  %v1009 = vld [vmem:[%s1 + $0x1ed8] sm:$0xff]
  %v1010 = vld [vmem:[%s1 + $0x1ee0] sm:$0xff]
  %v1011 = vld [vmem:[%s1 + $0x1ee8] sm:$0xff]
  %v1012 = vld [vmem:[%s1 + $0x1ef0] sm:$0xff]
  %v1013 = vld [vmem:[%s1 + $0x1ef8] sm:$0xff]
  %v1014 = vld [vmem:[%s1 + $0x1f00] sm:$0xff]
  %v1015 = vld [vmem:[%s1 + $0x1f08] sm:$0xff]
  %v1016 = vld [vmem:[%s1 + $0x1f10] sm:$0xff]
  %v1017 = vld [vmem:[%s1 + $0x1f18] sm:$0xff]
  %v1018 = vld [vmem:[%s1 + $0x1f20] sm:$0xff]
  %v1019 = vld [vmem:[%s1 + $0x1f28] sm:$0xff]
  %v1020 = vld [vmem:[%s1 + $0x1f30] sm:$0xff]
  %v1021 = vld [vmem:[%s1 + $0x1f38] sm:$0xff]
  %v1022 = vld [vmem:[%s1 + $0x1f40] sm:$0xff]
  %v1023 = vld [vmem:[%s1 + $0x1f48] sm:$0xff]
  %v1024 = vld [vmem:[%s1 + $0x1f50] sm:$0xff]
  %v1025 = vld [vmem:[%s1 + $0x1f58] sm:$0xff]
  %v1026 = vld [vmem:[%s1 + $0x1f60] sm:$0xff]
  %v1027 = vld [vmem:[%s1 + $0x1f68] sm:$0xff]
  %v1028 = vld [vmem:[%s1 + $0x1f70] sm:$0xff]
  %v1029 = vld [vmem:[%s1 + $0x1f78] sm:$0xff]
  %v1030 = vld [vmem:[%s1 + $0x1f80] sm:$0xff]
  %v1031 = vld [vmem:[%s1 + $0x1f88] sm:$0xff]
  %v1032 = vld [vmem:[%s1 + $0x1f90] sm:$0xff]
  %v1033 = vld [vmem:[%s1 + $0x1f98] sm:$0xff]
  %v1034 = vld [vmem:[%s1 + $0x1fa0] sm:$0xff]
  %v1035 = vld [vmem:[%s1 + $0x1fa8] sm:$0xff]
  %v1036 = vld [vmem:[%s1 + $0x1fb0] sm:$0xff]
  %v1037 = vld [vmem:[%s1 + $0x1fb8] sm:$0xff]
  %v1038 = vld [vmem:[%s1 + $0x1fc0] sm:$0xff]
  %v1039 = vld [vmem:[%s1 + $0x1fc8] sm:$0xff]
  %v1040 = vld [vmem:[%s1 + $0x1fd0] sm:$0xff]
  %v1041 = vld [vmem:[%s1 + $0x1fd8] sm:$0xff]
  %v1042 = vld [vmem:[%s1 + $0x1fe0] sm:$0xff]
  %v1043 = vld [vmem:[%s1 + $0x1fe8] sm:$0xff]
  %v1044 = vld [vmem:[%s1 + $0x1ff0] sm:$0xff]
  %v1045 = vld [vmem:[%s1 + $0x1ff8] sm:$0xff]
  %v1046 = vld [vmem:[%s1 + $0x2000] sm:$0xff]
  %v1047 = vld [vmem:[%s1 + $0x2008] sm:$0xff]
  %v1048 = vld [vmem:[%s1 + $0x2010] sm:$0xff]
  %v1049 = vld [vmem:[%s1 + $0x2018] sm:$0xff]
  %v1050 = vld [vmem:[%s1 + $0x2020] sm:$0xff]
  %v1051 = vld [vmem:[%s1 + $0x2028] sm:$0xff]
  %v1052 = vld [vmem:[%s1 + $0x2030] sm:$0xff]
  %v1053 = vld [vmem:[%s1 + $0x2038] sm:$0xff]
  %v1054 = vld [vmem:[%s1 + $0x2040] sm:$0xff]
  %v1055 = vld [vmem:[%s1 + $0x2048] sm:$0xff]
  %v1056 = vld [vmem:[%s1 + $0x2050] sm:$0xff]
  %v1057 = vld [vmem:[%s1 + $0x2058] sm:$0xff]
  %v1058 = vld [vmem:[%s1 + $0x2060] sm:$0xff]
  %v1059 = vld [vmem:[%s1 + $0x2068] sm:$0xff]
  %v1060 = vld [vmem:[%s1 + $0x2070] sm:$0xff]
  %v1061 = vld [vmem:[%s1 + $0x2078] sm:$0xff]
  %v1062 = vld [vmem:[%s1 + $0x2080] sm:$0xff]
  %v1063 = vld [vmem:[%s1 + $0x2088] sm:$0xff]
  %v1064 = vld [vmem:[%s1 + $0x2090] sm:$0xff]
  %v1065 = vld [vmem:[%s1 + $0x2098] sm:$0xff]
  %v1066 = vld [vmem:[%s1 + $0x20a0] sm:$0xff]
  %v1067 = vld [vmem:[%s1 + $0x20a8] sm:$0xff]
  %v1068 = vld [vmem:[%s1 + $0x20b0] sm:$0xff]
  %v1069 = vld [vmem:[%s1 + $0x20b8] sm:$0xff]
  %v1070 = vld [vmem:[%s1 + $0x20c0] sm:$0xff]
  %v1071 = vld [vmem:[%s1 + $0x20c8] sm:$0xff]
  %v1072 = vld [vmem:[%s1 + $0x20d0] sm:$0xff]
  %v1073 = vld [vmem:[%s1 + $0x20d8] sm:$0xff]
  %v1074 = vld [vmem:[%s1 + $0x20e0] sm:$0xff]
  %v1075 = vld [vmem:[%s1 + $0x20e8] sm:$0xff]
  %v1076 = vld [vmem:[%s1 + $0x20f0] sm:$0xff]
  %v1077 = vld [vmem:[%s1 + $0x20f8] sm:$0xff]
  %v1078 = vld [vmem:[%s1 + $0x2100] sm:$0xff]
  %v1079 = vld [vmem:[%s1 + $0x2108] sm:$0xff]
  %v1080 = vld [vmem:[%s1 + $0x2110] sm:$0xff]
  %v1081 = vld [vmem:[%s1 + $0x2118] sm:$0xff]
  %v1082 = vld [vmem:[%s1 + $0x2120] sm:$0xff]
  %v1083 = vld [vmem:[%s1 + $0x2128] sm:$0xff]
  %v1084 = vld [vmem:[%s1 + $0x2130] sm:$0xff]
  %v1085 = vld [vmem:[%s1 + $0x2138] sm:$0xff]
  %v1086 = vld [vmem:[%s1 + $0x2140] sm:$0xff]
  %v1087 = vld [vmem:[%s1 + $0x2148] sm:$0xff]
  %v1088 = vld [vmem:[%s1 + $0x2150] sm:$0xff]
  %v1089 = vld [vmem:[%s1 + $0x2158] sm:$0xff]
  %v1090 = vld [vmem:[%s1 + $0x2160] sm:$0xff]
  %v1091 = vld [vmem:[%s1 + $0x2168] sm:$0xff]
  %v1092 = vld [vmem:[%s1 + $0x2170] sm:$0xff]
  %v1093 = vld [vmem:[%s1 + $0x2178] sm:$0xff]
  %v1094 = vld [vmem:[%s1 + $0x2180] sm:$0xff]
  %v1095 = vld [vmem:[%s1 + $0x2188] sm:$0xff]
  %v1096 = vld [vmem:[%s1 + $0x2190] sm:$0xff]
  %v1097 = vld [vmem:[%s1 + $0x2198] sm:$0xff]
  %v1098 = vld [vmem:[%s1 + $0x21a0] sm:$0xff]
  %v1099 = vld [vmem:[%s1 + $0x21a8] sm:$0xff]
  %v1100 = vld [vmem:[%s1 + $0x21b0] sm:$0xff]
  %v1101 = vld [vmem:[%s1 + $0x21b8] sm:$0xff]
  %v1102 = vld [vmem:[%s1 + $0x21c0] sm:$0xff]
  %v1103 = vld [vmem:[%s1 + $0x21c8] sm:$0xff]
  %v1104 = vld [vmem:[%s1 + $0x21d0] sm:$0xff]
  %v1105 = vld [vmem:[%s1 + $0x21d8] sm:$0xff]
  %v1106 = vld [vmem:[%s1 + $0x21e0] sm:$0xff]
  %v1107 = vld [vmem:[%s1 + $0x21e8] sm:$0xff]
  %v1108 = vld [vmem:[%s1 + $0x21f0] sm:$0xff]
  %v1109 = vld [vmem:[%s1 + $0x21f8] sm:$0xff]
  %v1110 = vld [vmem:[%s1 + $0x2200] sm:$0xff]
  %v1111 = vld [vmem:[%s1 + $0x2208] sm:$0xff]
  %v1112 = vld [vmem:[%s1 + $0x2210] sm:$0xff]
  %v1113 = vld [vmem:[%s1 + $0x2218] sm:$0xff]
  %v1114 = vld [vmem:[%s1 + $0x2220] sm:$0xff]
  %v1115 = vld [vmem:[%s1 + $0x2228] sm:$0xff]
  %v1116 = vld [vmem:[%s1 + $0x2230] sm:$0xff]
  %v1117 = vld [vmem:[%s1 + $0x2238] sm:$0xff]
  %v1118 = vld [vmem:[%s1 + $0x2240] sm:$0xff]
  %v1119 = vld [vmem:[%s1 + $0x2248] sm:$0xff]
  %v1120 = vld [vmem:[%s1 + $0x2250] sm:$0xff]
  %v1121 = vld [vmem:[%s1 + $0x2258] sm:$0xff]
  %v1122 = vld [vmem:[%s1 + $0x2260] sm:$0xff]
  %v1123 = vld [vmem:[%s1 + $0x2268] sm:$0xff]
  %v1124 = vld [vmem:[%s1 + $0x2270] sm:$0xff]
  %v1125 = vld [vmem:[%s1 + $0x2278] sm:$0xff]
  %v1126 = vld [vmem:[%s1 + $0x2280] sm:$0xff]
  %v1127 = vld [vmem:[%s1 + $0x2288] sm:$0xff]
  %v1128 = vld [vmem:[%s1 + $0x2290] sm:$0xff]
  %v1129 = vld [vmem:[%s1 + $0x2298] sm:$0xff]
  %v1130 = vld [vmem:[%s1 + $0x22a0] sm:$0xff]
  %v1131 = vld [vmem:[%s1 + $0x22a8] sm:$0xff]
  %v1132 = vld [vmem:[%s1 + $0x22b0] sm:$0xff]
  %v1133 = vld [vmem:[%s1 + $0x22b8] sm:$0xff]
  %v1134 = vld [vmem:[%s1 + $0x22c0] sm:$0xff]
  %v1135 = vld [vmem:[%s1 + $0x22c8] sm:$0xff]
  %v1136 = vld [vmem:[%s1 + $0x22d0] sm:$0xff]
  %v1137 = vld [vmem:[%s1 + $0x22d8] sm:$0xff]
  %v1138 = vld [vmem:[%s1 + $0x22e0] sm:$0xff]
  %v1139 = vld [vmem:[%s1 + $0x22e8] sm:$0xff]
  %v1140 = vld [vmem:[%s1 + $0x22f0] sm:$0xff]
  %v1141 = vld [vmem:[%s1 + $0x22f8] sm:$0xff]
  %v1142 = vld [vmem:[%s1 + $0x2300] sm:$0xff]
  %v1143 = vld [vmem:[%s1 + $0x2308] sm:$0xff]
  %v1144 = vld [vmem:[%s1 + $0x2310] sm:$0xff]
  %v1145 = vld [vmem:[%s1 + $0x2318] sm:$0xff]
  %v1146 = vld [vmem:[%s1 + $0x2320] sm:$0xff]
  %v1147 = vld [vmem:[%s1 + $0x2328] sm:$0xff]
  %v1148 = vld [vmem:[%s1 + $0x2330] sm:$0xff]
  %v1149 = vld [vmem:[%s1 + $0x2338] sm:$0xff]
  %v1150 = vld [vmem:[%s1 + $0x2340] sm:$0xff]
  %v1151 = vld [vmem:[%s1 + $0x2348] sm:$0xff]
  %v1152 = vld [vmem:[%s1 + $0x2350] sm:$0xff]
  %v1153 = vld [vmem:[%s1 + $0x2358] sm:$0xff]
  %v1154 = vld [vmem:[%s1 + $0x2360] sm:$0xff]
  %v1155 = vld [vmem:[%s1 + $0x2368] sm:$0xff]
  %v1156 = vld [vmem:[%s1 + $0x2370] sm:$0xff]
  %v1157 = vld [vmem:[%s1 + $0x2378] sm:$0xff]
  %v1158 = vld [vmem:[%s1 + $0x2380] sm:$0xff]
  %v1159 = vld [vmem:[%s1 + $0x2388] sm:$0xff]
  %v1160 = vld [vmem:[%s1 + $0x2390] sm:$0xff]
  %v1161 = vld [vmem:[%s1 + $0x2398] sm:$0xff]
  %v1162 = vld [vmem:[%s1 + $0x23a0] sm:$0xff]
  %v1163 = vld [vmem:[%s1 + $0x23a8] sm:$0xff]
  %v1164 = vld [vmem:[%s1 + $0x23b0] sm:$0xff]
  %v1165 = vld [vmem:[%s1 + $0x23b8] sm:$0xff]
  %v1166 = vld [vmem:[%s1 + $0x23c0] sm:$0xff]
  %v1167 = vld [vmem:[%s1 + $0x23c8] sm:$0xff]
  %v1168 = vld [vmem:[%s1 + $0x23d0] sm:$0xff]
  %v1169 = vld [vmem:[%s1 + $0x23d8] sm:$0xff]
  %v1170 = vld [vmem:[%s1 + $0x23e0] sm:$0xff]
  %v1171 = vld [vmem:[%s1 + $0x23e8] sm:$0xff]
  %v1172 = vld [vmem:[%s1 + $0x23f0] sm:$0xff]
  %v1173 = vld [vmem:[%s1 + $0x23f8] sm:$0xff]
  %1179 = vst [vmem:[#allocation1] ss:$4 sm:$0xff] %v17
  %s1180 = scalar_lea.vmem [#allocation1], 32
  %1181 = vst [vmem:[%s1180] ss:$4 sm:$0xff] %v18
  %v1182 = vld.sshfl [vmem:[#allocation1] sm:$0xff pattern:$0x73625140]
  %v1183 = vld.sshfl [vmem:[#allocation1 + $0x8] sm:$0xff pattern:$0x73625140]
  %v1184 = vld.sshfl [vmem:[#allocation1 + $0x10] sm:$0xff pattern:$0x73625140]
  %v1185 = vld.sshfl [vmem:[#allocation1 + $0x18] sm:$0xff pattern:$0x73625140]
  %v1186 = vld.sshfl [vmem:[#allocation1 + $0x20] sm:$0xff pattern:$0x73625140]
  %v1187 = vld.sshfl [vmem:[#allocation1 + $0x28] sm:$0xff pattern:$0x73625140]
  %v1188 = vld.sshfl [vmem:[#allocation1 + $0x30] sm:$0xff pattern:$0x73625140]
  %v1189 = vld.sshfl [vmem:[#allocation1 + $0x38] sm:$0xff pattern:$0x73625140]
  %1190 = vst [vmem:[#allocation1] ss:$4 sm:$0xff] %v19
  %1191 = vst [vmem:[%s1180] ss:$4 sm:$0xff] %v20
  %v1192 = vld.sshfl [vmem:[#allocation1] sm:$0xff pattern:$0x73625140]
  %v1193 = vld.sshfl [vmem:[#allocation1 + $0x8] sm:$0xff pattern:$0x73625140]
  %v1194 = vld.sshfl [vmem:[#allocation1 + $0x10] sm:$0xff pattern:$0x73625140]
  %v1195 = vld.sshfl [vmem:[#allocation1 + $0x18] sm:$0xff pattern:$0x73625140]
  %v1196 = vld.sshfl [vmem:[#allocation1 + $0x20] sm:$0xff pattern:$0x73625140]
  %v1197 = vld.sshfl [vmem:[#allocation1 + $0x28] sm:$0xff pattern:$0x73625140]
  %v1198 = vld.sshfl [vmem:[#allocation1 + $0x30] sm:$0xff pattern:$0x73625140]
  %v1199 = vld.sshfl [vmem:[#allocation1 + $0x38] sm:$0xff pattern:$0x73625140]
  %1200 = vst [vmem:[#allocation1] ss:$4 sm:$0xff] %v21
  %v1201 = vld.sshfl [vmem:[#allocation1] sm:$0xff pattern:$0x73625140]
  %v1202 = vld.sshfl [vmem:[#allocation1 + $0x8] sm:$0xff pattern:$0x73625140]
  %1221 = vmatpush.msra.mxu0 %v82
  %1222 = vmatpush.msra.mxu0 %v78
  %1223 = vmatpush.msra.mxu0 %v74
  %1224 = vmatpush.msra.mxu0 %v70
  %1225 = vmatpush.msra.mxu0 %v66
  %1226 = vmatpush.msra.mxu0 %v62
  %1227 = vmatpush.msra.mxu0 %v58
  %1228 = vmatpush.msra.mxu0 %v54
  %1229 = vmatpush.msra.mxu0 %v50
  %1230 = vmatpush.msra.mxu0 %v46
  %1231 = vmatpush.msra.mxu0 %v42
  %1232 = vmatpush.msra.mxu0 %v38
  %1233 = vmatpush.msra.mxu0 %v34
  %1234 = vmatpush.msra.mxu0 %v30
  %1235 = vmatpush.msra.mxu0 %v26
  %1236 = vmatpush.msra.mxu0 %v22
  %1237 = vmatmul.f32.gmra.mxu0 %v1182
  %v1238 = vpop.f32.mrf.mxu0
  %v1239 = vadd.f32 0.0, %v1238
  %1240 = vdwg.mxu0
  %1241 = vmatpush.msra.mxu0 %v146
  %1242 = vmatpush.msra.mxu0 %v142
  %1243 = vmatpush.msra.mxu0 %v138
  %1244 = vmatpush.msra.mxu0 %v134
  %1245 = vmatpush.msra.mxu0 %v130
  %1246 = vmatpush.msra.mxu0 %v126
  %1247 = vmatpush.msra.mxu0 %v122
  %1248 = vmatpush.msra.mxu0 %v118
  %1249 = vmatpush.msra.mxu0 %v114
  %1250 = vmatpush.msra.mxu0 %v110
  %1251 = vmatpush.msra.mxu0 %v106
  %1252 = vmatpush.msra.mxu0 %v102
  %1253 = vmatpush.msra.mxu0 %v98
  %1254 = vmatpush.msra.mxu0 %v94
  %1255 = vmatpush.msra.mxu0 %v90
  %1256 = vmatpush.msra.mxu0 %v86
  %1257 = vmatmul.f32.gmra.mxu0 %v1183
  %v1258 = vpop.f32.mrf.mxu0
  %v1259 = vadd.f32 %v1239, %v1258
  %1260 = vdwg.mxu0
  %1261 = vmatpush.msra.mxu0 %v210
  %1262 = vmatpush.msra.mxu0 %v206
  %1263 = vmatpush.msra.mxu0 %v202
  %1264 = vmatpush.msra.mxu0 %v198
  %1265 = vmatpush.msra.mxu0 %v194
  %1266 = vmatpush.msra.mxu0 %v190
  %1267 = vmatpush.msra.mxu0 %v186
  %1268 = vmatpush.msra.mxu0 %v182
  %1269 = vmatpush.msra.mxu0 %v178
  %1270 = vmatpush.msra.mxu0 %v174
  %1271 = vmatpush.msra.mxu0 %v170
  %1272 = vmatpush.msra.mxu0 %v166
  %1273 = vmatpush.msra.mxu0 %v162
  %1274 = vmatpush.msra.mxu0 %v158
  %1275 = vmatpush.msra.mxu0 %v154
  %1276 = vmatpush.msra.mxu0 %v150
  %1277 = vmatmul.f32.gmra.mxu0 %v1184
  %v1278 = vpop.f32.mrf.mxu0
  %v1279 = vadd.f32 %v1259, %v1278
  %1280 = vdwg.mxu0
  %1281 = vmatpush.msra.mxu0 %v274
  %1282 = vmatpush.msra.mxu0 %v270
  %1283 = vmatpush.msra.mxu0 %v266
  %1284 = vmatpush.msra.mxu0 %v262
  %1285 = vmatpush.msra.mxu0 %v258
  %1286 = vmatpush.msra.mxu0 %v254
  %1287 = vmatpush.msra.mxu0 %v250
  %1288 = vmatpush.msra.mxu0 %v246
  %1289 = vmatpush.msra.mxu0 %v242
  %1290 = vmatpush.msra.mxu0 %v238
  %1291 = vmatpush.msra.mxu0 %v234
  %1292 = vmatpush.msra.mxu0 %v230
  %1293 = vmatpush.msra.mxu0 %v226
  %1294 = vmatpush.msra.mxu0 %v222
  %1295 = vmatpush.msra.mxu0 %v218
  %1296 = vmatpush.msra.mxu0 %v214
  %1297 = vmatmul.f32.gmra.mxu0 %v1185
  %v1298 = vpop.f32.mrf.mxu0
  %v1299 = vadd.f32 %v1279, %v1298
  %1300 = vdwg.mxu0
  %1301 = vmatpush.msra.mxu0 %v338
  %1302 = vmatpush.msra.mxu0 %v334
  %1303 = vmatpush.msra.mxu0 %v330
  %1304 = vmatpush.msra.mxu0 %v326
  %1305 = vmatpush.msra.mxu0 %v322
  %1306 = vmatpush.msra.mxu0 %v318
  %1307 = vmatpush.msra.mxu0 %v314
  %1308 = vmatpush.msra.mxu0 %v310
  %1309 = vmatpush.msra.mxu0 %v306
  %1310 = vmatpush.msra.mxu0 %v302
  %1311 = vmatpush.msra.mxu0 %v298
  %1312 = vmatpush.msra.mxu0 %v294
  %1313 = vmatpush.msra.mxu0 %v290
  %1314 = vmatpush.msra.mxu0 %v286
  %1315 = vmatpush.msra.mxu0 %v282
  %1316 = vmatpush.msra.mxu0 %v278
  %1317 = vmatmul.f32.gmra.mxu0 %v1186
  %v1318 = vpop.f32.mrf.mxu0
  %v1319 = vadd.f32 %v1299, %v1318
  %1320 = vdwg.mxu0
  %1321 = vmatpush.msra.mxu0 %v402
  %1322 = vmatpush.msra.mxu0 %v398
  %1323 = vmatpush.msra.mxu0 %v394
  %1324 = vmatpush.msra.mxu0 %v390
  %1325 = vmatpush.msra.mxu0 %v386
  %1326 = vmatpush.msra.mxu0 %v382
  %1327 = vmatpush.msra.mxu0 %v378
  %1328 = vmatpush.msra.mxu0 %v374
  %1329 = vmatpush.msra.mxu0 %v370
  %1330 = vmatpush.msra.mxu0 %v366
  %1331 = vmatpush.msra.mxu0 %v362
  %1332 = vmatpush.msra.mxu0 %v358
  %1333 = vmatpush.msra.mxu0 %v354
  %1334 = vmatpush.msra.mxu0 %v350
  %1335 = vmatpush.msra.mxu0 %v346
  %1336 = vmatpush.msra.mxu0 %v342
  %1337 = vmatmul.f32.gmra.mxu0 %v1187
  %v1338 = vpop.f32.mrf.mxu0
  %v1339 = vadd.f32 %v1319, %v1338
  %1340 = vdwg.mxu0
  %1341 = vmatpush.msra.mxu0 %v466
  %1342 = vmatpush.msra.mxu0 %v462
  %1343 = vmatpush.msra.mxu0 %v458
  %1344 = vmatpush.msra.mxu0 %v454
  %1345 = vmatpush.msra.mxu0 %v450
  %1346 = vmatpush.msra.mxu0 %v446
  %1347 = vmatpush.msra.mxu0 %v442
  %1348 = vmatpush.msra.mxu0 %v438
  %1349 = vmatpush.msra.mxu0 %v434
  %1350 = vmatpush.msra.mxu0 %v430
  %1351 = vmatpush.msra.mxu0 %v426
  %1352 = vmatpush.msra.mxu0 %v422
  %1353 = vmatpush.msra.mxu0 %v418
  %1354 = vmatpush.msra.mxu0 %v414
  %1355 = vmatpush.msra.mxu0 %v410
  %1356 = vmatpush.msra.mxu0 %v406
  %1357 = vmatmul.f32.gmra.mxu0 %v1188
  %v1358 = vpop.f32.mrf.mxu0
  %v1359 = vadd.f32 %v1339, %v1358
  %1360 = vdwg.mxu0
  %1361 = vmatpush.msra.mxu0 %v530
  %1362 = vmatpush.msra.mxu0 %v526
  %1363 = vmatpush.msra.mxu0 %v522
  %1364 = vmatpush.msra.mxu0 %v518
  %1365 = vmatpush.msra.mxu0 %v514
  %1366 = vmatpush.msra.mxu0 %v510
  %1367 = vmatpush.msra.mxu0 %v506
  %1368 = vmatpush.msra.mxu0 %v502
  %1369 = vmatpush.msra.mxu0 %v498
  %1370 = vmatpush.msra.mxu0 %v494
  %1371 = vmatpush.msra.mxu0 %v490
  %1372 = vmatpush.msra.mxu0 %v486
  %1373 = vmatpush.msra.mxu0 %v482
  %1374 = vmatpush.msra.mxu0 %v478
  %1375 = vmatpush.msra.mxu0 %v474
  %1376 = vmatpush.msra.mxu0 %v470
  %1377 = vmatmul.f32.gmra.mxu0 %v1189
  %v1378 = vpop.f32.mrf.mxu0
  %v1379 = vadd.f32 %v1359, %v1378
  %1380 = vdwg.mxu0
  %1381 = vmatpush.msra.mxu0 %v594
  %1382 = vmatpush.msra.mxu0 %v590
  %1383 = vmatpush.msra.mxu0 %v586
  %1384 = vmatpush.msra.mxu0 %v582
  %1385 = vmatpush.msra.mxu0 %v578
  %1386 = vmatpush.msra.mxu0 %v574
  %1387 = vmatpush.msra.mxu0 %v570
  %1388 = vmatpush.msra.mxu0 %v566
  %1389 = vmatpush.msra.mxu0 %v562
  %1390 = vmatpush.msra.mxu0 %v558
  %1391 = vmatpush.msra.mxu0 %v554
  %1392 = vmatpush.msra.mxu0 %v550
  %1393 = vmatpush.msra.mxu0 %v546
  %1394 = vmatpush.msra.mxu0 %v542
  %1395 = vmatpush.msra.mxu0 %v538
  %1396 = vmatpush.msra.mxu0 %v534
  %1397 = vmatmul.f32.gmra.mxu0 %v1192
  %v1398 = vpop.f32.mrf.mxu0
  %v1399 = vadd.f32 %v1379, %v1398
  %1400 = vdwg.mxu0
  %1401 = vmatpush.msra.mxu0 %v658
  %1402 = vmatpush.msra.mxu0 %v654
  %1403 = vmatpush.msra.mxu0 %v650
  %1404 = vmatpush.msra.mxu0 %v646
  %1405 = vmatpush.msra.mxu0 %v642
  %1406 = vmatpush.msra.mxu0 %v638
  %1407 = vmatpush.msra.mxu0 %v634
  %1408 = vmatpush.msra.mxu0 %v630
  %1409 = vmatpush.msra.mxu0 %v626
  %1410 = vmatpush.msra.mxu0 %v622
  %1411 = vmatpush.msra.mxu0 %v618
  %1412 = vmatpush.msra.mxu0 %v614
  %1413 = vmatpush.msra.mxu0 %v610
  %1414 = vmatpush.msra.mxu0 %v606
  %1415 = vmatpush.msra.mxu0 %v602
  %1416 = vmatpush.msra.mxu0 %v598
  %1417 = vmatmul.f32.gmra.mxu0 %v1193
  %v1418 = vpop.f32.mrf.mxu0
  %v1419 = vadd.f32 %v1399, %v1418
  %1420 = vdwg.mxu0
  %1421 = vmatpush.msra.mxu0 %v722
  %1422 = vmatpush.msra.mxu0 %v718
  %1423 = vmatpush.msra.mxu0 %v714
  %1424 = vmatpush.msra.mxu0 %v710
  %1425 = vmatpush.msra.mxu0 %v706
  %1426 = vmatpush.msra.mxu0 %v702
  %1427 = vmatpush.msra.mxu0 %v698
  %1428 = vmatpush.msra.mxu0 %v694
  %1429 = vmatpush.msra.mxu0 %v690
  %1430 = vmatpush.msra.mxu0 %v686
  %1431 = vmatpush.msra.mxu0 %v682
  %1432 = vmatpush.msra.mxu0 %v678
  %1433 = vmatpush.msra.mxu0 %v674
  %1434 = vmatpush.msra.mxu0 %v670
  %1435 = vmatpush.msra.mxu0 %v666
  %1436 = vmatpush.msra.mxu0 %v662
  %1437 = vmatmul.f32.gmra.mxu0 %v1194
  %v1438 = vpop.f32.mrf.mxu0
  %v1439 = vadd.f32 %v1419, %v1438
  %1440 = vdwg.mxu0
  %1441 = vmatpush.msra.mxu0 %v786
  %1442 = vmatpush.msra.mxu0 %v782
  %1443 = vmatpush.msra.mxu0 %v778
  %1444 = vmatpush.msra.mxu0 %v774
  %1445 = vmatpush.msra.mxu0 %v770
  %1446 = vmatpush.msra.mxu0 %v766
  %1447 = vmatpush.msra.mxu0 %v762
  %1448 = vmatpush.msra.mxu0 %v758
  %1449 = vmatpush.msra.mxu0 %v754
  %1450 = vmatpush.msra.mxu0 %v750
  %1451 = vmatpush.msra.mxu0 %v746
  %1452 = vmatpush.msra.mxu0 %v742
  %1453 = vmatpush.msra.mxu0 %v738
  %1454 = vmatpush.msra.mxu0 %v734
  %1455 = vmatpush.msra.mxu0 %v730
  %1456 = vmatpush.msra.mxu0 %v726
  %1457 = vmatmul.f32.gmra.mxu0 %v1195
  %v1458 = vpop.f32.mrf.mxu0
  %v1459 = vadd.f32 %v1439, %v1458
  %1460 = vdwg.mxu0
  %1461 = vmatpush.msra.mxu0 %v850
  %1462 = vmatpush.msra.mxu0 %v846
  %1463 = vmatpush.msra.mxu0 %v842
  %1464 = vmatpush.msra.mxu0 %v838
  %1465 = vmatpush.msra.mxu0 %v834
  %1466 = vmatpush.msra.mxu0 %v830
  %1467 = vmatpush.msra.mxu0 %v826
  %1468 = vmatpush.msra.mxu0 %v822
  %1469 = vmatpush.msra.mxu0 %v818
  %1470 = vmatpush.msra.mxu0 %v814
  %1471 = vmatpush.msra.mxu0 %v810
  %1472 = vmatpush.msra.mxu0 %v806
  %1473 = vmatpush.msra.mxu0 %v802
  %1474 = vmatpush.msra.mxu0 %v798
  %1475 = vmatpush.msra.mxu0 %v794
  %1476 = vmatpush.msra.mxu0 %v790
  %1477 = vmatmul.f32.gmra.mxu0 %v1196
  %v1478 = vpop.f32.mrf.mxu0
  %v1479 = vadd.f32 %v1459, %v1478
  %1480 = vdwg.mxu0
  %1481 = vmatpush.msra.mxu0 %v914
  %1482 = vmatpush.msra.mxu0 %v910
  %1483 = vmatpush.msra.mxu0 %v906
  %1484 = vmatpush.msra.mxu0 %v902
  %1485 = vmatpush.msra.mxu0 %v898
  %1486 = vmatpush.msra.mxu0 %v894
  %1487 = vmatpush.msra.mxu0 %v890
  %1488 = vmatpush.msra.mxu0 %v886
  %1489 = vmatpush.msra.mxu0 %v882
  %1490 = vmatpush.msra.mxu0 %v878
  %1491 = vmatpush.msra.mxu0 %v874
  %1492 = vmatpush.msra.mxu0 %v870
  %1493 = vmatpush.msra.mxu0 %v866
  %1494 = vmatpush.msra.mxu0 %v862
  %1495 = vmatpush.msra.mxu0 %v858
  %1496 = vmatpush.msra.mxu0 %v854
  %1497 = vmatmul.f32.gmra.mxu0 %v1197
  %v1498 = vpop.f32.mrf.mxu0
  %v1499 = vadd.f32 %v1479, %v1498
  %1500 = vdwg.mxu0
  %1501 = vmatpush.msra.mxu0 %v978
  %1502 = vmatpush.msra.mxu0 %v974
  %1503 = vmatpush.msra.mxu0 %v970
  %1504 = vmatpush.msra.mxu0 %v966
  %1505 = vmatpush.msra.mxu0 %v962
  %1506 = vmatpush.msra.mxu0 %v958
  %1507 = vmatpush.msra.mxu0 %v954
  %1508 = vmatpush.msra.mxu0 %v950
  %1509 = vmatpush.msra.mxu0 %v946
  %1510 = vmatpush.msra.mxu0 %v942
  %1511 = vmatpush.msra.mxu0 %v938
  %1512 = vmatpush.msra.mxu0 %v934
  %1513 = vmatpush.msra.mxu0 %v930
  %1514 = vmatpush.msra.mxu0 %v926
  %1515 = vmatpush.msra.mxu0 %v922
  %1516 = vmatpush.msra.mxu0 %v918
  %1517 = vmatmul.f32.gmra.mxu0 %v1198
  %v1518 = vpop.f32.mrf.mxu0
  %v1519 = vadd.f32 %v1499, %v1518
  %1520 = vdwg.mxu0
  %1521 = vmatpush.msra.mxu0 %v1042
  %1522 = vmatpush.msra.mxu0 %v1038
  %1523 = vmatpush.msra.mxu0 %v1034
  %1524 = vmatpush.msra.mxu0 %v1030
  %1525 = vmatpush.msra.mxu0 %v1026
  %1526 = vmatpush.msra.mxu0 %v1022
  %1527 = vmatpush.msra.mxu0 %v1018
  %1528 = vmatpush.msra.mxu0 %v1014
  %1529 = vmatpush.msra.mxu0 %v1010
  %1530 = vmatpush.msra.mxu0 %v1006
  %1531 = vmatpush.msra.mxu0 %v1002
  %1532 = vmatpush.msra.mxu0 %v998
  %1533 = vmatpush.msra.mxu0 %v994
  %1534 = vmatpush.msra.mxu0 %v990
  %1535 = vmatpush.msra.mxu0 %v986
  %1536 = vmatpush.msra.mxu0 %v982
  %1537 = vmatmul.f32.gmra.mxu0 %v1199
  %v1538 = vpop.f32.mrf.mxu0
  %v1539 = vadd.f32 %v1519, %v1538
  %1540 = vdwg.mxu0
  %1541 = vmatpush.msra.mxu0 %v1106
  %1542 = vmatpush.msra.mxu0 %v1102
  %1543 = vmatpush.msra.mxu0 %v1098
  %1544 = vmatpush.msra.mxu0 %v1094
  %1545 = vmatpush.msra.mxu0 %v1090
  %1546 = vmatpush.msra.mxu0 %v1086
  %1547 = vmatpush.msra.mxu0 %v1082
  %1548 = vmatpush.msra.mxu0 %v1078
  %1549 = vmatpush.msra.mxu0 %v1074
  %1550 = vmatpush.msra.mxu0 %v1070
  %1551 = vmatpush.msra.mxu0 %v1066
  %1552 = vmatpush.msra.mxu0 %v1062
  %1553 = vmatpush.msra.mxu0 %v1058
  %1554 = vmatpush.msra.mxu0 %v1054
  %1555 = vmatpush.msra.mxu0 %v1050
  %1556 = vmatpush.msra.mxu0 %v1046
  %1557 = vmatmul.f32.gmra.mxu0 %v1201
  %v1558 = vpop.f32.mrf.mxu0
  %v1559 = vadd.f32 %v1539, %v1558
  %1560 = vdwg.mxu0
  %1561 = vmatpush.msra.mxu0 %v1170
  %1562 = vmatpush.msra.mxu0 %v1166
  %1563 = vmatpush.msra.mxu0 %v1162
  %1564 = vmatpush.msra.mxu0 %v1158
  %1565 = vmatpush.msra.mxu0 %v1154
  %1566 = vmatpush.msra.mxu0 %v1150
  %1567 = vmatpush.msra.mxu0 %v1146
  %1568 = vmatpush.msra.mxu0 %v1142
  %1569 = vmatpush.msra.mxu0 %v1138
  %1570 = vmatpush.msra.mxu0 %v1134
  %1571 = vmatpush.msra.mxu0 %v1130
  %1572 = vmatpush.msra.mxu0 %v1126
  %1573 = vmatpush.msra.mxu0 %v1122
  %1574 = vmatpush.msra.mxu0 %v1118
  %1575 = vmatpush.msra.mxu0 %v1114
  %1576 = vmatpush.msra.mxu0 %v1110
  %1577 = vmatmul.f32.gmra.mxu0 %v1202
  %v1578 = vpop.f32.mrf.mxu0
  %v1579 = vadd.f32 %v1559, %v1578
  %1580 = vdwg.mxu0
  %1581 = vmatpush.msra.mxu0 %v83
  %1582 = vmatpush.msra.mxu0 %v79
  %1583 = vmatpush.msra.mxu0 %v75
  %1584 = vmatpush.msra.mxu0 %v71
  %1585 = vmatpush.msra.mxu0 %v67
  %1586 = vmatpush.msra.mxu0 %v63
  %1587 = vmatpush.msra.mxu0 %v59
  %1588 = vmatpush.msra.mxu0 %v55
  %1589 = vmatpush.msra.mxu0 %v51
  %1590 = vmatpush.msra.mxu0 %v47
  %1591 = vmatpush.msra.mxu0 %v43
  %1592 = vmatpush.msra.mxu0 %v39
  %1593 = vmatpush.msra.mxu0 %v35
  %1594 = vmatpush.msra.mxu0 %v31
  %1595 = vmatpush.msra.mxu0 %v27
  %1596 = vmatpush.msra.mxu0 %v23
  %1597 = vmatmul.f32.gmra.mxu0 %v1182
  %v1598 = vpop.f32.mrf.mxu0
  %v1599 = vadd.f32 0.0, %v1598
  %1600 = vdwg.mxu0
  %1601 = vmatpush.msra.mxu0 %v147
  %1602 = vmatpush.msra.mxu0 %v143
  %1603 = vmatpush.msra.mxu0 %v139
  %1604 = vmatpush.msra.mxu0 %v135
  %1605 = vmatpush.msra.mxu0 %v131
  %1606 = vmatpush.msra.mxu0 %v127
  %1607 = vmatpush.msra.mxu0 %v123
  %1608 = vmatpush.msra.mxu0 %v119
  %1609 = vmatpush.msra.mxu0 %v115
  %1610 = vmatpush.msra.mxu0 %v111
  %1611 = vmatpush.msra.mxu0 %v107
  %1612 = vmatpush.msra.mxu0 %v103
  %1613 = vmatpush.msra.mxu0 %v99
  %1614 = vmatpush.msra.mxu0 %v95
  %1615 = vmatpush.msra.mxu0 %v91
  %1616 = vmatpush.msra.mxu0 %v87
  %1617 = vmatmul.f32.gmra.mxu0 %v1183
  %v1618 = vpop.f32.mrf.mxu0
  %v1619 = vadd.f32 %v1599, %v1618
  %1620 = vdwg.mxu0
  %1621 = vmatpush.msra.mxu0 %v211
  %1622 = vmatpush.msra.mxu0 %v207
  %1623 = vmatpush.msra.mxu0 %v203
  %1624 = vmatpush.msra.mxu0 %v199
  %1625 = vmatpush.msra.mxu0 %v195
  %1626 = vmatpush.msra.mxu0 %v191
  %1627 = vmatpush.msra.mxu0 %v187
  %1628 = vmatpush.msra.mxu0 %v183
  %1629 = vmatpush.msra.mxu0 %v179
  %1630 = vmatpush.msra.mxu0 %v175
  %1631 = vmatpush.msra.mxu0 %v171
  %1632 = vmatpush.msra.mxu0 %v167
  %1633 = vmatpush.msra.mxu0 %v163
  %1634 = vmatpush.msra.mxu0 %v159
  %1635 = vmatpush.msra.mxu0 %v155
  %1636 = vmatpush.msra.mxu0 %v151
  %1637 = vmatmul.f32.gmra.mxu0 %v1184
  %v1638 = vpop.f32.mrf.mxu0
  %v1639 = vadd.f32 %v1619, %v1638
  %1640 = vdwg.mxu0
  %1641 = vmatpush.msra.mxu0 %v275
  %1642 = vmatpush.msra.mxu0 %v271
  %1643 = vmatpush.msra.mxu0 %v267
  %1644 = vmatpush.msra.mxu0 %v263
  %1645 = vmatpush.msra.mxu0 %v259
  %1646 = vmatpush.msra.mxu0 %v255
  %1647 = vmatpush.msra.mxu0 %v251
  %1648 = vmatpush.msra.mxu0 %v247
  %1649 = vmatpush.msra.mxu0 %v243
  %1650 = vmatpush.msra.mxu0 %v239
  %1651 = vmatpush.msra.mxu0 %v235
  %1652 = vmatpush.msra.mxu0 %v231
  %1653 = vmatpush.msra.mxu0 %v227
  %1654 = vmatpush.msra.mxu0 %v223
  %1655 = vmatpush.msra.mxu0 %v219
  %1656 = vmatpush.msra.mxu0 %v215
  %1657 = vmatmul.f32.gmra.mxu0 %v1185
  %v1658 = vpop.f32.mrf.mxu0
  %v1659 = vadd.f32 %v1639, %v1658
  %1660 = vdwg.mxu0
  %1661 = vmatpush.msra.mxu0 %v339
  %1662 = vmatpush.msra.mxu0 %v335
  %1663 = vmatpush.msra.mxu0 %v331
  %1664 = vmatpush.msra.mxu0 %v327
  %1665 = vmatpush.msra.mxu0 %v323
  %1666 = vmatpush.msra.mxu0 %v319
  %1667 = vmatpush.msra.mxu0 %v315
  %1668 = vmatpush.msra.mxu0 %v311
  %1669 = vmatpush.msra.mxu0 %v307
  %1670 = vmatpush.msra.mxu0 %v303
  %1671 = vmatpush.msra.mxu0 %v299
  %1672 = vmatpush.msra.mxu0 %v295
  %1673 = vmatpush.msra.mxu0 %v291
  %1674 = vmatpush.msra.mxu0 %v287
  %1675 = vmatpush.msra.mxu0 %v283
  %1676 = vmatpush.msra.mxu0 %v279
  %1677 = vmatmul.f32.gmra.mxu0 %v1186
  %v1678 = vpop.f32.mrf.mxu0
  %v1679 = vadd.f32 %v1659, %v1678
  %1680 = vdwg.mxu0
  %1681 = vmatpush.msra.mxu0 %v403
  %1682 = vmatpush.msra.mxu0 %v399
  %1683 = vmatpush.msra.mxu0 %v395
  %1684 = vmatpush.msra.mxu0 %v391
  %1685 = vmatpush.msra.mxu0 %v387
  %1686 = vmatpush.msra.mxu0 %v383
  %1687 = vmatpush.msra.mxu0 %v379
  %1688 = vmatpush.msra.mxu0 %v375
  %1689 = vmatpush.msra.mxu0 %v371
  %1690 = vmatpush.msra.mxu0 %v367
  %1691 = vmatpush.msra.mxu0 %v363
  %1692 = vmatpush.msra.mxu0 %v359
  %1693 = vmatpush.msra.mxu0 %v355
  %1694 = vmatpush.msra.mxu0 %v351
  %1695 = vmatpush.msra.mxu0 %v347
  %1696 = vmatpush.msra.mxu0 %v343
  %1697 = vmatmul.f32.gmra.mxu0 %v1187
  %v1698 = vpop.f32.mrf.mxu0
  %v1699 = vadd.f32 %v1679, %v1698
  %1700 = vdwg.mxu0
  %1701 = vmatpush.msra.mxu0 %v467
  %1702 = vmatpush.msra.mxu0 %v463
  %1703 = vmatpush.msra.mxu0 %v459
  %1704 = vmatpush.msra.mxu0 %v455
  %1705 = vmatpush.msra.mxu0 %v451
  %1706 = vmatpush.msra.mxu0 %v447
  %1707 = vmatpush.msra.mxu0 %v443
  %1708 = vmatpush.msra.mxu0 %v439
  %1709 = vmatpush.msra.mxu0 %v435
  %1710 = vmatpush.msra.mxu0 %v431
  %1711 = vmatpush.msra.mxu0 %v427
  %1712 = vmatpush.msra.mxu0 %v423
  %1713 = vmatpush.msra.mxu0 %v419
  %1714 = vmatpush.msra.mxu0 %v415
  %1715 = vmatpush.msra.mxu0 %v411
  %1716 = vmatpush.msra.mxu0 %v407
  %1717 = vmatmul.f32.gmra.mxu0 %v1188
  %v1718 = vpop.f32.mrf.mxu0
  %v1719 = vadd.f32 %v1699, %v1718
  %1720 = vdwg.mxu0
  %1721 = vmatpush.msra.mxu0 %v531
  %1722 = vmatpush.msra.mxu0 %v527
  %1723 = vmatpush.msra.mxu0 %v523
  %1724 = vmatpush.msra.mxu0 %v519
  %1725 = vmatpush.msra.mxu0 %v515
  %1726 = vmatpush.msra.mxu0 %v511
  %1727 = vmatpush.msra.mxu0 %v507
  %1728 = vmatpush.msra.mxu0 %v503
  %1729 = vmatpush.msra.mxu0 %v499
  %1730 = vmatpush.msra.mxu0 %v495
  %1731 = vmatpush.msra.mxu0 %v491
  %1732 = vmatpush.msra.mxu0 %v487
  %1733 = vmatpush.msra.mxu0 %v483
  %1734 = vmatpush.msra.mxu0 %v479
  %1735 = vmatpush.msra.mxu0 %v475
  %1736 = vmatpush.msra.mxu0 %v471
  %1737 = vmatmul.f32.gmra.mxu0 %v1189
  %v1738 = vpop.f32.mrf.mxu0
  %v1739 = vadd.f32 %v1719, %v1738
  %1740 = vdwg.mxu0
  %1741 = vmatpush.msra.mxu0 %v595
  %1742 = vmatpush.msra.mxu0 %v591
  %1743 = vmatpush.msra.mxu0 %v587
  %1744 = vmatpush.msra.mxu0 %v583
  %1745 = vmatpush.msra.mxu0 %v579
  %1746 = vmatpush.msra.mxu0 %v575
  %1747 = vmatpush.msra.mxu0 %v571
  %1748 = vmatpush.msra.mxu0 %v567
  %1749 = vmatpush.msra.mxu0 %v563
  %1750 = vmatpush.msra.mxu0 %v559
  %1751 = vmatpush.msra.mxu0 %v555
  %1752 = vmatpush.msra.mxu0 %v551
  %1753 = vmatpush.msra.mxu0 %v547
  %1754 = vmatpush.msra.mxu0 %v543
  %1755 = vmatpush.msra.mxu0 %v539
  %1756 = vmatpush.msra.mxu0 %v535
  %1757 = vmatmul.f32.gmra.mxu0 %v1192
  %v1758 = vpop.f32.mrf.mxu0
  %v1759 = vadd.f32 %v1739, %v1758
  %1760 = vdwg.mxu0
  %1761 = vmatpush.msra.mxu0 %v659
  %1762 = vmatpush.msra.mxu0 %v655
  %1763 = vmatpush.msra.mxu0 %v651
  %1764 = vmatpush.msra.mxu0 %v647
  %1765 = vmatpush.msra.mxu0 %v643
  %1766 = vmatpush.msra.mxu0 %v639
  %1767 = vmatpush.msra.mxu0 %v635
  %1768 = vmatpush.msra.mxu0 %v631
  %1769 = vmatpush.msra.mxu0 %v627
  %1770 = vmatpush.msra.mxu0 %v623
  %1771 = vmatpush.msra.mxu0 %v619
  %1772 = vmatpush.msra.mxu0 %v615
  %1773 = vmatpush.msra.mxu0 %v611
  %1774 = vmatpush.msra.mxu0 %v607
  %1775 = vmatpush.msra.mxu0 %v603
  %1776 = vmatpush.msra.mxu0 %v599
  %1777 = vmatmul.f32.gmra.mxu0 %v1193
  %v1778 = vpop.f32.mrf.mxu0
  %v1779 = vadd.f32 %v1759, %v1778
  %1780 = vdwg.mxu0
  %1781 = vmatpush.msra.mxu0 %v723
  %1782 = vmatpush.msra.mxu0 %v719
  %1783 = vmatpush.msra.mxu0 %v715
  %1784 = vmatpush.msra.mxu0 %v711
  %1785 = vmatpush.msra.mxu0 %v707
  %1786 = vmatpush.msra.mxu0 %v703
  %1787 = vmatpush.msra.mxu0 %v699
  %1788 = vmatpush.msra.mxu0 %v695
  %1789 = vmatpush.msra.mxu0 %v691
  %1790 = vmatpush.msra.mxu0 %v687
  %1791 = vmatpush.msra.mxu0 %v683
  %1792 = vmatpush.msra.mxu0 %v679
  %1793 = vmatpush.msra.mxu0 %v675
  %1794 = vmatpush.msra.mxu0 %v671
  %1795 = vmatpush.msra.mxu0 %v667
  %1796 = vmatpush.msra.mxu0 %v663
  %1797 = vmatmul.f32.gmra.mxu0 %v1194
  %v1798 = vpop.f32.mrf.mxu0
  %v1799 = vadd.f32 %v1779, %v1798
  %1800 = vdwg.mxu0
  %1801 = vmatpush.msra.mxu0 %v787
  %1802 = vmatpush.msra.mxu0 %v783
  %1803 = vmatpush.msra.mxu0 %v779
  %1804 = vmatpush.msra.mxu0 %v775
  %1805 = vmatpush.msra.mxu0 %v771
  %1806 = vmatpush.msra.mxu0 %v767
  %1807 = vmatpush.msra.mxu0 %v763
  %1808 = vmatpush.msra.mxu0 %v759
  %1809 = vmatpush.msra.mxu0 %v755
  %1810 = vmatpush.msra.mxu0 %v751
  %1811 = vmatpush.msra.mxu0 %v747
  %1812 = vmatpush.msra.mxu0 %v743
  %1813 = vmatpush.msra.mxu0 %v739
  %1814 = vmatpush.msra.mxu0 %v735
  %1815 = vmatpush.msra.mxu0 %v731
  %1816 = vmatpush.msra.mxu0 %v727
  %1817 = vmatmul.f32.gmra.mxu0 %v1195
  %v1818 = vpop.f32.mrf.mxu0
  %v1819 = vadd.f32 %v1799, %v1818
  %1820 = vdwg.mxu0
  %1821 = vmatpush.msra.mxu0 %v851
  %1822 = vmatpush.msra.mxu0 %v847
  %1823 = vmatpush.msra.mxu0 %v843
  %1824 = vmatpush.msra.mxu0 %v839
  %1825 = vmatpush.msra.mxu0 %v835
  %1826 = vmatpush.msra.mxu0 %v831
  %1827 = vmatpush.msra.mxu0 %v827
  %1828 = vmatpush.msra.mxu0 %v823
  %1829 = vmatpush.msra.mxu0 %v819
  %1830 = vmatpush.msra.mxu0 %v815
  %1831 = vmatpush.msra.mxu0 %v811
  %1832 = vmatpush.msra.mxu0 %v807
  %1833 = vmatpush.msra.mxu0 %v803
  %1834 = vmatpush.msra.mxu0 %v799
  %1835 = vmatpush.msra.mxu0 %v795
  %1836 = vmatpush.msra.mxu0 %v791
  %1837 = vmatmul.f32.gmra.mxu0 %v1196
  %v1838 = vpop.f32.mrf.mxu0
  %v1839 = vadd.f32 %v1819, %v1838
  %1840 = vdwg.mxu0
  %1841 = vmatpush.msra.mxu0 %v915
  %1842 = vmatpush.msra.mxu0 %v911
  %1843 = vmatpush.msra.mxu0 %v907
  %1844 = vmatpush.msra.mxu0 %v903
  %1845 = vmatpush.msra.mxu0 %v899
  %1846 = vmatpush.msra.mxu0 %v895
  %1847 = vmatpush.msra.mxu0 %v891
  %1848 = vmatpush.msra.mxu0 %v887
  %1849 = vmatpush.msra.mxu0 %v883
  %1850 = vmatpush.msra.mxu0 %v879
  %1851 = vmatpush.msra.mxu0 %v875
  %1852 = vmatpush.msra.mxu0 %v871
  %1853 = vmatpush.msra.mxu0 %v867
  %1854 = vmatpush.msra.mxu0 %v863
  %1855 = vmatpush.msra.mxu0 %v859
  %1856 = vmatpush.msra.mxu0 %v855
  %1857 = vmatmul.f32.gmra.mxu0 %v1197
  %v1858 = vpop.f32.mrf.mxu0
  %v1859 = vadd.f32 %v1839, %v1858
  %1860 = vdwg.mxu0
  %1861 = vmatpush.msra.mxu0 %v979
  %1862 = vmatpush.msra.mxu0 %v975
  %1863 = vmatpush.msra.mxu0 %v971
  %1864 = vmatpush.msra.mxu0 %v967
  %1865 = vmatpush.msra.mxu0 %v963
  %1866 = vmatpush.msra.mxu0 %v959
  %1867 = vmatpush.msra.mxu0 %v955
  %1868 = vmatpush.msra.mxu0 %v951
  %1869 = vmatpush.msra.mxu0 %v947
  %1870 = vmatpush.msra.mxu0 %v943
  %1871 = vmatpush.msra.mxu0 %v939
  %1872 = vmatpush.msra.mxu0 %v935
  %1873 = vmatpush.msra.mxu0 %v931
  %1874 = vmatpush.msra.mxu0 %v927
  %1875 = vmatpush.msra.mxu0 %v923
  %1876 = vmatpush.msra.mxu0 %v919
  %1877 = vmatmul.f32.gmra.mxu0 %v1198
  %v1878 = vpop.f32.mrf.mxu0
  %v1879 = vadd.f32 %v1859, %v1878
  %1880 = vdwg.mxu0
  %1881 = vmatpush.msra.mxu0 %v1043
  %1882 = vmatpush.msra.mxu0 %v1039
  %1883 = vmatpush.msra.mxu0 %v1035
  %1884 = vmatpush.msra.mxu0 %v1031
  %1885 = vmatpush.msra.mxu0 %v1027
  %1886 = vmatpush.msra.mxu0 %v1023
  %1887 = vmatpush.msra.mxu0 %v1019
  %1888 = vmatpush.msra.mxu0 %v1015
  %1889 = vmatpush.msra.mxu0 %v1011
  %1890 = vmatpush.msra.mxu0 %v1007
  %1891 = vmatpush.msra.mxu0 %v1003
  %1892 = vmatpush.msra.mxu0 %v999
  %1893 = vmatpush.msra.mxu0 %v995
  %1894 = vmatpush.msra.mxu0 %v991
  %1895 = vmatpush.msra.mxu0 %v987
  %1896 = vmatpush.msra.mxu0 %v983
  %1897 = vmatmul.f32.gmra.mxu0 %v1199
  %v1898 = vpop.f32.mrf.mxu0
  %v1899 = vadd.f32 %v1879, %v1898
  %1900 = vdwg.mxu0
  %1901 = vmatpush.msra.mxu0 %v1107
  %1902 = vmatpush.msra.mxu0 %v1103
  %1903 = vmatpush.msra.mxu0 %v1099
  %1904 = vmatpush.msra.mxu0 %v1095
  %1905 = vmatpush.msra.mxu0 %v1091
  %1906 = vmatpush.msra.mxu0 %v1087
  %1907 = vmatpush.msra.mxu0 %v1083
  %1908 = vmatpush.msra.mxu0 %v1079
  %1909 = vmatpush.msra.mxu0 %v1075
  %1910 = vmatpush.msra.mxu0 %v1071
  %1911 = vmatpush.msra.mxu0 %v1067
  %1912 = vmatpush.msra.mxu0 %v1063
  %1913 = vmatpush.msra.mxu0 %v1059
  %1914 = vmatpush.msra.mxu0 %v1055
  %1915 = vmatpush.msra.mxu0 %v1051
  %1916 = vmatpush.msra.mxu0 %v1047
  %1917 = vmatmul.f32.gmra.mxu0 %v1201
  %v1918 = vpop.f32.mrf.mxu0
  %v1919 = vadd.f32 %v1899, %v1918
  %1920 = vdwg.mxu0
  %1921 = vmatpush.msra.mxu0 %v1171
  %1922 = vmatpush.msra.mxu0 %v1167
  %1923 = vmatpush.msra.mxu0 %v1163
  %1924 = vmatpush.msra.mxu0 %v1159
  %1925 = vmatpush.msra.mxu0 %v1155
  %1926 = vmatpush.msra.mxu0 %v1151
  %1927 = vmatpush.msra.mxu0 %v1147
  %1928 = vmatpush.msra.mxu0 %v1143
  %1929 = vmatpush.msra.mxu0 %v1139
  %1930 = vmatpush.msra.mxu0 %v1135
  %1931 = vmatpush.msra.mxu0 %v1131
  %1932 = vmatpush.msra.mxu0 %v1127
  %1933 = vmatpush.msra.mxu0 %v1123
  %1934 = vmatpush.msra.mxu0 %v1119
  %1935 = vmatpush.msra.mxu0 %v1115
  %1936 = vmatpush.msra.mxu0 %v1111
  %1937 = vmatmul.f32.gmra.mxu0 %v1202
  %v1938 = vpop.f32.mrf.mxu0
  %v1939 = vadd.f32 %v1919, %v1938
  %1940 = vdwg.mxu0
  %1941 = vmatpush.msra.mxu0 %v84
  %1942 = vmatpush.msra.mxu0 %v80
  %1943 = vmatpush.msra.mxu0 %v76
  %1944 = vmatpush.msra.mxu0 %v72
  %1945 = vmatpush.msra.mxu0 %v68
  %1946 = vmatpush.msra.mxu0 %v64
  %1947 = vmatpush.msra.mxu0 %v60
  %1948 = vmatpush.msra.mxu0 %v56
  %1949 = vmatpush.msra.mxu0 %v52
  %1950 = vmatpush.msra.mxu0 %v48
  %1951 = vmatpush.msra.mxu0 %v44
  %1952 = vmatpush.msra.mxu0 %v40
  %1953 = vmatpush.msra.mxu0 %v36
  %1954 = vmatpush.msra.mxu0 %v32
  %1955 = vmatpush.msra.mxu0 %v28
  %1956 = vmatpush.msra.mxu0 %v24
  %1957 = vmatmul.f32.gmra.mxu0 %v1182
  %v1958 = vpop.f32.mrf.mxu0
  %v1959 = vadd.f32 0.0, %v1958
  %1960 = vdwg.mxu0
  %1961 = vmatpush.msra.mxu0 %v148
  %1962 = vmatpush.msra.mxu0 %v144
  %1963 = vmatpush.msra.mxu0 %v140
  %1964 = vmatpush.msra.mxu0 %v136
  %1965 = vmatpush.msra.mxu0 %v132
  %1966 = vmatpush.msra.mxu0 %v128
  %1967 = vmatpush.msra.mxu0 %v124
  %1968 = vmatpush.msra.mxu0 %v120
  %1969 = vmatpush.msra.mxu0 %v116
  %1970 = vmatpush.msra.mxu0 %v112
  %1971 = vmatpush.msra.mxu0 %v108
  %1972 = vmatpush.msra.mxu0 %v104
  %1973 = vmatpush.msra.mxu0 %v100
  %1974 = vmatpush.msra.mxu0 %v96
  %1975 = vmatpush.msra.mxu0 %v92
  %1976 = vmatpush.msra.mxu0 %v88
  %1977 = vmatmul.f32.gmra.mxu0 %v1183
  %v1978 = vpop.f32.mrf.mxu0
  %v1979 = vadd.f32 %v1959, %v1978
  %1980 = vdwg.mxu0
  %1981 = vmatpush.msra.mxu0 %v212
  %1982 = vmatpush.msra.mxu0 %v208
  %1983 = vmatpush.msra.mxu0 %v204
  %1984 = vmatpush.msra.mxu0 %v200
  %1985 = vmatpush.msra.mxu0 %v196
  %1986 = vmatpush.msra.mxu0 %v192
  %1987 = vmatpush.msra.mxu0 %v188
  %1988 = vmatpush.msra.mxu0 %v184
  %1989 = vmatpush.msra.mxu0 %v180
  %1990 = vmatpush.msra.mxu0 %v176
  %1991 = vmatpush.msra.mxu0 %v172
  %1992 = vmatpush.msra.mxu0 %v168
  %1993 = vmatpush.msra.mxu0 %v164
  %1994 = vmatpush.msra.mxu0 %v160
  %1995 = vmatpush.msra.mxu0 %v156
  %1996 = vmatpush.msra.mxu0 %v152
  %1997 = vmatmul.f32.gmra.mxu0 %v1184
  %v1998 = vpop.f32.mrf.mxu0
  %v1999 = vadd.f32 %v1979, %v1998
  %2000 = vdwg.mxu0
  %2001 = vmatpush.msra.mxu0 %v276
  %2002 = vmatpush.msra.mxu0 %v272
  %2003 = vmatpush.msra.mxu0 %v268
  %2004 = vmatpush.msra.mxu0 %v264
  %2005 = vmatpush.msra.mxu0 %v260
  %2006 = vmatpush.msra.mxu0 %v256
  %2007 = vmatpush.msra.mxu0 %v252
  %2008 = vmatpush.msra.mxu0 %v248
  %2009 = vmatpush.msra.mxu0 %v244
  %2010 = vmatpush.msra.mxu0 %v240
  %2011 = vmatpush.msra.mxu0 %v236
  %2012 = vmatpush.msra.mxu0 %v232
  %2013 = vmatpush.msra.mxu0 %v228
  %2014 = vmatpush.msra.mxu0 %v224
  %2015 = vmatpush.msra.mxu0 %v220
  %2016 = vmatpush.msra.mxu0 %v216
  %2017 = vmatmul.f32.gmra.mxu0 %v1185
  %v2018 = vpop.f32.mrf.mxu0
  %v2019 = vadd.f32 %v1999, %v2018
  %2020 = vdwg.mxu0
  %2021 = vmatpush.msra.mxu0 %v340
  %2022 = vmatpush.msra.mxu0 %v336
  %2023 = vmatpush.msra.mxu0 %v332
  %2024 = vmatpush.msra.mxu0 %v328
  %2025 = vmatpush.msra.mxu0 %v324
  %2026 = vmatpush.msra.mxu0 %v320
  %2027 = vmatpush.msra.mxu0 %v316
  %2028 = vmatpush.msra.mxu0 %v312
  %2029 = vmatpush.msra.mxu0 %v308
  %2030 = vmatpush.msra.mxu0 %v304
  %2031 = vmatpush.msra.mxu0 %v300
  %2032 = vmatpush.msra.mxu0 %v296
  %2033 = vmatpush.msra.mxu0 %v292
  %2034 = vmatpush.msra.mxu0 %v288
  %2035 = vmatpush.msra.mxu0 %v284
  %2036 = vmatpush.msra.mxu0 %v280
  %2037 = vmatmul.f32.gmra.mxu0 %v1186
  %v2038 = vpop.f32.mrf.mxu0
  %v2039 = vadd.f32 %v2019, %v2038
  %2040 = vdwg.mxu0
  %2041 = vmatpush.msra.mxu0 %v404
  %2042 = vmatpush.msra.mxu0 %v400
  %2043 = vmatpush.msra.mxu0 %v396
  %2044 = vmatpush.msra.mxu0 %v392
  %2045 = vmatpush.msra.mxu0 %v388
  %2046 = vmatpush.msra.mxu0 %v384
  %2047 = vmatpush.msra.mxu0 %v380
  %2048 = vmatpush.msra.mxu0 %v376
  %2049 = vmatpush.msra.mxu0 %v372
  %2050 = vmatpush.msra.mxu0 %v368
  %2051 = vmatpush.msra.mxu0 %v364
  %2052 = vmatpush.msra.mxu0 %v360
  %2053 = vmatpush.msra.mxu0 %v356
  %2054 = vmatpush.msra.mxu0 %v352
  %2055 = vmatpush.msra.mxu0 %v348
  %2056 = vmatpush.msra.mxu0 %v344
  %2057 = vmatmul.f32.gmra.mxu0 %v1187
  %v2058 = vpop.f32.mrf.mxu0
  %v2059 = vadd.f32 %v2039, %v2058
  %2060 = vdwg.mxu0
  %2061 = vmatpush.msra.mxu0 %v468
  %2062 = vmatpush.msra.mxu0 %v464
  %2063 = vmatpush.msra.mxu0 %v460
  %2064 = vmatpush.msra.mxu0 %v456
  %2065 = vmatpush.msra.mxu0 %v452
  %2066 = vmatpush.msra.mxu0 %v448
  %2067 = vmatpush.msra.mxu0 %v444
  %2068 = vmatpush.msra.mxu0 %v440
  %2069 = vmatpush.msra.mxu0 %v436
  %2070 = vmatpush.msra.mxu0 %v432
  %2071 = vmatpush.msra.mxu0 %v428
  %2072 = vmatpush.msra.mxu0 %v424
  %2073 = vmatpush.msra.mxu0 %v420
  %2074 = vmatpush.msra.mxu0 %v416
  %2075 = vmatpush.msra.mxu0 %v412
  %2076 = vmatpush.msra.mxu0 %v408
  %2077 = vmatmul.f32.gmra.mxu0 %v1188
  %v2078 = vpop.f32.mrf.mxu0
  %v2079 = vadd.f32 %v2059, %v2078
  %2080 = vdwg.mxu0
  %2081 = vmatpush.msra.mxu0 %v532
  %2082 = vmatpush.msra.mxu0 %v528
  %2083 = vmatpush.msra.mxu0 %v524
  %2084 = vmatpush.msra.mxu0 %v520
  %2085 = vmatpush.msra.mxu0 %v516
  %2086 = vmatpush.msra.mxu0 %v512
  %2087 = vmatpush.msra.mxu0 %v508
  %2088 = vmatpush.msra.mxu0 %v504
  %2089 = vmatpush.msra.mxu0 %v500
  %2090 = vmatpush.msra.mxu0 %v496
  %2091 = vmatpush.msra.mxu0 %v492
  %2092 = vmatpush.msra.mxu0 %v488
  %2093 = vmatpush.msra.mxu0 %v484
  %2094 = vmatpush.msra.mxu0 %v480
  %2095 = vmatpush.msra.mxu0 %v476
  %2096 = vmatpush.msra.mxu0 %v472
  %2097 = vmatmul.f32.gmra.mxu0 %v1189
  %v2098 = vpop.f32.mrf.mxu0
  %v2099 = vadd.f32 %v2079, %v2098
  %2100 = vdwg.mxu0
  %2101 = vmatpush.msra.mxu0 %v596
  %2102 = vmatpush.msra.mxu0 %v592
  %2103 = vmatpush.msra.mxu0 %v588
  %2104 = vmatpush.msra.mxu0 %v584
  %2105 = vmatpush.msra.mxu0 %v580
  %2106 = vmatpush.msra.mxu0 %v576
  %2107 = vmatpush.msra.mxu0 %v572
  %2108 = vmatpush.msra.mxu0 %v568
  %2109 = vmatpush.msra.mxu0 %v564
  %2110 = vmatpush.msra.mxu0 %v560
  %2111 = vmatpush.msra.mxu0 %v556
  %2112 = vmatpush.msra.mxu0 %v552
  %2113 = vmatpush.msra.mxu0 %v548
  %2114 = vmatpush.msra.mxu0 %v544
  %2115 = vmatpush.msra.mxu0 %v540
  %2116 = vmatpush.msra.mxu0 %v536
  %2117 = vmatmul.f32.gmra.mxu0 %v1192
  %v2118 = vpop.f32.mrf.mxu0
  %v2119 = vadd.f32 %v2099, %v2118
  %2120 = vdwg.mxu0
  %2121 = vmatpush.msra.mxu0 %v660
  %2122 = vmatpush.msra.mxu0 %v656
  %2123 = vmatpush.msra.mxu0 %v652
  %2124 = vmatpush.msra.mxu0 %v648
  %2125 = vmatpush.msra.mxu0 %v644
  %2126 = vmatpush.msra.mxu0 %v640
  %2127 = vmatpush.msra.mxu0 %v636
  %2128 = vmatpush.msra.mxu0 %v632
  %2129 = vmatpush.msra.mxu0 %v628
  %2130 = vmatpush.msra.mxu0 %v624
  %2131 = vmatpush.msra.mxu0 %v620
  %2132 = vmatpush.msra.mxu0 %v616
  %2133 = vmatpush.msra.mxu0 %v612
  %2134 = vmatpush.msra.mxu0 %v608
  %2135 = vmatpush.msra.mxu0 %v604
  %2136 = vmatpush.msra.mxu0 %v600
  %2137 = vmatmul.f32.gmra.mxu0 %v1193
  %v2138 = vpop.f32.mrf.mxu0
  %v2139 = vadd.f32 %v2119, %v2138
  %2140 = vdwg.mxu0
  %2141 = vmatpush.msra.mxu0 %v724
  %2142 = vmatpush.msra.mxu0 %v720
  %2143 = vmatpush.msra.mxu0 %v716
  %2144 = vmatpush.msra.mxu0 %v712
  %2145 = vmatpush.msra.mxu0 %v708
  %2146 = vmatpush.msra.mxu0 %v704
  %2147 = vmatpush.msra.mxu0 %v700
  %2148 = vmatpush.msra.mxu0 %v696
  %2149 = vmatpush.msra.mxu0 %v692
  %2150 = vmatpush.msra.mxu0 %v688
  %2151 = vmatpush.msra.mxu0 %v684
  %2152 = vmatpush.msra.mxu0 %v680
  %2153 = vmatpush.msra.mxu0 %v676
  %2154 = vmatpush.msra.mxu0 %v672
  %2155 = vmatpush.msra.mxu0 %v668
  %2156 = vmatpush.msra.mxu0 %v664
  %2157 = vmatmul.f32.gmra.mxu0 %v1194
  %v2158 = vpop.f32.mrf.mxu0
  %v2159 = vadd.f32 %v2139, %v2158
  %2160 = vdwg.mxu0
  %2161 = vmatpush.msra.mxu0 %v788
  %2162 = vmatpush.msra.mxu0 %v784
  %2163 = vmatpush.msra.mxu0 %v780
  %2164 = vmatpush.msra.mxu0 %v776
  %2165 = vmatpush.msra.mxu0 %v772
  %2166 = vmatpush.msra.mxu0 %v768
  %2167 = vmatpush.msra.mxu0 %v764
  %2168 = vmatpush.msra.mxu0 %v760
  %2169 = vmatpush.msra.mxu0 %v756
  %2170 = vmatpush.msra.mxu0 %v752
  %2171 = vmatpush.msra.mxu0 %v748
  %2172 = vmatpush.msra.mxu0 %v744
  %2173 = vmatpush.msra.mxu0 %v740
  %2174 = vmatpush.msra.mxu0 %v736
  %2175 = vmatpush.msra.mxu0 %v732
  %2176 = vmatpush.msra.mxu0 %v728
  %2177 = vmatmul.f32.gmra.mxu0 %v1195
  %v2178 = vpop.f32.mrf.mxu0
  %v2179 = vadd.f32 %v2159, %v2178
  %2180 = vdwg.mxu0
  %2181 = vmatpush.msra.mxu0 %v852
  %2182 = vmatpush.msra.mxu0 %v848
  %2183 = vmatpush.msra.mxu0 %v844
  %2184 = vmatpush.msra.mxu0 %v840
  %2185 = vmatpush.msra.mxu0 %v836
  %2186 = vmatpush.msra.mxu0 %v832
  %2187 = vmatpush.msra.mxu0 %v828
  %2188 = vmatpush.msra.mxu0 %v824
  %2189 = vmatpush.msra.mxu0 %v820
  %2190 = vmatpush.msra.mxu0 %v816
  %2191 = vmatpush.msra.mxu0 %v812
  %2192 = vmatpush.msra.mxu0 %v808
  %2193 = vmatpush.msra.mxu0 %v804
  %2194 = vmatpush.msra.mxu0 %v800
  %2195 = vmatpush.msra.mxu0 %v796
  %2196 = vmatpush.msra.mxu0 %v792
  %2197 = vmatmul.f32.gmra.mxu0 %v1196
  %v2198 = vpop.f32.mrf.mxu0
  %v2199 = vadd.f32 %v2179, %v2198
  %2200 = vdwg.mxu0
  %2201 = vmatpush.msra.mxu0 %v916
  %2202 = vmatpush.msra.mxu0 %v912
  %2203 = vmatpush.msra.mxu0 %v908
  %2204 = vmatpush.msra.mxu0 %v904
  %2205 = vmatpush.msra.mxu0 %v900
  %2206 = vmatpush.msra.mxu0 %v896
  %2207 = vmatpush.msra.mxu0 %v892
  %2208 = vmatpush.msra.mxu0 %v888
  %2209 = vmatpush.msra.mxu0 %v884
  %2210 = vmatpush.msra.mxu0 %v880
  %2211 = vmatpush.msra.mxu0 %v876
  %2212 = vmatpush.msra.mxu0 %v872
  %2213 = vmatpush.msra.mxu0 %v868
  %2214 = vmatpush.msra.mxu0 %v864
  %2215 = vmatpush.msra.mxu0 %v860
  %2216 = vmatpush.msra.mxu0 %v856
  %2217 = vmatmul.f32.gmra.mxu0 %v1197
  %v2218 = vpop.f32.mrf.mxu0
  %v2219 = vadd.f32 %v2199, %v2218
  %2220 = vdwg.mxu0
  %2221 = vmatpush.msra.mxu0 %v980
  %2222 = vmatpush.msra.mxu0 %v976
  %2223 = vmatpush.msra.mxu0 %v972
  %2224 = vmatpush.msra.mxu0 %v968
  %2225 = vmatpush.msra.mxu0 %v964
  %2226 = vmatpush.msra.mxu0 %v960
  %2227 = vmatpush.msra.mxu0 %v956
  %2228 = vmatpush.msra.mxu0 %v952
  %2229 = vmatpush.msra.mxu0 %v948
  %2230 = vmatpush.msra.mxu0 %v944
  %2231 = vmatpush.msra.mxu0 %v940
  %2232 = vmatpush.msra.mxu0 %v936
  %2233 = vmatpush.msra.mxu0 %v932
  %2234 = vmatpush.msra.mxu0 %v928
  %2235 = vmatpush.msra.mxu0 %v924
  %2236 = vmatpush.msra.mxu0 %v920
  %2237 = vmatmul.f32.gmra.mxu0 %v1198
  %v2238 = vpop.f32.mrf.mxu0
  %v2239 = vadd.f32 %v2219, %v2238
  %2240 = vdwg.mxu0
  %2241 = vmatpush.msra.mxu0 %v1044
  %2242 = vmatpush.msra.mxu0 %v1040
  %2243 = vmatpush.msra.mxu0 %v1036
  %2244 = vmatpush.msra.mxu0 %v1032
  %2245 = vmatpush.msra.mxu0 %v1028
  %2246 = vmatpush.msra.mxu0 %v1024
  %2247 = vmatpush.msra.mxu0 %v1020
  %2248 = vmatpush.msra.mxu0 %v1016
  %2249 = vmatpush.msra.mxu0 %v1012
  %2250 = vmatpush.msra.mxu0 %v1008
  %2251 = vmatpush.msra.mxu0 %v1004
  %2252 = vmatpush.msra.mxu0 %v1000
  %2253 = vmatpush.msra.mxu0 %v996
  %2254 = vmatpush.msra.mxu0 %v992
  %2255 = vmatpush.msra.mxu0 %v988
  %2256 = vmatpush.msra.mxu0 %v984
  %2257 = vmatmul.f32.gmra.mxu0 %v1199
  %v2258 = vpop.f32.mrf.mxu0
  %v2259 = vadd.f32 %v2239, %v2258
  %2260 = vdwg.mxu0
  %2261 = vmatpush.msra.mxu0 %v1108
  %2262 = vmatpush.msra.mxu0 %v1104
  %2263 = vmatpush.msra.mxu0 %v1100
  %2264 = vmatpush.msra.mxu0 %v1096
  %2265 = vmatpush.msra.mxu0 %v1092
  %2266 = vmatpush.msra.mxu0 %v1088
  %2267 = vmatpush.msra.mxu0 %v1084
  %2268 = vmatpush.msra.mxu0 %v1080
  %2269 = vmatpush.msra.mxu0 %v1076
  %2270 = vmatpush.msra.mxu0 %v1072
  %2271 = vmatpush.msra.mxu0 %v1068
  %2272 = vmatpush.msra.mxu0 %v1064
  %2273 = vmatpush.msra.mxu0 %v1060
  %2274 = vmatpush.msra.mxu0 %v1056
  %2275 = vmatpush.msra.mxu0 %v1052
  %2276 = vmatpush.msra.mxu0 %v1048
  %2277 = vmatmul.f32.gmra.mxu0 %v1201
  %v2278 = vpop.f32.mrf.mxu0
  %v2279 = vadd.f32 %v2259, %v2278
  %2280 = vdwg.mxu0
  %2281 = vmatpush.msra.mxu0 %v1172
  %2282 = vmatpush.msra.mxu0 %v1168
  %2283 = vmatpush.msra.mxu0 %v1164
  %2284 = vmatpush.msra.mxu0 %v1160
  %2285 = vmatpush.msra.mxu0 %v1156
  %2286 = vmatpush.msra.mxu0 %v1152
  %2287 = vmatpush.msra.mxu0 %v1148
  %2288 = vmatpush.msra.mxu0 %v1144
  %2289 = vmatpush.msra.mxu0 %v1140
  %2290 = vmatpush.msra.mxu0 %v1136
  %2291 = vmatpush.msra.mxu0 %v1132
  %2292 = vmatpush.msra.mxu0 %v1128
  %2293 = vmatpush.msra.mxu0 %v1124
  %2294 = vmatpush.msra.mxu0 %v1120
  %2295 = vmatpush.msra.mxu0 %v1116
  %2296 = vmatpush.msra.mxu0 %v1112
  %2297 = vmatmul.f32.gmra.mxu0 %v1202
  %v2298 = vpop.f32.mrf.mxu0
  %v2299 = vadd.f32 %v2279, %v2298
  %2300 = vdwg.mxu0
  %2301 = vmatpush.msra.mxu0 %v85
  %2302 = vmatpush.msra.mxu0 %v81
  %2303 = vmatpush.msra.mxu0 %v77
  %2304 = vmatpush.msra.mxu0 %v73
  %2305 = vmatpush.msra.mxu0 %v69
  %2306 = vmatpush.msra.mxu0 %v65
  %2307 = vmatpush.msra.mxu0 %v61
  %2308 = vmatpush.msra.mxu0 %v57
  %2309 = vmatpush.msra.mxu0 %v53
  %2310 = vmatpush.msra.mxu0 %v49
  %2311 = vmatpush.msra.mxu0 %v45
  %2312 = vmatpush.msra.mxu0 %v41
  %2313 = vmatpush.msra.mxu0 %v37
  %2314 = vmatpush.msra.mxu0 %v33
  %2315 = vmatpush.msra.mxu0 %v29
  %2316 = vmatpush.msra.mxu0 %v25
  %2317 = vmatmul.f32.gmra.mxu0 %v1182
  %v2318 = vpop.f32.mrf.mxu0
  %v2319 = vadd.f32 0.0, %v2318
  %2320 = vdwg.mxu0
  %2321 = vmatpush.msra.mxu0 %v149
  %2322 = vmatpush.msra.mxu0 %v145
  %2323 = vmatpush.msra.mxu0 %v141
  %2324 = vmatpush.msra.mxu0 %v137
  %2325 = vmatpush.msra.mxu0 %v133
  %2326 = vmatpush.msra.mxu0 %v129
  %2327 = vmatpush.msra.mxu0 %v125
  %2328 = vmatpush.msra.mxu0 %v121
  %2329 = vmatpush.msra.mxu0 %v117
  %2330 = vmatpush.msra.mxu0 %v113
  %2331 = vmatpush.msra.mxu0 %v109
  %2332 = vmatpush.msra.mxu0 %v105
  %2333 = vmatpush.msra.mxu0 %v101
  %2334 = vmatpush.msra.mxu0 %v97
  %2335 = vmatpush.msra.mxu0 %v93
  %2336 = vmatpush.msra.mxu0 %v89
  %2337 = vmatmul.f32.gmra.mxu0 %v1183
  %v2338 = vpop.f32.mrf.mxu0
  %v2339 = vadd.f32 %v2319, %v2338
  %2340 = vdwg.mxu0
  %2341 = vmatpush.msra.mxu0 %v213
  %2342 = vmatpush.msra.mxu0 %v209
  %2343 = vmatpush.msra.mxu0 %v205
  %2344 = vmatpush.msra.mxu0 %v201
  %2345 = vmatpush.msra.mxu0 %v197
  %2346 = vmatpush.msra.mxu0 %v193
  %2347 = vmatpush.msra.mxu0 %v189
  %2348 = vmatpush.msra.mxu0 %v185
  %2349 = vmatpush.msra.mxu0 %v181
  %2350 = vmatpush.msra.mxu0 %v177
  %2351 = vmatpush.msra.mxu0 %v173
  %2352 = vmatpush.msra.mxu0 %v169
  %2353 = vmatpush.msra.mxu0 %v165
  %2354 = vmatpush.msra.mxu0 %v161
  %2355 = vmatpush.msra.mxu0 %v157
  %2356 = vmatpush.msra.mxu0 %v153
  %2357 = vmatmul.f32.gmra.mxu0 %v1184
  %v2358 = vpop.f32.mrf.mxu0
  %v2359 = vadd.f32 %v2339, %v2358
  %2360 = vdwg.mxu0
  %2361 = vmatpush.msra.mxu0 %v277
  %2362 = vmatpush.msra.mxu0 %v273
  %2363 = vmatpush.msra.mxu0 %v269
  %2364 = vmatpush.msra.mxu0 %v265
  %2365 = vmatpush.msra.mxu0 %v261
  %2366 = vmatpush.msra.mxu0 %v257
  %2367 = vmatpush.msra.mxu0 %v253
  %2368 = vmatpush.msra.mxu0 %v249
  %2369 = vmatpush.msra.mxu0 %v245
  %2370 = vmatpush.msra.mxu0 %v241
  %2371 = vmatpush.msra.mxu0 %v237
  %2372 = vmatpush.msra.mxu0 %v233
  %2373 = vmatpush.msra.mxu0 %v229
  %2374 = vmatpush.msra.mxu0 %v225
  %2375 = vmatpush.msra.mxu0 %v221
  %2376 = vmatpush.msra.mxu0 %v217
  %2377 = vmatmul.f32.gmra.mxu0 %v1185
  %v2378 = vpop.f32.mrf.mxu0
  %v2379 = vadd.f32 %v2359, %v2378
  %2380 = vdwg.mxu0
  %2381 = vmatpush.msra.mxu0 %v341
  %2382 = vmatpush.msra.mxu0 %v337
  %2383 = vmatpush.msra.mxu0 %v333
  %2384 = vmatpush.msra.mxu0 %v329
  %2385 = vmatpush.msra.mxu0 %v325
  %2386 = vmatpush.msra.mxu0 %v321
  %2387 = vmatpush.msra.mxu0 %v317
  %2388 = vmatpush.msra.mxu0 %v313
  %2389 = vmatpush.msra.mxu0 %v309
  %2390 = vmatpush.msra.mxu0 %v305
  %2391 = vmatpush.msra.mxu0 %v301
  %2392 = vmatpush.msra.mxu0 %v297
  %2393 = vmatpush.msra.mxu0 %v293
  %2394 = vmatpush.msra.mxu0 %v289
  %2395 = vmatpush.msra.mxu0 %v285
  %2396 = vmatpush.msra.mxu0 %v281
  %2397 = vmatmul.f32.gmra.mxu0 %v1186
  %v2398 = vpop.f32.mrf.mxu0
  %v2399 = vadd.f32 %v2379, %v2398
  %2400 = vdwg.mxu0
  %2401 = vmatpush.msra.mxu0 %v405
  %2402 = vmatpush.msra.mxu0 %v401
  %2403 = vmatpush.msra.mxu0 %v397
  %2404 = vmatpush.msra.mxu0 %v393
  %2405 = vmatpush.msra.mxu0 %v389
  %2406 = vmatpush.msra.mxu0 %v385
  %2407 = vmatpush.msra.mxu0 %v381
  %2408 = vmatpush.msra.mxu0 %v377
  %2409 = vmatpush.msra.mxu0 %v373
  %2410 = vmatpush.msra.mxu0 %v369
  %2411 = vmatpush.msra.mxu0 %v365
  %2412 = vmatpush.msra.mxu0 %v361
  %2413 = vmatpush.msra.mxu0 %v357
  %2414 = vmatpush.msra.mxu0 %v353
  %2415 = vmatpush.msra.mxu0 %v349
  %2416 = vmatpush.msra.mxu0 %v345
  %2417 = vmatmul.f32.gmra.mxu0 %v1187
  %v2418 = vpop.f32.mrf.mxu0
  %v2419 = vadd.f32 %v2399, %v2418
  %2420 = vdwg.mxu0
  %2421 = vmatpush.msra.mxu0 %v469
  %2422 = vmatpush.msra.mxu0 %v465
  %2423 = vmatpush.msra.mxu0 %v461
  %2424 = vmatpush.msra.mxu0 %v457
  %2425 = vmatpush.msra.mxu0 %v453
  %2426 = vmatpush.msra.mxu0 %v449
  %2427 = vmatpush.msra.mxu0 %v445
  %2428 = vmatpush.msra.mxu0 %v441
  %2429 = vmatpush.msra.mxu0 %v437
  %2430 = vmatpush.msra.mxu0 %v433
  %2431 = vmatpush.msra.mxu0 %v429
  %2432 = vmatpush.msra.mxu0 %v425
  %2433 = vmatpush.msra.mxu0 %v421
  %2434 = vmatpush.msra.mxu0 %v417
  %2435 = vmatpush.msra.mxu0 %v413
  %2436 = vmatpush.msra.mxu0 %v409
  %2437 = vmatmul.f32.gmra.mxu0 %v1188
  %v2438 = vpop.f32.mrf.mxu0
  %v2439 = vadd.f32 %v2419, %v2438
  %2440 = vdwg.mxu0
  %2441 = vmatpush.msra.mxu0 %v533
  %2442 = vmatpush.msra.mxu0 %v529
  %2443 = vmatpush.msra.mxu0 %v525
  %2444 = vmatpush.msra.mxu0 %v521
  %2445 = vmatpush.msra.mxu0 %v517
  %2446 = vmatpush.msra.mxu0 %v513
  %2447 = vmatpush.msra.mxu0 %v509
  %2448 = vmatpush.msra.mxu0 %v505
  %2449 = vmatpush.msra.mxu0 %v501
  %2450 = vmatpush.msra.mxu0 %v497
  %2451 = vmatpush.msra.mxu0 %v493
  %2452 = vmatpush.msra.mxu0 %v489
  %2453 = vmatpush.msra.mxu0 %v485
  %2454 = vmatpush.msra.mxu0 %v481
  %2455 = vmatpush.msra.mxu0 %v477
  %2456 = vmatpush.msra.mxu0 %v473
  %2457 = vmatmul.f32.gmra.mxu0 %v1189
  %v2458 = vpop.f32.mrf.mxu0
  %v2459 = vadd.f32 %v2439, %v2458
  %2460 = vdwg.mxu0
  %2461 = vmatpush.msra.mxu0 %v597
  %2462 = vmatpush.msra.mxu0 %v593
  %2463 = vmatpush.msra.mxu0 %v589
  %2464 = vmatpush.msra.mxu0 %v585
  %2465 = vmatpush.msra.mxu0 %v581
  %2466 = vmatpush.msra.mxu0 %v577
  %2467 = vmatpush.msra.mxu0 %v573
  %2468 = vmatpush.msra.mxu0 %v569
  %2469 = vmatpush.msra.mxu0 %v565
  %2470 = vmatpush.msra.mxu0 %v561
  %2471 = vmatpush.msra.mxu0 %v557
  %2472 = vmatpush.msra.mxu0 %v553
  %2473 = vmatpush.msra.mxu0 %v549
  %2474 = vmatpush.msra.mxu0 %v545
  %2475 = vmatpush.msra.mxu0 %v541
  %2476 = vmatpush.msra.mxu0 %v537
  %2477 = vmatmul.f32.gmra.mxu0 %v1192
  %v2478 = vpop.f32.mrf.mxu0
  %v2479 = vadd.f32 %v2459, %v2478
  %2480 = vdwg.mxu0
  %2481 = vmatpush.msra.mxu0 %v661
  %2482 = vmatpush.msra.mxu0 %v657
  %2483 = vmatpush.msra.mxu0 %v653
  %2484 = vmatpush.msra.mxu0 %v649
  %2485 = vmatpush.msra.mxu0 %v645
  %2486 = vmatpush.msra.mxu0 %v641
  %2487 = vmatpush.msra.mxu0 %v637
  %2488 = vmatpush.msra.mxu0 %v633
  %2489 = vmatpush.msra.mxu0 %v629
  %2490 = vmatpush.msra.mxu0 %v625
  %2491 = vmatpush.msra.mxu0 %v621
  %2492 = vmatpush.msra.mxu0 %v617
  %2493 = vmatpush.msra.mxu0 %v613
  %2494 = vmatpush.msra.mxu0 %v609
  %2495 = vmatpush.msra.mxu0 %v605
  %2496 = vmatpush.msra.mxu0 %v601
  %2497 = vmatmul.f32.gmra.mxu0 %v1193
  %v2498 = vpop.f32.mrf.mxu0
  %v2499 = vadd.f32 %v2479, %v2498
  %2500 = vdwg.mxu0
  %2501 = vmatpush.msra.mxu0 %v725
  %2502 = vmatpush.msra.mxu0 %v721
  %2503 = vmatpush.msra.mxu0 %v717
  %2504 = vmatpush.msra.mxu0 %v713
  %2505 = vmatpush.msra.mxu0 %v709
  %2506 = vmatpush.msra.mxu0 %v705
  %2507 = vmatpush.msra.mxu0 %v701
  %2508 = vmatpush.msra.mxu0 %v697
  %2509 = vmatpush.msra.mxu0 %v693
  %2510 = vmatpush.msra.mxu0 %v689
  %2511 = vmatpush.msra.mxu0 %v685
  %2512 = vmatpush.msra.mxu0 %v681
  %2513 = vmatpush.msra.mxu0 %v677
  %2514 = vmatpush.msra.mxu0 %v673
  %2515 = vmatpush.msra.mxu0 %v669
  %2516 = vmatpush.msra.mxu0 %v665
  %2517 = vmatmul.f32.gmra.mxu0 %v1194
  %v2518 = vpop.f32.mrf.mxu0
  %v2519 = vadd.f32 %v2499, %v2518
  %2520 = vdwg.mxu0
  %2521 = vmatpush.msra.mxu0 %v789
  %2522 = vmatpush.msra.mxu0 %v785
  %2523 = vmatpush.msra.mxu0 %v781
  %2524 = vmatpush.msra.mxu0 %v777
  %2525 = vmatpush.msra.mxu0 %v773
  %2526 = vmatpush.msra.mxu0 %v769
  %2527 = vmatpush.msra.mxu0 %v765
  %2528 = vmatpush.msra.mxu0 %v761
  %2529 = vmatpush.msra.mxu0 %v757
  %2530 = vmatpush.msra.mxu0 %v753
  %2531 = vmatpush.msra.mxu0 %v749
  %2532 = vmatpush.msra.mxu0 %v745
  %2533 = vmatpush.msra.mxu0 %v741
  %2534 = vmatpush.msra.mxu0 %v737
  %2535 = vmatpush.msra.mxu0 %v733
  %2536 = vmatpush.msra.mxu0 %v729
  %2537 = vmatmul.f32.gmra.mxu0 %v1195
  %v2538 = vpop.f32.mrf.mxu0
  %v2539 = vadd.f32 %v2519, %v2538
  %2540 = vdwg.mxu0
  %2541 = vmatpush.msra.mxu0 %v853
  %2542 = vmatpush.msra.mxu0 %v849
  %2543 = vmatpush.msra.mxu0 %v845
  %2544 = vmatpush.msra.mxu0 %v841
  %2545 = vmatpush.msra.mxu0 %v837
  %2546 = vmatpush.msra.mxu0 %v833
  %2547 = vmatpush.msra.mxu0 %v829
  %2548 = vmatpush.msra.mxu0 %v825
  %2549 = vmatpush.msra.mxu0 %v821
  %2550 = vmatpush.msra.mxu0 %v817
  %2551 = vmatpush.msra.mxu0 %v813
  %2552 = vmatpush.msra.mxu0 %v809
  %2553 = vmatpush.msra.mxu0 %v805
  %2554 = vmatpush.msra.mxu0 %v801
  %2555 = vmatpush.msra.mxu0 %v797
  %2556 = vmatpush.msra.mxu0 %v793
  %2557 = vmatmul.f32.gmra.mxu0 %v1196
  %v2558 = vpop.f32.mrf.mxu0
  %v2559 = vadd.f32 %v2539, %v2558
  %2560 = vdwg.mxu0
  %2561 = vmatpush.msra.mxu0 %v917
  %2562 = vmatpush.msra.mxu0 %v913
  %2563 = vmatpush.msra.mxu0 %v909
  %2564 = vmatpush.msra.mxu0 %v905
  %2565 = vmatpush.msra.mxu0 %v901
  %2566 = vmatpush.msra.mxu0 %v897
  %2567 = vmatpush.msra.mxu0 %v893
  %2568 = vmatpush.msra.mxu0 %v889
  %2569 = vmatpush.msra.mxu0 %v885
  %2570 = vmatpush.msra.mxu0 %v881
  %2571 = vmatpush.msra.mxu0 %v877
  %2572 = vmatpush.msra.mxu0 %v873
  %2573 = vmatpush.msra.mxu0 %v869
  %2574 = vmatpush.msra.mxu0 %v865
  %2575 = vmatpush.msra.mxu0 %v861
  %2576 = vmatpush.msra.mxu0 %v857
  %2577 = vmatmul.f32.gmra.mxu0 %v1197
  %v2578 = vpop.f32.mrf.mxu0
  %v2579 = vadd.f32 %v2559, %v2578
  %2580 = vdwg.mxu0
  %2581 = vmatpush.msra.mxu0 %v981
  %2582 = vmatpush.msra.mxu0 %v977
  %2583 = vmatpush.msra.mxu0 %v973
  %2584 = vmatpush.msra.mxu0 %v969
  %2585 = vmatpush.msra.mxu0 %v965
  %2586 = vmatpush.msra.mxu0 %v961
  %2587 = vmatpush.msra.mxu0 %v957
  %2588 = vmatpush.msra.mxu0 %v953
  %2589 = vmatpush.msra.mxu0 %v949
  %2590 = vmatpush.msra.mxu0 %v945
  %2591 = vmatpush.msra.mxu0 %v941
  %2592 = vmatpush.msra.mxu0 %v937
  %2593 = vmatpush.msra.mxu0 %v933
  %2594 = vmatpush.msra.mxu0 %v929
  %2595 = vmatpush.msra.mxu0 %v925
  %2596 = vmatpush.msra.mxu0 %v921
  %2597 = vmatmul.f32.gmra.mxu0 %v1198
  %v2598 = vpop.f32.mrf.mxu0
  %v2599 = vadd.f32 %v2579, %v2598
  %2600 = vdwg.mxu0
  %2601 = vmatpush.msra.mxu0 %v1045
  %2602 = vmatpush.msra.mxu0 %v1041
  %2603 = vmatpush.msra.mxu0 %v1037
  %2604 = vmatpush.msra.mxu0 %v1033
  %2605 = vmatpush.msra.mxu0 %v1029
  %2606 = vmatpush.msra.mxu0 %v1025
  %2607 = vmatpush.msra.mxu0 %v1021
  %2608 = vmatpush.msra.mxu0 %v1017
  %2609 = vmatpush.msra.mxu0 %v1013
  %2610 = vmatpush.msra.mxu0 %v1009
  %2611 = vmatpush.msra.mxu0 %v1005
  %2612 = vmatpush.msra.mxu0 %v1001
  %2613 = vmatpush.msra.mxu0 %v997
  %2614 = vmatpush.msra.mxu0 %v993
  %2615 = vmatpush.msra.mxu0 %v989
  %2616 = vmatpush.msra.mxu0 %v985
  %2617 = vmatmul.f32.gmra.mxu0 %v1199
  %v2618 = vpop.f32.mrf.mxu0
  %v2619 = vadd.f32 %v2599, %v2618
  %2620 = vdwg.mxu0
  %2621 = vmatpush.msra.mxu0 %v1109
  %2622 = vmatpush.msra.mxu0 %v1105
  %2623 = vmatpush.msra.mxu0 %v1101
  %2624 = vmatpush.msra.mxu0 %v1097
  %2625 = vmatpush.msra.mxu0 %v1093
  %2626 = vmatpush.msra.mxu0 %v1089
  %2627 = vmatpush.msra.mxu0 %v1085
  %2628 = vmatpush.msra.mxu0 %v1081
  %2629 = vmatpush.msra.mxu0 %v1077
  %2630 = vmatpush.msra.mxu0 %v1073
  %2631 = vmatpush.msra.mxu0 %v1069
  %2632 = vmatpush.msra.mxu0 %v1065
  %2633 = vmatpush.msra.mxu0 %v1061
  %2634 = vmatpush.msra.mxu0 %v1057
  %2635 = vmatpush.msra.mxu0 %v1053
  %2636 = vmatpush.msra.mxu0 %v1049
  %2637 = vmatmul.f32.gmra.mxu0 %v1201
  %v2638 = vpop.f32.mrf.mxu0
  %v2639 = vadd.f32 %v2619, %v2638
  %2640 = vdwg.mxu0
  %2641 = vmatpush.msra.mxu0 %v1173
  %2642 = vmatpush.msra.mxu0 %v1169
  %2643 = vmatpush.msra.mxu0 %v1165
  %2644 = vmatpush.msra.mxu0 %v1161
  %2645 = vmatpush.msra.mxu0 %v1157
  %2646 = vmatpush.msra.mxu0 %v1153
  %2647 = vmatpush.msra.mxu0 %v1149
  %2648 = vmatpush.msra.mxu0 %v1145
  %2649 = vmatpush.msra.mxu0 %v1141
  %2650 = vmatpush.msra.mxu0 %v1137
  %2651 = vmatpush.msra.mxu0 %v1133
  %2652 = vmatpush.msra.mxu0 %v1129
  %2653 = vmatpush.msra.mxu0 %v1125
  %2654 = vmatpush.msra.mxu0 %v1121
  %2655 = vmatpush.msra.mxu0 %v1117
  %2656 = vmatpush.msra.mxu0 %v1113
  %2657 = vmatmul.f32.gmra.mxu0 %v1202
  %v2658 = vpop.f32.mrf.mxu0
  %v2659 = vadd.f32 %v2639, %v2658
  %2660 = vdwg.mxu0
  %v2661 = vld [vmem:[%s2] sm:$0xf]
  %v2663 = vperm.slane %v2661, 0
  %v2664 = vperm.slane %v2661, 1
  %v2665 = vperm.slane %v2661, 2
  %v2666 = vperm.slane %v2661, 3
  %v2671 = vmul.f32 %v1579, %v2663
  %v2672 = vmul.f32 %v1939, %v2664
  %v2673 = vmul.f32 %v2299, %v2665
  %v2674 = vmul.f32 %v2659, %v2666
  %v2675 = vld [vmem:[%s3] sm:$0xf]
  %v2677 = vperm.slane %v2675, 0
  %v2678 = vperm.slane %v2675, 1
  %v2679 = vperm.slane %v2675, 2
  %v2680 = vperm.slane %v2675, 3
  %v2685 = vadd.f32 %v2671, %v2677
  %v2686 = vadd.f32 %v2672, %v2678
  %v2687 = vadd.f32 %v2673, %v2679
  %v2688 = vadd.f32 %v2674, %v2680
  %v2689 = vmax.f32 %v2685, 0.0
  %v2690 = vmax.f32 %v2686, 0.0
  %v2691 = vmax.f32 %v2687, 0.0
  %v2692 = vmax.f32 %v2688, 0.0
  %v2697 = vrot.slane %v2690, 6
  %v2698 = vrot.slane %v2691, 4
  %v2699 = vrot.slane %v2692, 2
  %vm2700 = vcmask 1041408
  %v2701 = vsel %vm2700, %v2689, %v2697
  %vm2702 = vcmask 1045508
  %v2703 = vsel %vm2702, %v2698, %v2699
  %vm2704 = vcmask 1043456
  %v2705 = vsel %vm2704, %v2701, %v2703
  %2707 = vst [vmem:[%s4] sm:$0xff] %v2705
  // Predicated region
  $region18: #{basic_cnn_forward.11} parent=0 // pred_check
    _
  $region19: #{basic_cnn_forward.11} parent=0 // pred_check_branch
    %2709 = sbr.rel (0) target = $region21
  $region20: #{basic_cnn_forward.11} parent=0 // pred_region
    _
  $region21: #{basic_cnn_forward.11} parent=0 // pred_fallthru
    _
  // Predicated region
  $region22: #{basic_cnn_forward.11} parent=0 // pred_check
    _
  $region23: #{basic_cnn_forward.11} parent=0 // pred_check_branch
    %2711 = sbr.rel (0) target = $region25
  $region24: #{basic_cnn_forward.11} parent=0 // pred_region
    _
  $region25: #{basic_cnn_forward.11} parent=0 // pred_fallthru
    _

// kernel: basic_cnn_forward.13
$region0: #{basic_cnn_forward.13}
  #allocation0 [shape = 'u32[]', space=smem, size = 0x4, offset = 0x4, fixed_abs, tag = 'smem constant byte address 0x4 - core index']
  #allocation1 [shape = 'u32[72,128]{1,0:T(1,128)}', space=vmem, size = 0x9000, scoped, tag = 'internal scratch']
  %s0 = inlined_call_operand.vmem [shape: f32[2,512], index: 0, kind: input, shape index: {}]
  %s1 = inlined_call_operand.hbm [shape: f32[512,65536], index: 1, kind: input, shape index: {}]
  %s2 = inlined_call_operand.vmem [shape: f32[1,65536], index: 2, kind: input, shape index: {}]
  %s3 = inlined_call_operand.vmem [shape: f32[2,65536], index: 3, kind: output, shape index: {}]
  %s4 = sld [smem:[#allocation0]]
  $region49: #{basic_cnn_forward.13} parent=0
    _
  %s6 = ssub.s32 1, %s4
  %s7 = scalar_select 0, %s6, %s4
  $region1: #{basic_cnn_forward.13} parent=0
    #allocation2 [shape = 'u8[8388608]{0}', space=vmem, size = 0x800000, scoped, tag = 'input window, operand 1']
    #allocation3 [shape = 's32[2]{0}', space=sflag, size = 0x8, scoped, tag = 'scoped memory for basic_cnn_forward.13']
    %8 = vsyncpa [#allocation3], 0
    %s9 = scalar_lea.sflag [#allocation3], 1
    %10 = vsyncpa %s9, 0
    loop: start=0, step=1, limit=34
    $region2: #{basic_cnn_forward.13} parent=1 // loop_pre_header
      _
    $region3: #{basic_cnn_forward.13} parent=1 // loop_header
      %s12 = sphi 0, %s16
      %p13 = scmp.ge.s32.totalorder %s12, 34
      %s20 = sphi 0, %s20
      %s22 = sphi 0, %s20
      %s23 = sphi 0, %s22
      %s37 = sphi 0, %s23
      %s43 = sphi 0, %s45
      %s46 = sphi 0, %s43
      %s47 = sphi 0, %s46
      %s63 = sphi 0, %s47
      %s69 = sphi 0, %s71
      %s72 = sphi 0, %s69
      %s73 = sphi 0, %s72
      %s89 = sphi 0, %s73
      %s95 = sphi 0, %s97
      %s98 = sphi 0, %s95
      %s99 = sphi 0, %s98
      %s115 = sphi 0, %s99
    $region4: #{basic_cnn_forward.13} parent=1 // loop_header_branch
      %15 = sbr.rel (%p13) target = $region8
    $region5: #{basic_cnn_forward.13} parent=1 // loop_body
      %s17 = ssub.s32 %s12, 1
      %s18 = ssub.s32 %s12, 2
      %s19 = sadd.s32 %s12, 1
      %s21 = sadd.s32 %s20, 1
      %p24 = scmp.eq.s32.totalorder %s12, 31
      %p25 = scmp.ne.s32.totalorder %s20, %s22
      %p26 = scmp.eq.s32.totalorder %s12, 0
      %p27 = por %p25, %p26
      %p28 = scmp.ne.s32.totalorder %s20, %s22
      %p29 = scmp.eq.s32.totalorder %s17, 31
      %p30 = por %p28, %p29
      %p31 = scmp.ne.s32.totalorder %s22, %s23
      %p32 = scmp.eq.s32.totalorder %s17, 0
      %p33 = por %p31, %p32
      %p34 = scmp.ne.s32.totalorder %s22, %s23
      %p35 = scmp.eq.s32.totalorder %s18, 31
      %p36 = por %p34, %p35
      %p38 = scmp.ne.s32.totalorder %s23, %s37
      %p39 = scmp.eq.s32.totalorder %s18, 0
      %p40 = por %p38, %p39
      %s41 = ssub.s32 %s12, %s19
      %p42 = scmp.eq.s32.totalorder %s41, 0
      %s44 = sadd.s32 %s43, 1
      %s45 = scalar_select %p42, %s43, %s44
      %p48 = pneg %p42
      %p49 = scmp.eq.s32.totalorder %s12, 31
      %p50 = por %p48, %p49
      %p51 = scmp.ne.s32.totalorder %s43, %s46
      %p52 = scmp.eq.s32.totalorder %s12, 0
      %p53 = por %p51, %p52
      %p54 = scmp.ne.s32.totalorder %s43, %s46
      %p55 = scmp.eq.s32.totalorder %s17, 31
      %p56 = por %p54, %p55
      %p57 = scmp.ne.s32.totalorder %s46, %s47
      %p58 = scmp.eq.s32.totalorder %s17, 0
      %p59 = por %p57, %p58
      %p60 = scmp.ne.s32.totalorder %s46, %s47
      %p61 = scmp.eq.s32.totalorder %s18, 31
      %p62 = por %p60, %p61
      %p64 = scmp.ne.s32.totalorder %s47, %s63
      %p65 = scmp.eq.s32.totalorder %s18, 0
      %p66 = por %p64, %p65
      %s67 = ssub.s32 %s12, %s19
      %p68 = scmp.eq.s32.totalorder %s67, 0
      %s70 = sadd.s32 %s69, 1
      %s71 = scalar_select %p68, %s69, %s70
      %p74 = pneg %p68
      %p75 = scmp.eq.s32.totalorder %s12, 31
      %p76 = por %p74, %p75
      %p77 = scmp.ne.s32.totalorder %s69, %s72
      %p78 = scmp.eq.s32.totalorder %s12, 0
      %p79 = por %p77, %p78
      %p80 = scmp.ne.s32.totalorder %s69, %s72
      %p81 = scmp.eq.s32.totalorder %s17, 31
      %p82 = por %p80, %p81
      %p83 = scmp.ne.s32.totalorder %s72, %s73
      %p84 = scmp.eq.s32.totalorder %s17, 0
      %p85 = por %p83, %p84
      %p86 = scmp.ne.s32.totalorder %s72, %s73
      %p87 = scmp.eq.s32.totalorder %s18, 31
      %p88 = por %p86, %p87
      %p90 = scmp.ne.s32.totalorder %s73, %s89
      %p91 = scmp.eq.s32.totalorder %s18, 0
      %p92 = por %p90, %p91
      %s93 = ssub.s32 %s12, %s19
      %p94 = scmp.eq.s32.totalorder %s93, 0
      %s96 = sadd.s32 %s95, 1
      %s97 = scalar_select %p94, %s95, %s96
      %p100 = pneg %p94
      %p101 = scmp.eq.s32.totalorder %s12, 31
      %p102 = por %p100, %p101
      %p103 = scmp.ne.s32.totalorder %s95, %s98
      %p104 = scmp.eq.s32.totalorder %s12, 0
      %p105 = por %p103, %p104
      %p106 = scmp.ne.s32.totalorder %s95, %s98
      %p107 = scmp.eq.s32.totalorder %s17, 31
      %p108 = por %p106, %p107
      %p109 = scmp.ne.s32.totalorder %s98, %s99
      %p110 = scmp.eq.s32.totalorder %s17, 0
      %p111 = por %p109, %p110
      %p112 = scmp.ne.s32.totalorder %s98, %s99
      %p113 = scmp.eq.s32.totalorder %s18, 31
      %p114 = por %p112, %p113
      %p116 = scmp.ne.s32.totalorder %s99, %s115
      %p117 = scmp.eq.s32.totalorder %s18, 0
      %p118 = por %p116, %p117
      %p119 = scmp.le.s32.totalorder 1, %s12
      %p120 = scmp.lt.s32.totalorder %s12, 33
      %p121 = pnand %p119, %p120
      %p122 = pneg %p121
      // Predicated region
      $region9: #{basic_cnn_forward.13} parent=5 // pred_check
        _
      $region10: #{basic_cnn_forward.13} parent=5 // pred_check_branch
        %124 = sbr.rel (%p121) target = $region12
      $region11: #{basic_cnn_forward.13} parent=5 // pred_region
        %s125 = ssub.s32 %s12, 1
        // Predicated region
        $region13: #{basic_cnn_forward.13} parent=11 // pred_check
          %p126 = pneg %p33
        $region14: #{basic_cnn_forward.13} parent=11 // pred_check_branch
          %128 = sbr.rel (%p126) target = $region16
        $region15: #{basic_cnn_forward.13} parent=11 // pred_region
          _
        $region16: #{basic_cnn_forward.13} parent=11 // pred_fallthru
          _
      $region12: #{basic_cnn_forward.13} parent=5 // pred_fallthru
        _
      %p129 = scmp.lt.s32.totalorder %s12, 32
      // Predicated region
      $region17: #{basic_cnn_forward.13} parent=5 // pred_check
        %p130 = pneg %p129
      $region18: #{basic_cnn_forward.13} parent=5 // pred_check_branch
        %132 = sbr.rel (%p130) target = $region20
      $region19: #{basic_cnn_forward.13} parent=5 // pred_region
        // Predicated region
        $region21: #{basic_cnn_forward.13} parent=19 // pred_check
          %p133 = pneg %p53
        $region22: #{basic_cnn_forward.13} parent=19 // pred_check_branch
          %135 = sbr.rel (%p133) target = $region24
        $region23: #{basic_cnn_forward.13} parent=19 // pred_region
          %s136 = sand.u32 %s43, 1
          %s137 = scalar_lea.sflag [#allocation3], %s136
          %s138 = sand.u32 %s43, 1
          %s139 = smul.addr %s138, 8192
          %s140 = scalar_lea.vmem [#allocation2], %s139
          %s141 = smul.u32 16, %s12
          %143 = vsyncadd %s137, 0
          %s144 = smul.addr %s141, 8
          %s145 = scalar_lea.hbm %s1, %s144
          %s146 = sshll.u32 %s145, 4
          %s147 = int_to_ptr.hbm [resolvable:$true] %s146
          %s148 = sshll.u32 %s140, 4
          %s149 = int_to_ptr.vmem [resolvable:$true] %s148
          %154 = dma.hbm_to_vmem [thread:$0]  %s147, 131072, %s149, %s137, 65536, 2048, 128
        $region24: #{basic_cnn_forward.13} parent=19 // pred_fallthru
          _
        // Predicated region
        $region25: #{basic_cnn_forward.13} parent=19 // pred_check
          %p155 = pneg %p79
        $region26: #{basic_cnn_forward.13} parent=19 // pred_check_branch
          %157 = sbr.rel (%p155) target = $region28
        $region27: #{basic_cnn_forward.13} parent=19 // pred_region
          %s158 = smul.u32 16, %s12
          %p159 = scmp.lt.s32.totalorder %s158, 511
          %s160 = scalar_select %p159, %s158, 511
          %s161 = scalar_lea.vmem %s2, %s160
          %s162 = smul.u32 16, %s12
        $region28: #{basic_cnn_forward.13} parent=19 // pred_fallthru
          _
      $region20: #{basic_cnn_forward.13} parent=5 // pred_fallthru
        _
      %p163 = scmp.le.s32.totalorder 1, %s12
      %p164 = scmp.lt.s32.totalorder %s12, 33
      %p165 = pnand %p163, %p164
      %p166 = pneg %p165
      // Predicated region
      $region29: #{basic_cnn_forward.13} parent=5 // pred_check
        _
      $region30: #{basic_cnn_forward.13} parent=5 // pred_check_branch
        %168 = sbr.rel (%p165) target = $region32
      $region31: #{basic_cnn_forward.13} parent=5 // pred_region
        %s169 = ssub.s32 %s12, 1
        %s170 = sand.u32 %s46, 1
        %s171 = scalar_lea.sflag [#allocation3], %s170
        %s172 = sand.u32 %s46, 1
        %s173 = smul.addr %s172, 8192
        %s174 = scalar_lea.vmem [#allocation2], %s173
        // Predicated region
        $region33: #{basic_cnn_forward.13} parent=31 // pred_check
          %p175 = pneg %p59
        $region34: #{basic_cnn_forward.13} parent=31 // pred_check_branch
          %177 = sbr.rel (%p175) target = $region36
        $region35: #{basic_cnn_forward.13} parent=31 // pred_region
          %179 = dma.done %s171, 131072
        $region36: #{basic_cnn_forward.13} parent=31 // pred_fallthru
          _
        %p180 = pneg %p33
        %p181 = pneg %p30
        %s182 = sand.u32 %s46, 1
        %s183 = scalar_lea.sflag [#allocation3], %s182
        %s184 = sand.u32 %s46, 1
        %s185 = smul.addr %s184, 8192
        %s186 = scalar_lea.vmem [#allocation2], %s185
        %p187 = pneg %p59
        %p188 = pneg %p56
        %s189 = smul.u32 16, %s17
        %p190 = scmp.lt.s32.totalorder %s189, 511
        %s191 = scalar_select %p190, %s189, 511
        %s192 = scalar_lea.vmem %s2, %s191
        %p193 = pneg %p85
        %p194 = pneg %p82
        %p195 = pneg %p111
        %p196 = pneg %p108
        %s197 = smul.u32 16, %s17
        %p198 = scmp.lt.s32.totalorder %s197, 511
        %s199 = scalar_select %p198, %s197, 511
        %s200 = smul.addr %s199, 2
        %s201 = scalar_lea.vmem %s3, %s200
        %s202 = smul.u32 16, %s17
        %s203 = smul.u32 16, %s17
        %p204 = scmp.lt.s32.totalorder %s203, 511
        %s205 = scalar_select %p204, %s203, 511
        %s206 = scalar_lea.vmem %s2, %s205
        %s207 = smul.u32 16, %s17
        %s208 = smul.u32 16, %s17
        %p209 = scmp.lt.s32.totalorder %s208, 511
        %s210 = scalar_select %p209, %s208, 511
        %s211 = smul.addr %s210, 2
        %s212 = scalar_lea.vmem %s3, %s211
        %s213 = smul.u32 16, %s17
        %v214 = vld [vmem:[%s0] sm:$0xff]
        %v215 = vld [vmem:[%s174] sm:$0xff]
        %v216 = vld [vmem:[%s174 + $0x8] sm:$0xff]
        %v217 = vld [vmem:[%s174 + $0x10] sm:$0xff]
        %v218 = vld [vmem:[%s174 + $0x18] sm:$0xff]
        %v219 = vld [vmem:[%s174 + $0x20] sm:$0xff]
        %v220 = vld [vmem:[%s174 + $0x28] sm:$0xff]
        %v221 = vld [vmem:[%s174 + $0x30] sm:$0xff]
        %v222 = vld [vmem:[%s174 + $0x38] sm:$0xff]
        %v223 = vld [vmem:[%s174 + $0x40] sm:$0xff]
        %v224 = vld [vmem:[%s174 + $0x48] sm:$0xff]
        %v225 = vld [vmem:[%s174 + $0x50] sm:$0xff]
        %v226 = vld [vmem:[%s174 + $0x58] sm:$0xff]
        %v227 = vld [vmem:[%s174 + $0x60] sm:$0xff]
        %v228 = vld [vmem:[%s174 + $0x68] sm:$0xff]
        %v229 = vld [vmem:[%s174 + $0x70] sm:$0xff]
        %v230 = vld [vmem:[%s174 + $0x78] sm:$0xff]
        %v231 = vld [vmem:[%s174 + $0x80] sm:$0xff]
        %v232 = vld [vmem:[%s174 + $0x88] sm:$0xff]
        %v233 = vld [vmem:[%s174 + $0x90] sm:$0xff]
        %v234 = vld [vmem:[%s174 + $0x98] sm:$0xff]
        %v235 = vld [vmem:[%s174 + $0xa0] sm:$0xff]
        %v236 = vld [vmem:[%s174 + $0xa8] sm:$0xff]
        %v237 = vld [vmem:[%s174 + $0xb0] sm:$0xff]
        %v238 = vld [vmem:[%s174 + $0xb8] sm:$0xff]
        %v239 = vld [vmem:[%s174 + $0xc0] sm:$0xff]
        %v240 = vld [vmem:[%s174 + $0xc8] sm:$0xff]
        %v241 = vld [vmem:[%s174 + $0xd0] sm:$0xff]
        %v242 = vld [vmem:[%s174 + $0xd8] sm:$0xff]
        %v243 = vld [vmem:[%s174 + $0xe0] sm:$0xff]
        %v244 = vld [vmem:[%s174 + $0xe8] sm:$0xff]
        %v245 = vld [vmem:[%s174 + $0xf0] sm:$0xff]
        %v246 = vld [vmem:[%s174 + $0xf8] sm:$0xff]
        %v247 = vld [vmem:[%s174 + $0x100] sm:$0xff]
        %v248 = vld [vmem:[%s174 + $0x108] sm:$0xff]
        %v249 = vld [vmem:[%s174 + $0x110] sm:$0xff]
        %v250 = vld [vmem:[%s174 + $0x118] sm:$0xff]
        %v251 = vld [vmem:[%s174 + $0x120] sm:$0xff]
        %v252 = vld [vmem:[%s174 + $0x128] sm:$0xff]
        %v253 = vld [vmem:[%s174 + $0x130] sm:$0xff]
        %v254 = vld [vmem:[%s174 + $0x138] sm:$0xff]
        %v255 = vld [vmem:[%s174 + $0x140] sm:$0xff]
        %v256 = vld [vmem:[%s174 + $0x148] sm:$0xff]
        %v257 = vld [vmem:[%s174 + $0x150] sm:$0xff]
        %v258 = vld [vmem:[%s174 + $0x158] sm:$0xff]
        %v259 = vld [vmem:[%s174 + $0x160] sm:$0xff]
        %v260 = vld [vmem:[%s174 + $0x168] sm:$0xff]
        %v261 = vld [vmem:[%s174 + $0x170] sm:$0xff]
        %v262 = vld [vmem:[%s174 + $0x178] sm:$0xff]
        %v263 = vld [vmem:[%s174 + $0x180] sm:$0xff]
        %v264 = vld [vmem:[%s174 + $0x188] sm:$0xff]
        %v265 = vld [vmem:[%s174 + $0x190] sm:$0xff]
        %v266 = vld [vmem:[%s174 + $0x198] sm:$0xff]
        %v267 = vld [vmem:[%s174 + $0x1a0] sm:$0xff]
        %v268 = vld [vmem:[%s174 + $0x1a8] sm:$0xff]
        %v269 = vld [vmem:[%s174 + $0x1b0] sm:$0xff]
        %v270 = vld [vmem:[%s174 + $0x1b8] sm:$0xff]
        %v271 = vld [vmem:[%s174 + $0x1c0] sm:$0xff]
        %v272 = vld [vmem:[%s174 + $0x1c8] sm:$0xff]
        %v273 = vld [vmem:[%s174 + $0x1d0] sm:$0xff]
        %v274 = vld [vmem:[%s174 + $0x1d8] sm:$0xff]
        %v275 = vld [vmem:[%s174 + $0x1e0] sm:$0xff]
        %v276 = vld [vmem:[%s174 + $0x1e8] sm:$0xff]
        %v277 = vld [vmem:[%s174 + $0x1f0] sm:$0xff]
        %v278 = vld [vmem:[%s174 + $0x1f8] sm:$0xff]
        %v279 = vld [vmem:[%s174 + $0x200] sm:$0xff]
        %v280 = vld [vmem:[%s174 + $0x208] sm:$0xff]
        %v281 = vld [vmem:[%s174 + $0x210] sm:$0xff]
        %v282 = vld [vmem:[%s174 + $0x218] sm:$0xff]
        %v283 = vld [vmem:[%s174 + $0x220] sm:$0xff]
        %v284 = vld [vmem:[%s174 + $0x228] sm:$0xff]
        %v285 = vld [vmem:[%s174 + $0x230] sm:$0xff]
        %v286 = vld [vmem:[%s174 + $0x238] sm:$0xff]
        %v287 = vld [vmem:[%s174 + $0x240] sm:$0xff]
        %v288 = vld [vmem:[%s174 + $0x248] sm:$0xff]
        %v289 = vld [vmem:[%s174 + $0x250] sm:$0xff]
        %v290 = vld [vmem:[%s174 + $0x258] sm:$0xff]
        %v291 = vld [vmem:[%s174 + $0x260] sm:$0xff]
        %v292 = vld [vmem:[%s174 + $0x268] sm:$0xff]
        %v293 = vld [vmem:[%s174 + $0x270] sm:$0xff]
        %v294 = vld [vmem:[%s174 + $0x278] sm:$0xff]
        %v295 = vld [vmem:[%s174 + $0x280] sm:$0xff]
        %v296 = vld [vmem:[%s174 + $0x288] sm:$0xff]
        %v297 = vld [vmem:[%s174 + $0x290] sm:$0xff]
        %v298 = vld [vmem:[%s174 + $0x298] sm:$0xff]
        %v299 = vld [vmem:[%s174 + $0x2a0] sm:$0xff]
        %v300 = vld [vmem:[%s174 + $0x2a8] sm:$0xff]
        %v301 = vld [vmem:[%s174 + $0x2b0] sm:$0xff]
        %v302 = vld [vmem:[%s174 + $0x2b8] sm:$0xff]
        %v303 = vld [vmem:[%s174 + $0x2c0] sm:$0xff]
        %v304 = vld [vmem:[%s174 + $0x2c8] sm:$0xff]
        %v305 = vld [vmem:[%s174 + $0x2d0] sm:$0xff]
        %v306 = vld [vmem:[%s174 + $0x2d8] sm:$0xff]
        %v307 = vld [vmem:[%s174 + $0x2e0] sm:$0xff]
        %v308 = vld [vmem:[%s174 + $0x2e8] sm:$0xff]
        %v309 = vld [vmem:[%s174 + $0x2f0] sm:$0xff]
        %v310 = vld [vmem:[%s174 + $0x2f8] sm:$0xff]
        %v311 = vld [vmem:[%s174 + $0x300] sm:$0xff]
        %v312 = vld [vmem:[%s174 + $0x308] sm:$0xff]
        %v313 = vld [vmem:[%s174 + $0x310] sm:$0xff]
        %v314 = vld [vmem:[%s174 + $0x318] sm:$0xff]
        %v315 = vld [vmem:[%s174 + $0x320] sm:$0xff]
        %v316 = vld [vmem:[%s174 + $0x328] sm:$0xff]
        %v317 = vld [vmem:[%s174 + $0x330] sm:$0xff]
        %v318 = vld [vmem:[%s174 + $0x338] sm:$0xff]
        %v319 = vld [vmem:[%s174 + $0x340] sm:$0xff]
        %v320 = vld [vmem:[%s174 + $0x348] sm:$0xff]
        %v321 = vld [vmem:[%s174 + $0x350] sm:$0xff]
        %v322 = vld [vmem:[%s174 + $0x358] sm:$0xff]
        %v323 = vld [vmem:[%s174 + $0x360] sm:$0xff]
        %v324 = vld [vmem:[%s174 + $0x368] sm:$0xff]
        %v325 = vld [vmem:[%s174 + $0x370] sm:$0xff]
        %v326 = vld [vmem:[%s174 + $0x378] sm:$0xff]
        %v327 = vld [vmem:[%s174 + $0x380] sm:$0xff]
        %v328 = vld [vmem:[%s174 + $0x388] sm:$0xff]
        %v329 = vld [vmem:[%s174 + $0x390] sm:$0xff]
        %v330 = vld [vmem:[%s174 + $0x398] sm:$0xff]
        %v331 = vld [vmem:[%s174 + $0x3a0] sm:$0xff]
        %v332 = vld [vmem:[%s174 + $0x3a8] sm:$0xff]
        %v333 = vld [vmem:[%s174 + $0x3b0] sm:$0xff]
        %v334 = vld [vmem:[%s174 + $0x3b8] sm:$0xff]
        %v335 = vld [vmem:[%s174 + $0x3c0] sm:$0xff]
        %v336 = vld [vmem:[%s174 + $0x3c8] sm:$0xff]
        %v337 = vld [vmem:[%s174 + $0x3d0] sm:$0xff]
        %v338 = vld [vmem:[%s174 + $0x3d8] sm:$0xff]
        %v339 = vld [vmem:[%s174 + $0x3e0] sm:$0xff]
        %v340 = vld [vmem:[%s174 + $0x3e8] sm:$0xff]
        %v341 = vld [vmem:[%s174 + $0x3f0] sm:$0xff]
        %v342 = vld [vmem:[%s174 + $0x3f8] sm:$0xff]
        %v343 = vld [vmem:[%s174 + $0x400] sm:$0xff]
        %v344 = vld [vmem:[%s174 + $0x408] sm:$0xff]
        %v345 = vld [vmem:[%s174 + $0x410] sm:$0xff]
        %v346 = vld [vmem:[%s174 + $0x418] sm:$0xff]
        %v347 = vld [vmem:[%s174 + $0x420] sm:$0xff]
        %v348 = vld [vmem:[%s174 + $0x428] sm:$0xff]
        %v349 = vld [vmem:[%s174 + $0x430] sm:$0xff]
        %v350 = vld [vmem:[%s174 + $0x438] sm:$0xff]
        %v351 = vld [vmem:[%s174 + $0x440] sm:$0xff]
        %v352 = vld [vmem:[%s174 + $0x448] sm:$0xff]
        %v353 = vld [vmem:[%s174 + $0x450] sm:$0xff]
        %v354 = vld [vmem:[%s174 + $0x458] sm:$0xff]
        %v355 = vld [vmem:[%s174 + $0x460] sm:$0xff]
        %v356 = vld [vmem:[%s174 + $0x468] sm:$0xff]
        %v357 = vld [vmem:[%s174 + $0x470] sm:$0xff]
        %v358 = vld [vmem:[%s174 + $0x478] sm:$0xff]
        %v359 = vld [vmem:[%s174 + $0x480] sm:$0xff]
        %v360 = vld [vmem:[%s174 + $0x488] sm:$0xff]
        %v361 = vld [vmem:[%s174 + $0x490] sm:$0xff]
        %v362 = vld [vmem:[%s174 + $0x498] sm:$0xff]
        %v363 = vld [vmem:[%s174 + $0x4a0] sm:$0xff]
        %v364 = vld [vmem:[%s174 + $0x4a8] sm:$0xff]
        %v365 = vld [vmem:[%s174 + $0x4b0] sm:$0xff]
        %v366 = vld [vmem:[%s174 + $0x4b8] sm:$0xff]
        %v367 = vld [vmem:[%s174 + $0x4c0] sm:$0xff]
        %v368 = vld [vmem:[%s174 + $0x4c8] sm:$0xff]
        %v369 = vld [vmem:[%s174 + $0x4d0] sm:$0xff]
        %v370 = vld [vmem:[%s174 + $0x4d8] sm:$0xff]
        %v371 = vld [vmem:[%s174 + $0x4e0] sm:$0xff]
        %v372 = vld [vmem:[%s174 + $0x4e8] sm:$0xff]
        %v373 = vld [vmem:[%s174 + $0x4f0] sm:$0xff]
        %v374 = vld [vmem:[%s174 + $0x4f8] sm:$0xff]
        %v375 = vld [vmem:[%s174 + $0x500] sm:$0xff]
        %v376 = vld [vmem:[%s174 + $0x508] sm:$0xff]
        %v377 = vld [vmem:[%s174 + $0x510] sm:$0xff]
        %v378 = vld [vmem:[%s174 + $0x518] sm:$0xff]
        %v379 = vld [vmem:[%s174 + $0x520] sm:$0xff]
        %v380 = vld [vmem:[%s174 + $0x528] sm:$0xff]
        %v381 = vld [vmem:[%s174 + $0x530] sm:$0xff]
        %v382 = vld [vmem:[%s174 + $0x538] sm:$0xff]
        %v383 = vld [vmem:[%s174 + $0x540] sm:$0xff]
        %v384 = vld [vmem:[%s174 + $0x548] sm:$0xff]
        %v385 = vld [vmem:[%s174 + $0x550] sm:$0xff]
        %v386 = vld [vmem:[%s174 + $0x558] sm:$0xff]
        %v387 = vld [vmem:[%s174 + $0x560] sm:$0xff]
        %v388 = vld [vmem:[%s174 + $0x568] sm:$0xff]
        %v389 = vld [vmem:[%s174 + $0x570] sm:$0xff]
        %v390 = vld [vmem:[%s174 + $0x578] sm:$0xff]
        %v391 = vld [vmem:[%s174 + $0x580] sm:$0xff]
        %v392 = vld [vmem:[%s174 + $0x588] sm:$0xff]
        %v393 = vld [vmem:[%s174 + $0x590] sm:$0xff]
        %v394 = vld [vmem:[%s174 + $0x598] sm:$0xff]
        %v395 = vld [vmem:[%s174 + $0x5a0] sm:$0xff]
        %v396 = vld [vmem:[%s174 + $0x5a8] sm:$0xff]
        %v397 = vld [vmem:[%s174 + $0x5b0] sm:$0xff]
        %v398 = vld [vmem:[%s174 + $0x5b8] sm:$0xff]
        %v399 = vld [vmem:[%s174 + $0x5c0] sm:$0xff]
        %v400 = vld [vmem:[%s174 + $0x5c8] sm:$0xff]
        %v401 = vld [vmem:[%s174 + $0x5d0] sm:$0xff]
        %v402 = vld [vmem:[%s174 + $0x5d8] sm:$0xff]
        %v403 = vld [vmem:[%s174 + $0x5e0] sm:$0xff]
        %v404 = vld [vmem:[%s174 + $0x5e8] sm:$0xff]
        %v405 = vld [vmem:[%s174 + $0x5f0] sm:$0xff]
        %v406 = vld [vmem:[%s174 + $0x5f8] sm:$0xff]
        %v407 = vld [vmem:[%s174 + $0x600] sm:$0xff]
        %v408 = vld [vmem:[%s174 + $0x608] sm:$0xff]
        %v409 = vld [vmem:[%s174 + $0x610] sm:$0xff]
        %v410 = vld [vmem:[%s174 + $0x618] sm:$0xff]
        %v411 = vld [vmem:[%s174 + $0x620] sm:$0xff]
        %v412 = vld [vmem:[%s174 + $0x628] sm:$0xff]
        %v413 = vld [vmem:[%s174 + $0x630] sm:$0xff]
        %v414 = vld [vmem:[%s174 + $0x638] sm:$0xff]
        %v415 = vld [vmem:[%s174 + $0x640] sm:$0xff]
        %v416 = vld [vmem:[%s174 + $0x648] sm:$0xff]
        %v417 = vld [vmem:[%s174 + $0x650] sm:$0xff]
        %v418 = vld [vmem:[%s174 + $0x658] sm:$0xff]
        %v419 = vld [vmem:[%s174 + $0x660] sm:$0xff]
        %v420 = vld [vmem:[%s174 + $0x668] sm:$0xff]
        %v421 = vld [vmem:[%s174 + $0x670] sm:$0xff]
        %v422 = vld [vmem:[%s174 + $0x678] sm:$0xff]
        %v423 = vld [vmem:[%s174 + $0x680] sm:$0xff]
        %v424 = vld [vmem:[%s174 + $0x688] sm:$0xff]
        %v425 = vld [vmem:[%s174 + $0x690] sm:$0xff]
        %v426 = vld [vmem:[%s174 + $0x698] sm:$0xff]
        %v427 = vld [vmem:[%s174 + $0x6a0] sm:$0xff]
        %v428 = vld [vmem:[%s174 + $0x6a8] sm:$0xff]
        %v429 = vld [vmem:[%s174 + $0x6b0] sm:$0xff]
        %v430 = vld [vmem:[%s174 + $0x6b8] sm:$0xff]
        %v431 = vld [vmem:[%s174 + $0x6c0] sm:$0xff]
        %v432 = vld [vmem:[%s174 + $0x6c8] sm:$0xff]
        %v433 = vld [vmem:[%s174 + $0x6d0] sm:$0xff]
        %v434 = vld [vmem:[%s174 + $0x6d8] sm:$0xff]
        %v435 = vld [vmem:[%s174 + $0x6e0] sm:$0xff]
        %v436 = vld [vmem:[%s174 + $0x6e8] sm:$0xff]
        %v437 = vld [vmem:[%s174 + $0x6f0] sm:$0xff]
        %v438 = vld [vmem:[%s174 + $0x6f8] sm:$0xff]
        %v439 = vld [vmem:[%s174 + $0x700] sm:$0xff]
        %v440 = vld [vmem:[%s174 + $0x708] sm:$0xff]
        %v441 = vld [vmem:[%s174 + $0x710] sm:$0xff]
        %v442 = vld [vmem:[%s174 + $0x718] sm:$0xff]
        %v443 = vld [vmem:[%s174 + $0x720] sm:$0xff]
        %v444 = vld [vmem:[%s174 + $0x728] sm:$0xff]
        %v445 = vld [vmem:[%s174 + $0x730] sm:$0xff]
        %v446 = vld [vmem:[%s174 + $0x738] sm:$0xff]
        %v447 = vld [vmem:[%s174 + $0x740] sm:$0xff]
        %v448 = vld [vmem:[%s174 + $0x748] sm:$0xff]
        %v449 = vld [vmem:[%s174 + $0x750] sm:$0xff]
        %v450 = vld [vmem:[%s174 + $0x758] sm:$0xff]
        %v451 = vld [vmem:[%s174 + $0x760] sm:$0xff]
        %v452 = vld [vmem:[%s174 + $0x768] sm:$0xff]
        %v453 = vld [vmem:[%s174 + $0x770] sm:$0xff]
        %v454 = vld [vmem:[%s174 + $0x778] sm:$0xff]
        %v455 = vld [vmem:[%s174 + $0x780] sm:$0xff]
        %v456 = vld [vmem:[%s174 + $0x788] sm:$0xff]
        %v457 = vld [vmem:[%s174 + $0x790] sm:$0xff]
        %v458 = vld [vmem:[%s174 + $0x798] sm:$0xff]
        %v459 = vld [vmem:[%s174 + $0x7a0] sm:$0xff]
        %v460 = vld [vmem:[%s174 + $0x7a8] sm:$0xff]
        %v461 = vld [vmem:[%s174 + $0x7b0] sm:$0xff]
        %v462 = vld [vmem:[%s174 + $0x7b8] sm:$0xff]
        %v463 = vld [vmem:[%s174 + $0x7c0] sm:$0xff]
        %v464 = vld [vmem:[%s174 + $0x7c8] sm:$0xff]
        %v465 = vld [vmem:[%s174 + $0x7d0] sm:$0xff]
        %v466 = vld [vmem:[%s174 + $0x7d8] sm:$0xff]
        %v467 = vld [vmem:[%s174 + $0x7e0] sm:$0xff]
        %v468 = vld [vmem:[%s174 + $0x7e8] sm:$0xff]
        %v469 = vld [vmem:[%s174 + $0x7f0] sm:$0xff]
        %v470 = vld [vmem:[%s174 + $0x7f8] sm:$0xff]
        %v471 = vld [vmem:[%s174 + $0x800] sm:$0xff]
        %v472 = vld [vmem:[%s174 + $0x808] sm:$0xff]
        %v473 = vld [vmem:[%s174 + $0x810] sm:$0xff]
        %v474 = vld [vmem:[%s174 + $0x818] sm:$0xff]
        %v475 = vld [vmem:[%s174 + $0x820] sm:$0xff]
        %v476 = vld [vmem:[%s174 + $0x828] sm:$0xff]
        %v477 = vld [vmem:[%s174 + $0x830] sm:$0xff]
        %v478 = vld [vmem:[%s174 + $0x838] sm:$0xff]
        %v479 = vld [vmem:[%s174 + $0x840] sm:$0xff]
        %v480 = vld [vmem:[%s174 + $0x848] sm:$0xff]
        %v481 = vld [vmem:[%s174 + $0x850] sm:$0xff]
        %v482 = vld [vmem:[%s174 + $0x858] sm:$0xff]
        %v483 = vld [vmem:[%s174 + $0x860] sm:$0xff]
        %v484 = vld [vmem:[%s174 + $0x868] sm:$0xff]
        %v485 = vld [vmem:[%s174 + $0x870] sm:$0xff]
        %v486 = vld [vmem:[%s174 + $0x878] sm:$0xff]
        %v487 = vld [vmem:[%s174 + $0x880] sm:$0xff]
        %v488 = vld [vmem:[%s174 + $0x888] sm:$0xff]
        %v489 = vld [vmem:[%s174 + $0x890] sm:$0xff]
        %v490 = vld [vmem:[%s174 + $0x898] sm:$0xff]
        %v491 = vld [vmem:[%s174 + $0x8a0] sm:$0xff]
        %v492 = vld [vmem:[%s174 + $0x8a8] sm:$0xff]
        %v493 = vld [vmem:[%s174 + $0x8b0] sm:$0xff]
        %v494 = vld [vmem:[%s174 + $0x8b8] sm:$0xff]
        %v495 = vld [vmem:[%s174 + $0x8c0] sm:$0xff]
        %v496 = vld [vmem:[%s174 + $0x8c8] sm:$0xff]
        %v497 = vld [vmem:[%s174 + $0x8d0] sm:$0xff]
        %v498 = vld [vmem:[%s174 + $0x8d8] sm:$0xff]
        %v499 = vld [vmem:[%s174 + $0x8e0] sm:$0xff]
        %v500 = vld [vmem:[%s174 + $0x8e8] sm:$0xff]
        %v501 = vld [vmem:[%s174 + $0x8f0] sm:$0xff]
        %v502 = vld [vmem:[%s174 + $0x8f8] sm:$0xff]
        %v503 = vld [vmem:[%s174 + $0x900] sm:$0xff]
        %v504 = vld [vmem:[%s174 + $0x908] sm:$0xff]
        %v505 = vld [vmem:[%s174 + $0x910] sm:$0xff]
        %v506 = vld [vmem:[%s174 + $0x918] sm:$0xff]
        %v507 = vld [vmem:[%s174 + $0x920] sm:$0xff]
        %v508 = vld [vmem:[%s174 + $0x928] sm:$0xff]
        %v509 = vld [vmem:[%s174 + $0x930] sm:$0xff]
        %v510 = vld [vmem:[%s174 + $0x938] sm:$0xff]
        %v511 = vld [vmem:[%s174 + $0x940] sm:$0xff]
        %v512 = vld [vmem:[%s174 + $0x948] sm:$0xff]
        %v513 = vld [vmem:[%s174 + $0x950] sm:$0xff]
        %v514 = vld [vmem:[%s174 + $0x958] sm:$0xff]
        %v515 = vld [vmem:[%s174 + $0x960] sm:$0xff]
        %v516 = vld [vmem:[%s174 + $0x968] sm:$0xff]
        %v517 = vld [vmem:[%s174 + $0x970] sm:$0xff]
        %v518 = vld [vmem:[%s174 + $0x978] sm:$0xff]
        %v519 = vld [vmem:[%s174 + $0x980] sm:$0xff]
        %v520 = vld [vmem:[%s174 + $0x988] sm:$0xff]
        %v521 = vld [vmem:[%s174 + $0x990] sm:$0xff]
        %v522 = vld [vmem:[%s174 + $0x998] sm:$0xff]
        %v523 = vld [vmem:[%s174 + $0x9a0] sm:$0xff]
        %v524 = vld [vmem:[%s174 + $0x9a8] sm:$0xff]
        %v525 = vld [vmem:[%s174 + $0x9b0] sm:$0xff]
        %v526 = vld [vmem:[%s174 + $0x9b8] sm:$0xff]
        %v527 = vld [vmem:[%s174 + $0x9c0] sm:$0xff]
        %v528 = vld [vmem:[%s174 + $0x9c8] sm:$0xff]
        %v529 = vld [vmem:[%s174 + $0x9d0] sm:$0xff]
        %v530 = vld [vmem:[%s174 + $0x9d8] sm:$0xff]
        %v531 = vld [vmem:[%s174 + $0x9e0] sm:$0xff]
        %v532 = vld [vmem:[%s174 + $0x9e8] sm:$0xff]
        %v533 = vld [vmem:[%s174 + $0x9f0] sm:$0xff]
        %v534 = vld [vmem:[%s174 + $0x9f8] sm:$0xff]
        %v535 = vld [vmem:[%s174 + $0xa00] sm:$0xff]
        %v536 = vld [vmem:[%s174 + $0xa08] sm:$0xff]
        %v537 = vld [vmem:[%s174 + $0xa10] sm:$0xff]
        %v538 = vld [vmem:[%s174 + $0xa18] sm:$0xff]
        %v539 = vld [vmem:[%s174 + $0xa20] sm:$0xff]
        %v540 = vld [vmem:[%s174 + $0xa28] sm:$0xff]
        %v541 = vld [vmem:[%s174 + $0xa30] sm:$0xff]
        %v542 = vld [vmem:[%s174 + $0xa38] sm:$0xff]
        %v543 = vld [vmem:[%s174 + $0xa40] sm:$0xff]
        %v544 = vld [vmem:[%s174 + $0xa48] sm:$0xff]
        %v545 = vld [vmem:[%s174 + $0xa50] sm:$0xff]
        %v546 = vld [vmem:[%s174 + $0xa58] sm:$0xff]
        %v547 = vld [vmem:[%s174 + $0xa60] sm:$0xff]
        %v548 = vld [vmem:[%s174 + $0xa68] sm:$0xff]
        %v549 = vld [vmem:[%s174 + $0xa70] sm:$0xff]
        %v550 = vld [vmem:[%s174 + $0xa78] sm:$0xff]
        %v551 = vld [vmem:[%s174 + $0xa80] sm:$0xff]
        %v552 = vld [vmem:[%s174 + $0xa88] sm:$0xff]
        %v553 = vld [vmem:[%s174 + $0xa90] sm:$0xff]
        %v554 = vld [vmem:[%s174 + $0xa98] sm:$0xff]
        %v555 = vld [vmem:[%s174 + $0xaa0] sm:$0xff]
        %v556 = vld [vmem:[%s174 + $0xaa8] sm:$0xff]
        %v557 = vld [vmem:[%s174 + $0xab0] sm:$0xff]
        %v558 = vld [vmem:[%s174 + $0xab8] sm:$0xff]
        %v559 = vld [vmem:[%s174 + $0xac0] sm:$0xff]
        %v560 = vld [vmem:[%s174 + $0xac8] sm:$0xff]
        %v561 = vld [vmem:[%s174 + $0xad0] sm:$0xff]
        %v562 = vld [vmem:[%s174 + $0xad8] sm:$0xff]
        %v563 = vld [vmem:[%s174 + $0xae0] sm:$0xff]
        %v564 = vld [vmem:[%s174 + $0xae8] sm:$0xff]
        %v565 = vld [vmem:[%s174 + $0xaf0] sm:$0xff]
        %v566 = vld [vmem:[%s174 + $0xaf8] sm:$0xff]
        %v567 = vld [vmem:[%s174 + $0xb00] sm:$0xff]
        %v568 = vld [vmem:[%s174 + $0xb08] sm:$0xff]
        %v569 = vld [vmem:[%s174 + $0xb10] sm:$0xff]
        %v570 = vld [vmem:[%s174 + $0xb18] sm:$0xff]
        %v571 = vld [vmem:[%s174 + $0xb20] sm:$0xff]
        %v572 = vld [vmem:[%s174 + $0xb28] sm:$0xff]
        %v573 = vld [vmem:[%s174 + $0xb30] sm:$0xff]
        %v574 = vld [vmem:[%s174 + $0xb38] sm:$0xff]
        %v575 = vld [vmem:[%s174 + $0xb40] sm:$0xff]
        %v576 = vld [vmem:[%s174 + $0xb48] sm:$0xff]
        %v577 = vld [vmem:[%s174 + $0xb50] sm:$0xff]
        %v578 = vld [vmem:[%s174 + $0xb58] sm:$0xff]
        %v579 = vld [vmem:[%s174 + $0xb60] sm:$0xff]
        %v580 = vld [vmem:[%s174 + $0xb68] sm:$0xff]
        %v581 = vld [vmem:[%s174 + $0xb70] sm:$0xff]
        %v582 = vld [vmem:[%s174 + $0xb78] sm:$0xff]
        %v583 = vld [vmem:[%s174 + $0xb80] sm:$0xff]
        %v584 = vld [vmem:[%s174 + $0xb88] sm:$0xff]
        %v585 = vld [vmem:[%s174 + $0xb90] sm:$0xff]
        %v586 = vld [vmem:[%s174 + $0xb98] sm:$0xff]
        %v587 = vld [vmem:[%s174 + $0xba0] sm:$0xff]
        %v588 = vld [vmem:[%s174 + $0xba8] sm:$0xff]
        %v589 = vld [vmem:[%s174 + $0xbb0] sm:$0xff]
        %v590 = vld [vmem:[%s174 + $0xbb8] sm:$0xff]
        %v591 = vld [vmem:[%s174 + $0xbc0] sm:$0xff]
        %v592 = vld [vmem:[%s174 + $0xbc8] sm:$0xff]
        %v593 = vld [vmem:[%s174 + $0xbd0] sm:$0xff]
        %v594 = vld [vmem:[%s174 + $0xbd8] sm:$0xff]
        %v595 = vld [vmem:[%s174 + $0xbe0] sm:$0xff]
        %v596 = vld [vmem:[%s174 + $0xbe8] sm:$0xff]
        %v597 = vld [vmem:[%s174 + $0xbf0] sm:$0xff]
        %v598 = vld [vmem:[%s174 + $0xbf8] sm:$0xff]
        %v599 = vld [vmem:[%s174 + $0xc00] sm:$0xff]
        %v600 = vld [vmem:[%s174 + $0xc08] sm:$0xff]
        %v601 = vld [vmem:[%s174 + $0xc10] sm:$0xff]
        %v602 = vld [vmem:[%s174 + $0xc18] sm:$0xff]
        %v603 = vld [vmem:[%s174 + $0xc20] sm:$0xff]
        %v604 = vld [vmem:[%s174 + $0xc28] sm:$0xff]
        %v605 = vld [vmem:[%s174 + $0xc30] sm:$0xff]
        %v606 = vld [vmem:[%s174 + $0xc38] sm:$0xff]
        %v607 = vld [vmem:[%s174 + $0xc40] sm:$0xff]
        %v608 = vld [vmem:[%s174 + $0xc48] sm:$0xff]
        %v609 = vld [vmem:[%s174 + $0xc50] sm:$0xff]
        %v610 = vld [vmem:[%s174 + $0xc58] sm:$0xff]
        %v611 = vld [vmem:[%s174 + $0xc60] sm:$0xff]
        %v612 = vld [vmem:[%s174 + $0xc68] sm:$0xff]
        %v613 = vld [vmem:[%s174 + $0xc70] sm:$0xff]
        %v614 = vld [vmem:[%s174 + $0xc78] sm:$0xff]
        %v615 = vld [vmem:[%s174 + $0xc80] sm:$0xff]
        %v616 = vld [vmem:[%s174 + $0xc88] sm:$0xff]
        %v617 = vld [vmem:[%s174 + $0xc90] sm:$0xff]
        %v618 = vld [vmem:[%s174 + $0xc98] sm:$0xff]
        %v619 = vld [vmem:[%s174 + $0xca0] sm:$0xff]
        %v620 = vld [vmem:[%s174 + $0xca8] sm:$0xff]
        %v621 = vld [vmem:[%s174 + $0xcb0] sm:$0xff]
        %v622 = vld [vmem:[%s174 + $0xcb8] sm:$0xff]
        %v623 = vld [vmem:[%s174 + $0xcc0] sm:$0xff]
        %v624 = vld [vmem:[%s174 + $0xcc8] sm:$0xff]
        %v625 = vld [vmem:[%s174 + $0xcd0] sm:$0xff]
        %v626 = vld [vmem:[%s174 + $0xcd8] sm:$0xff]
        %v627 = vld [vmem:[%s174 + $0xce0] sm:$0xff]
        %v628 = vld [vmem:[%s174 + $0xce8] sm:$0xff]
        %v629 = vld [vmem:[%s174 + $0xcf0] sm:$0xff]
        %v630 = vld [vmem:[%s174 + $0xcf8] sm:$0xff]
        %v631 = vld [vmem:[%s174 + $0xd00] sm:$0xff]
        %v632 = vld [vmem:[%s174 + $0xd08] sm:$0xff]
        %v633 = vld [vmem:[%s174 + $0xd10] sm:$0xff]
        %v634 = vld [vmem:[%s174 + $0xd18] sm:$0xff]
        %v635 = vld [vmem:[%s174 + $0xd20] sm:$0xff]
        %v636 = vld [vmem:[%s174 + $0xd28] sm:$0xff]
        %v637 = vld [vmem:[%s174 + $0xd30] sm:$0xff]
        %v638 = vld [vmem:[%s174 + $0xd38] sm:$0xff]
        %v639 = vld [vmem:[%s174 + $0xd40] sm:$0xff]
        %v640 = vld [vmem:[%s174 + $0xd48] sm:$0xff]
        %v641 = vld [vmem:[%s174 + $0xd50] sm:$0xff]
        %v642 = vld [vmem:[%s174 + $0xd58] sm:$0xff]
        %v643 = vld [vmem:[%s174 + $0xd60] sm:$0xff]
        %v644 = vld [vmem:[%s174 + $0xd68] sm:$0xff]
        %v645 = vld [vmem:[%s174 + $0xd70] sm:$0xff]
        %v646 = vld [vmem:[%s174 + $0xd78] sm:$0xff]
        %v647 = vld [vmem:[%s174 + $0xd80] sm:$0xff]
        %v648 = vld [vmem:[%s174 + $0xd88] sm:$0xff]
        %v649 = vld [vmem:[%s174 + $0xd90] sm:$0xff]
        %v650 = vld [vmem:[%s174 + $0xd98] sm:$0xff]
        %v651 = vld [vmem:[%s174 + $0xda0] sm:$0xff]
        %v652 = vld [vmem:[%s174 + $0xda8] sm:$0xff]
        %v653 = vld [vmem:[%s174 + $0xdb0] sm:$0xff]
        %v654 = vld [vmem:[%s174 + $0xdb8] sm:$0xff]
        %v655 = vld [vmem:[%s174 + $0xdc0] sm:$0xff]
        %v656 = vld [vmem:[%s174 + $0xdc8] sm:$0xff]
        %v657 = vld [vmem:[%s174 + $0xdd0] sm:$0xff]
        %v658 = vld [vmem:[%s174 + $0xdd8] sm:$0xff]
        %v659 = vld [vmem:[%s174 + $0xde0] sm:$0xff]
        %v660 = vld [vmem:[%s174 + $0xde8] sm:$0xff]
        %v661 = vld [vmem:[%s174 + $0xdf0] sm:$0xff]
        %v662 = vld [vmem:[%s174 + $0xdf8] sm:$0xff]
        %v663 = vld [vmem:[%s174 + $0xe00] sm:$0xff]
        %v664 = vld [vmem:[%s174 + $0xe08] sm:$0xff]
        %v665 = vld [vmem:[%s174 + $0xe10] sm:$0xff]
        %v666 = vld [vmem:[%s174 + $0xe18] sm:$0xff]
        %v667 = vld [vmem:[%s174 + $0xe20] sm:$0xff]
        %v668 = vld [vmem:[%s174 + $0xe28] sm:$0xff]
        %v669 = vld [vmem:[%s174 + $0xe30] sm:$0xff]
        %v670 = vld [vmem:[%s174 + $0xe38] sm:$0xff]
        %v671 = vld [vmem:[%s174 + $0xe40] sm:$0xff]
        %v672 = vld [vmem:[%s174 + $0xe48] sm:$0xff]
        %v673 = vld [vmem:[%s174 + $0xe50] sm:$0xff]
        %v674 = vld [vmem:[%s174 + $0xe58] sm:$0xff]
        %v675 = vld [vmem:[%s174 + $0xe60] sm:$0xff]
        %v676 = vld [vmem:[%s174 + $0xe68] sm:$0xff]
        %v677 = vld [vmem:[%s174 + $0xe70] sm:$0xff]
        %v678 = vld [vmem:[%s174 + $0xe78] sm:$0xff]
        %v679 = vld [vmem:[%s174 + $0xe80] sm:$0xff]
        %v680 = vld [vmem:[%s174 + $0xe88] sm:$0xff]
        %v681 = vld [vmem:[%s174 + $0xe90] sm:$0xff]
        %v682 = vld [vmem:[%s174 + $0xe98] sm:$0xff]
        %v683 = vld [vmem:[%s174 + $0xea0] sm:$0xff]
        %v684 = vld [vmem:[%s174 + $0xea8] sm:$0xff]
        %v685 = vld [vmem:[%s174 + $0xeb0] sm:$0xff]
        %v686 = vld [vmem:[%s174 + $0xeb8] sm:$0xff]
        %v687 = vld [vmem:[%s174 + $0xec0] sm:$0xff]
        %v688 = vld [vmem:[%s174 + $0xec8] sm:$0xff]
        %v689 = vld [vmem:[%s174 + $0xed0] sm:$0xff]
        %v690 = vld [vmem:[%s174 + $0xed8] sm:$0xff]
        %v691 = vld [vmem:[%s174 + $0xee0] sm:$0xff]
        %v692 = vld [vmem:[%s174 + $0xee8] sm:$0xff]
        %v693 = vld [vmem:[%s174 + $0xef0] sm:$0xff]
        %v694 = vld [vmem:[%s174 + $0xef8] sm:$0xff]
        %v695 = vld [vmem:[%s174 + $0xf00] sm:$0xff]
        %v696 = vld [vmem:[%s174 + $0xf08] sm:$0xff]
        %v697 = vld [vmem:[%s174 + $0xf10] sm:$0xff]
        %v698 = vld [vmem:[%s174 + $0xf18] sm:$0xff]
        %v699 = vld [vmem:[%s174 + $0xf20] sm:$0xff]
        %v700 = vld [vmem:[%s174 + $0xf28] sm:$0xff]
        %v701 = vld [vmem:[%s174 + $0xf30] sm:$0xff]
        %v702 = vld [vmem:[%s174 + $0xf38] sm:$0xff]
        %v703 = vld [vmem:[%s174 + $0xf40] sm:$0xff]
        %v704 = vld [vmem:[%s174 + $0xf48] sm:$0xff]
        %v705 = vld [vmem:[%s174 + $0xf50] sm:$0xff]
        %v706 = vld [vmem:[%s174 + $0xf58] sm:$0xff]
        %v707 = vld [vmem:[%s174 + $0xf60] sm:$0xff]
        %v708 = vld [vmem:[%s174 + $0xf68] sm:$0xff]
        %v709 = vld [vmem:[%s174 + $0xf70] sm:$0xff]
        %v710 = vld [vmem:[%s174 + $0xf78] sm:$0xff]
        %v711 = vld [vmem:[%s174 + $0xf80] sm:$0xff]
        %v712 = vld [vmem:[%s174 + $0xf88] sm:$0xff]
        %v713 = vld [vmem:[%s174 + $0xf90] sm:$0xff]
        %v714 = vld [vmem:[%s174 + $0xf98] sm:$0xff]
        %v715 = vld [vmem:[%s174 + $0xfa0] sm:$0xff]
        %v716 = vld [vmem:[%s174 + $0xfa8] sm:$0xff]
        %v717 = vld [vmem:[%s174 + $0xfb0] sm:$0xff]
        %v718 = vld [vmem:[%s174 + $0xfb8] sm:$0xff]
        %v719 = vld [vmem:[%s174 + $0xfc0] sm:$0xff]
        %v720 = vld [vmem:[%s174 + $0xfc8] sm:$0xff]
        %v721 = vld [vmem:[%s174 + $0xfd0] sm:$0xff]
        %v722 = vld [vmem:[%s174 + $0xfd8] sm:$0xff]
        %v723 = vld [vmem:[%s174 + $0xfe0] sm:$0xff]
        %v724 = vld [vmem:[%s174 + $0xfe8] sm:$0xff]
        %v725 = vld [vmem:[%s174 + $0xff0] sm:$0xff]
        %v726 = vld [vmem:[%s174 + $0xff8] sm:$0xff]
        %v727 = vld [vmem:[%s174 + $0x1000] sm:$0xff]
        %v728 = vld [vmem:[%s174 + $0x1008] sm:$0xff]
        %v729 = vld [vmem:[%s174 + $0x1010] sm:$0xff]
        %v730 = vld [vmem:[%s174 + $0x1018] sm:$0xff]
        %v731 = vld [vmem:[%s174 + $0x1020] sm:$0xff]
        %v732 = vld [vmem:[%s174 + $0x1028] sm:$0xff]
        %v733 = vld [vmem:[%s174 + $0x1030] sm:$0xff]
        %v734 = vld [vmem:[%s174 + $0x1038] sm:$0xff]
        %v735 = vld [vmem:[%s174 + $0x1040] sm:$0xff]
        %v736 = vld [vmem:[%s174 + $0x1048] sm:$0xff]
        %v737 = vld [vmem:[%s174 + $0x1050] sm:$0xff]
        %v738 = vld [vmem:[%s174 + $0x1058] sm:$0xff]
        %v739 = vld [vmem:[%s174 + $0x1060] sm:$0xff]
        %v740 = vld [vmem:[%s174 + $0x1068] sm:$0xff]
        %v741 = vld [vmem:[%s174 + $0x1070] sm:$0xff]
        %v742 = vld [vmem:[%s174 + $0x1078] sm:$0xff]
        %v743 = vld [vmem:[%s174 + $0x1080] sm:$0xff]
        %v744 = vld [vmem:[%s174 + $0x1088] sm:$0xff]
        %v745 = vld [vmem:[%s174 + $0x1090] sm:$0xff]
        %v746 = vld [vmem:[%s174 + $0x1098] sm:$0xff]
        %v747 = vld [vmem:[%s174 + $0x10a0] sm:$0xff]
        %v748 = vld [vmem:[%s174 + $0x10a8] sm:$0xff]
        %v749 = vld [vmem:[%s174 + $0x10b0] sm:$0xff]
        %v750 = vld [vmem:[%s174 + $0x10b8] sm:$0xff]
        %v751 = vld [vmem:[%s174 + $0x10c0] sm:$0xff]
        %v752 = vld [vmem:[%s174 + $0x10c8] sm:$0xff]
        %v753 = vld [vmem:[%s174 + $0x10d0] sm:$0xff]
        %v754 = vld [vmem:[%s174 + $0x10d8] sm:$0xff]
        %v755 = vld [vmem:[%s174 + $0x10e0] sm:$0xff]
        %v756 = vld [vmem:[%s174 + $0x10e8] sm:$0xff]
        %v757 = vld [vmem:[%s174 + $0x10f0] sm:$0xff]
        %v758 = vld [vmem:[%s174 + $0x10f8] sm:$0xff]
        %v759 = vld [vmem:[%s174 + $0x1100] sm:$0xff]
        %v760 = vld [vmem:[%s174 + $0x1108] sm:$0xff]
        %v761 = vld [vmem:[%s174 + $0x1110] sm:$0xff]
        %v762 = vld [vmem:[%s174 + $0x1118] sm:$0xff]
        %v763 = vld [vmem:[%s174 + $0x1120] sm:$0xff]
        %v764 = vld [vmem:[%s174 + $0x1128] sm:$0xff]
        %v765 = vld [vmem:[%s174 + $0x1130] sm:$0xff]
        %v766 = vld [vmem:[%s174 + $0x1138] sm:$0xff]
        %v767 = vld [vmem:[%s174 + $0x1140] sm:$0xff]
        %v768 = vld [vmem:[%s174 + $0x1148] sm:$0xff]
        %v769 = vld [vmem:[%s174 + $0x1150] sm:$0xff]
        %v770 = vld [vmem:[%s174 + $0x1158] sm:$0xff]
        %v771 = vld [vmem:[%s174 + $0x1160] sm:$0xff]
        %v772 = vld [vmem:[%s174 + $0x1168] sm:$0xff]
        %v773 = vld [vmem:[%s174 + $0x1170] sm:$0xff]
        %v774 = vld [vmem:[%s174 + $0x1178] sm:$0xff]
        %v775 = vld [vmem:[%s174 + $0x1180] sm:$0xff]
        %v776 = vld [vmem:[%s174 + $0x1188] sm:$0xff]
        %v777 = vld [vmem:[%s174 + $0x1190] sm:$0xff]
        %v778 = vld [vmem:[%s174 + $0x1198] sm:$0xff]
        %v779 = vld [vmem:[%s174 + $0x11a0] sm:$0xff]
        %v780 = vld [vmem:[%s174 + $0x11a8] sm:$0xff]
        %v781 = vld [vmem:[%s174 + $0x11b0] sm:$0xff]
        %v782 = vld [vmem:[%s174 + $0x11b8] sm:$0xff]
        %v783 = vld [vmem:[%s174 + $0x11c0] sm:$0xff]
        %v784 = vld [vmem:[%s174 + $0x11c8] sm:$0xff]
        %v785 = vld [vmem:[%s174 + $0x11d0] sm:$0xff]
        %v786 = vld [vmem:[%s174 + $0x11d8] sm:$0xff]
        %v787 = vld [vmem:[%s174 + $0x11e0] sm:$0xff]
        %v788 = vld [vmem:[%s174 + $0x11e8] sm:$0xff]
        %v789 = vld [vmem:[%s174 + $0x11f0] sm:$0xff]
        %v790 = vld [vmem:[%s174 + $0x11f8] sm:$0xff]
        %v791 = vld [vmem:[%s174 + $0x1200] sm:$0xff]
        %v792 = vld [vmem:[%s174 + $0x1208] sm:$0xff]
        %v793 = vld [vmem:[%s174 + $0x1210] sm:$0xff]
        %v794 = vld [vmem:[%s174 + $0x1218] sm:$0xff]
        %v795 = vld [vmem:[%s174 + $0x1220] sm:$0xff]
        %v796 = vld [vmem:[%s174 + $0x1228] sm:$0xff]
        %v797 = vld [vmem:[%s174 + $0x1230] sm:$0xff]
        %v798 = vld [vmem:[%s174 + $0x1238] sm:$0xff]
        %v799 = vld [vmem:[%s174 + $0x1240] sm:$0xff]
        %v800 = vld [vmem:[%s174 + $0x1248] sm:$0xff]
        %v801 = vld [vmem:[%s174 + $0x1250] sm:$0xff]
        %v802 = vld [vmem:[%s174 + $0x1258] sm:$0xff]
        %v803 = vld [vmem:[%s174 + $0x1260] sm:$0xff]
        %v804 = vld [vmem:[%s174 + $0x1268] sm:$0xff]
        %v805 = vld [vmem:[%s174 + $0x1270] sm:$0xff]
        %v806 = vld [vmem:[%s174 + $0x1278] sm:$0xff]
        %v807 = vld [vmem:[%s174 + $0x1280] sm:$0xff]
        %v808 = vld [vmem:[%s174 + $0x1288] sm:$0xff]
        %v809 = vld [vmem:[%s174 + $0x1290] sm:$0xff]
        %v810 = vld [vmem:[%s174 + $0x1298] sm:$0xff]
        %v811 = vld [vmem:[%s174 + $0x12a0] sm:$0xff]
        %v812 = vld [vmem:[%s174 + $0x12a8] sm:$0xff]
        %v813 = vld [vmem:[%s174 + $0x12b0] sm:$0xff]
        %v814 = vld [vmem:[%s174 + $0x12b8] sm:$0xff]
        %v815 = vld [vmem:[%s174 + $0x12c0] sm:$0xff]
        %v816 = vld [vmem:[%s174 + $0x12c8] sm:$0xff]
        %v817 = vld [vmem:[%s174 + $0x12d0] sm:$0xff]
        %v818 = vld [vmem:[%s174 + $0x12d8] sm:$0xff]
        %v819 = vld [vmem:[%s174 + $0x12e0] sm:$0xff]
        %v820 = vld [vmem:[%s174 + $0x12e8] sm:$0xff]
        %v821 = vld [vmem:[%s174 + $0x12f0] sm:$0xff]
        %v822 = vld [vmem:[%s174 + $0x12f8] sm:$0xff]
        %v823 = vld [vmem:[%s174 + $0x1300] sm:$0xff]
        %v824 = vld [vmem:[%s174 + $0x1308] sm:$0xff]
        %v825 = vld [vmem:[%s174 + $0x1310] sm:$0xff]
        %v826 = vld [vmem:[%s174 + $0x1318] sm:$0xff]
        %v827 = vld [vmem:[%s174 + $0x1320] sm:$0xff]
        %v828 = vld [vmem:[%s174 + $0x1328] sm:$0xff]
        %v829 = vld [vmem:[%s174 + $0x1330] sm:$0xff]
        %v830 = vld [vmem:[%s174 + $0x1338] sm:$0xff]
        %v831 = vld [vmem:[%s174 + $0x1340] sm:$0xff]
        %v832 = vld [vmem:[%s174 + $0x1348] sm:$0xff]
        %v833 = vld [vmem:[%s174 + $0x1350] sm:$0xff]
        %v834 = vld [vmem:[%s174 + $0x1358] sm:$0xff]
        %v835 = vld [vmem:[%s174 + $0x1360] sm:$0xff]
        %v836 = vld [vmem:[%s174 + $0x1368] sm:$0xff]
        %v837 = vld [vmem:[%s174 + $0x1370] sm:$0xff]
        %v838 = vld [vmem:[%s174 + $0x1378] sm:$0xff]
        %v839 = vld [vmem:[%s174 + $0x1380] sm:$0xff]
        %v840 = vld [vmem:[%s174 + $0x1388] sm:$0xff]
        %v841 = vld [vmem:[%s174 + $0x1390] sm:$0xff]
        %v842 = vld [vmem:[%s174 + $0x1398] sm:$0xff]
        %v843 = vld [vmem:[%s174 + $0x13a0] sm:$0xff]
        %v844 = vld [vmem:[%s174 + $0x13a8] sm:$0xff]
        %v845 = vld [vmem:[%s174 + $0x13b0] sm:$0xff]
        %v846 = vld [vmem:[%s174 + $0x13b8] sm:$0xff]
        %v847 = vld [vmem:[%s174 + $0x13c0] sm:$0xff]
        %v848 = vld [vmem:[%s174 + $0x13c8] sm:$0xff]
        %v849 = vld [vmem:[%s174 + $0x13d0] sm:$0xff]
        %v850 = vld [vmem:[%s174 + $0x13d8] sm:$0xff]
        %v851 = vld [vmem:[%s174 + $0x13e0] sm:$0xff]
        %v852 = vld [vmem:[%s174 + $0x13e8] sm:$0xff]
        %v853 = vld [vmem:[%s174 + $0x13f0] sm:$0xff]
        %v854 = vld [vmem:[%s174 + $0x13f8] sm:$0xff]
        %v855 = vld [vmem:[%s174 + $0x1400] sm:$0xff]
        %v856 = vld [vmem:[%s174 + $0x1408] sm:$0xff]
        %v857 = vld [vmem:[%s174 + $0x1410] sm:$0xff]
        %v858 = vld [vmem:[%s174 + $0x1418] sm:$0xff]
        %v859 = vld [vmem:[%s174 + $0x1420] sm:$0xff]
        %v860 = vld [vmem:[%s174 + $0x1428] sm:$0xff]
        %v861 = vld [vmem:[%s174 + $0x1430] sm:$0xff]
        %v862 = vld [vmem:[%s174 + $0x1438] sm:$0xff]
        %v863 = vld [vmem:[%s174 + $0x1440] sm:$0xff]
        %v864 = vld [vmem:[%s174 + $0x1448] sm:$0xff]
        %v865 = vld [vmem:[%s174 + $0x1450] sm:$0xff]
        %v866 = vld [vmem:[%s174 + $0x1458] sm:$0xff]
        %v867 = vld [vmem:[%s174 + $0x1460] sm:$0xff]
        %v868 = vld [vmem:[%s174 + $0x1468] sm:$0xff]
        %v869 = vld [vmem:[%s174 + $0x1470] sm:$0xff]
        %v870 = vld [vmem:[%s174 + $0x1478] sm:$0xff]
        %v871 = vld [vmem:[%s174 + $0x1480] sm:$0xff]
        %v872 = vld [vmem:[%s174 + $0x1488] sm:$0xff]
        %v873 = vld [vmem:[%s174 + $0x1490] sm:$0xff]
        %v874 = vld [vmem:[%s174 + $0x1498] sm:$0xff]
        %v875 = vld [vmem:[%s174 + $0x14a0] sm:$0xff]
        %v876 = vld [vmem:[%s174 + $0x14a8] sm:$0xff]
        %v877 = vld [vmem:[%s174 + $0x14b0] sm:$0xff]
        %v878 = vld [vmem:[%s174 + $0x14b8] sm:$0xff]
        %v879 = vld [vmem:[%s174 + $0x14c0] sm:$0xff]
        %v880 = vld [vmem:[%s174 + $0x14c8] sm:$0xff]
        %v881 = vld [vmem:[%s174 + $0x14d0] sm:$0xff]
        %v882 = vld [vmem:[%s174 + $0x14d8] sm:$0xff]
        %v883 = vld [vmem:[%s174 + $0x14e0] sm:$0xff]
        %v884 = vld [vmem:[%s174 + $0x14e8] sm:$0xff]
        %v885 = vld [vmem:[%s174 + $0x14f0] sm:$0xff]
        %v886 = vld [vmem:[%s174 + $0x14f8] sm:$0xff]
        %v887 = vld [vmem:[%s174 + $0x1500] sm:$0xff]
        %v888 = vld [vmem:[%s174 + $0x1508] sm:$0xff]
        %v889 = vld [vmem:[%s174 + $0x1510] sm:$0xff]
        %v890 = vld [vmem:[%s174 + $0x1518] sm:$0xff]
        %v891 = vld [vmem:[%s174 + $0x1520] sm:$0xff]
        %v892 = vld [vmem:[%s174 + $0x1528] sm:$0xff]
        %v893 = vld [vmem:[%s174 + $0x1530] sm:$0xff]
        %v894 = vld [vmem:[%s174 + $0x1538] sm:$0xff]
        %v895 = vld [vmem:[%s174 + $0x1540] sm:$0xff]
        %v896 = vld [vmem:[%s174 + $0x1548] sm:$0xff]
        %v897 = vld [vmem:[%s174 + $0x1550] sm:$0xff]
        %v898 = vld [vmem:[%s174 + $0x1558] sm:$0xff]
        %v899 = vld [vmem:[%s174 + $0x1560] sm:$0xff]
        %v900 = vld [vmem:[%s174 + $0x1568] sm:$0xff]
        %v901 = vld [vmem:[%s174 + $0x1570] sm:$0xff]
        %v902 = vld [vmem:[%s174 + $0x1578] sm:$0xff]
        %v903 = vld [vmem:[%s174 + $0x1580] sm:$0xff]
        %v904 = vld [vmem:[%s174 + $0x1588] sm:$0xff]
        %v905 = vld [vmem:[%s174 + $0x1590] sm:$0xff]
        %v906 = vld [vmem:[%s174 + $0x1598] sm:$0xff]
        %v907 = vld [vmem:[%s174 + $0x15a0] sm:$0xff]
        %v908 = vld [vmem:[%s174 + $0x15a8] sm:$0xff]
        %v909 = vld [vmem:[%s174 + $0x15b0] sm:$0xff]
        %v910 = vld [vmem:[%s174 + $0x15b8] sm:$0xff]
        %v911 = vld [vmem:[%s174 + $0x15c0] sm:$0xff]
        %v912 = vld [vmem:[%s174 + $0x15c8] sm:$0xff]
        %v913 = vld [vmem:[%s174 + $0x15d0] sm:$0xff]
        %v914 = vld [vmem:[%s174 + $0x15d8] sm:$0xff]
        %v915 = vld [vmem:[%s174 + $0x15e0] sm:$0xff]
        %v916 = vld [vmem:[%s174 + $0x15e8] sm:$0xff]
        %v917 = vld [vmem:[%s174 + $0x15f0] sm:$0xff]
        %v918 = vld [vmem:[%s174 + $0x15f8] sm:$0xff]
        %v919 = vld [vmem:[%s174 + $0x1600] sm:$0xff]
        %v920 = vld [vmem:[%s174 + $0x1608] sm:$0xff]
        %v921 = vld [vmem:[%s174 + $0x1610] sm:$0xff]
        %v922 = vld [vmem:[%s174 + $0x1618] sm:$0xff]
        %v923 = vld [vmem:[%s174 + $0x1620] sm:$0xff]
        %v924 = vld [vmem:[%s174 + $0x1628] sm:$0xff]
        %v925 = vld [vmem:[%s174 + $0x1630] sm:$0xff]
        %v926 = vld [vmem:[%s174 + $0x1638] sm:$0xff]
        %v927 = vld [vmem:[%s174 + $0x1640] sm:$0xff]
        %v928 = vld [vmem:[%s174 + $0x1648] sm:$0xff]
        %v929 = vld [vmem:[%s174 + $0x1650] sm:$0xff]
        %v930 = vld [vmem:[%s174 + $0x1658] sm:$0xff]
        %v931 = vld [vmem:[%s174 + $0x1660] sm:$0xff]
        %v932 = vld [vmem:[%s174 + $0x1668] sm:$0xff]
        %v933 = vld [vmem:[%s174 + $0x1670] sm:$0xff]
        %v934 = vld [vmem:[%s174 + $0x1678] sm:$0xff]
        %v935 = vld [vmem:[%s174 + $0x1680] sm:$0xff]
        %v936 = vld [vmem:[%s174 + $0x1688] sm:$0xff]
        %v937 = vld [vmem:[%s174 + $0x1690] sm:$0xff]
        %v938 = vld [vmem:[%s174 + $0x1698] sm:$0xff]
        %v939 = vld [vmem:[%s174 + $0x16a0] sm:$0xff]
        %v940 = vld [vmem:[%s174 + $0x16a8] sm:$0xff]
        %v941 = vld [vmem:[%s174 + $0x16b0] sm:$0xff]
        %v942 = vld [vmem:[%s174 + $0x16b8] sm:$0xff]
        %v943 = vld [vmem:[%s174 + $0x16c0] sm:$0xff]
        %v944 = vld [vmem:[%s174 + $0x16c8] sm:$0xff]
        %v945 = vld [vmem:[%s174 + $0x16d0] sm:$0xff]
        %v946 = vld [vmem:[%s174 + $0x16d8] sm:$0xff]
        %v947 = vld [vmem:[%s174 + $0x16e0] sm:$0xff]
        %v948 = vld [vmem:[%s174 + $0x16e8] sm:$0xff]
        %v949 = vld [vmem:[%s174 + $0x16f0] sm:$0xff]
        %v950 = vld [vmem:[%s174 + $0x16f8] sm:$0xff]
        %v951 = vld [vmem:[%s174 + $0x1700] sm:$0xff]
        %v952 = vld [vmem:[%s174 + $0x1708] sm:$0xff]
        %v953 = vld [vmem:[%s174 + $0x1710] sm:$0xff]
        %v954 = vld [vmem:[%s174 + $0x1718] sm:$0xff]
        %v955 = vld [vmem:[%s174 + $0x1720] sm:$0xff]
        %v956 = vld [vmem:[%s174 + $0x1728] sm:$0xff]
        %v957 = vld [vmem:[%s174 + $0x1730] sm:$0xff]
        %v958 = vld [vmem:[%s174 + $0x1738] sm:$0xff]
        %v959 = vld [vmem:[%s174 + $0x1740] sm:$0xff]
        %v960 = vld [vmem:[%s174 + $0x1748] sm:$0xff]
        %v961 = vld [vmem:[%s174 + $0x1750] sm:$0xff]
        %v962 = vld [vmem:[%s174 + $0x1758] sm:$0xff]
        %v963 = vld [vmem:[%s174 + $0x1760] sm:$0xff]
        %v964 = vld [vmem:[%s174 + $0x1768] sm:$0xff]
        %v965 = vld [vmem:[%s174 + $0x1770] sm:$0xff]
        %v966 = vld [vmem:[%s174 + $0x1778] sm:$0xff]
        %v967 = vld [vmem:[%s174 + $0x1780] sm:$0xff]
        %v968 = vld [vmem:[%s174 + $0x1788] sm:$0xff]
        %v969 = vld [vmem:[%s174 + $0x1790] sm:$0xff]
        %v970 = vld [vmem:[%s174 + $0x1798] sm:$0xff]
        %v971 = vld [vmem:[%s174 + $0x17a0] sm:$0xff]
        %v972 = vld [vmem:[%s174 + $0x17a8] sm:$0xff]
        %v973 = vld [vmem:[%s174 + $0x17b0] sm:$0xff]
        %v974 = vld [vmem:[%s174 + $0x17b8] sm:$0xff]
        %v975 = vld [vmem:[%s174 + $0x17c0] sm:$0xff]
        %v976 = vld [vmem:[%s174 + $0x17c8] sm:$0xff]
        %v977 = vld [vmem:[%s174 + $0x17d0] sm:$0xff]
        %v978 = vld [vmem:[%s174 + $0x17d8] sm:$0xff]
        %v979 = vld [vmem:[%s174 + $0x17e0] sm:$0xff]
        %v980 = vld [vmem:[%s174 + $0x17e8] sm:$0xff]
        %v981 = vld [vmem:[%s174 + $0x17f0] sm:$0xff]
        %v982 = vld [vmem:[%s174 + $0x17f8] sm:$0xff]
        %v983 = vld [vmem:[%s174 + $0x1800] sm:$0xff]
        %v984 = vld [vmem:[%s174 + $0x1808] sm:$0xff]
        %v985 = vld [vmem:[%s174 + $0x1810] sm:$0xff]
        %v986 = vld [vmem:[%s174 + $0x1818] sm:$0xff]
        %v987 = vld [vmem:[%s174 + $0x1820] sm:$0xff]
        %v988 = vld [vmem:[%s174 + $0x1828] sm:$0xff]
        %v989 = vld [vmem:[%s174 + $0x1830] sm:$0xff]
        %v990 = vld [vmem:[%s174 + $0x1838] sm:$0xff]
        %v991 = vld [vmem:[%s174 + $0x1840] sm:$0xff]
        %v992 = vld [vmem:[%s174 + $0x1848] sm:$0xff]
        %v993 = vld [vmem:[%s174 + $0x1850] sm:$0xff]
        %v994 = vld [vmem:[%s174 + $0x1858] sm:$0xff]
        %v995 = vld [vmem:[%s174 + $0x1860] sm:$0xff]
        %v996 = vld [vmem:[%s174 + $0x1868] sm:$0xff]
        %v997 = vld [vmem:[%s174 + $0x1870] sm:$0xff]
        %v998 = vld [vmem:[%s174 + $0x1878] sm:$0xff]
        %v999 = vld [vmem:[%s174 + $0x1880] sm:$0xff]
        %v1000 = vld [vmem:[%s174 + $0x1888] sm:$0xff]
        %v1001 = vld [vmem:[%s174 + $0x1890] sm:$0xff]
        %v1002 = vld [vmem:[%s174 + $0x1898] sm:$0xff]
        %v1003 = vld [vmem:[%s174 + $0x18a0] sm:$0xff]
        %v1004 = vld [vmem:[%s174 + $0x18a8] sm:$0xff]
        %v1005 = vld [vmem:[%s174 + $0x18b0] sm:$0xff]
        %v1006 = vld [vmem:[%s174 + $0x18b8] sm:$0xff]
        %v1007 = vld [vmem:[%s174 + $0x18c0] sm:$0xff]
        %v1008 = vld [vmem:[%s174 + $0x18c8] sm:$0xff]
        %v1009 = vld [vmem:[%s174 + $0x18d0] sm:$0xff]
        %v1010 = vld [vmem:[%s174 + $0x18d8] sm:$0xff]
        %v1011 = vld [vmem:[%s174 + $0x18e0] sm:$0xff]
        %v1012 = vld [vmem:[%s174 + $0x18e8] sm:$0xff]
        %v1013 = vld [vmem:[%s174 + $0x18f0] sm:$0xff]
        %v1014 = vld [vmem:[%s174 + $0x18f8] sm:$0xff]
        %v1015 = vld [vmem:[%s174 + $0x1900] sm:$0xff]
        %v1016 = vld [vmem:[%s174 + $0x1908] sm:$0xff]
        %v1017 = vld [vmem:[%s174 + $0x1910] sm:$0xff]
        %v1018 = vld [vmem:[%s174 + $0x1918] sm:$0xff]
        %v1019 = vld [vmem:[%s174 + $0x1920] sm:$0xff]
        %v1020 = vld [vmem:[%s174 + $0x1928] sm:$0xff]
        %v1021 = vld [vmem:[%s174 + $0x1930] sm:$0xff]
        %v1022 = vld [vmem:[%s174 + $0x1938] sm:$0xff]
        %v1023 = vld [vmem:[%s174 + $0x1940] sm:$0xff]
        %v1024 = vld [vmem:[%s174 + $0x1948] sm:$0xff]
        %v1025 = vld [vmem:[%s174 + $0x1950] sm:$0xff]
        %v1026 = vld [vmem:[%s174 + $0x1958] sm:$0xff]
        %v1027 = vld [vmem:[%s174 + $0x1960] sm:$0xff]
        %v1028 = vld [vmem:[%s174 + $0x1968] sm:$0xff]
        %v1029 = vld [vmem:[%s174 + $0x1970] sm:$0xff]
        %v1030 = vld [vmem:[%s174 + $0x1978] sm:$0xff]
        %v1031 = vld [vmem:[%s174 + $0x1980] sm:$0xff]
        %v1032 = vld [vmem:[%s174 + $0x1988] sm:$0xff]
        %v1033 = vld [vmem:[%s174 + $0x1990] sm:$0xff]
        %v1034 = vld [vmem:[%s174 + $0x1998] sm:$0xff]
        %v1035 = vld [vmem:[%s174 + $0x19a0] sm:$0xff]
        %v1036 = vld [vmem:[%s174 + $0x19a8] sm:$0xff]
        %v1037 = vld [vmem:[%s174 + $0x19b0] sm:$0xff]
        %v1038 = vld [vmem:[%s174 + $0x19b8] sm:$0xff]
        %v1039 = vld [vmem:[%s174 + $0x19c0] sm:$0xff]
        %v1040 = vld [vmem:[%s174 + $0x19c8] sm:$0xff]
        %v1041 = vld [vmem:[%s174 + $0x19d0] sm:$0xff]
        %v1042 = vld [vmem:[%s174 + $0x19d8] sm:$0xff]
        %v1043 = vld [vmem:[%s174 + $0x19e0] sm:$0xff]
        %v1044 = vld [vmem:[%s174 + $0x19e8] sm:$0xff]
        %v1045 = vld [vmem:[%s174 + $0x19f0] sm:$0xff]
        %v1046 = vld [vmem:[%s174 + $0x19f8] sm:$0xff]
        %v1047 = vld [vmem:[%s174 + $0x1a00] sm:$0xff]
        %v1048 = vld [vmem:[%s174 + $0x1a08] sm:$0xff]
        %v1049 = vld [vmem:[%s174 + $0x1a10] sm:$0xff]
        %v1050 = vld [vmem:[%s174 + $0x1a18] sm:$0xff]
        %v1051 = vld [vmem:[%s174 + $0x1a20] sm:$0xff]
        %v1052 = vld [vmem:[%s174 + $0x1a28] sm:$0xff]
        %v1053 = vld [vmem:[%s174 + $0x1a30] sm:$0xff]
        %v1054 = vld [vmem:[%s174 + $0x1a38] sm:$0xff]
        %v1055 = vld [vmem:[%s174 + $0x1a40] sm:$0xff]
        %v1056 = vld [vmem:[%s174 + $0x1a48] sm:$0xff]
        %v1057 = vld [vmem:[%s174 + $0x1a50] sm:$0xff]
        %v1058 = vld [vmem:[%s174 + $0x1a58] sm:$0xff]
        %v1059 = vld [vmem:[%s174 + $0x1a60] sm:$0xff]
        %v1060 = vld [vmem:[%s174 + $0x1a68] sm:$0xff]
        %v1061 = vld [vmem:[%s174 + $0x1a70] sm:$0xff]
        %v1062 = vld [vmem:[%s174 + $0x1a78] sm:$0xff]
        %v1063 = vld [vmem:[%s174 + $0x1a80] sm:$0xff]
        %v1064 = vld [vmem:[%s174 + $0x1a88] sm:$0xff]
        %v1065 = vld [vmem:[%s174 + $0x1a90] sm:$0xff]
        %v1066 = vld [vmem:[%s174 + $0x1a98] sm:$0xff]
        %v1067 = vld [vmem:[%s174 + $0x1aa0] sm:$0xff]
        %v1068 = vld [vmem:[%s174 + $0x1aa8] sm:$0xff]
        %v1069 = vld [vmem:[%s174 + $0x1ab0] sm:$0xff]
        %v1070 = vld [vmem:[%s174 + $0x1ab8] sm:$0xff]
        %v1071 = vld [vmem:[%s174 + $0x1ac0] sm:$0xff]
        %v1072 = vld [vmem:[%s174 + $0x1ac8] sm:$0xff]
        %v1073 = vld [vmem:[%s174 + $0x1ad0] sm:$0xff]
        %v1074 = vld [vmem:[%s174 + $0x1ad8] sm:$0xff]
        %v1075 = vld [vmem:[%s174 + $0x1ae0] sm:$0xff]
        %v1076 = vld [vmem:[%s174 + $0x1ae8] sm:$0xff]
        %v1077 = vld [vmem:[%s174 + $0x1af0] sm:$0xff]
        %v1078 = vld [vmem:[%s174 + $0x1af8] sm:$0xff]
        %v1079 = vld [vmem:[%s174 + $0x1b00] sm:$0xff]
        %v1080 = vld [vmem:[%s174 + $0x1b08] sm:$0xff]
        %v1081 = vld [vmem:[%s174 + $0x1b10] sm:$0xff]
        %v1082 = vld [vmem:[%s174 + $0x1b18] sm:$0xff]
        %v1083 = vld [vmem:[%s174 + $0x1b20] sm:$0xff]
        %v1084 = vld [vmem:[%s174 + $0x1b28] sm:$0xff]
        %v1085 = vld [vmem:[%s174 + $0x1b30] sm:$0xff]
        %v1086 = vld [vmem:[%s174 + $0x1b38] sm:$0xff]
        %v1087 = vld [vmem:[%s174 + $0x1b40] sm:$0xff]
        %v1088 = vld [vmem:[%s174 + $0x1b48] sm:$0xff]
        %v1089 = vld [vmem:[%s174 + $0x1b50] sm:$0xff]
        %v1090 = vld [vmem:[%s174 + $0x1b58] sm:$0xff]
        %v1091 = vld [vmem:[%s174 + $0x1b60] sm:$0xff]
        %v1092 = vld [vmem:[%s174 + $0x1b68] sm:$0xff]
        %v1093 = vld [vmem:[%s174 + $0x1b70] sm:$0xff]
        %v1094 = vld [vmem:[%s174 + $0x1b78] sm:$0xff]
        %v1095 = vld [vmem:[%s174 + $0x1b80] sm:$0xff]
        %v1096 = vld [vmem:[%s174 + $0x1b88] sm:$0xff]
        %v1097 = vld [vmem:[%s174 + $0x1b90] sm:$0xff]
        %v1098 = vld [vmem:[%s174 + $0x1b98] sm:$0xff]
        %v1099 = vld [vmem:[%s174 + $0x1ba0] sm:$0xff]
        %v1100 = vld [vmem:[%s174 + $0x1ba8] sm:$0xff]
        %v1101 = vld [vmem:[%s174 + $0x1bb0] sm:$0xff]
        %v1102 = vld [vmem:[%s174 + $0x1bb8] sm:$0xff]
        %v1103 = vld [vmem:[%s174 + $0x1bc0] sm:$0xff]
        %v1104 = vld [vmem:[%s174 + $0x1bc8] sm:$0xff]
        %v1105 = vld [vmem:[%s174 + $0x1bd0] sm:$0xff]
        %v1106 = vld [vmem:[%s174 + $0x1bd8] sm:$0xff]
        %v1107 = vld [vmem:[%s174 + $0x1be0] sm:$0xff]
        %v1108 = vld [vmem:[%s174 + $0x1be8] sm:$0xff]
        %v1109 = vld [vmem:[%s174 + $0x1bf0] sm:$0xff]
        %v1110 = vld [vmem:[%s174 + $0x1bf8] sm:$0xff]
        %v1111 = vld [vmem:[%s174 + $0x1c00] sm:$0xff]
        %v1112 = vld [vmem:[%s174 + $0x1c08] sm:$0xff]
        %v1113 = vld [vmem:[%s174 + $0x1c10] sm:$0xff]
        %v1114 = vld [vmem:[%s174 + $0x1c18] sm:$0xff]
        %v1115 = vld [vmem:[%s174 + $0x1c20] sm:$0xff]
        %v1116 = vld [vmem:[%s174 + $0x1c28] sm:$0xff]
        %v1117 = vld [vmem:[%s174 + $0x1c30] sm:$0xff]
        %v1118 = vld [vmem:[%s174 + $0x1c38] sm:$0xff]
        %v1119 = vld [vmem:[%s174 + $0x1c40] sm:$0xff]
        %v1120 = vld [vmem:[%s174 + $0x1c48] sm:$0xff]
        %v1121 = vld [vmem:[%s174 + $0x1c50] sm:$0xff]
        %v1122 = vld [vmem:[%s174 + $0x1c58] sm:$0xff]
        %v1123 = vld [vmem:[%s174 + $0x1c60] sm:$0xff]
        %v1124 = vld [vmem:[%s174 + $0x1c68] sm:$0xff]
        %v1125 = vld [vmem:[%s174 + $0x1c70] sm:$0xff]
        %v1126 = vld [vmem:[%s174 + $0x1c78] sm:$0xff]
        %v1127 = vld [vmem:[%s174 + $0x1c80] sm:$0xff]
        %v1128 = vld [vmem:[%s174 + $0x1c88] sm:$0xff]
        %v1129 = vld [vmem:[%s174 + $0x1c90] sm:$0xff]
        %v1130 = vld [vmem:[%s174 + $0x1c98] sm:$0xff]
        %v1131 = vld [vmem:[%s174 + $0x1ca0] sm:$0xff]
        %v1132 = vld [vmem:[%s174 + $0x1ca8] sm:$0xff]
        %v1133 = vld [vmem:[%s174 + $0x1cb0] sm:$0xff]
        %v1134 = vld [vmem:[%s174 + $0x1cb8] sm:$0xff]
        %v1135 = vld [vmem:[%s174 + $0x1cc0] sm:$0xff]
        %v1136 = vld [vmem:[%s174 + $0x1cc8] sm:$0xff]
        %v1137 = vld [vmem:[%s174 + $0x1cd0] sm:$0xff]
        %v1138 = vld [vmem:[%s174 + $0x1cd8] sm:$0xff]
        %v1139 = vld [vmem:[%s174 + $0x1ce0] sm:$0xff]
        %v1140 = vld [vmem:[%s174 + $0x1ce8] sm:$0xff]
        %v1141 = vld [vmem:[%s174 + $0x1cf0] sm:$0xff]
        %v1142 = vld [vmem:[%s174 + $0x1cf8] sm:$0xff]
        %v1143 = vld [vmem:[%s174 + $0x1d00] sm:$0xff]
        %v1144 = vld [vmem:[%s174 + $0x1d08] sm:$0xff]
        %v1145 = vld [vmem:[%s174 + $0x1d10] sm:$0xff]
        %v1146 = vld [vmem:[%s174 + $0x1d18] sm:$0xff]
        %v1147 = vld [vmem:[%s174 + $0x1d20] sm:$0xff]
        %v1148 = vld [vmem:[%s174 + $0x1d28] sm:$0xff]
        %v1149 = vld [vmem:[%s174 + $0x1d30] sm:$0xff]
        %v1150 = vld [vmem:[%s174 + $0x1d38] sm:$0xff]
        %v1151 = vld [vmem:[%s174 + $0x1d40] sm:$0xff]
        %v1152 = vld [vmem:[%s174 + $0x1d48] sm:$0xff]
        %v1153 = vld [vmem:[%s174 + $0x1d50] sm:$0xff]
        %v1154 = vld [vmem:[%s174 + $0x1d58] sm:$0xff]
        %v1155 = vld [vmem:[%s174 + $0x1d60] sm:$0xff]
        %v1156 = vld [vmem:[%s174 + $0x1d68] sm:$0xff]
        %v1157 = vld [vmem:[%s174 + $0x1d70] sm:$0xff]
        %v1158 = vld [vmem:[%s174 + $0x1d78] sm:$0xff]
        %v1159 = vld [vmem:[%s174 + $0x1d80] sm:$0xff]
        %v1160 = vld [vmem:[%s174 + $0x1d88] sm:$0xff]
        %v1161 = vld [vmem:[%s174 + $0x1d90] sm:$0xff]
        %v1162 = vld [vmem:[%s174 + $0x1d98] sm:$0xff]
        %v1163 = vld [vmem:[%s174 + $0x1da0] sm:$0xff]
        %v1164 = vld [vmem:[%s174 + $0x1da8] sm:$0xff]
        %v1165 = vld [vmem:[%s174 + $0x1db0] sm:$0xff]
        %v1166 = vld [vmem:[%s174 + $0x1db8] sm:$0xff]
        %v1167 = vld [vmem:[%s174 + $0x1dc0] sm:$0xff]
        %v1168 = vld [vmem:[%s174 + $0x1dc8] sm:$0xff]
        %v1169 = vld [vmem:[%s174 + $0x1dd0] sm:$0xff]
        %v1170 = vld [vmem:[%s174 + $0x1dd8] sm:$0xff]
        %v1171 = vld [vmem:[%s174 + $0x1de0] sm:$0xff]
        %v1172 = vld [vmem:[%s174 + $0x1de8] sm:$0xff]
        %v1173 = vld [vmem:[%s174 + $0x1df0] sm:$0xff]
        %v1174 = vld [vmem:[%s174 + $0x1df8] sm:$0xff]
        %v1175 = vld [vmem:[%s174 + $0x1e00] sm:$0xff]
        %v1176 = vld [vmem:[%s174 + $0x1e08] sm:$0xff]
        %v1177 = vld [vmem:[%s174 + $0x1e10] sm:$0xff]
        %v1178 = vld [vmem:[%s174 + $0x1e18] sm:$0xff]
        %v1179 = vld [vmem:[%s174 + $0x1e20] sm:$0xff]
        %v1180 = vld [vmem:[%s174 + $0x1e28] sm:$0xff]
        %v1181 = vld [vmem:[%s174 + $0x1e30] sm:$0xff]
        %v1182 = vld [vmem:[%s174 + $0x1e38] sm:$0xff]
        %v1183 = vld [vmem:[%s174 + $0x1e40] sm:$0xff]
        %v1184 = vld [vmem:[%s174 + $0x1e48] sm:$0xff]
        %v1185 = vld [vmem:[%s174 + $0x1e50] sm:$0xff]
        %v1186 = vld [vmem:[%s174 + $0x1e58] sm:$0xff]
        %v1187 = vld [vmem:[%s174 + $0x1e60] sm:$0xff]
        %v1188 = vld [vmem:[%s174 + $0x1e68] sm:$0xff]
        %v1189 = vld [vmem:[%s174 + $0x1e70] sm:$0xff]
        %v1190 = vld [vmem:[%s174 + $0x1e78] sm:$0xff]
        %v1191 = vld [vmem:[%s174 + $0x1e80] sm:$0xff]
        %v1192 = vld [vmem:[%s174 + $0x1e88] sm:$0xff]
        %v1193 = vld [vmem:[%s174 + $0x1e90] sm:$0xff]
        %v1194 = vld [vmem:[%s174 + $0x1e98] sm:$0xff]
        %v1195 = vld [vmem:[%s174 + $0x1ea0] sm:$0xff]
        %v1196 = vld [vmem:[%s174 + $0x1ea8] sm:$0xff]
        %v1197 = vld [vmem:[%s174 + $0x1eb0] sm:$0xff]
        %v1198 = vld [vmem:[%s174 + $0x1eb8] sm:$0xff]
        %v1199 = vld [vmem:[%s174 + $0x1ec0] sm:$0xff]
        %v1200 = vld [vmem:[%s174 + $0x1ec8] sm:$0xff]
        %v1201 = vld [vmem:[%s174 + $0x1ed0] sm:$0xff]
        %v1202 = vld [vmem:[%s174 + $0x1ed8] sm:$0xff]
        %v1203 = vld [vmem:[%s174 + $0x1ee0] sm:$0xff]
        %v1204 = vld [vmem:[%s174 + $0x1ee8] sm:$0xff]
        %v1205 = vld [vmem:[%s174 + $0x1ef0] sm:$0xff]
        %v1206 = vld [vmem:[%s174 + $0x1ef8] sm:$0xff]
        %v1207 = vld [vmem:[%s174 + $0x1f00] sm:$0xff]
        %v1208 = vld [vmem:[%s174 + $0x1f08] sm:$0xff]
        %v1209 = vld [vmem:[%s174 + $0x1f10] sm:$0xff]
        %v1210 = vld [vmem:[%s174 + $0x1f18] sm:$0xff]
        %v1211 = vld [vmem:[%s174 + $0x1f20] sm:$0xff]
        %v1212 = vld [vmem:[%s174 + $0x1f28] sm:$0xff]
        %v1213 = vld [vmem:[%s174 + $0x1f30] sm:$0xff]
        %v1214 = vld [vmem:[%s174 + $0x1f38] sm:$0xff]
        %v1215 = vld [vmem:[%s174 + $0x1f40] sm:$0xff]
        %v1216 = vld [vmem:[%s174 + $0x1f48] sm:$0xff]
        %v1217 = vld [vmem:[%s174 + $0x1f50] sm:$0xff]
        %v1218 = vld [vmem:[%s174 + $0x1f58] sm:$0xff]
        %v1219 = vld [vmem:[%s174 + $0x1f60] sm:$0xff]
        %v1220 = vld [vmem:[%s174 + $0x1f68] sm:$0xff]
        %v1221 = vld [vmem:[%s174 + $0x1f70] sm:$0xff]
        %v1222 = vld [vmem:[%s174 + $0x1f78] sm:$0xff]
        %v1223 = vld [vmem:[%s174 + $0x1f80] sm:$0xff]
        %v1224 = vld [vmem:[%s174 + $0x1f88] sm:$0xff]
        %v1225 = vld [vmem:[%s174 + $0x1f90] sm:$0xff]
        %v1226 = vld [vmem:[%s174 + $0x1f98] sm:$0xff]
        %v1227 = vld [vmem:[%s174 + $0x1fa0] sm:$0xff]
        %v1228 = vld [vmem:[%s174 + $0x1fa8] sm:$0xff]
        %v1229 = vld [vmem:[%s174 + $0x1fb0] sm:$0xff]
        %v1230 = vld [vmem:[%s174 + $0x1fb8] sm:$0xff]
        %v1231 = vld [vmem:[%s174 + $0x1fc0] sm:$0xff]
        %v1232 = vld [vmem:[%s174 + $0x1fc8] sm:$0xff]
        %v1233 = vld [vmem:[%s174 + $0x1fd0] sm:$0xff]
        %v1234 = vld [vmem:[%s174 + $0x1fd8] sm:$0xff]
        %v1235 = vld [vmem:[%s174 + $0x1fe0] sm:$0xff]
        %v1236 = vld [vmem:[%s174 + $0x1fe8] sm:$0xff]
        %v1237 = vld [vmem:[%s174 + $0x1ff0] sm:$0xff]
        %v1238 = vld [vmem:[%s174 + $0x1ff8] sm:$0xff]
        %v1239 = vld [vmem:[%s206] sm:$0xff]
        %v1240 = vld [vmem:[%s206 + $0x8] sm:$0xff]
        %v1243 = vperm.slane %v1239, 0
        %v1244 = vperm.slane %v1239, 1
        %v1245 = vperm.slane %v1239, 2
        %v1246 = vperm.slane %v1239, 3
        %v1247 = vperm.slane %v1239, 4
        %v1248 = vperm.slane %v1239, 5
        %v1249 = vperm.slane %v1239, 6
        %v1250 = vperm.slane %v1239, 7
        %v1251 = vperm.slane %v1240, 0
        %v1252 = vperm.slane %v1240, 1
        %v1253 = vperm.slane %v1240, 2
        %v1254 = vperm.slane %v1240, 3
        %v1255 = vperm.slane %v1240, 4
        %v1256 = vperm.slane %v1240, 5
        %v1257 = vperm.slane %v1240, 6
        %v1258 = vperm.slane %v1240, 7
        %1276 = vst [vmem:[#allocation1] ss:$4 sm:$0xff] %v214
        %v1277 = vld.sshfl [vmem:[#allocation1] sm:$0xff pattern:$0x73625140]
        %v1278 = vld.sshfl [vmem:[#allocation1 + $0x8] sm:$0xff pattern:$0x73625140]
        %v1279 = vld.sshfl [vmem:[#allocation1 + $0x10] sm:$0xff pattern:$0x73625140]
        %v1280 = vld.sshfl [vmem:[#allocation1 + $0x18] sm:$0xff pattern:$0x73625140]
        %1285 = vmatpush.msra.mxu0 %v455
        %1286 = vmatpush.msra.mxu0 %v439
        %1287 = vmatpush.msra.mxu0 %v423
        %1288 = vmatpush.msra.mxu0 %v407
        %1289 = vmatpush.msra.mxu0 %v391
        %1290 = vmatpush.msra.mxu0 %v375
        %1291 = vmatpush.msra.mxu0 %v359
        %1292 = vmatpush.msra.mxu0 %v343
        %1293 = vmatpush.msra.mxu0 %v327
        %1294 = vmatpush.msra.mxu0 %v311
        %1295 = vmatpush.msra.mxu0 %v295
        %1296 = vmatpush.msra.mxu0 %v279
        %1297 = vmatpush.msra.mxu0 %v263
        %1298 = vmatpush.msra.mxu0 %v247
        %1299 = vmatpush.msra.mxu0 %v231
        %1300 = vmatpush.msra.mxu0 %v215
        %1301 = vmatmul.f32.gmra.mxu0 %v1277
        %v1302 = vpop.f32.mrf.mxu0
        %v1303 = vadd.f32 %v1243, %v1302
        %1304 = vdwg.mxu0
        %1305 = vmatpush.msra.mxu0 %v711
        %1306 = vmatpush.msra.mxu0 %v695
        %1307 = vmatpush.msra.mxu0 %v679
        %1308 = vmatpush.msra.mxu0 %v663
        %1309 = vmatpush.msra.mxu0 %v647
        %1310 = vmatpush.msra.mxu0 %v631
        %1311 = vmatpush.msra.mxu0 %v615
        %1312 = vmatpush.msra.mxu0 %v599
        %1313 = vmatpush.msra.mxu0 %v583
        %1314 = vmatpush.msra.mxu0 %v567
        %1315 = vmatpush.msra.mxu0 %v551
        %1316 = vmatpush.msra.mxu0 %v535
        %1317 = vmatpush.msra.mxu0 %v519
        %1318 = vmatpush.msra.mxu0 %v503
        %1319 = vmatpush.msra.mxu0 %v487
        %1320 = vmatpush.msra.mxu0 %v471
        %1321 = vmatmul.f32.gmra.mxu0 %v1278
        %v1322 = vpop.f32.mrf.mxu0
        %v1323 = vadd.f32 %v1303, %v1322
        %1324 = vdwg.mxu0
        %1325 = vmatpush.msra.mxu0 %v967
        %1326 = vmatpush.msra.mxu0 %v951
        %1327 = vmatpush.msra.mxu0 %v935
        %1328 = vmatpush.msra.mxu0 %v919
        %1329 = vmatpush.msra.mxu0 %v903
        %1330 = vmatpush.msra.mxu0 %v887
        %1331 = vmatpush.msra.mxu0 %v871
        %1332 = vmatpush.msra.mxu0 %v855
        %1333 = vmatpush.msra.mxu0 %v839
        %1334 = vmatpush.msra.mxu0 %v823
        %1335 = vmatpush.msra.mxu0 %v807
        %1336 = vmatpush.msra.mxu0 %v791
        %1337 = vmatpush.msra.mxu0 %v775
        %1338 = vmatpush.msra.mxu0 %v759
        %1339 = vmatpush.msra.mxu0 %v743
        %1340 = vmatpush.msra.mxu0 %v727
        %1341 = vmatmul.f32.gmra.mxu0 %v1279
        %v1342 = vpop.f32.mrf.mxu0
        %v1343 = vadd.f32 %v1323, %v1342
        %1344 = vdwg.mxu0
        %1345 = vmatpush.msra.mxu0 %v1223
        %1346 = vmatpush.msra.mxu0 %v1207
        %1347 = vmatpush.msra.mxu0 %v1191
        %1348 = vmatpush.msra.mxu0 %v1175
        %1349 = vmatpush.msra.mxu0 %v1159
        %1350 = vmatpush.msra.mxu0 %v1143
        %1351 = vmatpush.msra.mxu0 %v1127
        %1352 = vmatpush.msra.mxu0 %v1111
        %1353 = vmatpush.msra.mxu0 %v1095
        %1354 = vmatpush.msra.mxu0 %v1079
        %1355 = vmatpush.msra.mxu0 %v1063
        %1356 = vmatpush.msra.mxu0 %v1047
        %1357 = vmatpush.msra.mxu0 %v1031
        %1358 = vmatpush.msra.mxu0 %v1015
        %1359 = vmatpush.msra.mxu0 %v999
        %1360 = vmatpush.msra.mxu0 %v983
        %1361 = vmatmul.f32.gmra.mxu0 %v1280
        %v1362 = vpop.f32.mrf.mxu0
        %v1363 = vadd.f32 %v1343, %v1362
        %1364 = vdwg.mxu0
        %1365 = vmatpush.msra.mxu0 %v456
        %1366 = vmatpush.msra.mxu0 %v440
        %1367 = vmatpush.msra.mxu0 %v424
        %1368 = vmatpush.msra.mxu0 %v408
        %1369 = vmatpush.msra.mxu0 %v392
        %1370 = vmatpush.msra.mxu0 %v376
        %1371 = vmatpush.msra.mxu0 %v360
        %1372 = vmatpush.msra.mxu0 %v344
        %1373 = vmatpush.msra.mxu0 %v328
        %1374 = vmatpush.msra.mxu0 %v312
        %1375 = vmatpush.msra.mxu0 %v296
        %1376 = vmatpush.msra.mxu0 %v280
        %1377 = vmatpush.msra.mxu0 %v264
        %1378 = vmatpush.msra.mxu0 %v248
        %1379 = vmatpush.msra.mxu0 %v232
        %1380 = vmatpush.msra.mxu0 %v216
        %1381 = vmatmul.f32.gmra.mxu0 %v1277
        %v1382 = vpop.f32.mrf.mxu0
        %v1383 = vadd.f32 %v1244, %v1382
        %1384 = vdwg.mxu0
        %1385 = vmatpush.msra.mxu0 %v712
        %1386 = vmatpush.msra.mxu0 %v696
        %1387 = vmatpush.msra.mxu0 %v680
        %1388 = vmatpush.msra.mxu0 %v664
        %1389 = vmatpush.msra.mxu0 %v648
        %1390 = vmatpush.msra.mxu0 %v632
        %1391 = vmatpush.msra.mxu0 %v616
        %1392 = vmatpush.msra.mxu0 %v600
        %1393 = vmatpush.msra.mxu0 %v584
        %1394 = vmatpush.msra.mxu0 %v568
        %1395 = vmatpush.msra.mxu0 %v552
        %1396 = vmatpush.msra.mxu0 %v536
        %1397 = vmatpush.msra.mxu0 %v520
        %1398 = vmatpush.msra.mxu0 %v504
        %1399 = vmatpush.msra.mxu0 %v488
        %1400 = vmatpush.msra.mxu0 %v472
        %1401 = vmatmul.f32.gmra.mxu0 %v1278
        %v1402 = vpop.f32.mrf.mxu0
        %v1403 = vadd.f32 %v1383, %v1402
        %1404 = vdwg.mxu0
        %1405 = vmatpush.msra.mxu0 %v968
        %1406 = vmatpush.msra.mxu0 %v952
        %1407 = vmatpush.msra.mxu0 %v936
        %1408 = vmatpush.msra.mxu0 %v920
        %1409 = vmatpush.msra.mxu0 %v904
        %1410 = vmatpush.msra.mxu0 %v888
        %1411 = vmatpush.msra.mxu0 %v872
        %1412 = vmatpush.msra.mxu0 %v856
        %1413 = vmatpush.msra.mxu0 %v840
        %1414 = vmatpush.msra.mxu0 %v824
        %1415 = vmatpush.msra.mxu0 %v808
        %1416 = vmatpush.msra.mxu0 %v792
        %1417 = vmatpush.msra.mxu0 %v776
        %1418 = vmatpush.msra.mxu0 %v760
        %1419 = vmatpush.msra.mxu0 %v744
        %1420 = vmatpush.msra.mxu0 %v728
        %1421 = vmatmul.f32.gmra.mxu0 %v1279
        %v1422 = vpop.f32.mrf.mxu0
        %v1423 = vadd.f32 %v1403, %v1422
        %1424 = vdwg.mxu0
        %1425 = vmatpush.msra.mxu0 %v1224
        %1426 = vmatpush.msra.mxu0 %v1208
        %1427 = vmatpush.msra.mxu0 %v1192
        %1428 = vmatpush.msra.mxu0 %v1176
        %1429 = vmatpush.msra.mxu0 %v1160
        %1430 = vmatpush.msra.mxu0 %v1144
        %1431 = vmatpush.msra.mxu0 %v1128
        %1432 = vmatpush.msra.mxu0 %v1112
        %1433 = vmatpush.msra.mxu0 %v1096
        %1434 = vmatpush.msra.mxu0 %v1080
        %1435 = vmatpush.msra.mxu0 %v1064
        %1436 = vmatpush.msra.mxu0 %v1048
        %1437 = vmatpush.msra.mxu0 %v1032
        %1438 = vmatpush.msra.mxu0 %v1016
        %1439 = vmatpush.msra.mxu0 %v1000
        %1440 = vmatpush.msra.mxu0 %v984
        %1441 = vmatmul.f32.gmra.mxu0 %v1280
        %v1442 = vpop.f32.mrf.mxu0
        %v1443 = vadd.f32 %v1423, %v1442
        %1444 = vdwg.mxu0
        %1445 = vmatpush.msra.mxu0 %v457
        %1446 = vmatpush.msra.mxu0 %v441
        %1447 = vmatpush.msra.mxu0 %v425
        %1448 = vmatpush.msra.mxu0 %v409
        %1449 = vmatpush.msra.mxu0 %v393
        %1450 = vmatpush.msra.mxu0 %v377
        %1451 = vmatpush.msra.mxu0 %v361
        %1452 = vmatpush.msra.mxu0 %v345
        %1453 = vmatpush.msra.mxu0 %v329
        %1454 = vmatpush.msra.mxu0 %v313
        %1455 = vmatpush.msra.mxu0 %v297
        %1456 = vmatpush.msra.mxu0 %v281
        %1457 = vmatpush.msra.mxu0 %v265
        %1458 = vmatpush.msra.mxu0 %v249
        %1459 = vmatpush.msra.mxu0 %v233
        %1460 = vmatpush.msra.mxu0 %v217
        %1461 = vmatmul.f32.gmra.mxu0 %v1277
        %v1462 = vpop.f32.mrf.mxu0
        %v1463 = vadd.f32 %v1245, %v1462
        %1464 = vdwg.mxu0
        %1465 = vmatpush.msra.mxu0 %v713
        %1466 = vmatpush.msra.mxu0 %v697
        %1467 = vmatpush.msra.mxu0 %v681
        %1468 = vmatpush.msra.mxu0 %v665
        %1469 = vmatpush.msra.mxu0 %v649
        %1470 = vmatpush.msra.mxu0 %v633
        %1471 = vmatpush.msra.mxu0 %v617
        %1472 = vmatpush.msra.mxu0 %v601
        %1473 = vmatpush.msra.mxu0 %v585
        %1474 = vmatpush.msra.mxu0 %v569
        %1475 = vmatpush.msra.mxu0 %v553
        %1476 = vmatpush.msra.mxu0 %v537
        %1477 = vmatpush.msra.mxu0 %v521
        %1478 = vmatpush.msra.mxu0 %v505
        %1479 = vmatpush.msra.mxu0 %v489
        %1480 = vmatpush.msra.mxu0 %v473
        %1481 = vmatmul.f32.gmra.mxu0 %v1278
        %v1482 = vpop.f32.mrf.mxu0
        %v1483 = vadd.f32 %v1463, %v1482
        %1484 = vdwg.mxu0
        %1485 = vmatpush.msra.mxu0 %v969
        %1486 = vmatpush.msra.mxu0 %v953
        %1487 = vmatpush.msra.mxu0 %v937
        %1488 = vmatpush.msra.mxu0 %v921
        %1489 = vmatpush.msra.mxu0 %v905
        %1490 = vmatpush.msra.mxu0 %v889
        %1491 = vmatpush.msra.mxu0 %v873
        %1492 = vmatpush.msra.mxu0 %v857
        %1493 = vmatpush.msra.mxu0 %v841
        %1494 = vmatpush.msra.mxu0 %v825
        %1495 = vmatpush.msra.mxu0 %v809
        %1496 = vmatpush.msra.mxu0 %v793
        %1497 = vmatpush.msra.mxu0 %v777
        %1498 = vmatpush.msra.mxu0 %v761
        %1499 = vmatpush.msra.mxu0 %v745
        %1500 = vmatpush.msra.mxu0 %v729
        %1501 = vmatmul.f32.gmra.mxu0 %v1279
        %v1502 = vpop.f32.mrf.mxu0
        %v1503 = vadd.f32 %v1483, %v1502
        %1504 = vdwg.mxu0
        %1505 = vmatpush.msra.mxu0 %v1225
        %1506 = vmatpush.msra.mxu0 %v1209
        %1507 = vmatpush.msra.mxu0 %v1193
        %1508 = vmatpush.msra.mxu0 %v1177
        %1509 = vmatpush.msra.mxu0 %v1161
        %1510 = vmatpush.msra.mxu0 %v1145
        %1511 = vmatpush.msra.mxu0 %v1129
        %1512 = vmatpush.msra.mxu0 %v1113
        %1513 = vmatpush.msra.mxu0 %v1097
        %1514 = vmatpush.msra.mxu0 %v1081
        %1515 = vmatpush.msra.mxu0 %v1065
        %1516 = vmatpush.msra.mxu0 %v1049
        %1517 = vmatpush.msra.mxu0 %v1033
        %1518 = vmatpush.msra.mxu0 %v1017
        %1519 = vmatpush.msra.mxu0 %v1001
        %1520 = vmatpush.msra.mxu0 %v985
        %1521 = vmatmul.f32.gmra.mxu0 %v1280
        %v1522 = vpop.f32.mrf.mxu0
        %v1523 = vadd.f32 %v1503, %v1522
        %1524 = vdwg.mxu0
        %1525 = vmatpush.msra.mxu0 %v458
        %1526 = vmatpush.msra.mxu0 %v442
        %1527 = vmatpush.msra.mxu0 %v426
        %1528 = vmatpush.msra.mxu0 %v410
        %1529 = vmatpush.msra.mxu0 %v394
        %1530 = vmatpush.msra.mxu0 %v378
        %1531 = vmatpush.msra.mxu0 %v362
        %1532 = vmatpush.msra.mxu0 %v346
        %1533 = vmatpush.msra.mxu0 %v330
        %1534 = vmatpush.msra.mxu0 %v314
        %1535 = vmatpush.msra.mxu0 %v298
        %1536 = vmatpush.msra.mxu0 %v282
        %1537 = vmatpush.msra.mxu0 %v266
        %1538 = vmatpush.msra.mxu0 %v250
        %1539 = vmatpush.msra.mxu0 %v234
        %1540 = vmatpush.msra.mxu0 %v218
        %1541 = vmatmul.f32.gmra.mxu0 %v1277
        %v1542 = vpop.f32.mrf.mxu0
        %v1543 = vadd.f32 %v1246, %v1542
        %1544 = vdwg.mxu0
        %1545 = vmatpush.msra.mxu0 %v714
        %1546 = vmatpush.msra.mxu0 %v698
        %1547 = vmatpush.msra.mxu0 %v682
        %1548 = vmatpush.msra.mxu0 %v666
        %1549 = vmatpush.msra.mxu0 %v650
        %1550 = vmatpush.msra.mxu0 %v634
        %1551 = vmatpush.msra.mxu0 %v618
        %1552 = vmatpush.msra.mxu0 %v602
        %1553 = vmatpush.msra.mxu0 %v586
        %1554 = vmatpush.msra.mxu0 %v570
        %1555 = vmatpush.msra.mxu0 %v554
        %1556 = vmatpush.msra.mxu0 %v538
        %1557 = vmatpush.msra.mxu0 %v522
        %1558 = vmatpush.msra.mxu0 %v506
        %1559 = vmatpush.msra.mxu0 %v490
        %1560 = vmatpush.msra.mxu0 %v474
        %1561 = vmatmul.f32.gmra.mxu0 %v1278
        %v1562 = vpop.f32.mrf.mxu0
        %v1563 = vadd.f32 %v1543, %v1562
        %1564 = vdwg.mxu0
        %1565 = vmatpush.msra.mxu0 %v970
        %1566 = vmatpush.msra.mxu0 %v954
        %1567 = vmatpush.msra.mxu0 %v938
        %1568 = vmatpush.msra.mxu0 %v922
        %1569 = vmatpush.msra.mxu0 %v906
        %1570 = vmatpush.msra.mxu0 %v890
        %1571 = vmatpush.msra.mxu0 %v874
        %1572 = vmatpush.msra.mxu0 %v858
        %1573 = vmatpush.msra.mxu0 %v842
        %1574 = vmatpush.msra.mxu0 %v826
        %1575 = vmatpush.msra.mxu0 %v810
        %1576 = vmatpush.msra.mxu0 %v794
        %1577 = vmatpush.msra.mxu0 %v778
        %1578 = vmatpush.msra.mxu0 %v762
        %1579 = vmatpush.msra.mxu0 %v746
        %1580 = vmatpush.msra.mxu0 %v730
        %1581 = vmatmul.f32.gmra.mxu0 %v1279
        %v1582 = vpop.f32.mrf.mxu0
        %v1583 = vadd.f32 %v1563, %v1582
        %1584 = vdwg.mxu0
        %1585 = vmatpush.msra.mxu0 %v1226
        %1586 = vmatpush.msra.mxu0 %v1210
        %1587 = vmatpush.msra.mxu0 %v1194
        %1588 = vmatpush.msra.mxu0 %v1178
        %1589 = vmatpush.msra.mxu0 %v1162
        %1590 = vmatpush.msra.mxu0 %v1146
        %1591 = vmatpush.msra.mxu0 %v1130
        %1592 = vmatpush.msra.mxu0 %v1114
        %1593 = vmatpush.msra.mxu0 %v1098
        %1594 = vmatpush.msra.mxu0 %v1082
        %1595 = vmatpush.msra.mxu0 %v1066
        %1596 = vmatpush.msra.mxu0 %v1050
        %1597 = vmatpush.msra.mxu0 %v1034
        %1598 = vmatpush.msra.mxu0 %v1018
        %1599 = vmatpush.msra.mxu0 %v1002
        %1600 = vmatpush.msra.mxu0 %v986
        %1601 = vmatmul.f32.gmra.mxu0 %v1280
        %v1602 = vpop.f32.mrf.mxu0
        %v1603 = vadd.f32 %v1583, %v1602
        %1604 = vdwg.mxu0
        %1605 = vmatpush.msra.mxu0 %v459
        %1606 = vmatpush.msra.mxu0 %v443
        %1607 = vmatpush.msra.mxu0 %v427
        %1608 = vmatpush.msra.mxu0 %v411
        %1609 = vmatpush.msra.mxu0 %v395
        %1610 = vmatpush.msra.mxu0 %v379
        %1611 = vmatpush.msra.mxu0 %v363
        %1612 = vmatpush.msra.mxu0 %v347
        %1613 = vmatpush.msra.mxu0 %v331
        %1614 = vmatpush.msra.mxu0 %v315
        %1615 = vmatpush.msra.mxu0 %v299
        %1616 = vmatpush.msra.mxu0 %v283
        %1617 = vmatpush.msra.mxu0 %v267
        %1618 = vmatpush.msra.mxu0 %v251
        %1619 = vmatpush.msra.mxu0 %v235
        %1620 = vmatpush.msra.mxu0 %v219
        %1621 = vmatmul.f32.gmra.mxu0 %v1277
        %v1622 = vpop.f32.mrf.mxu0
        %v1623 = vadd.f32 %v1247, %v1622
        %1624 = vdwg.mxu0
        %1625 = vmatpush.msra.mxu0 %v715
        %1626 = vmatpush.msra.mxu0 %v699
        %1627 = vmatpush.msra.mxu0 %v683
        %1628 = vmatpush.msra.mxu0 %v667
        %1629 = vmatpush.msra.mxu0 %v651
        %1630 = vmatpush.msra.mxu0 %v635
        %1631 = vmatpush.msra.mxu0 %v619
        %1632 = vmatpush.msra.mxu0 %v603
        %1633 = vmatpush.msra.mxu0 %v587
        %1634 = vmatpush.msra.mxu0 %v571
        %1635 = vmatpush.msra.mxu0 %v555
        %1636 = vmatpush.msra.mxu0 %v539
        %1637 = vmatpush.msra.mxu0 %v523
        %1638 = vmatpush.msra.mxu0 %v507
        %1639 = vmatpush.msra.mxu0 %v491
        %1640 = vmatpush.msra.mxu0 %v475
        %1641 = vmatmul.f32.gmra.mxu0 %v1278
        %v1642 = vpop.f32.mrf.mxu0
        %v1643 = vadd.f32 %v1623, %v1642
        %1644 = vdwg.mxu0
        %1645 = vmatpush.msra.mxu0 %v971
        %1646 = vmatpush.msra.mxu0 %v955
        %1647 = vmatpush.msra.mxu0 %v939
        %1648 = vmatpush.msra.mxu0 %v923
        %1649 = vmatpush.msra.mxu0 %v907
        %1650 = vmatpush.msra.mxu0 %v891
        %1651 = vmatpush.msra.mxu0 %v875
        %1652 = vmatpush.msra.mxu0 %v859
        %1653 = vmatpush.msra.mxu0 %v843
        %1654 = vmatpush.msra.mxu0 %v827
        %1655 = vmatpush.msra.mxu0 %v811
        %1656 = vmatpush.msra.mxu0 %v795
        %1657 = vmatpush.msra.mxu0 %v779
        %1658 = vmatpush.msra.mxu0 %v763
        %1659 = vmatpush.msra.mxu0 %v747
        %1660 = vmatpush.msra.mxu0 %v731
        %1661 = vmatmul.f32.gmra.mxu0 %v1279
        %v1662 = vpop.f32.mrf.mxu0
        %v1663 = vadd.f32 %v1643, %v1662
        %1664 = vdwg.mxu0
        %1665 = vmatpush.msra.mxu0 %v1227
        %1666 = vmatpush.msra.mxu0 %v1211
        %1667 = vmatpush.msra.mxu0 %v1195
        %1668 = vmatpush.msra.mxu0 %v1179
        %1669 = vmatpush.msra.mxu0 %v1163
        %1670 = vmatpush.msra.mxu0 %v1147
        %1671 = vmatpush.msra.mxu0 %v1131
        %1672 = vmatpush.msra.mxu0 %v1115
        %1673 = vmatpush.msra.mxu0 %v1099
        %1674 = vmatpush.msra.mxu0 %v1083
        %1675 = vmatpush.msra.mxu0 %v1067
        %1676 = vmatpush.msra.mxu0 %v1051
        %1677 = vmatpush.msra.mxu0 %v1035
        %1678 = vmatpush.msra.mxu0 %v1019
        %1679 = vmatpush.msra.mxu0 %v1003
        %1680 = vmatpush.msra.mxu0 %v987
        %1681 = vmatmul.f32.gmra.mxu0 %v1280
        %v1682 = vpop.f32.mrf.mxu0
        %v1683 = vadd.f32 %v1663, %v1682
        %1684 = vdwg.mxu0
        %1685 = vmatpush.msra.mxu0 %v460
        %1686 = vmatpush.msra.mxu0 %v444
        %1687 = vmatpush.msra.mxu0 %v428
        %1688 = vmatpush.msra.mxu0 %v412
        %1689 = vmatpush.msra.mxu0 %v396
        %1690 = vmatpush.msra.mxu0 %v380
        %1691 = vmatpush.msra.mxu0 %v364
        %1692 = vmatpush.msra.mxu0 %v348
        %1693 = vmatpush.msra.mxu0 %v332
        %1694 = vmatpush.msra.mxu0 %v316
        %1695 = vmatpush.msra.mxu0 %v300
        %1696 = vmatpush.msra.mxu0 %v284
        %1697 = vmatpush.msra.mxu0 %v268
        %1698 = vmatpush.msra.mxu0 %v252
        %1699 = vmatpush.msra.mxu0 %v236
        %1700 = vmatpush.msra.mxu0 %v220
        %1701 = vmatmul.f32.gmra.mxu0 %v1277
        %v1702 = vpop.f32.mrf.mxu0
        %v1703 = vadd.f32 %v1248, %v1702
        %1704 = vdwg.mxu0
        %1705 = vmatpush.msra.mxu0 %v716
        %1706 = vmatpush.msra.mxu0 %v700
        %1707 = vmatpush.msra.mxu0 %v684
        %1708 = vmatpush.msra.mxu0 %v668
        %1709 = vmatpush.msra.mxu0 %v652
        %1710 = vmatpush.msra.mxu0 %v636
        %1711 = vmatpush.msra.mxu0 %v620
        %1712 = vmatpush.msra.mxu0 %v604
        %1713 = vmatpush.msra.mxu0 %v588
        %1714 = vmatpush.msra.mxu0 %v572
        %1715 = vmatpush.msra.mxu0 %v556
        %1716 = vmatpush.msra.mxu0 %v540
        %1717 = vmatpush.msra.mxu0 %v524
        %1718 = vmatpush.msra.mxu0 %v508
        %1719 = vmatpush.msra.mxu0 %v492
        %1720 = vmatpush.msra.mxu0 %v476
        %1721 = vmatmul.f32.gmra.mxu0 %v1278
        %v1722 = vpop.f32.mrf.mxu0
        %v1723 = vadd.f32 %v1703, %v1722
        %1724 = vdwg.mxu0
        %1725 = vmatpush.msra.mxu0 %v972
        %1726 = vmatpush.msra.mxu0 %v956
        %1727 = vmatpush.msra.mxu0 %v940
        %1728 = vmatpush.msra.mxu0 %v924
        %1729 = vmatpush.msra.mxu0 %v908
        %1730 = vmatpush.msra.mxu0 %v892
        %1731 = vmatpush.msra.mxu0 %v876
        %1732 = vmatpush.msra.mxu0 %v860
        %1733 = vmatpush.msra.mxu0 %v844
        %1734 = vmatpush.msra.mxu0 %v828
        %1735 = vmatpush.msra.mxu0 %v812
        %1736 = vmatpush.msra.mxu0 %v796
        %1737 = vmatpush.msra.mxu0 %v780
        %1738 = vmatpush.msra.mxu0 %v764
        %1739 = vmatpush.msra.mxu0 %v748
        %1740 = vmatpush.msra.mxu0 %v732
        %1741 = vmatmul.f32.gmra.mxu0 %v1279
        %v1742 = vpop.f32.mrf.mxu0
        %v1743 = vadd.f32 %v1723, %v1742
        %1744 = vdwg.mxu0
        %1745 = vmatpush.msra.mxu0 %v1228
        %1746 = vmatpush.msra.mxu0 %v1212
        %1747 = vmatpush.msra.mxu0 %v1196
        %1748 = vmatpush.msra.mxu0 %v1180
        %1749 = vmatpush.msra.mxu0 %v1164
        %1750 = vmatpush.msra.mxu0 %v1148
        %1751 = vmatpush.msra.mxu0 %v1132
        %1752 = vmatpush.msra.mxu0 %v1116
        %1753 = vmatpush.msra.mxu0 %v1100
        %1754 = vmatpush.msra.mxu0 %v1084
        %1755 = vmatpush.msra.mxu0 %v1068
        %1756 = vmatpush.msra.mxu0 %v1052
        %1757 = vmatpush.msra.mxu0 %v1036
        %1758 = vmatpush.msra.mxu0 %v1020
        %1759 = vmatpush.msra.mxu0 %v1004
        %1760 = vmatpush.msra.mxu0 %v988
        %1761 = vmatmul.f32.gmra.mxu0 %v1280
        %v1762 = vpop.f32.mrf.mxu0
        %v1763 = vadd.f32 %v1743, %v1762
        %1764 = vdwg.mxu0
        %1765 = vmatpush.msra.mxu0 %v461
        %1766 = vmatpush.msra.mxu0 %v445
        %1767 = vmatpush.msra.mxu0 %v429
        %1768 = vmatpush.msra.mxu0 %v413
        %1769 = vmatpush.msra.mxu0 %v397
        %1770 = vmatpush.msra.mxu0 %v381
        %1771 = vmatpush.msra.mxu0 %v365
        %1772 = vmatpush.msra.mxu0 %v349
        %1773 = vmatpush.msra.mxu0 %v333
        %1774 = vmatpush.msra.mxu0 %v317
        %1775 = vmatpush.msra.mxu0 %v301
        %1776 = vmatpush.msra.mxu0 %v285
        %1777 = vmatpush.msra.mxu0 %v269
        %1778 = vmatpush.msra.mxu0 %v253
        %1779 = vmatpush.msra.mxu0 %v237
        %1780 = vmatpush.msra.mxu0 %v221
        %1781 = vmatmul.f32.gmra.mxu0 %v1277
        %v1782 = vpop.f32.mrf.mxu0
        %v1783 = vadd.f32 %v1249, %v1782
        %1784 = vdwg.mxu0
        %1785 = vmatpush.msra.mxu0 %v717
        %1786 = vmatpush.msra.mxu0 %v701
        %1787 = vmatpush.msra.mxu0 %v685
        %1788 = vmatpush.msra.mxu0 %v669
        %1789 = vmatpush.msra.mxu0 %v653
        %1790 = vmatpush.msra.mxu0 %v637
        %1791 = vmatpush.msra.mxu0 %v621
        %1792 = vmatpush.msra.mxu0 %v605
        %1793 = vmatpush.msra.mxu0 %v589
        %1794 = vmatpush.msra.mxu0 %v573
        %1795 = vmatpush.msra.mxu0 %v557
        %1796 = vmatpush.msra.mxu0 %v541
        %1797 = vmatpush.msra.mxu0 %v525
        %1798 = vmatpush.msra.mxu0 %v509
        %1799 = vmatpush.msra.mxu0 %v493
        %1800 = vmatpush.msra.mxu0 %v477
        %1801 = vmatmul.f32.gmra.mxu0 %v1278
        %v1802 = vpop.f32.mrf.mxu0
        %v1803 = vadd.f32 %v1783, %v1802
        %1804 = vdwg.mxu0
        %1805 = vmatpush.msra.mxu0 %v973
        %1806 = vmatpush.msra.mxu0 %v957
        %1807 = vmatpush.msra.mxu0 %v941
        %1808 = vmatpush.msra.mxu0 %v925
        %1809 = vmatpush.msra.mxu0 %v909
        %1810 = vmatpush.msra.mxu0 %v893
        %1811 = vmatpush.msra.mxu0 %v877
        %1812 = vmatpush.msra.mxu0 %v861
        %1813 = vmatpush.msra.mxu0 %v845
        %1814 = vmatpush.msra.mxu0 %v829
        %1815 = vmatpush.msra.mxu0 %v813
        %1816 = vmatpush.msra.mxu0 %v797
        %1817 = vmatpush.msra.mxu0 %v781
        %1818 = vmatpush.msra.mxu0 %v765
        %1819 = vmatpush.msra.mxu0 %v749
        %1820 = vmatpush.msra.mxu0 %v733
        %1821 = vmatmul.f32.gmra.mxu0 %v1279
        %v1822 = vpop.f32.mrf.mxu0
        %v1823 = vadd.f32 %v1803, %v1822
        %1824 = vdwg.mxu0
        %1825 = vmatpush.msra.mxu0 %v1229
        %1826 = vmatpush.msra.mxu0 %v1213
        %1827 = vmatpush.msra.mxu0 %v1197
        %1828 = vmatpush.msra.mxu0 %v1181
        %1829 = vmatpush.msra.mxu0 %v1165
        %1830 = vmatpush.msra.mxu0 %v1149
        %1831 = vmatpush.msra.mxu0 %v1133
        %1832 = vmatpush.msra.mxu0 %v1117
        %1833 = vmatpush.msra.mxu0 %v1101
        %1834 = vmatpush.msra.mxu0 %v1085
        %1835 = vmatpush.msra.mxu0 %v1069
        %1836 = vmatpush.msra.mxu0 %v1053
        %1837 = vmatpush.msra.mxu0 %v1037
        %1838 = vmatpush.msra.mxu0 %v1021
        %1839 = vmatpush.msra.mxu0 %v1005
        %1840 = vmatpush.msra.mxu0 %v989
        %1841 = vmatmul.f32.gmra.mxu0 %v1280
        %v1842 = vpop.f32.mrf.mxu0
        %v1843 = vadd.f32 %v1823, %v1842
        %1844 = vdwg.mxu0
        %1845 = vmatpush.msra.mxu0 %v462
        %1846 = vmatpush.msra.mxu0 %v446
        %1847 = vmatpush.msra.mxu0 %v430
        %1848 = vmatpush.msra.mxu0 %v414
        %1849 = vmatpush.msra.mxu0 %v398
        %1850 = vmatpush.msra.mxu0 %v382
        %1851 = vmatpush.msra.mxu0 %v366
        %1852 = vmatpush.msra.mxu0 %v350
        %1853 = vmatpush.msra.mxu0 %v334
        %1854 = vmatpush.msra.mxu0 %v318
        %1855 = vmatpush.msra.mxu0 %v302
        %1856 = vmatpush.msra.mxu0 %v286
        %1857 = vmatpush.msra.mxu0 %v270
        %1858 = vmatpush.msra.mxu0 %v254
        %1859 = vmatpush.msra.mxu0 %v238
        %1860 = vmatpush.msra.mxu0 %v222
        %1861 = vmatmul.f32.gmra.mxu0 %v1277
        %v1862 = vpop.f32.mrf.mxu0
        %v1863 = vadd.f32 %v1250, %v1862
        %1864 = vdwg.mxu0
        %1865 = vmatpush.msra.mxu0 %v718
        %1866 = vmatpush.msra.mxu0 %v702
        %1867 = vmatpush.msra.mxu0 %v686
        %1868 = vmatpush.msra.mxu0 %v670
        %1869 = vmatpush.msra.mxu0 %v654
        %1870 = vmatpush.msra.mxu0 %v638
        %1871 = vmatpush.msra.mxu0 %v622
        %1872 = vmatpush.msra.mxu0 %v606
        %1873 = vmatpush.msra.mxu0 %v590
        %1874 = vmatpush.msra.mxu0 %v574
        %1875 = vmatpush.msra.mxu0 %v558
        %1876 = vmatpush.msra.mxu0 %v542
        %1877 = vmatpush.msra.mxu0 %v526
        %1878 = vmatpush.msra.mxu0 %v510
        %1879 = vmatpush.msra.mxu0 %v494
        %1880 = vmatpush.msra.mxu0 %v478
        %1881 = vmatmul.f32.gmra.mxu0 %v1278
        %v1882 = vpop.f32.mrf.mxu0
        %v1883 = vadd.f32 %v1863, %v1882
        %1884 = vdwg.mxu0
        %1885 = vmatpush.msra.mxu0 %v974
        %1886 = vmatpush.msra.mxu0 %v958
        %1887 = vmatpush.msra.mxu0 %v942
        %1888 = vmatpush.msra.mxu0 %v926
        %1889 = vmatpush.msra.mxu0 %v910
        %1890 = vmatpush.msra.mxu0 %v894
        %1891 = vmatpush.msra.mxu0 %v878
        %1892 = vmatpush.msra.mxu0 %v862
        %1893 = vmatpush.msra.mxu0 %v846
        %1894 = vmatpush.msra.mxu0 %v830
        %1895 = vmatpush.msra.mxu0 %v814
        %1896 = vmatpush.msra.mxu0 %v798
        %1897 = vmatpush.msra.mxu0 %v782
        %1898 = vmatpush.msra.mxu0 %v766
        %1899 = vmatpush.msra.mxu0 %v750
        %1900 = vmatpush.msra.mxu0 %v734
        %1901 = vmatmul.f32.gmra.mxu0 %v1279
        %v1902 = vpop.f32.mrf.mxu0
        %v1903 = vadd.f32 %v1883, %v1902
        %1904 = vdwg.mxu0
        %1905 = vmatpush.msra.mxu0 %v1230
        %1906 = vmatpush.msra.mxu0 %v1214
        %1907 = vmatpush.msra.mxu0 %v1198
        %1908 = vmatpush.msra.mxu0 %v1182
        %1909 = vmatpush.msra.mxu0 %v1166
        %1910 = vmatpush.msra.mxu0 %v1150
        %1911 = vmatpush.msra.mxu0 %v1134
        %1912 = vmatpush.msra.mxu0 %v1118
        %1913 = vmatpush.msra.mxu0 %v1102
        %1914 = vmatpush.msra.mxu0 %v1086
        %1915 = vmatpush.msra.mxu0 %v1070
        %1916 = vmatpush.msra.mxu0 %v1054
        %1917 = vmatpush.msra.mxu0 %v1038
        %1918 = vmatpush.msra.mxu0 %v1022
        %1919 = vmatpush.msra.mxu0 %v1006
        %1920 = vmatpush.msra.mxu0 %v990
        %1921 = vmatmul.f32.gmra.mxu0 %v1280
        %v1922 = vpop.f32.mrf.mxu0
        %v1923 = vadd.f32 %v1903, %v1922
        %1924 = vdwg.mxu0
        %1925 = vmatpush.msra.mxu0 %v463
        %1926 = vmatpush.msra.mxu0 %v447
        %1927 = vmatpush.msra.mxu0 %v431
        %1928 = vmatpush.msra.mxu0 %v415
        %1929 = vmatpush.msra.mxu0 %v399
        %1930 = vmatpush.msra.mxu0 %v383
        %1931 = vmatpush.msra.mxu0 %v367
        %1932 = vmatpush.msra.mxu0 %v351
        %1933 = vmatpush.msra.mxu0 %v335
        %1934 = vmatpush.msra.mxu0 %v319
        %1935 = vmatpush.msra.mxu0 %v303
        %1936 = vmatpush.msra.mxu0 %v287
        %1937 = vmatpush.msra.mxu0 %v271
        %1938 = vmatpush.msra.mxu0 %v255
        %1939 = vmatpush.msra.mxu0 %v239
        %1940 = vmatpush.msra.mxu0 %v223
        %1941 = vmatmul.f32.gmra.mxu0 %v1277
        %v1942 = vpop.f32.mrf.mxu0
        %v1943 = vadd.f32 %v1251, %v1942
        %1944 = vdwg.mxu0
        %1945 = vmatpush.msra.mxu0 %v719
        %1946 = vmatpush.msra.mxu0 %v703
        %1947 = vmatpush.msra.mxu0 %v687
        %1948 = vmatpush.msra.mxu0 %v671
        %1949 = vmatpush.msra.mxu0 %v655
        %1950 = vmatpush.msra.mxu0 %v639
        %1951 = vmatpush.msra.mxu0 %v623
        %1952 = vmatpush.msra.mxu0 %v607
        %1953 = vmatpush.msra.mxu0 %v591
        %1954 = vmatpush.msra.mxu0 %v575
        %1955 = vmatpush.msra.mxu0 %v559
        %1956 = vmatpush.msra.mxu0 %v543
        %1957 = vmatpush.msra.mxu0 %v527
        %1958 = vmatpush.msra.mxu0 %v511
        %1959 = vmatpush.msra.mxu0 %v495
        %1960 = vmatpush.msra.mxu0 %v479
        %1961 = vmatmul.f32.gmra.mxu0 %v1278
        %v1962 = vpop.f32.mrf.mxu0
        %v1963 = vadd.f32 %v1943, %v1962
        %1964 = vdwg.mxu0
        %1965 = vmatpush.msra.mxu0 %v975
        %1966 = vmatpush.msra.mxu0 %v959
        %1967 = vmatpush.msra.mxu0 %v943
        %1968 = vmatpush.msra.mxu0 %v927
        %1969 = vmatpush.msra.mxu0 %v911
        %1970 = vmatpush.msra.mxu0 %v895
        %1971 = vmatpush.msra.mxu0 %v879
        %1972 = vmatpush.msra.mxu0 %v863
        %1973 = vmatpush.msra.mxu0 %v847
        %1974 = vmatpush.msra.mxu0 %v831
        %1975 = vmatpush.msra.mxu0 %v815
        %1976 = vmatpush.msra.mxu0 %v799
        %1977 = vmatpush.msra.mxu0 %v783
        %1978 = vmatpush.msra.mxu0 %v767
        %1979 = vmatpush.msra.mxu0 %v751
        %1980 = vmatpush.msra.mxu0 %v735
        %1981 = vmatmul.f32.gmra.mxu0 %v1279
        %v1982 = vpop.f32.mrf.mxu0
        %v1983 = vadd.f32 %v1963, %v1982
        %1984 = vdwg.mxu0
        %1985 = vmatpush.msra.mxu0 %v1231
        %1986 = vmatpush.msra.mxu0 %v1215
        %1987 = vmatpush.msra.mxu0 %v1199
        %1988 = vmatpush.msra.mxu0 %v1183
        %1989 = vmatpush.msra.mxu0 %v1167
        %1990 = vmatpush.msra.mxu0 %v1151
        %1991 = vmatpush.msra.mxu0 %v1135
        %1992 = vmatpush.msra.mxu0 %v1119
        %1993 = vmatpush.msra.mxu0 %v1103
        %1994 = vmatpush.msra.mxu0 %v1087
        %1995 = vmatpush.msra.mxu0 %v1071
        %1996 = vmatpush.msra.mxu0 %v1055
        %1997 = vmatpush.msra.mxu0 %v1039
        %1998 = vmatpush.msra.mxu0 %v1023
        %1999 = vmatpush.msra.mxu0 %v1007
        %2000 = vmatpush.msra.mxu0 %v991
        %2001 = vmatmul.f32.gmra.mxu0 %v1280
        %v2002 = vpop.f32.mrf.mxu0
        %v2003 = vadd.f32 %v1983, %v2002
        %2004 = vdwg.mxu0
        %2005 = vmatpush.msra.mxu0 %v464
        %2006 = vmatpush.msra.mxu0 %v448
        %2007 = vmatpush.msra.mxu0 %v432
        %2008 = vmatpush.msra.mxu0 %v416
        %2009 = vmatpush.msra.mxu0 %v400
        %2010 = vmatpush.msra.mxu0 %v384
        %2011 = vmatpush.msra.mxu0 %v368
        %2012 = vmatpush.msra.mxu0 %v352
        %2013 = vmatpush.msra.mxu0 %v336
        %2014 = vmatpush.msra.mxu0 %v320
        %2015 = vmatpush.msra.mxu0 %v304
        %2016 = vmatpush.msra.mxu0 %v288
        %2017 = vmatpush.msra.mxu0 %v272
        %2018 = vmatpush.msra.mxu0 %v256
        %2019 = vmatpush.msra.mxu0 %v240
        %2020 = vmatpush.msra.mxu0 %v224
        %2021 = vmatmul.f32.gmra.mxu0 %v1277
        %v2022 = vpop.f32.mrf.mxu0
        %v2023 = vadd.f32 %v1252, %v2022
        %2024 = vdwg.mxu0
        %2025 = vmatpush.msra.mxu0 %v720
        %2026 = vmatpush.msra.mxu0 %v704
        %2027 = vmatpush.msra.mxu0 %v688
        %2028 = vmatpush.msra.mxu0 %v672
        %2029 = vmatpush.msra.mxu0 %v656
        %2030 = vmatpush.msra.mxu0 %v640
        %2031 = vmatpush.msra.mxu0 %v624
        %2032 = vmatpush.msra.mxu0 %v608
        %2033 = vmatpush.msra.mxu0 %v592
        %2034 = vmatpush.msra.mxu0 %v576
        %2035 = vmatpush.msra.mxu0 %v560
        %2036 = vmatpush.msra.mxu0 %v544
        %2037 = vmatpush.msra.mxu0 %v528
        %2038 = vmatpush.msra.mxu0 %v512
        %2039 = vmatpush.msra.mxu0 %v496
        %2040 = vmatpush.msra.mxu0 %v480
        %2041 = vmatmul.f32.gmra.mxu0 %v1278
        %v2042 = vpop.f32.mrf.mxu0
        %v2043 = vadd.f32 %v2023, %v2042
        %2044 = vdwg.mxu0
        %2045 = vmatpush.msra.mxu0 %v976
        %2046 = vmatpush.msra.mxu0 %v960
        %2047 = vmatpush.msra.mxu0 %v944
        %2048 = vmatpush.msra.mxu0 %v928
        %2049 = vmatpush.msra.mxu0 %v912
        %2050 = vmatpush.msra.mxu0 %v896
        %2051 = vmatpush.msra.mxu0 %v880
        %2052 = vmatpush.msra.mxu0 %v864
        %2053 = vmatpush.msra.mxu0 %v848
        %2054 = vmatpush.msra.mxu0 %v832
        %2055 = vmatpush.msra.mxu0 %v816
        %2056 = vmatpush.msra.mxu0 %v800
        %2057 = vmatpush.msra.mxu0 %v784
        %2058 = vmatpush.msra.mxu0 %v768
        %2059 = vmatpush.msra.mxu0 %v752
        %2060 = vmatpush.msra.mxu0 %v736
        %2061 = vmatmul.f32.gmra.mxu0 %v1279
        %v2062 = vpop.f32.mrf.mxu0
        %v2063 = vadd.f32 %v2043, %v2062
        %2064 = vdwg.mxu0
        %2065 = vmatpush.msra.mxu0 %v1232
        %2066 = vmatpush.msra.mxu0 %v1216
        %2067 = vmatpush.msra.mxu0 %v1200
        %2068 = vmatpush.msra.mxu0 %v1184
        %2069 = vmatpush.msra.mxu0 %v1168
        %2070 = vmatpush.msra.mxu0 %v1152
        %2071 = vmatpush.msra.mxu0 %v1136
        %2072 = vmatpush.msra.mxu0 %v1120
        %2073 = vmatpush.msra.mxu0 %v1104
        %2074 = vmatpush.msra.mxu0 %v1088
        %2075 = vmatpush.msra.mxu0 %v1072
        %2076 = vmatpush.msra.mxu0 %v1056
        %2077 = vmatpush.msra.mxu0 %v1040
        %2078 = vmatpush.msra.mxu0 %v1024
        %2079 = vmatpush.msra.mxu0 %v1008
        %2080 = vmatpush.msra.mxu0 %v992
        %2081 = vmatmul.f32.gmra.mxu0 %v1280
        %v2082 = vpop.f32.mrf.mxu0
        %v2083 = vadd.f32 %v2063, %v2082
        %2084 = vdwg.mxu0
        %2085 = vmatpush.msra.mxu0 %v465
        %2086 = vmatpush.msra.mxu0 %v449
        %2087 = vmatpush.msra.mxu0 %v433
        %2088 = vmatpush.msra.mxu0 %v417
        %2089 = vmatpush.msra.mxu0 %v401
        %2090 = vmatpush.msra.mxu0 %v385
        %2091 = vmatpush.msra.mxu0 %v369
        %2092 = vmatpush.msra.mxu0 %v353
        %2093 = vmatpush.msra.mxu0 %v337
        %2094 = vmatpush.msra.mxu0 %v321
        %2095 = vmatpush.msra.mxu0 %v305
        %2096 = vmatpush.msra.mxu0 %v289
        %2097 = vmatpush.msra.mxu0 %v273
        %2098 = vmatpush.msra.mxu0 %v257
        %2099 = vmatpush.msra.mxu0 %v241
        %2100 = vmatpush.msra.mxu0 %v225
        %2101 = vmatmul.f32.gmra.mxu0 %v1277
        %v2102 = vpop.f32.mrf.mxu0
        %v2103 = vadd.f32 %v1253, %v2102
        %2104 = vdwg.mxu0
        %2105 = vmatpush.msra.mxu0 %v721
        %2106 = vmatpush.msra.mxu0 %v705
        %2107 = vmatpush.msra.mxu0 %v689
        %2108 = vmatpush.msra.mxu0 %v673
        %2109 = vmatpush.msra.mxu0 %v657
        %2110 = vmatpush.msra.mxu0 %v641
        %2111 = vmatpush.msra.mxu0 %v625
        %2112 = vmatpush.msra.mxu0 %v609
        %2113 = vmatpush.msra.mxu0 %v593
        %2114 = vmatpush.msra.mxu0 %v577
        %2115 = vmatpush.msra.mxu0 %v561
        %2116 = vmatpush.msra.mxu0 %v545
        %2117 = vmatpush.msra.mxu0 %v529
        %2118 = vmatpush.msra.mxu0 %v513
        %2119 = vmatpush.msra.mxu0 %v497
        %2120 = vmatpush.msra.mxu0 %v481
        %2121 = vmatmul.f32.gmra.mxu0 %v1278
        %v2122 = vpop.f32.mrf.mxu0
        %v2123 = vadd.f32 %v2103, %v2122
        %2124 = vdwg.mxu0
        %2125 = vmatpush.msra.mxu0 %v977
        %2126 = vmatpush.msra.mxu0 %v961
        %2127 = vmatpush.msra.mxu0 %v945
        %2128 = vmatpush.msra.mxu0 %v929
        %2129 = vmatpush.msra.mxu0 %v913
        %2130 = vmatpush.msra.mxu0 %v897
        %2131 = vmatpush.msra.mxu0 %v881
        %2132 = vmatpush.msra.mxu0 %v865
        %2133 = vmatpush.msra.mxu0 %v849
        %2134 = vmatpush.msra.mxu0 %v833
        %2135 = vmatpush.msra.mxu0 %v817
        %2136 = vmatpush.msra.mxu0 %v801
        %2137 = vmatpush.msra.mxu0 %v785
        %2138 = vmatpush.msra.mxu0 %v769
        %2139 = vmatpush.msra.mxu0 %v753
        %2140 = vmatpush.msra.mxu0 %v737
        %2141 = vmatmul.f32.gmra.mxu0 %v1279
        %v2142 = vpop.f32.mrf.mxu0
        %v2143 = vadd.f32 %v2123, %v2142
        %2144 = vdwg.mxu0
        %2145 = vmatpush.msra.mxu0 %v1233
        %2146 = vmatpush.msra.mxu0 %v1217
        %2147 = vmatpush.msra.mxu0 %v1201
        %2148 = vmatpush.msra.mxu0 %v1185
        %2149 = vmatpush.msra.mxu0 %v1169
        %2150 = vmatpush.msra.mxu0 %v1153
        %2151 = vmatpush.msra.mxu0 %v1137
        %2152 = vmatpush.msra.mxu0 %v1121
        %2153 = vmatpush.msra.mxu0 %v1105
        %2154 = vmatpush.msra.mxu0 %v1089
        %2155 = vmatpush.msra.mxu0 %v1073
        %2156 = vmatpush.msra.mxu0 %v1057
        %2157 = vmatpush.msra.mxu0 %v1041
        %2158 = vmatpush.msra.mxu0 %v1025
        %2159 = vmatpush.msra.mxu0 %v1009
        %2160 = vmatpush.msra.mxu0 %v993
        %2161 = vmatmul.f32.gmra.mxu0 %v1280
        %v2162 = vpop.f32.mrf.mxu0
        %v2163 = vadd.f32 %v2143, %v2162
        %2164 = vdwg.mxu0
        %2165 = vmatpush.msra.mxu0 %v466
        %2166 = vmatpush.msra.mxu0 %v450
        %2167 = vmatpush.msra.mxu0 %v434
        %2168 = vmatpush.msra.mxu0 %v418
        %2169 = vmatpush.msra.mxu0 %v402
        %2170 = vmatpush.msra.mxu0 %v386
        %2171 = vmatpush.msra.mxu0 %v370
        %2172 = vmatpush.msra.mxu0 %v354
        %2173 = vmatpush.msra.mxu0 %v338
        %2174 = vmatpush.msra.mxu0 %v322
        %2175 = vmatpush.msra.mxu0 %v306
        %2176 = vmatpush.msra.mxu0 %v290
        %2177 = vmatpush.msra.mxu0 %v274
        %2178 = vmatpush.msra.mxu0 %v258
        %2179 = vmatpush.msra.mxu0 %v242
        %2180 = vmatpush.msra.mxu0 %v226
        %2181 = vmatmul.f32.gmra.mxu0 %v1277
        %v2182 = vpop.f32.mrf.mxu0
        %v2183 = vadd.f32 %v1254, %v2182
        %2184 = vdwg.mxu0
        %2185 = vmatpush.msra.mxu0 %v722
        %2186 = vmatpush.msra.mxu0 %v706
        %2187 = vmatpush.msra.mxu0 %v690
        %2188 = vmatpush.msra.mxu0 %v674
        %2189 = vmatpush.msra.mxu0 %v658
        %2190 = vmatpush.msra.mxu0 %v642
        %2191 = vmatpush.msra.mxu0 %v626
        %2192 = vmatpush.msra.mxu0 %v610
        %2193 = vmatpush.msra.mxu0 %v594
        %2194 = vmatpush.msra.mxu0 %v578
        %2195 = vmatpush.msra.mxu0 %v562
        %2196 = vmatpush.msra.mxu0 %v546
        %2197 = vmatpush.msra.mxu0 %v530
        %2198 = vmatpush.msra.mxu0 %v514
        %2199 = vmatpush.msra.mxu0 %v498
        %2200 = vmatpush.msra.mxu0 %v482
        %2201 = vmatmul.f32.gmra.mxu0 %v1278
        %v2202 = vpop.f32.mrf.mxu0
        %v2203 = vadd.f32 %v2183, %v2202
        %2204 = vdwg.mxu0
        %2205 = vmatpush.msra.mxu0 %v978
        %2206 = vmatpush.msra.mxu0 %v962
        %2207 = vmatpush.msra.mxu0 %v946
        %2208 = vmatpush.msra.mxu0 %v930
        %2209 = vmatpush.msra.mxu0 %v914
        %2210 = vmatpush.msra.mxu0 %v898
        %2211 = vmatpush.msra.mxu0 %v882
        %2212 = vmatpush.msra.mxu0 %v866
        %2213 = vmatpush.msra.mxu0 %v850
        %2214 = vmatpush.msra.mxu0 %v834
        %2215 = vmatpush.msra.mxu0 %v818
        %2216 = vmatpush.msra.mxu0 %v802
        %2217 = vmatpush.msra.mxu0 %v786
        %2218 = vmatpush.msra.mxu0 %v770
        %2219 = vmatpush.msra.mxu0 %v754
        %2220 = vmatpush.msra.mxu0 %v738
        %2221 = vmatmul.f32.gmra.mxu0 %v1279
        %v2222 = vpop.f32.mrf.mxu0
        %v2223 = vadd.f32 %v2203, %v2222
        %2224 = vdwg.mxu0
        %2225 = vmatpush.msra.mxu0 %v1234
        %2226 = vmatpush.msra.mxu0 %v1218
        %2227 = vmatpush.msra.mxu0 %v1202
        %2228 = vmatpush.msra.mxu0 %v1186
        %2229 = vmatpush.msra.mxu0 %v1170
        %2230 = vmatpush.msra.mxu0 %v1154
        %2231 = vmatpush.msra.mxu0 %v1138
        %2232 = vmatpush.msra.mxu0 %v1122
        %2233 = vmatpush.msra.mxu0 %v1106
        %2234 = vmatpush.msra.mxu0 %v1090
        %2235 = vmatpush.msra.mxu0 %v1074
        %2236 = vmatpush.msra.mxu0 %v1058
        %2237 = vmatpush.msra.mxu0 %v1042
        %2238 = vmatpush.msra.mxu0 %v1026
        %2239 = vmatpush.msra.mxu0 %v1010
        %2240 = vmatpush.msra.mxu0 %v994
        %2241 = vmatmul.f32.gmra.mxu0 %v1280
        %v2242 = vpop.f32.mrf.mxu0
        %v2243 = vadd.f32 %v2223, %v2242
        %2244 = vdwg.mxu0
        %2245 = vmatpush.msra.mxu0 %v467
        %2246 = vmatpush.msra.mxu0 %v451
        %2247 = vmatpush.msra.mxu0 %v435
        %2248 = vmatpush.msra.mxu0 %v419
        %2249 = vmatpush.msra.mxu0 %v403
        %2250 = vmatpush.msra.mxu0 %v387
        %2251 = vmatpush.msra.mxu0 %v371
        %2252 = vmatpush.msra.mxu0 %v355
        %2253 = vmatpush.msra.mxu0 %v339
        %2254 = vmatpush.msra.mxu0 %v323
        %2255 = vmatpush.msra.mxu0 %v307
        %2256 = vmatpush.msra.mxu0 %v291
        %2257 = vmatpush.msra.mxu0 %v275
        %2258 = vmatpush.msra.mxu0 %v259
        %2259 = vmatpush.msra.mxu0 %v243
        %2260 = vmatpush.msra.mxu0 %v227
        %2261 = vmatmul.f32.gmra.mxu0 %v1277
        %v2262 = vpop.f32.mrf.mxu0
        %v2263 = vadd.f32 %v1255, %v2262
        %2264 = vdwg.mxu0
        %2265 = vmatpush.msra.mxu0 %v723
        %2266 = vmatpush.msra.mxu0 %v707
        %2267 = vmatpush.msra.mxu0 %v691
        %2268 = vmatpush.msra.mxu0 %v675
        %2269 = vmatpush.msra.mxu0 %v659
        %2270 = vmatpush.msra.mxu0 %v643
        %2271 = vmatpush.msra.mxu0 %v627
        %2272 = vmatpush.msra.mxu0 %v611
        %2273 = vmatpush.msra.mxu0 %v595
        %2274 = vmatpush.msra.mxu0 %v579
        %2275 = vmatpush.msra.mxu0 %v563
        %2276 = vmatpush.msra.mxu0 %v547
        %2277 = vmatpush.msra.mxu0 %v531
        %2278 = vmatpush.msra.mxu0 %v515
        %2279 = vmatpush.msra.mxu0 %v499
        %2280 = vmatpush.msra.mxu0 %v483
        %2281 = vmatmul.f32.gmra.mxu0 %v1278
        %v2282 = vpop.f32.mrf.mxu0
        %v2283 = vadd.f32 %v2263, %v2282
        %2284 = vdwg.mxu0
        %2285 = vmatpush.msra.mxu0 %v979
        %2286 = vmatpush.msra.mxu0 %v963
        %2287 = vmatpush.msra.mxu0 %v947
        %2288 = vmatpush.msra.mxu0 %v931
        %2289 = vmatpush.msra.mxu0 %v915
        %2290 = vmatpush.msra.mxu0 %v899
        %2291 = vmatpush.msra.mxu0 %v883
        %2292 = vmatpush.msra.mxu0 %v867
        %2293 = vmatpush.msra.mxu0 %v851
        %2294 = vmatpush.msra.mxu0 %v835
        %2295 = vmatpush.msra.mxu0 %v819
        %2296 = vmatpush.msra.mxu0 %v803
        %2297 = vmatpush.msra.mxu0 %v787
        %2298 = vmatpush.msra.mxu0 %v771
        %2299 = vmatpush.msra.mxu0 %v755
        %2300 = vmatpush.msra.mxu0 %v739
        %2301 = vmatmul.f32.gmra.mxu0 %v1279
        %v2302 = vpop.f32.mrf.mxu0
        %v2303 = vadd.f32 %v2283, %v2302
        %2304 = vdwg.mxu0
        %2305 = vmatpush.msra.mxu0 %v1235
        %2306 = vmatpush.msra.mxu0 %v1219
        %2307 = vmatpush.msra.mxu0 %v1203
        %2308 = vmatpush.msra.mxu0 %v1187
        %2309 = vmatpush.msra.mxu0 %v1171
        %2310 = vmatpush.msra.mxu0 %v1155
        %2311 = vmatpush.msra.mxu0 %v1139
        %2312 = vmatpush.msra.mxu0 %v1123
        %2313 = vmatpush.msra.mxu0 %v1107
        %2314 = vmatpush.msra.mxu0 %v1091
        %2315 = vmatpush.msra.mxu0 %v1075
        %2316 = vmatpush.msra.mxu0 %v1059
        %2317 = vmatpush.msra.mxu0 %v1043
        %2318 = vmatpush.msra.mxu0 %v1027
        %2319 = vmatpush.msra.mxu0 %v1011
        %2320 = vmatpush.msra.mxu0 %v995
        %2321 = vmatmul.f32.gmra.mxu0 %v1280
        %v2322 = vpop.f32.mrf.mxu0
        %v2323 = vadd.f32 %v2303, %v2322
        %2324 = vdwg.mxu0
        %2325 = vmatpush.msra.mxu0 %v468
        %2326 = vmatpush.msra.mxu0 %v452
        %2327 = vmatpush.msra.mxu0 %v436
        %2328 = vmatpush.msra.mxu0 %v420
        %2329 = vmatpush.msra.mxu0 %v404
        %2330 = vmatpush.msra.mxu0 %v388
        %2331 = vmatpush.msra.mxu0 %v372
        %2332 = vmatpush.msra.mxu0 %v356
        %2333 = vmatpush.msra.mxu0 %v340
        %2334 = vmatpush.msra.mxu0 %v324
        %2335 = vmatpush.msra.mxu0 %v308
        %2336 = vmatpush.msra.mxu0 %v292
        %2337 = vmatpush.msra.mxu0 %v276
        %2338 = vmatpush.msra.mxu0 %v260
        %2339 = vmatpush.msra.mxu0 %v244
        %2340 = vmatpush.msra.mxu0 %v228
        %2341 = vmatmul.f32.gmra.mxu0 %v1277
        %v2342 = vpop.f32.mrf.mxu0
        %v2343 = vadd.f32 %v1256, %v2342
        %2344 = vdwg.mxu0
        %2345 = vmatpush.msra.mxu0 %v724
        %2346 = vmatpush.msra.mxu0 %v708
        %2347 = vmatpush.msra.mxu0 %v692
        %2348 = vmatpush.msra.mxu0 %v676
        %2349 = vmatpush.msra.mxu0 %v660
        %2350 = vmatpush.msra.mxu0 %v644
        %2351 = vmatpush.msra.mxu0 %v628
        %2352 = vmatpush.msra.mxu0 %v612
        %2353 = vmatpush.msra.mxu0 %v596
        %2354 = vmatpush.msra.mxu0 %v580
        %2355 = vmatpush.msra.mxu0 %v564
        %2356 = vmatpush.msra.mxu0 %v548
        %2357 = vmatpush.msra.mxu0 %v532
        %2358 = vmatpush.msra.mxu0 %v516
        %2359 = vmatpush.msra.mxu0 %v500
        %2360 = vmatpush.msra.mxu0 %v484
        %2361 = vmatmul.f32.gmra.mxu0 %v1278
        %v2362 = vpop.f32.mrf.mxu0
        %v2363 = vadd.f32 %v2343, %v2362
        %2364 = vdwg.mxu0
        %2365 = vmatpush.msra.mxu0 %v980
        %2366 = vmatpush.msra.mxu0 %v964
        %2367 = vmatpush.msra.mxu0 %v948
        %2368 = vmatpush.msra.mxu0 %v932
        %2369 = vmatpush.msra.mxu0 %v916
        %2370 = vmatpush.msra.mxu0 %v900
        %2371 = vmatpush.msra.mxu0 %v884
        %2372 = vmatpush.msra.mxu0 %v868
        %2373 = vmatpush.msra.mxu0 %v852
        %2374 = vmatpush.msra.mxu0 %v836
        %2375 = vmatpush.msra.mxu0 %v820
        %2376 = vmatpush.msra.mxu0 %v804
        %2377 = vmatpush.msra.mxu0 %v788
        %2378 = vmatpush.msra.mxu0 %v772
        %2379 = vmatpush.msra.mxu0 %v756
        %2380 = vmatpush.msra.mxu0 %v740
        %2381 = vmatmul.f32.gmra.mxu0 %v1279
        %v2382 = vpop.f32.mrf.mxu0
        %v2383 = vadd.f32 %v2363, %v2382
        %2384 = vdwg.mxu0
        %2385 = vmatpush.msra.mxu0 %v1236
        %2386 = vmatpush.msra.mxu0 %v1220
        %2387 = vmatpush.msra.mxu0 %v1204
        %2388 = vmatpush.msra.mxu0 %v1188
        %2389 = vmatpush.msra.mxu0 %v1172
        %2390 = vmatpush.msra.mxu0 %v1156
        %2391 = vmatpush.msra.mxu0 %v1140
        %2392 = vmatpush.msra.mxu0 %v1124
        %2393 = vmatpush.msra.mxu0 %v1108
        %2394 = vmatpush.msra.mxu0 %v1092
        %2395 = vmatpush.msra.mxu0 %v1076
        %2396 = vmatpush.msra.mxu0 %v1060
        %2397 = vmatpush.msra.mxu0 %v1044
        %2398 = vmatpush.msra.mxu0 %v1028
        %2399 = vmatpush.msra.mxu0 %v1012
        %2400 = vmatpush.msra.mxu0 %v996
        %2401 = vmatmul.f32.gmra.mxu0 %v1280
        %v2402 = vpop.f32.mrf.mxu0
        %v2403 = vadd.f32 %v2383, %v2402
        %2404 = vdwg.mxu0
        %2405 = vmatpush.msra.mxu0 %v469
        %2406 = vmatpush.msra.mxu0 %v453
        %2407 = vmatpush.msra.mxu0 %v437
        %2408 = vmatpush.msra.mxu0 %v421
        %2409 = vmatpush.msra.mxu0 %v405
        %2410 = vmatpush.msra.mxu0 %v389
        %2411 = vmatpush.msra.mxu0 %v373
        %2412 = vmatpush.msra.mxu0 %v357
        %2413 = vmatpush.msra.mxu0 %v341
        %2414 = vmatpush.msra.mxu0 %v325
        %2415 = vmatpush.msra.mxu0 %v309
        %2416 = vmatpush.msra.mxu0 %v293
        %2417 = vmatpush.msra.mxu0 %v277
        %2418 = vmatpush.msra.mxu0 %v261
        %2419 = vmatpush.msra.mxu0 %v245
        %2420 = vmatpush.msra.mxu0 %v229
        %2421 = vmatmul.f32.gmra.mxu0 %v1277
        %v2422 = vpop.f32.mrf.mxu0
        %v2423 = vadd.f32 %v1257, %v2422
        %2424 = vdwg.mxu0
        %2425 = vmatpush.msra.mxu0 %v725
        %2426 = vmatpush.msra.mxu0 %v709
        %2427 = vmatpush.msra.mxu0 %v693
        %2428 = vmatpush.msra.mxu0 %v677
        %2429 = vmatpush.msra.mxu0 %v661
        %2430 = vmatpush.msra.mxu0 %v645
        %2431 = vmatpush.msra.mxu0 %v629
        %2432 = vmatpush.msra.mxu0 %v613
        %2433 = vmatpush.msra.mxu0 %v597
        %2434 = vmatpush.msra.mxu0 %v581
        %2435 = vmatpush.msra.mxu0 %v565
        %2436 = vmatpush.msra.mxu0 %v549
        %2437 = vmatpush.msra.mxu0 %v533
        %2438 = vmatpush.msra.mxu0 %v517
        %2439 = vmatpush.msra.mxu0 %v501
        %2440 = vmatpush.msra.mxu0 %v485
        %2441 = vmatmul.f32.gmra.mxu0 %v1278
        %v2442 = vpop.f32.mrf.mxu0
        %v2443 = vadd.f32 %v2423, %v2442
        %2444 = vdwg.mxu0
        %2445 = vmatpush.msra.mxu0 %v981
        %2446 = vmatpush.msra.mxu0 %v965
        %2447 = vmatpush.msra.mxu0 %v949
        %2448 = vmatpush.msra.mxu0 %v933
        %2449 = vmatpush.msra.mxu0 %v917
        %2450 = vmatpush.msra.mxu0 %v901
        %2451 = vmatpush.msra.mxu0 %v885
        %2452 = vmatpush.msra.mxu0 %v869
        %2453 = vmatpush.msra.mxu0 %v853
        %2454 = vmatpush.msra.mxu0 %v837
        %2455 = vmatpush.msra.mxu0 %v821
        %2456 = vmatpush.msra.mxu0 %v805
        %2457 = vmatpush.msra.mxu0 %v789
        %2458 = vmatpush.msra.mxu0 %v773
        %2459 = vmatpush.msra.mxu0 %v757
        %2460 = vmatpush.msra.mxu0 %v741
        %2461 = vmatmul.f32.gmra.mxu0 %v1279
        %v2462 = vpop.f32.mrf.mxu0
        %v2463 = vadd.f32 %v2443, %v2462
        %2464 = vdwg.mxu0
        %2465 = vmatpush.msra.mxu0 %v1237
        %2466 = vmatpush.msra.mxu0 %v1221
        %2467 = vmatpush.msra.mxu0 %v1205
        %2468 = vmatpush.msra.mxu0 %v1189
        %2469 = vmatpush.msra.mxu0 %v1173
        %2470 = vmatpush.msra.mxu0 %v1157
        %2471 = vmatpush.msra.mxu0 %v1141
        %2472 = vmatpush.msra.mxu0 %v1125
        %2473 = vmatpush.msra.mxu0 %v1109
        %2474 = vmatpush.msra.mxu0 %v1093
        %2475 = vmatpush.msra.mxu0 %v1077
        %2476 = vmatpush.msra.mxu0 %v1061
        %2477 = vmatpush.msra.mxu0 %v1045
        %2478 = vmatpush.msra.mxu0 %v1029
        %2479 = vmatpush.msra.mxu0 %v1013
        %2480 = vmatpush.msra.mxu0 %v997
        %2481 = vmatmul.f32.gmra.mxu0 %v1280
        %v2482 = vpop.f32.mrf.mxu0
        %v2483 = vadd.f32 %v2463, %v2482
        %2484 = vdwg.mxu0
        %2485 = vmatpush.msra.mxu0 %v470
        %2486 = vmatpush.msra.mxu0 %v454
        %2487 = vmatpush.msra.mxu0 %v438
        %2488 = vmatpush.msra.mxu0 %v422
        %2489 = vmatpush.msra.mxu0 %v406
        %2490 = vmatpush.msra.mxu0 %v390
        %2491 = vmatpush.msra.mxu0 %v374
        %2492 = vmatpush.msra.mxu0 %v358
        %2493 = vmatpush.msra.mxu0 %v342
        %2494 = vmatpush.msra.mxu0 %v326
        %2495 = vmatpush.msra.mxu0 %v310
        %2496 = vmatpush.msra.mxu0 %v294
        %2497 = vmatpush.msra.mxu0 %v278
        %2498 = vmatpush.msra.mxu0 %v262
        %2499 = vmatpush.msra.mxu0 %v246
        %2500 = vmatpush.msra.mxu0 %v230
        %2501 = vmatmul.f32.gmra.mxu0 %v1277
        %v2502 = vpop.f32.mrf.mxu0
        %v2503 = vadd.f32 %v1258, %v2502
        %2504 = vdwg.mxu0
        %2505 = vmatpush.msra.mxu0 %v726
        %2506 = vmatpush.msra.mxu0 %v710
        %2507 = vmatpush.msra.mxu0 %v694
        %2508 = vmatpush.msra.mxu0 %v678
        %2509 = vmatpush.msra.mxu0 %v662
        %2510 = vmatpush.msra.mxu0 %v646
        %2511 = vmatpush.msra.mxu0 %v630
        %2512 = vmatpush.msra.mxu0 %v614
        %2513 = vmatpush.msra.mxu0 %v598
        %2514 = vmatpush.msra.mxu0 %v582
        %2515 = vmatpush.msra.mxu0 %v566
        %2516 = vmatpush.msra.mxu0 %v550
        %2517 = vmatpush.msra.mxu0 %v534
        %2518 = vmatpush.msra.mxu0 %v518
        %2519 = vmatpush.msra.mxu0 %v502
        %2520 = vmatpush.msra.mxu0 %v486
        %2521 = vmatmul.f32.gmra.mxu0 %v1278
        %v2522 = vpop.f32.mrf.mxu0
        %v2523 = vadd.f32 %v2503, %v2522
        %2524 = vdwg.mxu0
        %2525 = vmatpush.msra.mxu0 %v982
        %2526 = vmatpush.msra.mxu0 %v966
        %2527 = vmatpush.msra.mxu0 %v950
        %2528 = vmatpush.msra.mxu0 %v934
        %2529 = vmatpush.msra.mxu0 %v918
        %2530 = vmatpush.msra.mxu0 %v902
        %2531 = vmatpush.msra.mxu0 %v886
        %2532 = vmatpush.msra.mxu0 %v870
        %2533 = vmatpush.msra.mxu0 %v854
        %2534 = vmatpush.msra.mxu0 %v838
        %2535 = vmatpush.msra.mxu0 %v822
        %2536 = vmatpush.msra.mxu0 %v806
        %2537 = vmatpush.msra.mxu0 %v790
        %2538 = vmatpush.msra.mxu0 %v774
        %2539 = vmatpush.msra.mxu0 %v758
        %2540 = vmatpush.msra.mxu0 %v742
        %2541 = vmatmul.f32.gmra.mxu0 %v1279
        %v2542 = vpop.f32.mrf.mxu0
        %v2543 = vadd.f32 %v2523, %v2542
        %2544 = vdwg.mxu0
        %2545 = vmatpush.msra.mxu0 %v1238
        %2546 = vmatpush.msra.mxu0 %v1222
        %2547 = vmatpush.msra.mxu0 %v1206
        %2548 = vmatpush.msra.mxu0 %v1190
        %2549 = vmatpush.msra.mxu0 %v1174
        %2550 = vmatpush.msra.mxu0 %v1158
        %2551 = vmatpush.msra.mxu0 %v1142
        %2552 = vmatpush.msra.mxu0 %v1126
        %2553 = vmatpush.msra.mxu0 %v1110
        %2554 = vmatpush.msra.mxu0 %v1094
        %2555 = vmatpush.msra.mxu0 %v1078
        %2556 = vmatpush.msra.mxu0 %v1062
        %2557 = vmatpush.msra.mxu0 %v1046
        %2558 = vmatpush.msra.mxu0 %v1030
        %2559 = vmatpush.msra.mxu0 %v1014
        %2560 = vmatpush.msra.mxu0 %v998
        %2561 = vmatmul.f32.gmra.mxu0 %v1280
        %v2562 = vpop.f32.mrf.mxu0
        %v2563 = vadd.f32 %v2543, %v2562
        %2564 = vdwg.mxu0
        %v2581 = vrot.slane %v1443, 6
        %v2582 = vrot.slane %v1523, 4
        %v2583 = vrot.slane %v1603, 2
        %v2584 = vrot.slane %v1763, 6
        %v2585 = vrot.slane %v1843, 4
        %v2586 = vrot.slane %v1923, 2
        %v2587 = vrot.slane %v2083, 6
        %v2588 = vrot.slane %v2163, 4
        %v2589 = vrot.slane %v2243, 2
        %v2590 = vrot.slane %v2403, 6
        %v2591 = vrot.slane %v2483, 4
        %v2592 = vrot.slane %v2563, 2
        %vm2593 = vcmask 1041408
        %v2594 = vsel %vm2593, %v1363, %v2581
        %vm2595 = vcmask 1045508
        %v2596 = vsel %vm2595, %v2582, %v2583
        %vm2597 = vcmask 1043456
        %v2598 = vsel %vm2597, %v2594, %v2596
        %v2599 = vsel %vm2593, %v1683, %v2584
        %v2600 = vsel %vm2595, %v2585, %v2586
        %v2601 = vsel %vm2597, %v2599, %v2600
        %v2602 = vsel %vm2593, %v2003, %v2587
        %v2603 = vsel %vm2595, %v2588, %v2589
        %v2604 = vsel %vm2597, %v2602, %v2603
        %v2605 = vsel %vm2593, %v2323, %v2590
        %v2606 = vsel %vm2595, %v2591, %v2592
        %v2607 = vsel %vm2597, %v2605, %v2606
        %2612 = vst [vmem:[%s212] sm:$0xff] %v2598
        %2613 = vst [vmem:[%s212 + $0x8] sm:$0xff] %v2601
        %2614 = vst [vmem:[%s212 + $0x10] sm:$0xff] %v2604
        %2615 = vst [vmem:[%s212 + $0x18] sm:$0xff] %v2607
        %s2616 = smul.u32 16, %s17
        %p2617 = scmp.lt.s32.totalorder %s2616, 511
        %s2618 = scalar_select %p2617, %s2616, 511
        %s2619 = smul.addr %s2618, 2
        %s2620 = scalar_lea.vmem %s3, %s2619
        // Predicated region
        $region37: #{basic_cnn_forward.13} parent=31 // pred_check
          %p2621 = pneg %p108
        $region38: #{basic_cnn_forward.13} parent=31 // pred_check_branch
          %2623 = sbr.rel (%p2621) target = $region40
        $region39: #{basic_cnn_forward.13} parent=31 // pred_region
          %s2624 = smul.u32 16, %s17
        $region40: #{basic_cnn_forward.13} parent=31 // pred_fallthru
          _
      $region32: #{basic_cnn_forward.13} parent=5 // pred_fallthru
        _
      %p2625 = scmp.le.s32.totalorder 2, %s12
      // Predicated region
      $region41: #{basic_cnn_forward.13} parent=5 // pred_check
        %p2626 = pneg %p2625
      $region42: #{basic_cnn_forward.13} parent=5 // pred_check_branch
        %2628 = sbr.rel (%p2626) target = $region44
      $region43: #{basic_cnn_forward.13} parent=5 // pred_region
        %s2629 = ssub.s32 %s12, 2
        // Predicated region
        $region45: #{basic_cnn_forward.13} parent=43 // pred_check
          %p2630 = pneg %p114
        $region46: #{basic_cnn_forward.13} parent=43 // pred_check_branch
          %2632 = sbr.rel (%p2630) target = $region48
        $region47: #{basic_cnn_forward.13} parent=43 // pred_region
          %s2633 = smul.u32 16, %s18
          %p2634 = scmp.lt.s32.totalorder %s2633, 511
          %s2635 = scalar_select %p2634, %s2633, 511
          %s2636 = smul.addr %s2635, 2
          %s2637 = scalar_lea.vmem %s3, %s2636
        $region48: #{basic_cnn_forward.13} parent=43 // pred_fallthru
          _
      $region44: #{basic_cnn_forward.13} parent=5 // pred_fallthru
        _
    $region6: #{basic_cnn_forward.13} parent=1 // loop_footer
      %s16 = sadd.s32 1, %s12
    $region7: #{basic_cnn_forward.13} parent=1 // loop_footer_branch
      %11 = sbr.rel target = $region3
    $region8: #{basic_cnn_forward.13} parent=1 // loop_exit
      _
    %2638 = vsyncpa [#allocation3], 1
    %s2639 = scalar_lea.sflag [#allocation3], 1
    %2640 = vsyncpa %s2639, 1

</llo_original>
